<compile_context>
chip_gen: v6e
topology: v6e:2x2x1
jax: 0.10.0
libtpu: 0.0.40
codegen_flags: <defaults>
</compile_context>

<pallas_src>
import jax
import jax.numpy as jnp
from jax.experimental import pallas as pl
from jax.experimental.pallas import tpu as pltpu

KSIZE = 5   # Conv2d kernel_size=5
PAD = 2     # Conv2d padding=2 ("same" for stride 1)
_HIGHEST = jax.lax.Precision.HIGHEST


# ---------------- trace-time operator matrices (built in the wrapper) ----------------
def _band_matrices(w, n):
    """(5, n, n): band[di, r, c] = w[di, dj] where r - c == dj - 2.

    Right-multiplying an H-padded image row block by band[di] applies kernel-row
    di's five W-direction taps and the zero boundary along W in one MXU matmul.
    """
    r = jax.lax.broadcasted_iota(jnp.int32, (n, n), 0)
    c = jax.lax.broadcasted_iota(jnp.int32, (n, n), 1)
    bands = []
    for di in range(KSIZE):
        m = jnp.zeros((n, n), jnp.float32)
        for dj in range(KSIZE):
            m = m + jnp.where(r - c == dj - PAD, w[di, dj], 0.0)
        bands.append(m)
    return jnp.stack(bands, axis=0).astype(jnp.float32)


def _pool_w_matrix(n):
    """(n, n//2) with 0.5 where r // 2 == c: right-matmul = W-direction pair mean."""
    r = jax.lax.broadcasted_iota(jnp.int32, (n, n // 2), 0)
    c = jax.lax.broadcasted_iota(jnp.int32, (n, n // 2), 1)
    return jnp.where(r // 2 == c, 0.5, 0.0).astype(jnp.float32)


def _pool_h_matrix(m):
    """(m//2, m) with 0.5 where c // 2 == r: left-matmul = H-direction pair mean.

    m = bt * Hin (merged batch*rows); Hin is even so row pairs never cross images.
    """
    r = jax.lax.broadcasted_iota(jnp.int32, (m // 2, m), 0)
    c = jax.lax.broadcasted_iota(jnp.int32, (m // 2, m), 1)
    return jnp.where(c // 2 == r, 0.5, 0.0).astype(jnp.float32)


# ---------------------------------- kernel ----------------------------------
def _layer(x3d, pad_ref, band_ref, b_ref, pw, ph):
    """conv(5x5, same) -> +bias -> ReLU -> 2x2 avg-pool on one batch tile.

    x3d      : (bt, Hin, Win) f32 value
    pad_ref  : (bt, Hin + 4, Win) VMEM scratch (H-only zero padding)
    band_ref : (5, Win, Win) VMEM banded weight matrices
    b_ref    : (1,) SMEM bias
    pw       : (Win, Win//2) value,  ph : (bt*Hin//2, bt*Hin) value
    returns  : (bt*Hin//2, Win//2) f32 value (merged batch*rows form)
    """
    bt, Hin, Win = x3d.shape

    # H-only padding: zero just the 2-row halo strips, lane-aligned interior store.
    pad_ref[:, 0:PAD, :] = jnp.zeros((bt, PAD, Win), jnp.float32)
    pad_ref[:, PAD + Hin:PAD + Hin + PAD, :] = jnp.zeros((bt, PAD, Win), jnp.float32)
    pad_ref[:, PAD:PAD + Hin, :] = x3d

    # 5 banded MXU matmuls (one per kernel row) accumulate the full 5x5 conv.
    acc = jnp.zeros((bt * Hin, Win), jnp.float32)
    for di in range(KSIZE):
        lhs = pad_ref[:, di:di + Hin, :].reshape(bt * Hin, Win)
        acc = acc + jnp.dot(lhs, band_ref[di],
                            preferred_element_type=jnp.float32,
                            precision=_HIGHEST)

    y = jnp.maximum(acc + b_ref[0], 0.0)   # bias + ReLU on the VPU

    # 2x2 average pooling as two single (non-batched) MXU matmuls: 0.5 * 0.5 = mean of 4.
    t = jnp.dot(y, pw, preferred_element_type=jnp.float32, precision=_HIGHEST)
    return jnp.dot(ph, t, preferred_element_type=jnp.float32, precision=_HIGHEST)


def _cnn_fused_kernel(x_ref, band1_ref, band2_ref, pw1_ref, ph1_ref,
                      pw2_ref, ph2_ref, b1_ref, b2_ref, out_ref,
                      pad1_ref, pad2_ref):
    """Fused CNN_NET forward for one batch tile: two conv->ReLU->avgpool layers."""
    bt, H, W = x_ref.shape
    y1 = _layer(x_ref[...], pad1_ref, band1_ref, b1_ref, pw1_ref[...], ph1_ref[...])
    y1_3d = y1.reshape(bt, H // 2, W // 2)
    y2 = _layer(y1_3d, pad2_ref, band2_ref, b2_ref, pw2_ref[...], ph2_ref[...])
    out_ref[...] = y2.reshape(bt, H // 4, W // 4).astype(out_ref.dtype)


# ------------------------------ tiling policy ------------------------------
def _vmem_estimate_bytes(bt, H, W):
    """Rough per-step VMEM footprint (f32): double-buffered I/O blocks, pad
    scratches, band/pool operand blocks (ph scales quadratically with bt*H)."""
    f = 4
    inp = 2 * bt * H * W * f
    outp = 2 * bt * (H // 4) * (W // 4) * f
    pads = (bt * (H + 2 * PAD) * W + bt * (H // 2 + 2 * PAD) * (W // 2)) * f
    bands = 2 * (KSIZE * W * W + KSIZE * (W // 2) * (W // 2)) * f
    pools = 2 * (W * (W // 2) + (W // 2) * (W // 4)) * f
    ph = 2 * ((bt * H // 2) * (bt * H) + (bt * H // 4) * (bt * H // 2)) * f
    return inp + outp + pads + bands + pools + ph


def _pick_batch_tile(N, H, W, vmem_budget=8 << 20):
    """Largest divisor of N under a conservative VMEM budget (safe for v5e's
    16 MiB / v7x's 32 MiB default scoped VMEM).  grid=1 whenever possible
    (v5e/v6e have a single TensorCore); only keep >=2 'parallel' steps for
    large N where per-step work beats the ~0.35us/step overhead (v7x, 2 TCs)."""
    divisors = [d for d in range(1, N + 1)
                if N % d == 0 and _vmem_estimate_bytes(d, H, W) <= vmem_budget]
    bt = max(divisors) if divisors else 1
    if N >= 16 and bt == N:
        smaller = [d for d in divisors if N // d >= 2]
        if smaller:
            bt = max(smaller)
    return bt


# -------------------------------- wrapper --------------------------------
def cnn_net_forward(x_nchw, params):
    """Pallas implementation of CNN_NET.forward. (N, 1, H, W) -> (N, 1, H//4, W//4)."""
    w1, b1, w2, b2 = params
    N, C, H, W = x_nchw.shape
    assert C == 1, "CNN_NET uses in_channels == out_channels == 1"
    assert H % 4 == 0 and W % 4 == 0, "H and W must be divisible by 4 (two 2x2 pools)"

    x = x_nchw[:, 0, :, :].astype(jnp.float32)      # squeeze channel -> (N, H, W)
    bt = _pick_batch_tile(N, H, W)
    grid = (pl.cdiv(N, bt),)
    H2, W2, H4, W4 = H // 2, W // 2, H // 4, W // 4

    band1 = _band_matrices(w1.astype(jnp.float32), W)
    band2 = _band_matrices(w2.astype(jnp.float32), W2)
    pw1, ph1 = _pool_w_matrix(W), _pool_h_matrix(bt * H)
    pw2, ph2 = _pool_w_matrix(W2), _pool_h_matrix(bt * H2)

    smem = pl.BlockSpec(memory_space=pltpu.MemorySpace.SMEM)
    out = pl.pallas_call(
        _cnn_fused_kernel,
        out_shape=jax.ShapeDtypeStruct((N, H4, W4), jnp.float32),
        grid=grid,
        in_specs=[
            pl.BlockSpec((bt, H, W), lambda n: (n, 0, 0)),            # x tile
            pl.BlockSpec((KSIZE, W, W), lambda n: (0, 0, 0)),         # band1
            pl.BlockSpec((KSIZE, W2, W2), lambda n: (0, 0, 0)),       # band2
            pl.BlockSpec((W, W2), lambda n: (0, 0)),                  # pw1
            pl.BlockSpec((bt * H // 2, bt * H), lambda n: (0, 0)),    # ph1
            pl.BlockSpec((W2, W4), lambda n: (0, 0)),                 # pw2
            pl.BlockSpec((bt * H2 // 2, bt * H2), lambda n: (0, 0)),  # ph2
            smem,                                                     # b1 (1,)
            smem,                                                     # b2 (1,)
        ],
        out_specs=pl.BlockSpec((bt, H4, W4), lambda n: (n, 0, 0)),
        scratch_shapes=[
            pltpu.VMEM((bt, H + 2 * PAD, W), jnp.float32),    # layer-1 H-pad scratch
            pltpu.VMEM((bt, H2 + 2 * PAD, W2), jnp.float32),  # layer-2 H-pad scratch
        ],
        compiler_params=pltpu.CompilerParams(dimension_semantics=("parallel",)),
    )(x, band1, band2, pw1, ph1, pw2, ph2,
      b1.astype(jnp.float32), b2.astype(jnp.float32))

    return out[:, None, :, :]                        # back to NCHW


# ---------- pure-JAX reference (for correctness check) ----------
def _ref_layer(x, w, b):
    y = jax.lax.conv_general_dilated(
        x, w.reshape(1, 1, KSIZE, KSIZE), (1, 1), ((PAD, PAD), (PAD, PAD)),
        dimension_numbers=("NCHW", "OIHW", "NCHW"),
        precision=jax.lax.Precision.HIGHEST) + b[0]
    y = jnp.maximum(y, 0.0)
    n, c, h, w_ = y.shape
    return y.reshape(n, c, h // 2, 2, w_ // 2, 2).mean(axis=(3, 5))


def _ref_forward(x, params):
    w1, b1, w2, b2 = params
    return _ref_layer(_ref_layer(x, w1, b1), w2, b2)


if __name__ == "__main__":
    key = jax.random.PRNGKey(0)
    kx, k1, k2, k3, k4 = jax.random.split(key, 5)

    N, H, W = 2, 16, 16
    x = jax.random.normal(kx, (N, 1, H, W), dtype=jnp.float32)

    # Deterministic init mimicking PyTorch Conv2d defaults: U(-1/sqrt(fan_in), 1/sqrt(fan_in))
    bound = 1.0 / (KSIZE * KSIZE) ** 0.5
    w1 = jax.random.uniform(k1, (KSIZE, KSIZE), jnp.float32, -bound, bound)
    b1 = jax.random.uniform(k2, (1,), jnp.float32, -bound, bound)
    w2 = jax.random.uniform(k3, (KSIZE, KSIZE), jnp.float32, -bound, bound)
    b2 = jax.random.uniform(k4, (1,), jnp.float32, -bound, bound)
    params = (w1, b1, w2, b2)

    out = jax.block_until_ready(cnn_net_forward(x, params))
    ref = jax.block_until_ready(_ref_forward(x, params))

    assert out.shape == (N, 1, H // 4, W // 4), out.shape
    max_err = float(jnp.max(jnp.abs(out - ref)))
    assert jnp.allclose(out, ref, atol=1e-4, rtol=1e-4), max_err
    print("KERNEL_OK")
</pallas_src>

<mosaic_0001>
module attributes {stable_mosaic.version = 11 : i64} {
  func.func @_cnn_fused_kernel(%arg0: i32, %arg1: memref<2x16x16xf32, #tpu.memory_space<vmem>>, %arg2: memref<5x16x16xf32, #tpu.memory_space<vmem>>, %arg3: memref<5x8x8xf32, #tpu.memory_space<vmem>>, %arg4: memref<16x8xf32, #tpu.memory_space<vmem>>, %arg5: memref<16x32xf32, #tpu.memory_space<vmem>>, %arg6: memref<8x4xf32, #tpu.memory_space<vmem>>, %arg7: memref<8x16xf32, #tpu.memory_space<vmem>>, %arg8: memref<1xf32, #tpu.memory_space<smem>>, %arg9: memref<1xf32, #tpu.memory_space<smem>>, %arg10: memref<2x4x4xf32, #tpu.memory_space<vmem>>, %arg11: memref<2x20x16xf32, #tpu.memory_space<vmem>>, %arg12: memref<2x12x8xf32, #tpu.memory_space<vmem>>) attributes {dimension_semantics = [#tpu.dimension_semantics<parallel>], iteration_bounds = array<i64: 1>, scalar_prefetch = 0 : i64, scratch_operands = 2 : i64, tpu.core_type = #tpu.core_type<tc>, window_params = [{transform_indices = @transform_0, window_bounds = array<i64: 2, 16, 16>}, {pipeline_mode = #tpu.pipeline_mode<synchronous>, transform_indices = @transform_1, window_bounds = array<i64: 5, 16, 16>}, {pipeline_mode = #tpu.pipeline_mode<synchronous>, transform_indices = @transform_2, window_bounds = array<i64: 5, 8, 8>}, {pipeline_mode = #tpu.pipeline_mode<synchronous>, transform_indices = @transform_3, window_bounds = array<i64: 16, 8>}, {pipeline_mode = #tpu.pipeline_mode<synchronous>, transform_indices = @transform_4, window_bounds = array<i64: 16, 32>}, {pipeline_mode = #tpu.pipeline_mode<synchronous>, transform_indices = @transform_5, window_bounds = array<i64: 8, 4>}, {pipeline_mode = #tpu.pipeline_mode<synchronous>, transform_indices = @transform_6, window_bounds = array<i64: 8, 16>}, {transform_indices = @transform_7, window_bounds = array<i64: 1>}, {transform_indices = @transform_8, window_bounds = array<i64: 1>}, {transform_indices = @transform_9, window_bounds = array<i64: 2, 4, 4>}]} {
    %c0 = arith.constant 0 : index
    %c0_0 = arith.constant 0 : index
    %c0_1 = arith.constant 0 : index
    %0 = vector.load %arg1[%c0, %c0_0, %c0_1] : memref<2x16x16xf32, #tpu.memory_space<vmem>>, vector<2x16x16xf32>
    %c0_2 = arith.constant 0 : index
    %c0_3 = arith.constant 0 : index
    %1 = vector.load %arg4[%c0_2, %c0_3] : memref<16x8xf32, #tpu.memory_space<vmem>>, vector<16x8xf32>
    %c0_4 = arith.constant 0 : index
    %c0_5 = arith.constant 0 : index
    %2 = vector.load %arg5[%c0_4, %c0_5] : memref<16x32xf32, #tpu.memory_space<vmem>>, vector<16x32xf32>
    %cst = arith.constant 0.000000e+00 : f32
    %3 = vector.broadcast %cst : f32 to vector<2x2x16xf32>
    %c0_6 = arith.constant 0 : index
    %c0_7 = arith.constant 0 : index
    %c0_8 = arith.constant 0 : index
    %4 = vector.load %arg11[%c0_6, %c0_7, %c0_8] : memref<2x20x16xf32, #tpu.memory_space<vmem>>, vector<2x2x16xf32>
    tpu.vector_store %arg11[%c0_6, %c0_7, %c0_8], %3 {strides = array<i32>} : memref<2x20x16xf32, #tpu.memory_space<vmem>>, vector<2x2x16xf32>,
    %cst_9 = arith.constant 0.000000e+00 : f32
    %5 = vector.broadcast %cst_9 : f32 to vector<2x2x16xf32>
    %c0_10 = arith.constant 0 : index
    %c18 = arith.constant 18 : index
    %c0_11 = arith.constant 0 : index
    %6 = vector.load %arg11[%c0_10, %c18, %c0_11] : memref<2x20x16xf32, #tpu.memory_space<vmem>>, vector<2x2x16xf32>
    tpu.vector_store %arg11[%c0_10, %c18, %c0_11], %5 {strides = array<i32>} : memref<2x20x16xf32, #tpu.memory_space<vmem>>, vector<2x2x16xf32>,
    %c0_12 = arith.constant 0 : index
    %c2 = arith.constant 2 : index
    %c0_13 = arith.constant 0 : index
    %7 = vector.load %arg11[%c0_12, %c2, %c0_13] : memref<2x20x16xf32, #tpu.memory_space<vmem>>, vector<2x16x16xf32>
    tpu.vector_store %arg11[%c0_12, %c2, %c0_13], %0 {strides = array<i32>} : memref<2x20x16xf32, #tpu.memory_space<vmem>>, vector<2x16x16xf32>,
    %cst_14 = arith.constant 0.000000e+00 : f32
    %8 = vector.broadcast %cst_14 : f32 to vector<32x16xf32>
    %c0_15 = arith.constant 0 : index
    %c0_16 = arith.constant 0 : index
    %c0_17 = arith.constant 0 : index
    %9 = vector.load %arg11[%c0_15, %c0_16, %c0_17] : memref<2x20x16xf32, #tpu.memory_space<vmem>>, vector<2x16x16xf32>
    %10 = vector.shape_cast %9 : vector<2x16x16xf32> to vector<32x16xf32>
    %c0_18 = arith.constant 0 : index
    %c0_19 = arith.constant 0 : index
    %c0_20 = arith.constant 0 : index
    %11 = vector.load %arg2[%c0_18, %c0_19, %c0_20] : memref<5x16x16xf32, #tpu.memory_space<vmem>>, vector<1x16x16xf32>
    %12 = vector.shape_cast %11 : vector<1x16x16xf32> to vector<16x16xf32>
    %cst_21 = arith.constant dense<0.000000e+00> : vector<32x16xf32>
    %13 = tpu.matmul %10, %12, %cst_21 {dimension_numbers = #tpu.dot_dimension_numbers<[1], [0], [0], [1], [0, 0, 1, 1], [], []>, precision = #tpu.contract_precision<fp32>} : vector<32x16xf32>, vector<16x16xf32>, vector<32x16xf32> -> vector<32x16xf32>
    %14 = arith.addf %8, %13 : vector<32x16xf32>
    %c0_22 = arith.constant 0 : index
    %c1 = arith.constant 1 : index
    %c0_23 = arith.constant 0 : index
    %15 = vector.load %arg11[%c0_22, %c1, %c0_23] : memref<2x20x16xf32, #tpu.memory_space<vmem>>, vector<2x16x16xf32>
    %16 = vector.shape_cast %15 : vector<2x16x16xf32> to vector<32x16xf32>
    %c1_24 = arith.constant 1 : index
    %c0_25 = arith.constant 0 : index
    %c0_26 = arith.constant 0 : index
    %17 = vector.load %arg2[%c1_24, %c0_25, %c0_26] : memref<5x16x16xf32, #tpu.memory_space<vmem>>, vector<1x16x16xf32>
    %18 = vector.shape_cast %17 : vector<1x16x16xf32> to vector<16x16xf32>
    %cst_27 = arith.constant dense<0.000000e+00> : vector<32x16xf32>
    %19 = tpu.matmul %16, %18, %cst_27 {dimension_numbers = #tpu.dot_dimension_numbers<[1], [0], [0], [1], [0, 0, 1, 1], [], []>, precision = #tpu.contract_precision<fp32>} : vector<32x16xf32>, vector<16x16xf32>, vector<32x16xf32> -> vector<32x16xf32>
    %20 = arith.addf %14, %19 : vector<32x16xf32>
    %c0_28 = arith.constant 0 : index
    %c2_29 = arith.constant 2 : index
    %c0_30 = arith.constant 0 : index
    %21 = vector.load %arg11[%c0_28, %c2_29, %c0_30] : memref<2x20x16xf32, #tpu.memory_space<vmem>>, vector<2x16x16xf32>
    %22 = vector.shape_cast %21 : vector<2x16x16xf32> to vector<32x16xf32>
    %c2_31 = arith.constant 2 : index
    %c0_32 = arith.constant 0 : index
    %c0_33 = arith.constant 0 : index
    %23 = vector.load %arg2[%c2_31, %c0_32, %c0_33] : memref<5x16x16xf32, #tpu.memory_space<vmem>>, vector<1x16x16xf32>
    %24 = vector.shape_cast %23 : vector<1x16x16xf32> to vector<16x16xf32>
    %cst_34 = arith.constant dense<0.000000e+00> : vector<32x16xf32>
    %25 = tpu.matmul %22, %24, %cst_34 {dimension_numbers = #tpu.dot_dimension_numbers<[1], [0], [0], [1], [0, 0, 1, 1], [], []>, precision = #tpu.contract_precision<fp32>} : vector<32x16xf32>, vector<16x16xf32>, vector<32x16xf32> -> vector<32x16xf32>
    %26 = arith.addf %20, %25 : vector<32x16xf32>
    %c0_35 = arith.constant 0 : index
    %c3 = arith.constant 3 : index
    %c0_36 = arith.constant 0 : index
    %27 = vector.load %arg11[%c0_35, %c3, %c0_36] : memref<2x20x16xf32, #tpu.memory_space<vmem>>, vector<2x16x16xf32>
    %28 = vector.shape_cast %27 : vector<2x16x16xf32> to vector<32x16xf32>
    %c3_37 = arith.constant 3 : index
    %c0_38 = arith.constant 0 : index
    %c0_39 = arith.constant 0 : index
    %29 = vector.load %arg2[%c3_37, %c0_38, %c0_39] : memref<5x16x16xf32, #tpu.memory_space<vmem>>, vector<1x16x16xf32>
    %30 = vector.shape_cast %29 : vector<1x16x16xf32> to vector<16x16xf32>
    %cst_40 = arith.constant dense<0.000000e+00> : vector<32x16xf32>
    %31 = tpu.matmul %28, %30, %cst_40 {dimension_numbers = #tpu.dot_dimension_numbers<[1], [0], [0], [1], [0, 0, 1, 1], [], []>, precision = #tpu.contract_precision<fp32>} : vector<32x16xf32>, vector<16x16xf32>, vector<32x16xf32> -> vector<32x16xf32>
    %32 = arith.addf %26, %31 : vector<32x16xf32>
    %c0_41 = arith.constant 0 : index
    %c4 = arith.constant 4 : index
    %c0_42 = arith.constant 0 : index
    %33 = vector.load %arg11[%c0_41, %c4, %c0_42] : memref<2x20x16xf32, #tpu.memory_space<vmem>>, vector<2x16x16xf32>
    %34 = vector.shape_cast %33 : vector<2x16x16xf32> to vector<32x16xf32>
    %c4_43 = arith.constant 4 : index
    %c0_44 = arith.constant 0 : index
    %c0_45 = arith.constant 0 : index
    %35 = vector.load %arg2[%c4_43, %c0_44, %c0_45] : memref<5x16x16xf32, #tpu.memory_space<vmem>>, vector<1x16x16xf32>
    %36 = vector.shape_cast %35 : vector<1x16x16xf32> to vector<16x16xf32>
    %cst_46 = arith.constant dense<0.000000e+00> : vector<32x16xf32>
    %37 = tpu.matmul %34, %36, %cst_46 {dimension_numbers = #tpu.dot_dimension_numbers<[1], [0], [0], [1], [0, 0, 1, 1], [], []>, precision = #tpu.contract_precision<fp32>} : vector<32x16xf32>, vector<16x16xf32>, vector<32x16xf32> -> vector<32x16xf32>
    %38 = arith.addf %32, %37 : vector<32x16xf32>
    %c0_47 = arith.constant 0 : index
    %39 = memref.load %arg8[%c0_47] : memref<1xf32, #tpu.memory_space<smem>>
    %40 = vector.broadcast %39 : f32 to vector<32x16xf32>
    %41 = arith.addf %38, %40 : vector<32x16xf32>
    %cst_48 = arith.constant 0.000000e+00 : f32
    %42 = vector.broadcast %cst_48 : f32 to vector<32x16xf32>
    %43 = arith.maximumf %41, %42 : vector<32x16xf32>
    %cst_49 = arith.constant dense<0.000000e+00> : vector<32x8xf32>
    %44 = tpu.matmul %43, %1, %cst_49 {dimension_numbers = #tpu.dot_dimension_numbers<[1], [0], [0], [1], [0, 0, 1, 1], [], []>, precision = #tpu.contract_precision<fp32>} : vector<32x16xf32>, vector<16x8xf32>, vector<32x8xf32> -> vector<32x8xf32>
    %cst_50 = arith.constant dense<0.000000e+00> : vector<16x8xf32>
    %45 = tpu.matmul %2, %44, %cst_50 {dimension_numbers = #tpu.dot_dimension_numbers<[1], [0], [0], [1], [0, 0, 1, 1], [], []>, precision = #tpu.contract_precision<fp32>} : vector<16x32xf32>, vector<32x8xf32>, vector<16x8xf32> -> vector<16x8xf32>
    %46 = vector.shape_cast %45 : vector<16x8xf32> to vector<2x8x8xf32>
    %c0_51 = arith.constant 0 : index
    %c0_52 = arith.constant 0 : index
    %47 = vector.load %arg6[%c0_51, %c0_52] : memref<8x4xf32, #tpu.memory_space<vmem>>, vector<8x4xf32>
    %c0_53 = arith.constant 0 : index
    %c0_54 = arith.constant 0 : index
    %48 = vector.load %arg7[%c0_53, %c0_54] : memref<8x16xf32, #tpu.memory_space<vmem>>, vector<8x16xf32>
    %cst_55 = arith.constant 0.000000e+00 : f32
    %49 = vector.broadcast %cst_55 : f32 to vector<2x2x8xf32>
    %c0_56 = arith.constant 0 : index
    %c0_57 = arith.constant 0 : index
    %c0_58 = arith.constant 0 : index
    %50 = vector.load %arg12[%c0_56, %c0_57, %c0_58] : memref<2x12x8xf32, #tpu.memory_space<vmem>>, vector<2x2x8xf32>
    tpu.vector_store %arg12[%c0_56, %c0_57, %c0_58], %49 {strides = array<i32>} : memref<2x12x8xf32, #tpu.memory_space<vmem>>, vector<2x2x8xf32>,
    %cst_59 = arith.constant 0.000000e+00 : f32
    %51 = vector.broadcast %cst_59 : f32 to vector<2x2x8xf32>
    %c0_60 = arith.constant 0 : index
    %c10 = arith.constant 10 : index
    %c0_61 = arith.constant 0 : index
    %52 = vector.load %arg12[%c0_60, %c10, %c0_61] : memref<2x12x8xf32, #tpu.memory_space<vmem>>, vector<2x2x8xf32>
    tpu.vector_store %arg12[%c0_60, %c10, %c0_61], %51 {strides = array<i32>} : memref<2x12x8xf32, #tpu.memory_space<vmem>>, vector<2x2x8xf32>,
    %c0_62 = arith.constant 0 : index
    %c2_63 = arith.constant 2 : index
    %c0_64 = arith.constant 0 : index
    %53 = vector.load %arg12[%c0_62, %c2_63, %c0_64] : memref<2x12x8xf32, #tpu.memory_space<vmem>>, vector<2x8x8xf32>
    tpu.vector_store %arg12[%c0_62, %c2_63, %c0_64], %46 {strides = array<i32>} : memref<2x12x8xf32, #tpu.memory_space<vmem>>, vector<2x8x8xf32>,
    %cst_65 = arith.constant 0.000000e+00 : f32
    %54 = vector.broadcast %cst_65 : f32 to vector<16x8xf32>
    %c0_66 = arith.constant 0 : index
    %c0_67 = arith.constant 0 : index
    %c0_68 = arith.constant 0 : index
    %55 = vector.load %arg12[%c0_66, %c0_67, %c0_68] : memref<2x12x8xf32, #tpu.memory_space<vmem>>, vector<2x8x8xf32>
    %56 = vector.shape_cast %55 : vector<2x8x8xf32> to vector<16x8xf32>
    %c0_69 = arith.constant 0 : index
    %c0_70 = arith.constant 0 : index
    %c0_71 = arith.constant 0 : index
    %57 = vector.load %arg3[%c0_69, %c0_70, %c0_71] : memref<5x8x8xf32, #tpu.memory_space<vmem>>, vector<1x8x8xf32>
    %58 = vector.shape_cast %57 : vector<1x8x8xf32> to vector<8x8xf32>
    %cst_72 = arith.constant dense<0.000000e+00> : vector<16x8xf32>
    %59 = tpu.matmul %56, %58, %cst_72 {dimension_numbers = #tpu.dot_dimension_numbers<[1], [0], [0], [1], [0, 0, 1, 1], [], []>, precision = #tpu.contract_precision<fp32>} : vector<16x8xf32>, vector<8x8xf32>, vector<16x8xf32> -> vector<16x8xf32>
    %60 = arith.addf %54, %59 : vector<16x8xf32>
    %c0_73 = arith.constant 0 : index
    %c1_74 = arith.constant 1 : index
    %c0_75 = arith.constant 0 : index
    %61 = vector.load %arg12[%c0_73, %c1_74, %c0_75] : memref<2x12x8xf32, #tpu.memory_space<vmem>>, vector<2x8x8xf32>
    %62 = vector.shape_cast %61 : vector<2x8x8xf32> to vector<16x8xf32>
    %c1_76 = arith.constant 1 : index
    %c0_77 = arith.constant 0 : index
    %c0_78 = arith.constant 0 : index
    %63 = vector.load %arg3[%c1_76, %c0_77, %c0_78] : memref<5x8x8xf32, #tpu.memory_space<vmem>>, vector<1x8x8xf32>
    %64 = vector.shape_cast %63 : vector<1x8x8xf32> to vector<8x8xf32>
    %cst_79 = arith.constant dense<0.000000e+00> : vector<16x8xf32>
    %65 = tpu.matmul %62, %64, %cst_79 {dimension_numbers = #tpu.dot_dimension_numbers<[1], [0], [0], [1], [0, 0, 1, 1], [], []>, precision = #tpu.contract_precision<fp32>} : vector<16x8xf32>, vector<8x8xf32>, vector<16x8xf32> -> vector<16x8xf32>
    %66 = arith.addf %60, %65 : vector<16x8xf32>
    %c0_80 = arith.constant 0 : index
    %c2_81 = arith.constant 2 : index
    %c0_82 = arith.constant 0 : index
    %67 = vector.load %arg12[%c0_80, %c2_81, %c0_82] : memref<2x12x8xf32, #tpu.memory_space<vmem>>, vector<2x8x8xf32>
    %68 = vector.shape_cast %67 : vector<2x8x8xf32> to vector<16x8xf32>
    %c2_83 = arith.constant 2 : index
    %c0_84 = arith.constant 0 : index
    %c0_85 = arith.constant 0 : index
    %69 = vector.load %arg3[%c2_83, %c0_84, %c0_85] : memref<5x8x8xf32, #tpu.memory_space<vmem>>, vector<1x8x8xf32>
    %70 = vector.shape_cast %69 : vector<1x8x8xf32> to vector<8x8xf32>
    %cst_86 = arith.constant dense<0.000000e+00> : vector<16x8xf32>
    %71 = tpu.matmul %68, %70, %cst_86 {dimension_numbers = #tpu.dot_dimension_numbers<[1], [0], [0], [1], [0, 0, 1, 1], [], []>, precision = #tpu.contract_precision<fp32>} : vector<16x8xf32>, vector<8x8xf32>, vector<16x8xf32> -> vector<16x8xf32>
    %72 = arith.addf %66, %71 : vector<16x8xf32>
    %c0_87 = arith.constant 0 : index
    %c3_88 = arith.constant 3 : index
    %c0_89 = arith.constant 0 : index
    %73 = vector.load %arg12[%c0_87, %c3_88, %c0_89] : memref<2x12x8xf32, #tpu.memory_space<vmem>>, vector<2x8x8xf32>
    %74 = vector.shape_cast %73 : vector<2x8x8xf32> to vector<16x8xf32>
    %c3_90 = arith.constant 3 : index
    %c0_91 = arith.constant 0 : index
    %c0_92 = arith.constant 0 : index
    %75 = vector.load %arg3[%c3_90, %c0_91, %c0_92] : memref<5x8x8xf32, #tpu.memory_space<vmem>>, vector<1x8x8xf32>
    %76 = vector.shape_cast %75 : vector<1x8x8xf32> to vector<8x8xf32>
    %cst_93 = arith.constant dense<0.000000e+00> : vector<16x8xf32>
    %77 = tpu.matmul %74, %76, %cst_93 {dimension_numbers = #tpu.dot_dimension_numbers<[1], [0], [0], [1], [0, 0, 1, 1], [], []>, precision = #tpu.contract_precision<fp32>} : vector<16x8xf32>, vector<8x8xf32>, vector<16x8xf32> -> vector<16x8xf32>
    %78 = arith.addf %72, %77 : vector<16x8xf32>
    %c0_94 = arith.constant 0 : index
    %c4_95 = arith.constant 4 : index
    %c0_96 = arith.constant 0 : index
    %79 = vector.load %arg12[%c0_94, %c4_95, %c0_96] : memref<2x12x8xf32, #tpu.memory_space<vmem>>, vector<2x8x8xf32>
    %80 = vector.shape_cast %79 : vector<2x8x8xf32> to vector<16x8xf32>
    %c4_97 = arith.constant 4 : index
    %c0_98 = arith.constant 0 : index
    %c0_99 = arith.constant 0 : index
    %81 = vector.load %arg3[%c4_97, %c0_98, %c0_99] : memref<5x8x8xf32, #tpu.memory_space<vmem>>, vector<1x8x8xf32>
    %82 = vector.shape_cast %81 : vector<1x8x8xf32> to vector<8x8xf32>
    %cst_100 = arith.constant dense<0.000000e+00> : vector<16x8xf32>
    %83 = tpu.matmul %80, %82, %cst_100 {dimension_numbers = #tpu.dot_dimension_numbers<[1], [0], [0], [1], [0, 0, 1, 1], [], []>, precision = #tpu.contract_precision<fp32>} : vector<16x8xf32>, vector<8x8xf32>, vector<16x8xf32> -> vector<16x8xf32>
    %84 = arith.addf %78, %83 : vector<16x8xf32>
    %c0_101 = arith.constant 0 : index
    %85 = memref.load %arg9[%c0_101] : memref<1xf32, #tpu.memory_space<smem>>
    %86 = vector.broadcast %85 : f32 to vector<16x8xf32>
    %87 = arith.addf %84, %86 : vector<16x8xf32>
    %cst_102 = arith.constant 0.000000e+00 : f32
    %88 = vector.broadcast %cst_102 : f32 to vector<16x8xf32>
    %89 = arith.maximumf %87, %88 : vector<16x8xf32>
    %cst_103 = arith.constant dense<0.000000e+00> : vector<16x4xf32>
    %90 = tpu.matmul %89, %47, %cst_103 {dimension_numbers = #tpu.dot_dimension_numbers<[1], [0], [0], [1], [0, 0, 1, 1], [], []>, precision = #tpu.contract_precision<fp32>} : vector<16x8xf32>, vector<8x4xf32>, vector<16x4xf32> -> vector<16x4xf32>
    %cst_104 = arith.constant dense<0.000000e+00> : vector<8x4xf32>
    %91 = tpu.matmul %48, %90, %cst_104 {dimension_numbers = #tpu.dot_dimension_numbers<[1], [0], [0], [1], [0, 0, 1, 1], [], []>, precision = #tpu.contract_precision<fp32>} : vector<8x16xf32>, vector<16x4xf32>, vector<8x4xf32> -> vector<8x4xf32>
    %92 = vector.shape_cast %91 : vector<8x4xf32> to vector<2x4x4xf32>
    %c0_105 = arith.constant 0 : index
    %c0_106 = arith.constant 0 : index
    %c0_107 = arith.constant 0 : index
    %93 = vector.load %arg10[%c0_105, %c0_106, %c0_107] : memref<2x4x4xf32, #tpu.memory_space<vmem>>, vector<2x4x4xf32>
    tpu.vector_store %arg10[%c0_105, %c0_106, %c0_107], %92 {strides = array<i32>} : memref<2x4x4xf32, #tpu.memory_space<vmem>>, vector<2x4x4xf32>,
    return
  }
  func.func @transform_0(%arg0: i32) -> (i32, i32, i32) {
    %c0_i32 = arith.constant 0 : i32
    %c0_i32_0 = arith.constant 0 : i32
    %c0_i32_1 = arith.constant 0 : i32
    return %arg0, %c0_i32, %c0_i32_0 : i32, i32, i32
  }
  func.func @transform_1(%arg0: i32) -> (i32, i32, i32) {
    %c0_i32 = arith.constant 0 : i32
    %c0_i32_0 = arith.constant 0 : i32
    %c0_i32_1 = arith.constant 0 : i32
    %c0_i32_2 = arith.constant 0 : i32
    return %c0_i32, %c0_i32_0, %c0_i32_1 : i32, i32, i32
  }
  func.func @transform_2(%arg0: i32) -> (i32, i32, i32) {
    %c0_i32 = arith.constant 0 : i32
    %c0_i32_0 = arith.constant 0 : i32
    %c0_i32_1 = arith.constant 0 : i32
    %c0_i32_2 = arith.constant 0 : i32
    return %c0_i32, %c0_i32_0, %c0_i32_1 : i32, i32, i32
  }
  func.func @transform_3(%arg0: i32) -> (i32, i32) {
    %c0_i32 = arith.constant 0 : i32
    %c0_i32_0 = arith.constant 0 : i32
    %c0_i32_1 = arith.constant 0 : i32
    return %c0_i32, %c0_i32_0 : i32, i32
  }
  func.func @transform_4(%arg0: i32) -> (i32, i32) {
    %c0_i32 = arith.constant 0 : i32
    %c0_i32_0 = arith.constant 0 : i32
    %c0_i32_1 = arith.constant 0 : i32
    return %c0_i32, %c0_i32_0 : i32, i32
  }
  func.func @transform_5(%arg0: i32) -> (i32, i32) {
    %c0_i32 = arith.constant 0 : i32
    %c0_i32_0 = arith.constant 0 : i32
    %c0_i32_1 = arith.constant 0 : i32
    return %c0_i32, %c0_i32_0 : i32, i32
  }
  func.func @transform_6(%arg0: i32) -> (i32, i32) {
    %c0_i32 = arith.constant 0 : i32
    %c0_i32_0 = arith.constant 0 : i32
    %c0_i32_1 = arith.constant 0 : i32
    return %c0_i32, %c0_i32_0 : i32, i32
  }
  func.func @transform_7(%arg0: i32) -> i32 {
    %c0_i32 = arith.constant 0 : i32
    %c0_i32_0 = arith.constant 0 : i32
    return %c0_i32 : i32
  }
  func.func @transform_8(%arg0: i32) -> i32 {
    %c0_i32 = arith.constant 0 : i32
    %c0_i32_0 = arith.constant 0 : i32
    return %c0_i32 : i32
  }
  func.func @transform_9(%arg0: i32) -> (i32, i32, i32) {
    %c0_i32 = arith.constant 0 : i32
    %c0_i32_0 = arith.constant 0 : i32
    %c0_i32_1 = arith.constant 0 : i32
    return %arg0, %c0_i32, %c0_i32_0 : i32, i32, i32
  }
}

</mosaic_0001>

<llo_original>
// kernel: tpu_custom_call.1
$region0: #{tpu_custom_call.1}
  #allocation0 [shape = 'u32[]', space=smem, size = 0x4, offset = 0x4, fixed_abs, tag = 'smem constant byte address 0x4 - core index']
  #allocation1 [shape = 'u32[144,128]{1,0:T(1,128)}', space=vmem, size = 0x12000, scoped, tag = 'internal scratch']
  #allocation2 [shape = 'f32[2,20,16]{2,1,0:T(8,128)}', space=vmem, size = 0x6000, scoped, tag = 'scratch operand']
  #allocation3 [shape = 'f32[2,12,8]{2,1,0:T(8,128)}', space=vmem, size = 0x4000, scoped, tag = 'scratch operand']
  #allocation4 [shape = 'f32[1]{0:T(128)S(6)}', space=smem, size = 0x200, scoped, tag = 'scoped memory for tpu_custom_call.1']
  #allocation5 [shape = 'f32[1]{0:T(128)S(6)}', space=smem, size = 0x200, scoped, tag = 'scoped memory for tpu_custom_call.1']
  %s0 = inlined_call_operand.hbm [shape: f32[2,16,16], index: 0, kind: input, shape index: {}]
  %s1 = inlined_call_operand.hbm [shape: f32[5,16,16], index: 1, kind: input, shape index: {}]
  %s2 = inlined_call_operand.vmem [shape: f32[5,8,8], index: 2, kind: input, shape index: {}]
  %s3 = inlined_call_operand.vmem [shape: f32[16,8], index: 3, kind: input, shape index: {}]
  %s4 = inlined_call_operand.hbm [shape: f32[16,32], index: 4, kind: input, shape index: {}]
  %s5 = inlined_call_operand.vmem [shape: f32[8,4], index: 5, kind: input, shape index: {}]
  %s6 = inlined_call_operand.vmem [shape: f32[8,16], index: 6, kind: input, shape index: {}]
  %s7 = inlined_call_operand.<no memory space> [shape: f32[1], index: 7, kind: input, shape index: {}]
  %s8 = inlined_call_operand.<no memory space> [shape: f32[1], index: 8, kind: input, shape index: {}]
  %s9 = inlined_call_operand.hbm [shape: f32[2,4,4], index: 9, kind: output, shape index: {}]
  %s10 = sld [smem:[#allocation0]]
  $region58: #{tpu_custom_call.1} parent=0
    _
  %s12 = ssub.s32 1, %s10
  %s13 = scalar_select 0, %s12, %s10
  %14 = sst [smem:[#allocation4]] %s7
  %15 = sst [smem:[#allocation5]] %s8
  $region1: #{tpu_custom_call.1} parent=0
    #allocation6 [shape = 'u8[16384]{0}', space=vmem, size = 0x4000, scoped, tag = 'input window, operand 0, single buffered']
    #allocation7 [shape = 's32[1]{0}', space=sflag, size = 0x4, scoped, tag = 'scoped memory for tpu_custom_call.1']
    #allocation8 [shape = 's32[1]{0}', space=sflag, size = 0x4, scoped, tag = 'scoped memory for tpu_custom_call.1']
    #allocation9 [shape = 'u8[40960]{0}', space=vmem, size = 0xa000, scoped, tag = 'input window, operand 1, single buffered']
    #allocation10 [shape = 's32[1]{0}', space=sflag, size = 0x4, scoped, tag = 'scoped memory for tpu_custom_call.1']
    #allocation11 [shape = 'u8[8192]{0}', space=vmem, size = 0x2000, scoped, tag = 'input window, operand 4, single buffered']
    #allocation12 [shape = 'u8[4096]{0}', space=vmem, size = 0x1000, scoped, tag = 'output window, operand 0, single buffered']
    %16 = vsyncpa [#allocation7], 0
    %17 = vsyncpa [#allocation10], 0
    %18 = vsyncpa [#allocation8], 0
    // Predicated region
    $region2: #{tpu_custom_call.1} parent=1 // pred_check
      _
    $region3: #{tpu_custom_call.1} parent=1 // pred_check_branch
      %20 = sbr.rel (0) target = $region5
    $region4: #{tpu_custom_call.1} parent=1 // pred_region
      %s22 = ssub.s32 512, 512
      %23 = vsyncadd [#allocation7], %s22
      %s24 = sshll.u32 [#allocation6], 4
      %s25 = int_to_ptr.vmem [resolvable:$true] %s24
      %30 = dma.hbm_to_vmem [thread:$0]  %s0, 512, %s25, [#allocation7], 128, 128, 8
    $region5: #{tpu_custom_call.1} parent=1 // pred_fallthru
      _
    // Predicated region
    $region6: #{tpu_custom_call.1} parent=1 // pred_check
      _
    $region7: #{tpu_custom_call.1} parent=1 // pred_check_branch
      %32 = sbr.rel (0) target = $region9
    $region8: #{tpu_custom_call.1} parent=1 // pred_region
      %s34 = ssub.s32 1280, 1280
      %35 = vsyncadd [#allocation10], %s34
      %s36 = sshll.u32 [#allocation9], 4
      %s37 = int_to_ptr.vmem [resolvable:$true] %s36
      %42 = dma.hbm_to_vmem [thread:$0]  %s1, 1280, %s37, [#allocation10], 128, 128, 8
    $region9: #{tpu_custom_call.1} parent=1 // pred_fallthru
      _
    // Predicated region
    $region10: #{tpu_custom_call.1} parent=1 // pred_check
      _
    $region11: #{tpu_custom_call.1} parent=1 // pred_check_branch
      %44 = sbr.rel (0) target = $region13
    $region12: #{tpu_custom_call.1} parent=1 // pred_region
      _
    $region13: #{tpu_custom_call.1} parent=1 // pred_fallthru
      _
    // Predicated region
    $region14: #{tpu_custom_call.1} parent=1 // pred_check
      _
    $region15: #{tpu_custom_call.1} parent=1 // pred_check_branch
      %46 = sbr.rel (0) target = $region17
    $region16: #{tpu_custom_call.1} parent=1 // pred_region
      _
    $region17: #{tpu_custom_call.1} parent=1 // pred_fallthru
      _
    // Predicated region
    $region18: #{tpu_custom_call.1} parent=1 // pred_check
      _
    $region19: #{tpu_custom_call.1} parent=1 // pred_check_branch
      %48 = sbr.rel (0) target = $region21
    $region20: #{tpu_custom_call.1} parent=1 // pred_region
      %s50 = ssub.s32 256, 256
      %51 = vsyncadd [#allocation10], %s50
      %s52 = sshll.u32 [#allocation11], 4
      %s53 = int_to_ptr.vmem [resolvable:$true] %s52
      %58 = dma.hbm_to_vmem [thread:$0]  %s4, 256, %s53, [#allocation10], 128, 128, 8
    $region21: #{tpu_custom_call.1} parent=1 // pred_fallthru
      _
    // Predicated region
    $region22: #{tpu_custom_call.1} parent=1 // pred_check
      _
    $region23: #{tpu_custom_call.1} parent=1 // pred_check_branch
      %60 = sbr.rel (0) target = $region25
    $region24: #{tpu_custom_call.1} parent=1 // pred_region
      _
    $region25: #{tpu_custom_call.1} parent=1 // pred_fallthru
      _
    // Predicated region
    $region26: #{tpu_custom_call.1} parent=1 // pred_check
      _
    $region27: #{tpu_custom_call.1} parent=1 // pred_check_branch
      %62 = sbr.rel (0) target = $region29
    $region28: #{tpu_custom_call.1} parent=1 // pred_region
      _
    $region29: #{tpu_custom_call.1} parent=1 // pred_fallthru
      _
    // Predicated region
    $region30: #{tpu_custom_call.1} parent=1 // pred_check
      _
    $region31: #{tpu_custom_call.1} parent=1 // pred_check_branch
      %64 = sbr.rel (0) target = $region33
    $region32: #{tpu_custom_call.1} parent=1 // pred_region
      _
    $region33: #{tpu_custom_call.1} parent=1 // pred_fallthru
      _
    // Predicated region
    $region34: #{tpu_custom_call.1} parent=1 // pred_check
      _
    $region35: #{tpu_custom_call.1} parent=1 // pred_check_branch
      %66 = sbr.rel (0) target = $region37
    $region36: #{tpu_custom_call.1} parent=1 // pred_region
      _
    $region37: #{tpu_custom_call.1} parent=1 // pred_fallthru
      _
    // Predicated region
    $region38: #{tpu_custom_call.1} parent=1 // pred_check
      _
    $region39: #{tpu_custom_call.1} parent=1 // pred_check_branch
      %68 = sbr.rel (0) target = $region41
    $region40: #{tpu_custom_call.1} parent=1 // pred_region
      %69 = dma.done [#allocation7], 512
    $region41: #{tpu_custom_call.1} parent=1 // pred_fallthru
      _
    // Predicated region
    $region42: #{tpu_custom_call.1} parent=1 // pred_check
      _
    $region43: #{tpu_custom_call.1} parent=1 // pred_check_branch
      %71 = sbr.rel (0) target = $region45
    $region44: #{tpu_custom_call.1} parent=1 // pred_region
      %72 = dma.done [#allocation10], 1280
    $region45: #{tpu_custom_call.1} parent=1 // pred_fallthru
      _
    // Predicated region
    $region46: #{tpu_custom_call.1} parent=1 // pred_check
      _
    $region47: #{tpu_custom_call.1} parent=1 // pred_check_branch
      %74 = sbr.rel (0) target = $region49
    $region48: #{tpu_custom_call.1} parent=1 // pred_region
      %75 = dma.done [#allocation10], 256
    $region49: #{tpu_custom_call.1} parent=1 // pred_fallthru
      _
    %v76 = vld [vmem:[#allocation6] sm:$0xff]
    %v77 = vld [vmem:[#allocation6 + $0x8] sm:$0xff]
    %v78 = vld [vmem:[#allocation6 + $0x10] sm:$0xff]
    %v79 = vld [vmem:[#allocation6 + $0x18] sm:$0xff]
    %v80 = vld [vmem:[%s3] sm:$0xff]
    %v81 = vld [vmem:[%s3 + $0x8] sm:$0xff]
    %v82 = vld [vmem:[#allocation11] sm:$0xff]
    %v83 = vld [vmem:[#allocation11 + $0x8] sm:$0xff]
    %vm84 = vcmask 123904
    %85 = vst.msk [vmem:[#allocation2] sm:$0x3] %vm84, 0.0
    %86 = vst.msk [vmem:[#allocation2 + $0x18] sm:$0x3] %vm84, 0.0
    %87 = vst.msk [vmem:[#allocation2 + $0x12] sm:$0x3] %vm84, 0.0
    %88 = vst.msk [vmem:[#allocation2 + $0x2a] sm:$0x3] %vm84, 0.0
    %vm89 = vcmask 130048
    %90 = vst.msk [vmem:[#allocation2 + $0x2] sm:$0xff] %vm89, %v76
    %91 = vst.msk [vmem:[#allocation2 + $0xa] sm:$0xff] %vm89, %v77
    %92 = vst.msk [vmem:[#allocation2 + $0x1a] sm:$0xff] %vm89, %v78
    %93 = vst.msk [vmem:[#allocation2 + $0x22] sm:$0xff] %vm89, %v79
    %v94 = vld [vmem:[#allocation2] sm:$0xff]
    %v95 = vld [vmem:[#allocation2 + $0x8] sm:$0xff]
    %v96 = vld [vmem:[#allocation2 + $0x18] sm:$0xff]
    %v97 = vld [vmem:[#allocation2 + $0x20] sm:$0xff]
    %v98 = vld [vmem:[#allocation9] sm:$0xff]
    %v99 = vld [vmem:[#allocation9 + $0x8] sm:$0xff]
    %v100 = vld [vmem:[#allocation2 + $0x1] sm:$0xff]
    %v101 = vld [vmem:[#allocation2 + $0x9] sm:$0xff]
    %v102 = vld [vmem:[#allocation2 + $0x19] sm:$0xff]
    %v103 = vld [vmem:[#allocation2 + $0x21] sm:$0xff]
    %s104 = scalar_lea.vmem [#allocation9], 16
    %v105 = vld [vmem:[%s104] sm:$0xff]
    %v106 = vld [vmem:[%s104 + $0x8] sm:$0xff]
    %v108 = vsel %vm89, %v100, 0
    %v111 = vsel %vm89, %v101, 0
    %v114 = vsel %vm89, %v102, 0
    %v117 = vsel %vm89, %v103, 0
    %119 = vmatprep.subr.mxu0 0.0
    %120 = vmatpush1.msra.mxu0 0.0
    %121 = vmatprep.subr.mxu0 0.0
    %122 = vmatpush1.msra.mxu0 0.0
    %123 = vmatprep.subr.mxu0 0.0
    %124 = vmatpush1.msra.mxu0 0.0
    %125 = vmatprep.subr.mxu0 0.0
    %126 = vmatpush1.msra.mxu0 0.0
    %127 = vmatprep.subr.mxu0 0.0
    %128 = vmatpush1.msra.mxu0 0.0
    %129 = vmatprep.subr.mxu0 0.0
    %130 = vmatpush1.msra.mxu0 0.0
    %131 = vmatprep.subr.mxu0 0.0
    %132 = vmatpush1.msra.mxu0 0.0
    %133 = vmatprep.subr.mxu0 0.0
    %134 = vmatpush1.msra.mxu0 0.0
    %135 = vmatprep.subr.mxu0 0.0
    %136 = vmatpush1.msra.mxu0 0.0
    %137 = vmatprep.subr.mxu0 0.0
    %138 = vmatpush1.msra.mxu0 0.0
    %139 = vmatprep.subr.mxu0 0.0
    %140 = vmatpush1.msra.mxu0 0.0
    %141 = vmatprep.subr.mxu0 0.0
    %142 = vmatpush1.msra.mxu0 0.0
    %143 = vmatprep.subr.mxu0 0.0
    %144 = vmatpush1.msra.mxu0 0.0
    %145 = vmatprep.subr.mxu0 0.0
    %146 = vmatpush1.msra.mxu0 0.0
    %147 = vmatprep.subr.mxu0 0.0
    %v148 = vand.u32 %v106, 4294901760
    %149 = vmatpush1.msra.mxu0 %v148
    %150 = vmatprep.subr.mxu0 0.0
    %v151 = vand.u32 %v105, 4294901760
    %152 = vmatpush1.msra.mxu0 %v151
    %153 = vmatprep.subr.mxu0 0.0
    %154 = vmatpush2.msra.mxu0 0.0
    %155 = vmatprep.subr.mxu0 0.0
    %156 = vmatpush2.msra.mxu0 0.0
    %157 = vmatprep.subr.mxu0 0.0
    %158 = vmatpush2.msra.mxu0 0.0
    %159 = vmatprep.subr.mxu0 0.0
    %160 = vmatpush2.msra.mxu0 0.0
    %161 = vmatprep.subr.mxu0 0.0
    %162 = vmatpush2.msra.mxu0 0.0
    %163 = vmatprep.subr.mxu0 0.0
    %164 = vmatpush2.msra.mxu0 0.0
    %165 = vmatprep.subr.mxu0 0.0
    %166 = vmatpush2.msra.mxu0 0.0
    %167 = vmatprep.subr.mxu0 0.0
    %168 = vmatpush2.msra.mxu0 0.0
    %169 = vmatprep.subr.mxu0 0.0
    %170 = vmatpush2.msra.mxu0 0.0
    %171 = vmatprep.subr.mxu0 0.0
    %172 = vmatpush2.msra.mxu0 0.0
    %173 = vmatprep.subr.mxu0 0.0
    %174 = vmatpush2.msra.mxu0 0.0
    %175 = vmatprep.subr.mxu0 0.0
    %176 = vmatpush2.msra.mxu0 0.0
    %177 = vmatprep.subr.mxu0 0.0
    %178 = vmatpush2.msra.mxu0 0.0
    %179 = vmatprep.subr.mxu0 0.0
    %180 = vmatpush2.msra.mxu0 0.0
    %181 = vmatprep.subr.mxu0 0.0
    %182 = vmatpush2.msra.mxu0 0.0
    %183 = vmatprep.subr.mxu0 0.0
    %184 = vmatpush2.msra.mxu0 0.0
    %185 = vmatprep.mubr.f32.mxu0 0.0
    %v186 = vand.u32 %v108, 4294901760
    %v187 = vsub.f32 %v108, %v186
    %v188 = vand.u32 %v187, 4294901760
    %v189 = vsub.f32 %v187, %v188
    %v190 = vand.u32 %v189, 4294901760
    %191 = vmatmul.mubr.f32.gmra.mxu0 %v190
    %v192 = vpop.f32.mrf.mxu0
    %v193 = vadd.f32 0.0, %v192
    %v194 = vpop.f32.mrf.mxu0
    %195 = vmatprep.mubr.f32.mxu0 0.0
    %v196 = vand.u32 %v111, 4294901760
    %v197 = vsub.f32 %v111, %v196
    %v198 = vand.u32 %v197, 4294901760
    %v199 = vsub.f32 %v197, %v198
    %v200 = vand.u32 %v199, 4294901760
    %201 = vmatmul.mubr.f32.gmra.mxu0 %v200
    %v202 = vpop.f32.mrf.mxu0
    %v203 = vadd.f32 0.0, %v202
    %v204 = vpop.f32.mrf.mxu0
    %205 = vmatprep.mubr.f32.mxu0 0.0
    %v206 = vand.u32 %v114, 4294901760
    %v207 = vsub.f32 %v114, %v206
    %v208 = vand.u32 %v207, 4294901760
    %v209 = vsub.f32 %v207, %v208
    %v210 = vand.u32 %v209, 4294901760
    %211 = vmatmul.mubr.f32.gmra.mxu0 %v210
    %v212 = vpop.f32.mrf.mxu0
    %v213 = vadd.f32 0.0, %v212
    %v214 = vpop.f32.mrf.mxu0
    %215 = vmatprep.mubr.f32.mxu0 0.0
    %v216 = vand.u32 %v117, 4294901760
    %v217 = vsub.f32 %v117, %v216
    %v218 = vand.u32 %v217, 4294901760
    %v219 = vsub.f32 %v217, %v218
    %v220 = vand.u32 %v219, 4294901760
    %221 = vmatmul.mubr.f32.gmra.mxu0 %v220
    %v222 = vpop.f32.mrf.mxu0
    %v223 = vadd.f32 0.0, %v222
    %v224 = vpop.f32.mrf.mxu0
    %225 = vdwg.mxu0
    %226 = vmatprep.subr.mxu0 0.0
    %227 = vmatpush1.msra.mxu0 0.0
    %228 = vmatprep.subr.mxu0 0.0
    %229 = vmatpush1.msra.mxu0 0.0
    %230 = vmatprep.subr.mxu0 0.0
    %231 = vmatpush1.msra.mxu0 0.0
    %232 = vmatprep.subr.mxu0 0.0
    %233 = vmatpush1.msra.mxu0 0.0
    %234 = vmatprep.subr.mxu0 0.0
    %235 = vmatpush1.msra.mxu0 0.0
    %236 = vmatprep.subr.mxu0 0.0
    %237 = vmatpush1.msra.mxu0 0.0
    %238 = vmatprep.subr.mxu0 0.0
    %239 = vmatpush1.msra.mxu0 0.0
    %240 = vmatprep.subr.mxu0 0.0
    %241 = vmatpush1.msra.mxu0 0.0
    %242 = vmatprep.subr.mxu0 0.0
    %243 = vmatpush1.msra.mxu0 0.0
    %244 = vmatprep.subr.mxu0 0.0
    %245 = vmatpush1.msra.mxu0 0.0
    %246 = vmatprep.subr.mxu0 0.0
    %247 = vmatpush1.msra.mxu0 0.0
    %248 = vmatprep.subr.mxu0 0.0
    %249 = vmatpush1.msra.mxu0 0.0
    %250 = vmatprep.subr.mxu0 0.0
    %251 = vmatpush1.msra.mxu0 0.0
    %252 = vmatprep.subr.mxu0 0.0
    %253 = vmatpush1.msra.mxu0 0.0
    %254 = vmatprep.subr.mxu0 0.0
    %v255 = vand.u32 %v106, 4294901760
    %v256 = vsub.f32 %v106, %v255
    %v257 = vand.u32 %v256, 4294901760
    %v258 = vsub.f32 %v256, %v257
    %v259 = vand.u32 %v258, 4294901760
    %260 = vmatpush1.msra.mxu0 %v259
    %261 = vmatprep.subr.mxu0 0.0
    %v262 = vand.u32 %v105, 4294901760
    %v263 = vsub.f32 %v105, %v262
    %v264 = vand.u32 %v263, 4294901760
    %v265 = vsub.f32 %v263, %v264
    %v266 = vand.u32 %v265, 4294901760
    %267 = vmatpush1.msra.mxu0 %v266
    %268 = vmatprep.subr.mxu0 0.0
    %269 = vmatpush2.msra.mxu0 0.0
    %270 = vmatprep.subr.mxu0 0.0
    %271 = vmatpush2.msra.mxu0 0.0
    %272 = vmatprep.subr.mxu0 0.0
    %273 = vmatpush2.msra.mxu0 0.0
    %274 = vmatprep.subr.mxu0 0.0
    %275 = vmatpush2.msra.mxu0 0.0
    %276 = vmatprep.subr.mxu0 0.0
    %277 = vmatpush2.msra.mxu0 0.0
    %278 = vmatprep.subr.mxu0 0.0
    %279 = vmatpush2.msra.mxu0 0.0
    %280 = vmatprep.subr.mxu0 0.0
    %281 = vmatpush2.msra.mxu0 0.0
    %282 = vmatprep.subr.mxu0 0.0
    %283 = vmatpush2.msra.mxu0 0.0
    %284 = vmatprep.subr.mxu0 0.0
    %285 = vmatpush2.msra.mxu0 0.0
    %286 = vmatprep.subr.mxu0 0.0
    %287 = vmatpush2.msra.mxu0 0.0
    %288 = vmatprep.subr.mxu0 0.0
    %289 = vmatpush2.msra.mxu0 0.0
    %290 = vmatprep.subr.mxu0 0.0
    %291 = vmatpush2.msra.mxu0 0.0
    %292 = vmatprep.subr.mxu0 0.0
    %293 = vmatpush2.msra.mxu0 0.0
    %294 = vmatprep.subr.mxu0 0.0
    %295 = vmatpush2.msra.mxu0 0.0
    %296 = vmatprep.subr.mxu0 0.0
    %297 = vmatpush2.msra.mxu0 0.0
    %298 = vmatprep.subr.mxu0 0.0
    %299 = vmatpush2.msra.mxu0 0.0
    %300 = vmatprep.mubr.f32.mxu0 0.0
    %v301 = vand.u32 %v108, 4294901760
    %302 = vmatmul.mubr.f32.gmra.mxu0 %v301
    %v303 = vpop.f32.mrf.mxu0
    %v304 = vadd.f32 %v193, %v303
    %v305 = vpop.f32.mrf.mxu0
    %306 = vmatprep.mubr.f32.mxu0 0.0
    %v307 = vand.u32 %v111, 4294901760
    %308 = vmatmul.mubr.f32.gmra.mxu0 %v307
    %v309 = vpop.f32.mrf.mxu0
    %v310 = vadd.f32 %v203, %v309
    %v311 = vpop.f32.mrf.mxu0
    %312 = vmatprep.mubr.f32.mxu0 0.0
    %v313 = vand.u32 %v114, 4294901760
    %314 = vmatmul.mubr.f32.gmra.mxu0 %v313
    %v315 = vpop.f32.mrf.mxu0
    %v316 = vadd.f32 %v213, %v315
    %v317 = vpop.f32.mrf.mxu0
    %318 = vmatprep.mubr.f32.mxu0 0.0
    %v319 = vand.u32 %v117, 4294901760
    %320 = vmatmul.mubr.f32.gmra.mxu0 %v319
    %v321 = vpop.f32.mrf.mxu0
    %v322 = vadd.f32 %v223, %v321
    %v323 = vpop.f32.mrf.mxu0
    %324 = vdwg.mxu0
    %325 = vmatprep.subr.mxu0 0.0
    %326 = vmatpush1.msra.mxu0 0.0
    %327 = vmatprep.subr.mxu0 0.0
    %328 = vmatpush1.msra.mxu0 0.0
    %329 = vmatprep.subr.mxu0 0.0
    %330 = vmatpush1.msra.mxu0 0.0
    %331 = vmatprep.subr.mxu0 0.0
    %332 = vmatpush1.msra.mxu0 0.0
    %333 = vmatprep.subr.mxu0 0.0
    %334 = vmatpush1.msra.mxu0 0.0
    %335 = vmatprep.subr.mxu0 0.0
    %336 = vmatpush1.msra.mxu0 0.0
    %337 = vmatprep.subr.mxu0 0.0
    %338 = vmatpush1.msra.mxu0 0.0
    %339 = vmatprep.subr.mxu0 0.0
    %340 = vmatpush1.msra.mxu0 0.0
    %341 = vmatprep.subr.mxu0 0.0
    %342 = vmatpush1.msra.mxu0 0.0
    %343 = vmatprep.subr.mxu0 0.0
    %344 = vmatpush1.msra.mxu0 0.0
    %345 = vmatprep.subr.mxu0 0.0
    %346 = vmatpush1.msra.mxu0 0.0
    %347 = vmatprep.subr.mxu0 0.0
    %348 = vmatpush1.msra.mxu0 0.0
    %349 = vmatprep.subr.mxu0 0.0
    %350 = vmatpush1.msra.mxu0 0.0
    %351 = vmatprep.subr.mxu0 0.0
    %352 = vmatpush1.msra.mxu0 0.0
    %353 = vmatprep.subr.mxu0 0.0
    %v354 = vand.u32 %v106, 4294901760
    %v355 = vsub.f32 %v106, %v354
    %356 = vmatpush1.msra.mxu0 %v355
    %357 = vmatprep.subr.mxu0 0.0
    %v358 = vand.u32 %v105, 4294901760
    %v359 = vsub.f32 %v105, %v358
    %360 = vmatpush1.msra.mxu0 %v359
    %361 = vmatprep.subr.mxu0 0.0
    %362 = vmatpush2.msra.mxu0 0.0
    %363 = vmatprep.subr.mxu0 0.0
    %364 = vmatpush2.msra.mxu0 0.0
    %365 = vmatprep.subr.mxu0 0.0
    %366 = vmatpush2.msra.mxu0 0.0
    %367 = vmatprep.subr.mxu0 0.0
    %368 = vmatpush2.msra.mxu0 0.0
    %369 = vmatprep.subr.mxu0 0.0
    %370 = vmatpush2.msra.mxu0 0.0
    %371 = vmatprep.subr.mxu0 0.0
    %372 = vmatpush2.msra.mxu0 0.0
    %373 = vmatprep.subr.mxu0 0.0
    %374 = vmatpush2.msra.mxu0 0.0
    %375 = vmatprep.subr.mxu0 0.0
    %376 = vmatpush2.msra.mxu0 0.0
    %377 = vmatprep.subr.mxu0 0.0
    %378 = vmatpush2.msra.mxu0 0.0
    %379 = vmatprep.subr.mxu0 0.0
    %380 = vmatpush2.msra.mxu0 0.0
    %381 = vmatprep.subr.mxu0 0.0
    %382 = vmatpush2.msra.mxu0 0.0
    %383 = vmatprep.subr.mxu0 0.0
    %384 = vmatpush2.msra.mxu0 0.0
    %385 = vmatprep.subr.mxu0 0.0
    %386 = vmatpush2.msra.mxu0 0.0
    %387 = vmatprep.subr.mxu0 0.0
    %388 = vmatpush2.msra.mxu0 0.0
    %389 = vmatprep.subr.mxu0 0.0
    %390 = vmatpush2.msra.mxu0 0.0
    %391 = vmatprep.subr.mxu0 0.0
    %392 = vmatpush2.msra.mxu0 0.0
    %393 = vmatprep.mubr.f32.mxu0 0.0
    %v394 = vand.u32 %v108, 4294901760
    %v395 = vsub.f32 %v108, %v394
    %396 = vmatmul.mubr.f32.gmra.mxu0 %v395
    %v397 = vpop.f32.mrf.mxu0
    %v398 = vadd.f32 %v304, %v397
    %v399 = vpop.f32.mrf.mxu0
    %400 = vmatprep.mubr.f32.mxu0 0.0
    %v401 = vand.u32 %v111, 4294901760
    %v402 = vsub.f32 %v111, %v401
    %403 = vmatmul.mubr.f32.gmra.mxu0 %v402
    %v404 = vpop.f32.mrf.mxu0
    %v405 = vadd.f32 %v310, %v404
    %v406 = vpop.f32.mrf.mxu0
    %407 = vmatprep.mubr.f32.mxu0 0.0
    %v408 = vand.u32 %v114, 4294901760
    %v409 = vsub.f32 %v114, %v408
    %410 = vmatmul.mubr.f32.gmra.mxu0 %v409
    %v411 = vpop.f32.mrf.mxu0
    %v412 = vadd.f32 %v316, %v411
    %v413 = vpop.f32.mrf.mxu0
    %414 = vmatprep.mubr.f32.mxu0 0.0
    %v415 = vand.u32 %v117, 4294901760
    %v416 = vsub.f32 %v117, %v415
    %417 = vmatmul.mubr.f32.gmra.mxu0 %v416
    %v418 = vpop.f32.mrf.mxu0
    %v419 = vadd.f32 %v322, %v418
    %v420 = vpop.f32.mrf.mxu0
    %421 = vdwg.mxu0
    %422 = vmatprep.subr.mxu0 0.0
    %423 = vmatpush1.msra.mxu0 0.0
    %424 = vmatprep.subr.mxu0 0.0
    %425 = vmatpush1.msra.mxu0 0.0
    %426 = vmatprep.subr.mxu0 0.0
    %427 = vmatpush1.msra.mxu0 0.0
    %428 = vmatprep.subr.mxu0 0.0
    %429 = vmatpush1.msra.mxu0 0.0
    %430 = vmatprep.subr.mxu0 0.0
    %431 = vmatpush1.msra.mxu0 0.0
    %432 = vmatprep.subr.mxu0 0.0
    %433 = vmatpush1.msra.mxu0 0.0
    %434 = vmatprep.subr.mxu0 0.0
    %435 = vmatpush1.msra.mxu0 0.0
    %436 = vmatprep.subr.mxu0 0.0
    %437 = vmatpush1.msra.mxu0 0.0
    %438 = vmatprep.subr.mxu0 0.0
    %439 = vmatpush1.msra.mxu0 0.0
    %440 = vmatprep.subr.mxu0 0.0
    %441 = vmatpush1.msra.mxu0 0.0
    %442 = vmatprep.subr.mxu0 0.0
    %443 = vmatpush1.msra.mxu0 0.0
    %444 = vmatprep.subr.mxu0 0.0
    %445 = vmatpush1.msra.mxu0 0.0
    %446 = vmatprep.subr.mxu0 0.0
    %447 = vmatpush1.msra.mxu0 0.0
    %448 = vmatprep.subr.mxu0 0.0
    %449 = vmatpush1.msra.mxu0 0.0
    %450 = vmatprep.subr.mxu0 0.0
    %v451 = vand.u32 %v106, 4294901760
    %452 = vmatpush1.msra.mxu0 %v451
    %453 = vmatprep.subr.mxu0 0.0
    %v454 = vand.u32 %v105, 4294901760
    %455 = vmatpush1.msra.mxu0 %v454
    %456 = vmatprep.subr.mxu0 0.0
    %457 = vmatpush2.msra.mxu0 0.0
    %458 = vmatprep.subr.mxu0 0.0
    %459 = vmatpush2.msra.mxu0 0.0
    %460 = vmatprep.subr.mxu0 0.0
    %461 = vmatpush2.msra.mxu0 0.0
    %462 = vmatprep.subr.mxu0 0.0
    %463 = vmatpush2.msra.mxu0 0.0
    %464 = vmatprep.subr.mxu0 0.0
    %465 = vmatpush2.msra.mxu0 0.0
    %466 = vmatprep.subr.mxu0 0.0
    %467 = vmatpush2.msra.mxu0 0.0
    %468 = vmatprep.subr.mxu0 0.0
    %469 = vmatpush2.msra.mxu0 0.0
    %470 = vmatprep.subr.mxu0 0.0
    %471 = vmatpush2.msra.mxu0 0.0
    %472 = vmatprep.subr.mxu0 0.0
    %473 = vmatpush2.msra.mxu0 0.0
    %474 = vmatprep.subr.mxu0 0.0
    %475 = vmatpush2.msra.mxu0 0.0
    %476 = vmatprep.subr.mxu0 0.0
    %477 = vmatpush2.msra.mxu0 0.0
    %478 = vmatprep.subr.mxu0 0.0
    %479 = vmatpush2.msra.mxu0 0.0
    %480 = vmatprep.subr.mxu0 0.0
    %481 = vmatpush2.msra.mxu0 0.0
    %482 = vmatprep.subr.mxu0 0.0
    %483 = vmatpush2.msra.mxu0 0.0
    %484 = vmatprep.subr.mxu0 0.0
    %485 = vmatpush2.msra.mxu0 0.0
    %486 = vmatprep.subr.mxu0 0.0
    %487 = vmatpush2.msra.mxu0 0.0
    %488 = vmatprep.mubr.f32.mxu0 0.0
    %v489 = vand.u32 %v108, 4294901760
    %v490 = vsub.f32 %v108, %v489
    %v491 = vand.u32 %v490, 4294901760
    %492 = vmatmul.mubr.f32.gmra.mxu0 %v491
    %v493 = vpop.f32.mrf.mxu0
    %v494 = vadd.f32 %v398, %v493
    %v495 = vpop.f32.mrf.mxu0
    %496 = vmatprep.mubr.f32.mxu0 0.0
    %v497 = vand.u32 %v111, 4294901760
    %v498 = vsub.f32 %v111, %v497
    %v499 = vand.u32 %v498, 4294901760
    %500 = vmatmul.mubr.f32.gmra.mxu0 %v499
    %v501 = vpop.f32.mrf.mxu0
    %v502 = vadd.f32 %v405, %v501
    %v503 = vpop.f32.mrf.mxu0
    %504 = vmatprep.mubr.f32.mxu0 0.0
    %v505 = vand.u32 %v114, 4294901760
    %v506 = vsub.f32 %v114, %v505
    %v507 = vand.u32 %v506, 4294901760
    %508 = vmatmul.mubr.f32.gmra.mxu0 %v507
    %v509 = vpop.f32.mrf.mxu0
    %v510 = vadd.f32 %v412, %v509
    %v511 = vpop.f32.mrf.mxu0
    %512 = vmatprep.mubr.f32.mxu0 0.0
    %v513 = vand.u32 %v117, 4294901760
    %v514 = vsub.f32 %v117, %v513
    %v515 = vand.u32 %v514, 4294901760
    %516 = vmatmul.mubr.f32.gmra.mxu0 %v515
    %v517 = vpop.f32.mrf.mxu0
    %v518 = vadd.f32 %v419, %v517
    %v519 = vpop.f32.mrf.mxu0
    %520 = vdwg.mxu0
    %521 = vmatprep.subr.mxu0 0.0
    %522 = vmatpush1.msra.mxu0 0.0
    %523 = vmatprep.subr.mxu0 0.0
    %524 = vmatpush1.msra.mxu0 0.0
    %525 = vmatprep.subr.mxu0 0.0
    %526 = vmatpush1.msra.mxu0 0.0
    %527 = vmatprep.subr.mxu0 0.0
    %528 = vmatpush1.msra.mxu0 0.0
    %529 = vmatprep.subr.mxu0 0.0
    %530 = vmatpush1.msra.mxu0 0.0
    %531 = vmatprep.subr.mxu0 0.0
    %532 = vmatpush1.msra.mxu0 0.0
    %533 = vmatprep.subr.mxu0 0.0
    %534 = vmatpush1.msra.mxu0 0.0
    %535 = vmatprep.subr.mxu0 0.0
    %536 = vmatpush1.msra.mxu0 0.0
    %537 = vmatprep.subr.mxu0 0.0
    %538 = vmatpush1.msra.mxu0 0.0
    %539 = vmatprep.subr.mxu0 0.0
    %540 = vmatpush1.msra.mxu0 0.0
    %541 = vmatprep.subr.mxu0 0.0
    %542 = vmatpush1.msra.mxu0 0.0
    %543 = vmatprep.subr.mxu0 0.0
    %544 = vmatpush1.msra.mxu0 0.0
    %545 = vmatprep.subr.mxu0 0.0
    %546 = vmatpush1.msra.mxu0 0.0
    %547 = vmatprep.subr.mxu0 0.0
    %548 = vmatpush1.msra.mxu0 0.0
    %549 = vmatprep.subr.mxu0 0.0
    %v550 = vand.u32 %v106, 4294901760
    %v551 = vsub.f32 %v106, %v550
    %v552 = vand.u32 %v551, 4294901760
    %553 = vmatpush1.msra.mxu0 %v552
    %554 = vmatprep.subr.mxu0 0.0
    %v555 = vand.u32 %v105, 4294901760
    %v556 = vsub.f32 %v105, %v555
    %v557 = vand.u32 %v556, 4294901760
    %558 = vmatpush1.msra.mxu0 %v557
    %559 = vmatprep.subr.mxu0 0.0
    %560 = vmatpush2.msra.mxu0 0.0
    %561 = vmatprep.subr.mxu0 0.0
    %562 = vmatpush2.msra.mxu0 0.0
    %563 = vmatprep.subr.mxu0 0.0
    %564 = vmatpush2.msra.mxu0 0.0
    %565 = vmatprep.subr.mxu0 0.0
    %566 = vmatpush2.msra.mxu0 0.0
    %567 = vmatprep.subr.mxu0 0.0
    %568 = vmatpush2.msra.mxu0 0.0
    %569 = vmatprep.subr.mxu0 0.0
    %570 = vmatpush2.msra.mxu0 0.0
    %571 = vmatprep.subr.mxu0 0.0
    %572 = vmatpush2.msra.mxu0 0.0
    %573 = vmatprep.subr.mxu0 0.0
    %574 = vmatpush2.msra.mxu0 0.0
    %575 = vmatprep.subr.mxu0 0.0
    %576 = vmatpush2.msra.mxu0 0.0
    %577 = vmatprep.subr.mxu0 0.0
    %578 = vmatpush2.msra.mxu0 0.0
    %579 = vmatprep.subr.mxu0 0.0
    %580 = vmatpush2.msra.mxu0 0.0
    %581 = vmatprep.subr.mxu0 0.0
    %582 = vmatpush2.msra.mxu0 0.0
    %583 = vmatprep.subr.mxu0 0.0
    %584 = vmatpush2.msra.mxu0 0.0
    %585 = vmatprep.subr.mxu0 0.0
    %586 = vmatpush2.msra.mxu0 0.0
    %587 = vmatprep.subr.mxu0 0.0
    %588 = vmatpush2.msra.mxu0 0.0
    %589 = vmatprep.subr.mxu0 0.0
    %590 = vmatpush2.msra.mxu0 0.0
    %591 = vmatprep.mubr.f32.mxu0 0.0
    %v592 = vand.u32 %v108, 4294901760
    %593 = vmatmul.mubr.f32.gmra.mxu0 %v592
    %v594 = vpop.f32.mrf.mxu0
    %v595 = vadd.f32 %v494, %v594
    %v596 = vpop.f32.mrf.mxu0
    %597 = vmatprep.mubr.f32.mxu0 0.0
    %v598 = vand.u32 %v111, 4294901760
    %599 = vmatmul.mubr.f32.gmra.mxu0 %v598
    %v600 = vpop.f32.mrf.mxu0
    %v601 = vadd.f32 %v502, %v600
    %v602 = vpop.f32.mrf.mxu0
    %603 = vmatprep.mubr.f32.mxu0 0.0
    %v604 = vand.u32 %v114, 4294901760
    %605 = vmatmul.mubr.f32.gmra.mxu0 %v604
    %v606 = vpop.f32.mrf.mxu0
    %v607 = vadd.f32 %v510, %v606
    %v608 = vpop.f32.mrf.mxu0
    %609 = vmatprep.mubr.f32.mxu0 0.0
    %v610 = vand.u32 %v117, 4294901760
    %611 = vmatmul.mubr.f32.gmra.mxu0 %v610
    %v612 = vpop.f32.mrf.mxu0
    %v613 = vadd.f32 %v518, %v612
    %v614 = vpop.f32.mrf.mxu0
    %615 = vdwg.mxu0
    %616 = vmatprep.subr.mxu0 0.0
    %617 = vmatpush1.msra.mxu0 0.0
    %618 = vmatprep.subr.mxu0 0.0
    %619 = vmatpush1.msra.mxu0 0.0
    %620 = vmatprep.subr.mxu0 0.0
    %621 = vmatpush1.msra.mxu0 0.0
    %622 = vmatprep.subr.mxu0 0.0
    %623 = vmatpush1.msra.mxu0 0.0
    %624 = vmatprep.subr.mxu0 0.0
    %625 = vmatpush1.msra.mxu0 0.0
    %626 = vmatprep.subr.mxu0 0.0
    %627 = vmatpush1.msra.mxu0 0.0
    %628 = vmatprep.subr.mxu0 0.0
    %629 = vmatpush1.msra.mxu0 0.0
    %630 = vmatprep.subr.mxu0 0.0
    %631 = vmatpush1.msra.mxu0 0.0
    %632 = vmatprep.subr.mxu0 0.0
    %633 = vmatpush1.msra.mxu0 0.0
    %634 = vmatprep.subr.mxu0 0.0
    %635 = vmatpush1.msra.mxu0 0.0
    %636 = vmatprep.subr.mxu0 0.0
    %637 = vmatpush1.msra.mxu0 0.0
    %638 = vmatprep.subr.mxu0 0.0
    %639 = vmatpush1.msra.mxu0 0.0
    %640 = vmatprep.subr.mxu0 0.0
    %641 = vmatpush1.msra.mxu0 0.0
    %642 = vmatprep.subr.mxu0 0.0
    %643 = vmatpush1.msra.mxu0 0.0
    %644 = vmatprep.subr.mxu0 0.0
    %v645 = vand.u32 %v106, 4294901760
    %646 = vmatpush1.msra.mxu0 %v645
    %647 = vmatprep.subr.mxu0 0.0
    %v648 = vand.u32 %v105, 4294901760
    %649 = vmatpush1.msra.mxu0 %v648
    %650 = vmatprep.subr.mxu0 0.0
    %651 = vmatpush2.msra.mxu0 0.0
    %652 = vmatprep.subr.mxu0 0.0
    %653 = vmatpush2.msra.mxu0 0.0
    %654 = vmatprep.subr.mxu0 0.0
    %655 = vmatpush2.msra.mxu0 0.0
    %656 = vmatprep.subr.mxu0 0.0
    %657 = vmatpush2.msra.mxu0 0.0
    %658 = vmatprep.subr.mxu0 0.0
    %659 = vmatpush2.msra.mxu0 0.0
    %660 = vmatprep.subr.mxu0 0.0
    %661 = vmatpush2.msra.mxu0 0.0
    %662 = vmatprep.subr.mxu0 0.0
    %663 = vmatpush2.msra.mxu0 0.0
    %664 = vmatprep.subr.mxu0 0.0
    %665 = vmatpush2.msra.mxu0 0.0
    %666 = vmatprep.subr.mxu0 0.0
    %667 = vmatpush2.msra.mxu0 0.0
    %668 = vmatprep.subr.mxu0 0.0
    %669 = vmatpush2.msra.mxu0 0.0
    %670 = vmatprep.subr.mxu0 0.0
    %671 = vmatpush2.msra.mxu0 0.0
    %672 = vmatprep.subr.mxu0 0.0
    %673 = vmatpush2.msra.mxu0 0.0
    %674 = vmatprep.subr.mxu0 0.0
    %675 = vmatpush2.msra.mxu0 0.0
    %676 = vmatprep.subr.mxu0 0.0
    %677 = vmatpush2.msra.mxu0 0.0
    %678 = vmatprep.subr.mxu0 0.0
    %679 = vmatpush2.msra.mxu0 0.0
    %680 = vmatprep.subr.mxu0 0.0
    %681 = vmatpush2.msra.mxu0 0.0
    %682 = vmatprep.mubr.f32.mxu0 0.0
    %v683 = vand.u32 %v108, 4294901760
    %684 = vmatmul.mubr.f32.gmra.mxu0 %v683
    %v685 = vpop.f32.mrf.mxu0
    %v686 = vadd.f32 %v595, %v685
    %v687 = vpop.f32.mrf.mxu0
    %688 = vmatprep.mubr.f32.mxu0 0.0
    %v689 = vand.u32 %v111, 4294901760
    %690 = vmatmul.mubr.f32.gmra.mxu0 %v689
    %v691 = vpop.f32.mrf.mxu0
    %v692 = vadd.f32 %v601, %v691
    %v693 = vpop.f32.mrf.mxu0
    %694 = vmatprep.mubr.f32.mxu0 0.0
    %v695 = vand.u32 %v114, 4294901760
    %696 = vmatmul.mubr.f32.gmra.mxu0 %v695
    %v697 = vpop.f32.mrf.mxu0
    %v698 = vadd.f32 %v607, %v697
    %v699 = vpop.f32.mrf.mxu0
    %700 = vmatprep.mubr.f32.mxu0 0.0
    %v701 = vand.u32 %v117, 4294901760
    %702 = vmatmul.mubr.f32.gmra.mxu0 %v701
    %v703 = vpop.f32.mrf.mxu0
    %v704 = vadd.f32 %v613, %v703
    %v705 = vpop.f32.mrf.mxu0
    %706 = vdwg.mxu0
    %v708 = vsel %vm89, %v94, 0
    %v711 = vsel %vm89, %v95, 0
    %v714 = vsel %vm89, %v96, 0
    %v717 = vsel %vm89, %v97, 0
    %719 = vmatprep.subr.mxu0 0.0
    %720 = vmatpush1.msra.mxu0 0.0
    %721 = vmatprep.subr.mxu0 0.0
    %722 = vmatpush1.msra.mxu0 0.0
    %723 = vmatprep.subr.mxu0 0.0
    %724 = vmatpush1.msra.mxu0 0.0
    %725 = vmatprep.subr.mxu0 0.0
    %726 = vmatpush1.msra.mxu0 0.0
    %727 = vmatprep.subr.mxu0 0.0
    %728 = vmatpush1.msra.mxu0 0.0
    %729 = vmatprep.subr.mxu0 0.0
    %730 = vmatpush1.msra.mxu0 0.0
    %731 = vmatprep.subr.mxu0 0.0
    %732 = vmatpush1.msra.mxu0 0.0
    %733 = vmatprep.subr.mxu0 0.0
    %734 = vmatpush1.msra.mxu0 0.0
    %735 = vmatprep.subr.mxu0 0.0
    %736 = vmatpush1.msra.mxu0 0.0
    %737 = vmatprep.subr.mxu0 0.0
    %738 = vmatpush1.msra.mxu0 0.0
    %739 = vmatprep.subr.mxu0 0.0
    %740 = vmatpush1.msra.mxu0 0.0
    %741 = vmatprep.subr.mxu0 0.0
    %742 = vmatpush1.msra.mxu0 0.0
    %743 = vmatprep.subr.mxu0 0.0
    %744 = vmatpush1.msra.mxu0 0.0
    %745 = vmatprep.subr.mxu0 0.0
    %746 = vmatpush1.msra.mxu0 0.0
    %747 = vmatprep.subr.mxu0 0.0
    %v748 = vand.u32 %v99, 4294901760
    %749 = vmatpush1.msra.mxu0 %v748
    %750 = vmatprep.subr.mxu0 0.0
    %v751 = vand.u32 %v98, 4294901760
    %752 = vmatpush1.msra.mxu0 %v751
    %753 = vmatprep.subr.mxu0 0.0
    %754 = vmatpush2.msra.mxu0 0.0
    %755 = vmatprep.subr.mxu0 0.0
    %756 = vmatpush2.msra.mxu0 0.0
    %757 = vmatprep.subr.mxu0 0.0
    %758 = vmatpush2.msra.mxu0 0.0
    %759 = vmatprep.subr.mxu0 0.0
    %760 = vmatpush2.msra.mxu0 0.0
    %761 = vmatprep.subr.mxu0 0.0
    %762 = vmatpush2.msra.mxu0 0.0
    %763 = vmatprep.subr.mxu0 0.0
    %764 = vmatpush2.msra.mxu0 0.0
    %765 = vmatprep.subr.mxu0 0.0
    %766 = vmatpush2.msra.mxu0 0.0
    %767 = vmatprep.subr.mxu0 0.0
    %768 = vmatpush2.msra.mxu0 0.0
    %769 = vmatprep.subr.mxu0 0.0
    %770 = vmatpush2.msra.mxu0 0.0
    %771 = vmatprep.subr.mxu0 0.0
    %772 = vmatpush2.msra.mxu0 0.0
    %773 = vmatprep.subr.mxu0 0.0
    %774 = vmatpush2.msra.mxu0 0.0
    %775 = vmatprep.subr.mxu0 0.0
    %776 = vmatpush2.msra.mxu0 0.0
    %777 = vmatprep.subr.mxu0 0.0
    %778 = vmatpush2.msra.mxu0 0.0
    %779 = vmatprep.subr.mxu0 0.0
    %780 = vmatpush2.msra.mxu0 0.0
    %781 = vmatprep.subr.mxu0 0.0
    %782 = vmatpush2.msra.mxu0 0.0
    %783 = vmatprep.subr.mxu0 0.0
    %784 = vmatpush2.msra.mxu0 0.0
    %785 = vmatprep.mubr.f32.mxu0 0.0
    %v786 = vand.u32 %v708, 4294901760
    %v787 = vsub.f32 %v708, %v786
    %v788 = vand.u32 %v787, 4294901760
    %v789 = vsub.f32 %v787, %v788
    %v790 = vand.u32 %v789, 4294901760
    %791 = vmatmul.mubr.f32.gmra.mxu0 %v790
    %v792 = vpop.f32.mrf.mxu0
    %v793 = vadd.f32 %v686, %v792
    %v794 = vpop.f32.mrf.mxu0
    %795 = vmatprep.mubr.f32.mxu0 0.0
    %v796 = vand.u32 %v711, 4294901760
    %v797 = vsub.f32 %v711, %v796
    %v798 = vand.u32 %v797, 4294901760
    %v799 = vsub.f32 %v797, %v798
    %v800 = vand.u32 %v799, 4294901760
    %801 = vmatmul.mubr.f32.gmra.mxu0 %v800
    %v802 = vpop.f32.mrf.mxu0
    %v803 = vadd.f32 %v692, %v802
    %v804 = vpop.f32.mrf.mxu0
    %805 = vmatprep.mubr.f32.mxu0 0.0
    %v806 = vand.u32 %v714, 4294901760
    %v807 = vsub.f32 %v714, %v806
    %v808 = vand.u32 %v807, 4294901760
    %v809 = vsub.f32 %v807, %v808
    %v810 = vand.u32 %v809, 4294901760
    %811 = vmatmul.mubr.f32.gmra.mxu0 %v810
    %v812 = vpop.f32.mrf.mxu0
    %v813 = vadd.f32 %v698, %v812
    %v814 = vpop.f32.mrf.mxu0
    %815 = vmatprep.mubr.f32.mxu0 0.0
    %v816 = vand.u32 %v717, 4294901760
    %v817 = vsub.f32 %v717, %v816
    %v818 = vand.u32 %v817, 4294901760
    %v819 = vsub.f32 %v817, %v818
    %v820 = vand.u32 %v819, 4294901760
    %821 = vmatmul.mubr.f32.gmra.mxu0 %v820
    %v822 = vpop.f32.mrf.mxu0
    %v823 = vadd.f32 %v704, %v822
    %v824 = vpop.f32.mrf.mxu0
    %825 = vdwg.mxu0
    %826 = vmatprep.subr.mxu0 0.0
    %827 = vmatpush1.msra.mxu0 0.0
    %828 = vmatprep.subr.mxu0 0.0
    %829 = vmatpush1.msra.mxu0 0.0
    %830 = vmatprep.subr.mxu0 0.0
    %831 = vmatpush1.msra.mxu0 0.0
    %832 = vmatprep.subr.mxu0 0.0
    %833 = vmatpush1.msra.mxu0 0.0
    %834 = vmatprep.subr.mxu0 0.0
    %835 = vmatpush1.msra.mxu0 0.0
    %836 = vmatprep.subr.mxu0 0.0
    %837 = vmatpush1.msra.mxu0 0.0
    %838 = vmatprep.subr.mxu0 0.0
    %839 = vmatpush1.msra.mxu0 0.0
    %840 = vmatprep.subr.mxu0 0.0
    %841 = vmatpush1.msra.mxu0 0.0
    %842 = vmatprep.subr.mxu0 0.0
    %843 = vmatpush1.msra.mxu0 0.0
    %844 = vmatprep.subr.mxu0 0.0
    %845 = vmatpush1.msra.mxu0 0.0
    %846 = vmatprep.subr.mxu0 0.0
    %847 = vmatpush1.msra.mxu0 0.0
    %848 = vmatprep.subr.mxu0 0.0
    %849 = vmatpush1.msra.mxu0 0.0
    %850 = vmatprep.subr.mxu0 0.0
    %851 = vmatpush1.msra.mxu0 0.0
    %852 = vmatprep.subr.mxu0 0.0
    %853 = vmatpush1.msra.mxu0 0.0
    %854 = vmatprep.subr.mxu0 0.0
    %v855 = vand.u32 %v99, 4294901760
    %v856 = vsub.f32 %v99, %v855
    %v857 = vand.u32 %v856, 4294901760
    %v858 = vsub.f32 %v856, %v857
    %v859 = vand.u32 %v858, 4294901760
    %860 = vmatpush1.msra.mxu0 %v859
    %861 = vmatprep.subr.mxu0 0.0
    %v862 = vand.u32 %v98, 4294901760
    %v863 = vsub.f32 %v98, %v862
    %v864 = vand.u32 %v863, 4294901760
    %v865 = vsub.f32 %v863, %v864
    %v866 = vand.u32 %v865, 4294901760
    %867 = vmatpush1.msra.mxu0 %v866
    %868 = vmatprep.subr.mxu0 0.0
    %869 = vmatpush2.msra.mxu0 0.0
    %870 = vmatprep.subr.mxu0 0.0
    %871 = vmatpush2.msra.mxu0 0.0
    %872 = vmatprep.subr.mxu0 0.0
    %873 = vmatpush2.msra.mxu0 0.0
    %874 = vmatprep.subr.mxu0 0.0
    %875 = vmatpush2.msra.mxu0 0.0
    %876 = vmatprep.subr.mxu0 0.0
    %877 = vmatpush2.msra.mxu0 0.0
    %878 = vmatprep.subr.mxu0 0.0
    %879 = vmatpush2.msra.mxu0 0.0
    %880 = vmatprep.subr.mxu0 0.0
    %881 = vmatpush2.msra.mxu0 0.0
    %882 = vmatprep.subr.mxu0 0.0
    %883 = vmatpush2.msra.mxu0 0.0
    %884 = vmatprep.subr.mxu0 0.0
    %885 = vmatpush2.msra.mxu0 0.0
    %886 = vmatprep.subr.mxu0 0.0
    %887 = vmatpush2.msra.mxu0 0.0
    %888 = vmatprep.subr.mxu0 0.0
    %889 = vmatpush2.msra.mxu0 0.0
    %890 = vmatprep.subr.mxu0 0.0
    %891 = vmatpush2.msra.mxu0 0.0
    %892 = vmatprep.subr.mxu0 0.0
    %893 = vmatpush2.msra.mxu0 0.0
    %894 = vmatprep.subr.mxu0 0.0
    %895 = vmatpush2.msra.mxu0 0.0
    %896 = vmatprep.subr.mxu0 0.0
    %897 = vmatpush2.msra.mxu0 0.0
    %898 = vmatprep.subr.mxu0 0.0
    %899 = vmatpush2.msra.mxu0 0.0
    %900 = vmatprep.mubr.f32.mxu0 0.0
    %v901 = vand.u32 %v708, 4294901760
    %902 = vmatmul.mubr.f32.gmra.mxu0 %v901
    %v903 = vpop.f32.mrf.mxu0
    %v904 = vadd.f32 %v793, %v903
    %v905 = vpop.f32.mrf.mxu0
    %906 = vmatprep.mubr.f32.mxu0 0.0
    %v907 = vand.u32 %v711, 4294901760
    %908 = vmatmul.mubr.f32.gmra.mxu0 %v907
    %v909 = vpop.f32.mrf.mxu0
    %v910 = vadd.f32 %v803, %v909
    %v911 = vpop.f32.mrf.mxu0
    %912 = vmatprep.mubr.f32.mxu0 0.0
    %v913 = vand.u32 %v714, 4294901760
    %914 = vmatmul.mubr.f32.gmra.mxu0 %v913
    %v915 = vpop.f32.mrf.mxu0
    %v916 = vadd.f32 %v813, %v915
    %v917 = vpop.f32.mrf.mxu0
    %918 = vmatprep.mubr.f32.mxu0 0.0
    %v919 = vand.u32 %v717, 4294901760
    %920 = vmatmul.mubr.f32.gmra.mxu0 %v919
    %v921 = vpop.f32.mrf.mxu0
    %v922 = vadd.f32 %v823, %v921
    %v923 = vpop.f32.mrf.mxu0
    %924 = vdwg.mxu0
    %925 = vmatprep.subr.mxu0 0.0
    %926 = vmatpush1.msra.mxu0 0.0
    %927 = vmatprep.subr.mxu0 0.0
    %928 = vmatpush1.msra.mxu0 0.0
    %929 = vmatprep.subr.mxu0 0.0
    %930 = vmatpush1.msra.mxu0 0.0
    %931 = vmatprep.subr.mxu0 0.0
    %932 = vmatpush1.msra.mxu0 0.0
    %933 = vmatprep.subr.mxu0 0.0
    %934 = vmatpush1.msra.mxu0 0.0
    %935 = vmatprep.subr.mxu0 0.0
    %936 = vmatpush1.msra.mxu0 0.0
    %937 = vmatprep.subr.mxu0 0.0
    %938 = vmatpush1.msra.mxu0 0.0
    %939 = vmatprep.subr.mxu0 0.0
    %940 = vmatpush1.msra.mxu0 0.0
    %941 = vmatprep.subr.mxu0 0.0
    %942 = vmatpush1.msra.mxu0 0.0
    %943 = vmatprep.subr.mxu0 0.0
    %944 = vmatpush1.msra.mxu0 0.0
    %945 = vmatprep.subr.mxu0 0.0
    %946 = vmatpush1.msra.mxu0 0.0
    %947 = vmatprep.subr.mxu0 0.0
    %948 = vmatpush1.msra.mxu0 0.0
    %949 = vmatprep.subr.mxu0 0.0
    %950 = vmatpush1.msra.mxu0 0.0
    %951 = vmatprep.subr.mxu0 0.0
    %952 = vmatpush1.msra.mxu0 0.0
    %953 = vmatprep.subr.mxu0 0.0
    %v954 = vand.u32 %v99, 4294901760
    %v955 = vsub.f32 %v99, %v954
    %956 = vmatpush1.msra.mxu0 %v955
    %957 = vmatprep.subr.mxu0 0.0
    %v958 = vand.u32 %v98, 4294901760
    %v959 = vsub.f32 %v98, %v958
    %960 = vmatpush1.msra.mxu0 %v959
    %961 = vmatprep.subr.mxu0 0.0
    %962 = vmatpush2.msra.mxu0 0.0
    %963 = vmatprep.subr.mxu0 0.0
    %964 = vmatpush2.msra.mxu0 0.0
    %965 = vmatprep.subr.mxu0 0.0
    %966 = vmatpush2.msra.mxu0 0.0
    %967 = vmatprep.subr.mxu0 0.0
    %968 = vmatpush2.msra.mxu0 0.0
    %969 = vmatprep.subr.mxu0 0.0
    %970 = vmatpush2.msra.mxu0 0.0
    %971 = vmatprep.subr.mxu0 0.0
    %972 = vmatpush2.msra.mxu0 0.0
    %973 = vmatprep.subr.mxu0 0.0
    %974 = vmatpush2.msra.mxu0 0.0
    %975 = vmatprep.subr.mxu0 0.0
    %976 = vmatpush2.msra.mxu0 0.0
    %977 = vmatprep.subr.mxu0 0.0
    %978 = vmatpush2.msra.mxu0 0.0
    %979 = vmatprep.subr.mxu0 0.0
    %980 = vmatpush2.msra.mxu0 0.0
    %981 = vmatprep.subr.mxu0 0.0
    %982 = vmatpush2.msra.mxu0 0.0
    %983 = vmatprep.subr.mxu0 0.0
    %984 = vmatpush2.msra.mxu0 0.0
    %985 = vmatprep.subr.mxu0 0.0
    %986 = vmatpush2.msra.mxu0 0.0
    %987 = vmatprep.subr.mxu0 0.0
    %988 = vmatpush2.msra.mxu0 0.0
    %989 = vmatprep.subr.mxu0 0.0
    %990 = vmatpush2.msra.mxu0 0.0
    %991 = vmatprep.subr.mxu0 0.0
    %992 = vmatpush2.msra.mxu0 0.0
    %993 = vmatprep.mubr.f32.mxu0 0.0
    %v994 = vand.u32 %v708, 4294901760
    %v995 = vsub.f32 %v708, %v994
    %996 = vmatmul.mubr.f32.gmra.mxu0 %v995
    %v997 = vpop.f32.mrf.mxu0
    %v998 = vadd.f32 %v904, %v997
    %v999 = vpop.f32.mrf.mxu0
    %1000 = vmatprep.mubr.f32.mxu0 0.0
    %v1001 = vand.u32 %v711, 4294901760
    %v1002 = vsub.f32 %v711, %v1001
    %1003 = vmatmul.mubr.f32.gmra.mxu0 %v1002
    %v1004 = vpop.f32.mrf.mxu0
    %v1005 = vadd.f32 %v910, %v1004
    %v1006 = vpop.f32.mrf.mxu0
    %1007 = vmatprep.mubr.f32.mxu0 0.0
    %v1008 = vand.u32 %v714, 4294901760
    %v1009 = vsub.f32 %v714, %v1008
    %1010 = vmatmul.mubr.f32.gmra.mxu0 %v1009
    %v1011 = vpop.f32.mrf.mxu0
    %v1012 = vadd.f32 %v916, %v1011
    %v1013 = vpop.f32.mrf.mxu0
    %1014 = vmatprep.mubr.f32.mxu0 0.0
    %v1015 = vand.u32 %v717, 4294901760
    %v1016 = vsub.f32 %v717, %v1015
    %1017 = vmatmul.mubr.f32.gmra.mxu0 %v1016
    %v1018 = vpop.f32.mrf.mxu0
    %v1019 = vadd.f32 %v922, %v1018
    %v1020 = vpop.f32.mrf.mxu0
    %1021 = vdwg.mxu0
    %1022 = vmatprep.subr.mxu0 0.0
    %1023 = vmatpush1.msra.mxu0 0.0
    %1024 = vmatprep.subr.mxu0 0.0
    %1025 = vmatpush1.msra.mxu0 0.0
    %1026 = vmatprep.subr.mxu0 0.0
    %1027 = vmatpush1.msra.mxu0 0.0
    %1028 = vmatprep.subr.mxu0 0.0
    %1029 = vmatpush1.msra.mxu0 0.0
    %1030 = vmatprep.subr.mxu0 0.0
    %1031 = vmatpush1.msra.mxu0 0.0
    %1032 = vmatprep.subr.mxu0 0.0
    %1033 = vmatpush1.msra.mxu0 0.0
    %1034 = vmatprep.subr.mxu0 0.0
    %1035 = vmatpush1.msra.mxu0 0.0
    %1036 = vmatprep.subr.mxu0 0.0
    %1037 = vmatpush1.msra.mxu0 0.0
    %1038 = vmatprep.subr.mxu0 0.0
    %1039 = vmatpush1.msra.mxu0 0.0
    %1040 = vmatprep.subr.mxu0 0.0
    %1041 = vmatpush1.msra.mxu0 0.0
    %1042 = vmatprep.subr.mxu0 0.0
    %1043 = vmatpush1.msra.mxu0 0.0
    %1044 = vmatprep.subr.mxu0 0.0
    %1045 = vmatpush1.msra.mxu0 0.0
    %1046 = vmatprep.subr.mxu0 0.0
    %1047 = vmatpush1.msra.mxu0 0.0
    %1048 = vmatprep.subr.mxu0 0.0
    %1049 = vmatpush1.msra.mxu0 0.0
    %1050 = vmatprep.subr.mxu0 0.0
    %v1051 = vand.u32 %v99, 4294901760
    %1052 = vmatpush1.msra.mxu0 %v1051
    %1053 = vmatprep.subr.mxu0 0.0
    %v1054 = vand.u32 %v98, 4294901760
    %1055 = vmatpush1.msra.mxu0 %v1054
    %1056 = vmatprep.subr.mxu0 0.0
    %1057 = vmatpush2.msra.mxu0 0.0
    %1058 = vmatprep.subr.mxu0 0.0
    %1059 = vmatpush2.msra.mxu0 0.0
    %1060 = vmatprep.subr.mxu0 0.0
    %1061 = vmatpush2.msra.mxu0 0.0
    %1062 = vmatprep.subr.mxu0 0.0
    %1063 = vmatpush2.msra.mxu0 0.0
    %1064 = vmatprep.subr.mxu0 0.0
    %1065 = vmatpush2.msra.mxu0 0.0
    %1066 = vmatprep.subr.mxu0 0.0
    %1067 = vmatpush2.msra.mxu0 0.0
    %1068 = vmatprep.subr.mxu0 0.0
    %1069 = vmatpush2.msra.mxu0 0.0
    %1070 = vmatprep.subr.mxu0 0.0
    %1071 = vmatpush2.msra.mxu0 0.0
    %1072 = vmatprep.subr.mxu0 0.0
    %1073 = vmatpush2.msra.mxu0 0.0
    %1074 = vmatprep.subr.mxu0 0.0
    %1075 = vmatpush2.msra.mxu0 0.0
    %1076 = vmatprep.subr.mxu0 0.0
    %1077 = vmatpush2.msra.mxu0 0.0
    %1078 = vmatprep.subr.mxu0 0.0
    %1079 = vmatpush2.msra.mxu0 0.0
    %1080 = vmatprep.subr.mxu0 0.0
    %1081 = vmatpush2.msra.mxu0 0.0
    %1082 = vmatprep.subr.mxu0 0.0
    %1083 = vmatpush2.msra.mxu0 0.0
    %1084 = vmatprep.subr.mxu0 0.0
    %1085 = vmatpush2.msra.mxu0 0.0
    %1086 = vmatprep.subr.mxu0 0.0
    %1087 = vmatpush2.msra.mxu0 0.0
    %1088 = vmatprep.mubr.f32.mxu0 0.0
    %v1089 = vand.u32 %v708, 4294901760
    %v1090 = vsub.f32 %v708, %v1089
    %v1091 = vand.u32 %v1090, 4294901760
    %1092 = vmatmul.mubr.f32.gmra.mxu0 %v1091
    %v1093 = vpop.f32.mrf.mxu0
    %v1094 = vadd.f32 %v998, %v1093
    %v1095 = vpop.f32.mrf.mxu0
    %1096 = vmatprep.mubr.f32.mxu0 0.0
    %v1097 = vand.u32 %v711, 4294901760
    %v1098 = vsub.f32 %v711, %v1097
    %v1099 = vand.u32 %v1098, 4294901760
    %1100 = vmatmul.mubr.f32.gmra.mxu0 %v1099
    %v1101 = vpop.f32.mrf.mxu0
    %v1102 = vadd.f32 %v1005, %v1101
    %v1103 = vpop.f32.mrf.mxu0
    %1104 = vmatprep.mubr.f32.mxu0 0.0
    %v1105 = vand.u32 %v714, 4294901760
    %v1106 = vsub.f32 %v714, %v1105
    %v1107 = vand.u32 %v1106, 4294901760
    %1108 = vmatmul.mubr.f32.gmra.mxu0 %v1107
    %v1109 = vpop.f32.mrf.mxu0
    %v1110 = vadd.f32 %v1012, %v1109
    %v1111 = vpop.f32.mrf.mxu0
    %1112 = vmatprep.mubr.f32.mxu0 0.0
    %v1113 = vand.u32 %v717, 4294901760
    %v1114 = vsub.f32 %v717, %v1113
    %v1115 = vand.u32 %v1114, 4294901760
    %1116 = vmatmul.mubr.f32.gmra.mxu0 %v1115
    %v1117 = vpop.f32.mrf.mxu0
    %v1118 = vadd.f32 %v1019, %v1117
    %v1119 = vpop.f32.mrf.mxu0
    %1120 = vdwg.mxu0
    %1121 = vmatprep.subr.mxu0 0.0
    %1122 = vmatpush1.msra.mxu0 0.0
    %1123 = vmatprep.subr.mxu0 0.0
    %1124 = vmatpush1.msra.mxu0 0.0
    %1125 = vmatprep.subr.mxu0 0.0
    %1126 = vmatpush1.msra.mxu0 0.0
    %1127 = vmatprep.subr.mxu0 0.0
    %1128 = vmatpush1.msra.mxu0 0.0
    %1129 = vmatprep.subr.mxu0 0.0
    %1130 = vmatpush1.msra.mxu0 0.0
    %1131 = vmatprep.subr.mxu0 0.0
    %1132 = vmatpush1.msra.mxu0 0.0
    %1133 = vmatprep.subr.mxu0 0.0
    %1134 = vmatpush1.msra.mxu0 0.0
    %1135 = vmatprep.subr.mxu0 0.0
    %1136 = vmatpush1.msra.mxu0 0.0
    %1137 = vmatprep.subr.mxu0 0.0
    %1138 = vmatpush1.msra.mxu0 0.0
    %1139 = vmatprep.subr.mxu0 0.0
    %1140 = vmatpush1.msra.mxu0 0.0
    %1141 = vmatprep.subr.mxu0 0.0
    %1142 = vmatpush1.msra.mxu0 0.0
    %1143 = vmatprep.subr.mxu0 0.0
    %1144 = vmatpush1.msra.mxu0 0.0
    %1145 = vmatprep.subr.mxu0 0.0
    %1146 = vmatpush1.msra.mxu0 0.0
    %1147 = vmatprep.subr.mxu0 0.0
    %1148 = vmatpush1.msra.mxu0 0.0
    %1149 = vmatprep.subr.mxu0 0.0
    %v1150 = vand.u32 %v99, 4294901760
    %v1151 = vsub.f32 %v99, %v1150
    %v1152 = vand.u32 %v1151, 4294901760
    %1153 = vmatpush1.msra.mxu0 %v1152
    %1154 = vmatprep.subr.mxu0 0.0
    %v1155 = vand.u32 %v98, 4294901760
    %v1156 = vsub.f32 %v98, %v1155
    %v1157 = vand.u32 %v1156, 4294901760
    %1158 = vmatpush1.msra.mxu0 %v1157
    %1159 = vmatprep.subr.mxu0 0.0
    %1160 = vmatpush2.msra.mxu0 0.0
    %1161 = vmatprep.subr.mxu0 0.0
    %1162 = vmatpush2.msra.mxu0 0.0
    %1163 = vmatprep.subr.mxu0 0.0
    %1164 = vmatpush2.msra.mxu0 0.0
    %1165 = vmatprep.subr.mxu0 0.0
    %1166 = vmatpush2.msra.mxu0 0.0
    %1167 = vmatprep.subr.mxu0 0.0
    %1168 = vmatpush2.msra.mxu0 0.0
    %1169 = vmatprep.subr.mxu0 0.0
    %1170 = vmatpush2.msra.mxu0 0.0
    %1171 = vmatprep.subr.mxu0 0.0
    %1172 = vmatpush2.msra.mxu0 0.0
    %1173 = vmatprep.subr.mxu0 0.0
    %1174 = vmatpush2.msra.mxu0 0.0
    %1175 = vmatprep.subr.mxu0 0.0
    %1176 = vmatpush2.msra.mxu0 0.0
    %1177 = vmatprep.subr.mxu0 0.0
    %1178 = vmatpush2.msra.mxu0 0.0
    %1179 = vmatprep.subr.mxu0 0.0
    %1180 = vmatpush2.msra.mxu0 0.0
    %1181 = vmatprep.subr.mxu0 0.0
    %1182 = vmatpush2.msra.mxu0 0.0
    %1183 = vmatprep.subr.mxu0 0.0
    %1184 = vmatpush2.msra.mxu0 0.0
    %1185 = vmatprep.subr.mxu0 0.0
    %1186 = vmatpush2.msra.mxu0 0.0
    %1187 = vmatprep.subr.mxu0 0.0
    %1188 = vmatpush2.msra.mxu0 0.0
    %1189 = vmatprep.subr.mxu0 0.0
    %1190 = vmatpush2.msra.mxu0 0.0
    %1191 = vmatprep.mubr.f32.mxu0 0.0
    %v1192 = vand.u32 %v708, 4294901760
    %1193 = vmatmul.mubr.f32.gmra.mxu0 %v1192
    %v1194 = vpop.f32.mrf.mxu0
    %v1195 = vadd.f32 %v1094, %v1194
    %v1196 = vpop.f32.mrf.mxu0
    %1197 = vmatprep.mubr.f32.mxu0 0.0
    %v1198 = vand.u32 %v711, 4294901760
    %1199 = vmatmul.mubr.f32.gmra.mxu0 %v1198
    %v1200 = vpop.f32.mrf.mxu0
    %v1201 = vadd.f32 %v1102, %v1200
    %v1202 = vpop.f32.mrf.mxu0
    %1203 = vmatprep.mubr.f32.mxu0 0.0
    %v1204 = vand.u32 %v714, 4294901760
    %1205 = vmatmul.mubr.f32.gmra.mxu0 %v1204
    %v1206 = vpop.f32.mrf.mxu0
    %v1207 = vadd.f32 %v1110, %v1206
    %v1208 = vpop.f32.mrf.mxu0
    %1209 = vmatprep.mubr.f32.mxu0 0.0
    %v1210 = vand.u32 %v717, 4294901760
    %1211 = vmatmul.mubr.f32.gmra.mxu0 %v1210
    %v1212 = vpop.f32.mrf.mxu0
    %v1213 = vadd.f32 %v1118, %v1212
    %v1214 = vpop.f32.mrf.mxu0
    %1215 = vdwg.mxu0
    %1216 = vmatprep.subr.mxu0 0.0
    %1217 = vmatpush1.msra.mxu0 0.0
    %1218 = vmatprep.subr.mxu0 0.0
    %1219 = vmatpush1.msra.mxu0 0.0
    %1220 = vmatprep.subr.mxu0 0.0
    %1221 = vmatpush1.msra.mxu0 0.0
    %1222 = vmatprep.subr.mxu0 0.0
    %1223 = vmatpush1.msra.mxu0 0.0
    %1224 = vmatprep.subr.mxu0 0.0
    %1225 = vmatpush1.msra.mxu0 0.0
    %1226 = vmatprep.subr.mxu0 0.0
    %1227 = vmatpush1.msra.mxu0 0.0
    %1228 = vmatprep.subr.mxu0 0.0
    %1229 = vmatpush1.msra.mxu0 0.0
    %1230 = vmatprep.subr.mxu0 0.0
    %1231 = vmatpush1.msra.mxu0 0.0
    %1232 = vmatprep.subr.mxu0 0.0
    %1233 = vmatpush1.msra.mxu0 0.0
    %1234 = vmatprep.subr.mxu0 0.0
    %1235 = vmatpush1.msra.mxu0 0.0
    %1236 = vmatprep.subr.mxu0 0.0
    %1237 = vmatpush1.msra.mxu0 0.0
    %1238 = vmatprep.subr.mxu0 0.0
    %1239 = vmatpush1.msra.mxu0 0.0
    %1240 = vmatprep.subr.mxu0 0.0
    %1241 = vmatpush1.msra.mxu0 0.0
    %1242 = vmatprep.subr.mxu0 0.0
    %1243 = vmatpush1.msra.mxu0 0.0
    %1244 = vmatprep.subr.mxu0 0.0
    %v1245 = vand.u32 %v99, 4294901760
    %1246 = vmatpush1.msra.mxu0 %v1245
    %1247 = vmatprep.subr.mxu0 0.0
    %v1248 = vand.u32 %v98, 4294901760
    %1249 = vmatpush1.msra.mxu0 %v1248
    %1250 = vmatprep.subr.mxu0 0.0
    %1251 = vmatpush2.msra.mxu0 0.0
    %1252 = vmatprep.subr.mxu0 0.0
    %1253 = vmatpush2.msra.mxu0 0.0
    %1254 = vmatprep.subr.mxu0 0.0
    %1255 = vmatpush2.msra.mxu0 0.0
    %1256 = vmatprep.subr.mxu0 0.0
    %1257 = vmatpush2.msra.mxu0 0.0
    %1258 = vmatprep.subr.mxu0 0.0
    %1259 = vmatpush2.msra.mxu0 0.0
    %1260 = vmatprep.subr.mxu0 0.0
    %1261 = vmatpush2.msra.mxu0 0.0
    %1262 = vmatprep.subr.mxu0 0.0
    %1263 = vmatpush2.msra.mxu0 0.0
    %1264 = vmatprep.subr.mxu0 0.0
    %1265 = vmatpush2.msra.mxu0 0.0
    %1266 = vmatprep.subr.mxu0 0.0
    %1267 = vmatpush2.msra.mxu0 0.0
    %1268 = vmatprep.subr.mxu0 0.0
    %1269 = vmatpush2.msra.mxu0 0.0
    %1270 = vmatprep.subr.mxu0 0.0
    %1271 = vmatpush2.msra.mxu0 0.0
    %1272 = vmatprep.subr.mxu0 0.0
    %1273 = vmatpush2.msra.mxu0 0.0
    %1274 = vmatprep.subr.mxu0 0.0
    %1275 = vmatpush2.msra.mxu0 0.0
    %1276 = vmatprep.subr.mxu0 0.0
    %1277 = vmatpush2.msra.mxu0 0.0
    %1278 = vmatprep.subr.mxu0 0.0
    %1279 = vmatpush2.msra.mxu0 0.0
    %1280 = vmatprep.subr.mxu0 0.0
    %1281 = vmatpush2.msra.mxu0 0.0
    %1282 = vmatprep.mubr.f32.mxu0 0.0
    %v1283 = vand.u32 %v708, 4294901760
    %1284 = vmatmul.mubr.f32.gmra.mxu0 %v1283
    %v1285 = vpop.f32.mrf.mxu0
    %v1286 = vadd.f32 %v1195, %v1285
    %v1287 = vpop.f32.mrf.mxu0
    %1288 = vmatprep.mubr.f32.mxu0 0.0
    %v1289 = vand.u32 %v711, 4294901760
    %1290 = vmatmul.mubr.f32.gmra.mxu0 %v1289
    %v1291 = vpop.f32.mrf.mxu0
    %v1292 = vadd.f32 %v1201, %v1291
    %v1293 = vpop.f32.mrf.mxu0
    %1294 = vmatprep.mubr.f32.mxu0 0.0
    %v1295 = vand.u32 %v714, 4294901760
    %1296 = vmatmul.mubr.f32.gmra.mxu0 %v1295
    %v1297 = vpop.f32.mrf.mxu0
    %v1298 = vadd.f32 %v1207, %v1297
    %v1299 = vpop.f32.mrf.mxu0
    %1300 = vmatprep.mubr.f32.mxu0 0.0
    %v1301 = vand.u32 %v717, 4294901760
    %1302 = vmatmul.mubr.f32.gmra.mxu0 %v1301
    %v1303 = vpop.f32.mrf.mxu0
    %v1304 = vadd.f32 %v1213, %v1303
    %v1305 = vpop.f32.mrf.mxu0
    %1306 = vdwg.mxu0
    %v1307 = vld [vmem:[#allocation2 + $0x2] sm:$0xff]
    %v1308 = vld [vmem:[#allocation2 + $0xa] sm:$0xff]
    %v1309 = vld [vmem:[#allocation2 + $0x1a] sm:$0xff]
    %v1310 = vld [vmem:[#allocation2 + $0x22] sm:$0xff]
    %s1311 = scalar_lea.vmem [#allocation9], 32
    %v1312 = vld [vmem:[%s1311] sm:$0xff]
    %v1313 = vld [vmem:[%s1311 + $0x8] sm:$0xff]
    %v1315 = vsel %vm89, %v1307, 0
    %v1318 = vsel %vm89, %v1308, 0
    %v1321 = vsel %vm89, %v1309, 0
    %v1324 = vsel %vm89, %v1310, 0
    %1326 = vmatprep.subr.mxu0 0.0
    %1327 = vmatpush1.msra.mxu0 0.0
    %1328 = vmatprep.subr.mxu0 0.0
    %1329 = vmatpush1.msra.mxu0 0.0
    %1330 = vmatprep.subr.mxu0 0.0
    %1331 = vmatpush1.msra.mxu0 0.0
    %1332 = vmatprep.subr.mxu0 0.0
    %1333 = vmatpush1.msra.mxu0 0.0
    %1334 = vmatprep.subr.mxu0 0.0
    %1335 = vmatpush1.msra.mxu0 0.0
    %1336 = vmatprep.subr.mxu0 0.0
    %1337 = vmatpush1.msra.mxu0 0.0
    %1338 = vmatprep.subr.mxu0 0.0
    %1339 = vmatpush1.msra.mxu0 0.0
    %1340 = vmatprep.subr.mxu0 0.0
    %1341 = vmatpush1.msra.mxu0 0.0
    %1342 = vmatprep.subr.mxu0 0.0
    %1343 = vmatpush1.msra.mxu0 0.0
    %1344 = vmatprep.subr.mxu0 0.0
    %1345 = vmatpush1.msra.mxu0 0.0
    %1346 = vmatprep.subr.mxu0 0.0
    %1347 = vmatpush1.msra.mxu0 0.0
    %1348 = vmatprep.subr.mxu0 0.0
    %1349 = vmatpush1.msra.mxu0 0.0
    %1350 = vmatprep.subr.mxu0 0.0
    %1351 = vmatpush1.msra.mxu0 0.0
    %1352 = vmatprep.subr.mxu0 0.0
    %1353 = vmatpush1.msra.mxu0 0.0
    %1354 = vmatprep.subr.mxu0 0.0
    %v1355 = vand.u32 %v1313, 4294901760
    %1356 = vmatpush1.msra.mxu0 %v1355
    %1357 = vmatprep.subr.mxu0 0.0
    %v1358 = vand.u32 %v1312, 4294901760
    %1359 = vmatpush1.msra.mxu0 %v1358
    %1360 = vmatprep.subr.mxu0 0.0
    %1361 = vmatpush2.msra.mxu0 0.0
    %1362 = vmatprep.subr.mxu0 0.0
    %1363 = vmatpush2.msra.mxu0 0.0
    %1364 = vmatprep.subr.mxu0 0.0
    %1365 = vmatpush2.msra.mxu0 0.0
    %1366 = vmatprep.subr.mxu0 0.0
    %1367 = vmatpush2.msra.mxu0 0.0
    %1368 = vmatprep.subr.mxu0 0.0
    %1369 = vmatpush2.msra.mxu0 0.0
    %1370 = vmatprep.subr.mxu0 0.0
    %1371 = vmatpush2.msra.mxu0 0.0
    %1372 = vmatprep.subr.mxu0 0.0
    %1373 = vmatpush2.msra.mxu0 0.0
    %1374 = vmatprep.subr.mxu0 0.0
    %1375 = vmatpush2.msra.mxu0 0.0
    %1376 = vmatprep.subr.mxu0 0.0
    %1377 = vmatpush2.msra.mxu0 0.0
    %1378 = vmatprep.subr.mxu0 0.0
    %1379 = vmatpush2.msra.mxu0 0.0
    %1380 = vmatprep.subr.mxu0 0.0
    %1381 = vmatpush2.msra.mxu0 0.0
    %1382 = vmatprep.subr.mxu0 0.0
    %1383 = vmatpush2.msra.mxu0 0.0
    %1384 = vmatprep.subr.mxu0 0.0
    %1385 = vmatpush2.msra.mxu0 0.0
    %1386 = vmatprep.subr.mxu0 0.0
    %1387 = vmatpush2.msra.mxu0 0.0
    %1388 = vmatprep.subr.mxu0 0.0
    %1389 = vmatpush2.msra.mxu0 0.0
    %1390 = vmatprep.subr.mxu0 0.0
    %1391 = vmatpush2.msra.mxu0 0.0
    %1392 = vmatprep.mubr.f32.mxu0 0.0
    %v1393 = vand.u32 %v1315, 4294901760
    %v1394 = vsub.f32 %v1315, %v1393
    %v1395 = vand.u32 %v1394, 4294901760
    %v1396 = vsub.f32 %v1394, %v1395
    %v1397 = vand.u32 %v1396, 4294901760
    %1398 = vmatmul.mubr.f32.gmra.mxu0 %v1397
    %v1399 = vpop.f32.mrf.mxu0
    %v1400 = vadd.f32 0.0, %v1399
    %v1401 = vpop.f32.mrf.mxu0
    %1402 = vmatprep.mubr.f32.mxu0 0.0
    %v1403 = vand.u32 %v1318, 4294901760
    %v1404 = vsub.f32 %v1318, %v1403
    %v1405 = vand.u32 %v1404, 4294901760
    %v1406 = vsub.f32 %v1404, %v1405
    %v1407 = vand.u32 %v1406, 4294901760
    %1408 = vmatmul.mubr.f32.gmra.mxu0 %v1407
    %v1409 = vpop.f32.mrf.mxu0
    %v1410 = vadd.f32 0.0, %v1409
    %v1411 = vpop.f32.mrf.mxu0
    %1412 = vmatprep.mubr.f32.mxu0 0.0
    %v1413 = vand.u32 %v1321, 4294901760
    %v1414 = vsub.f32 %v1321, %v1413
    %v1415 = vand.u32 %v1414, 4294901760
    %v1416 = vsub.f32 %v1414, %v1415
    %v1417 = vand.u32 %v1416, 4294901760
    %1418 = vmatmul.mubr.f32.gmra.mxu0 %v1417
    %v1419 = vpop.f32.mrf.mxu0
    %v1420 = vadd.f32 0.0, %v1419
    %v1421 = vpop.f32.mrf.mxu0
    %1422 = vmatprep.mubr.f32.mxu0 0.0
    %v1423 = vand.u32 %v1324, 4294901760
    %v1424 = vsub.f32 %v1324, %v1423
    %v1425 = vand.u32 %v1424, 4294901760
    %v1426 = vsub.f32 %v1424, %v1425
    %v1427 = vand.u32 %v1426, 4294901760
    %1428 = vmatmul.mubr.f32.gmra.mxu0 %v1427
    %v1429 = vpop.f32.mrf.mxu0
    %v1430 = vadd.f32 0.0, %v1429
    %v1431 = vpop.f32.mrf.mxu0
    %1432 = vdwg.mxu0
    %1433 = vmatprep.subr.mxu0 0.0
    %1434 = vmatpush1.msra.mxu0 0.0
    %1435 = vmatprep.subr.mxu0 0.0
    %1436 = vmatpush1.msra.mxu0 0.0
    %1437 = vmatprep.subr.mxu0 0.0
    %1438 = vmatpush1.msra.mxu0 0.0
    %1439 = vmatprep.subr.mxu0 0.0
    %1440 = vmatpush1.msra.mxu0 0.0
    %1441 = vmatprep.subr.mxu0 0.0
    %1442 = vmatpush1.msra.mxu0 0.0
    %1443 = vmatprep.subr.mxu0 0.0
    %1444 = vmatpush1.msra.mxu0 0.0
    %1445 = vmatprep.subr.mxu0 0.0
    %1446 = vmatpush1.msra.mxu0 0.0
    %1447 = vmatprep.subr.mxu0 0.0
    %1448 = vmatpush1.msra.mxu0 0.0
    %1449 = vmatprep.subr.mxu0 0.0
    %1450 = vmatpush1.msra.mxu0 0.0
    %1451 = vmatprep.subr.mxu0 0.0
    %1452 = vmatpush1.msra.mxu0 0.0
    %1453 = vmatprep.subr.mxu0 0.0
    %1454 = vmatpush1.msra.mxu0 0.0
    %1455 = vmatprep.subr.mxu0 0.0
    %1456 = vmatpush1.msra.mxu0 0.0
    %1457 = vmatprep.subr.mxu0 0.0
    %1458 = vmatpush1.msra.mxu0 0.0
    %1459 = vmatprep.subr.mxu0 0.0
    %1460 = vmatpush1.msra.mxu0 0.0
    %1461 = vmatprep.subr.mxu0 0.0
    %v1462 = vand.u32 %v1313, 4294901760
    %v1463 = vsub.f32 %v1313, %v1462
    %v1464 = vand.u32 %v1463, 4294901760
    %v1465 = vsub.f32 %v1463, %v1464
    %v1466 = vand.u32 %v1465, 4294901760
    %1467 = vmatpush1.msra.mxu0 %v1466
    %1468 = vmatprep.subr.mxu0 0.0
    %v1469 = vand.u32 %v1312, 4294901760
    %v1470 = vsub.f32 %v1312, %v1469
    %v1471 = vand.u32 %v1470, 4294901760
    %v1472 = vsub.f32 %v1470, %v1471
    %v1473 = vand.u32 %v1472, 4294901760
    %1474 = vmatpush1.msra.mxu0 %v1473
    %1475 = vmatprep.subr.mxu0 0.0
    %1476 = vmatpush2.msra.mxu0 0.0
    %1477 = vmatprep.subr.mxu0 0.0
    %1478 = vmatpush2.msra.mxu0 0.0
    %1479 = vmatprep.subr.mxu0 0.0
    %1480 = vmatpush2.msra.mxu0 0.0
    %1481 = vmatprep.subr.mxu0 0.0
    %1482 = vmatpush2.msra.mxu0 0.0
    %1483 = vmatprep.subr.mxu0 0.0
    %1484 = vmatpush2.msra.mxu0 0.0
    %1485 = vmatprep.subr.mxu0 0.0
    %1486 = vmatpush2.msra.mxu0 0.0
    %1487 = vmatprep.subr.mxu0 0.0
    %1488 = vmatpush2.msra.mxu0 0.0
    %1489 = vmatprep.subr.mxu0 0.0
    %1490 = vmatpush2.msra.mxu0 0.0
    %1491 = vmatprep.subr.mxu0 0.0
    %1492 = vmatpush2.msra.mxu0 0.0
    %1493 = vmatprep.subr.mxu0 0.0
    %1494 = vmatpush2.msra.mxu0 0.0
    %1495 = vmatprep.subr.mxu0 0.0
    %1496 = vmatpush2.msra.mxu0 0.0
    %1497 = vmatprep.subr.mxu0 0.0
    %1498 = vmatpush2.msra.mxu0 0.0
    %1499 = vmatprep.subr.mxu0 0.0
    %1500 = vmatpush2.msra.mxu0 0.0
    %1501 = vmatprep.subr.mxu0 0.0
    %1502 = vmatpush2.msra.mxu0 0.0
    %1503 = vmatprep.subr.mxu0 0.0
    %1504 = vmatpush2.msra.mxu0 0.0
    %1505 = vmatprep.subr.mxu0 0.0
    %1506 = vmatpush2.msra.mxu0 0.0
    %1507 = vmatprep.mubr.f32.mxu0 0.0
    %v1508 = vand.u32 %v1315, 4294901760
    %1509 = vmatmul.mubr.f32.gmra.mxu0 %v1508
    %v1510 = vpop.f32.mrf.mxu0
    %v1511 = vadd.f32 %v1400, %v1510
    %v1512 = vpop.f32.mrf.mxu0
    %1513 = vmatprep.mubr.f32.mxu0 0.0
    %v1514 = vand.u32 %v1318, 4294901760
    %1515 = vmatmul.mubr.f32.gmra.mxu0 %v1514
    %v1516 = vpop.f32.mrf.mxu0
    %v1517 = vadd.f32 %v1410, %v1516
    %v1518 = vpop.f32.mrf.mxu0
    %1519 = vmatprep.mubr.f32.mxu0 0.0
    %v1520 = vand.u32 %v1321, 4294901760
    %1521 = vmatmul.mubr.f32.gmra.mxu0 %v1520
    %v1522 = vpop.f32.mrf.mxu0
    %v1523 = vadd.f32 %v1420, %v1522
    %v1524 = vpop.f32.mrf.mxu0
    %1525 = vmatprep.mubr.f32.mxu0 0.0
    %v1526 = vand.u32 %v1324, 4294901760
    %1527 = vmatmul.mubr.f32.gmra.mxu0 %v1526
    %v1528 = vpop.f32.mrf.mxu0
    %v1529 = vadd.f32 %v1430, %v1528
    %v1530 = vpop.f32.mrf.mxu0
    %1531 = vdwg.mxu0
    %1532 = vmatprep.subr.mxu0 0.0
    %1533 = vmatpush1.msra.mxu0 0.0
    %1534 = vmatprep.subr.mxu0 0.0
    %1535 = vmatpush1.msra.mxu0 0.0
    %1536 = vmatprep.subr.mxu0 0.0
    %1537 = vmatpush1.msra.mxu0 0.0
    %1538 = vmatprep.subr.mxu0 0.0
    %1539 = vmatpush1.msra.mxu0 0.0
    %1540 = vmatprep.subr.mxu0 0.0
    %1541 = vmatpush1.msra.mxu0 0.0
    %1542 = vmatprep.subr.mxu0 0.0
    %1543 = vmatpush1.msra.mxu0 0.0
    %1544 = vmatprep.subr.mxu0 0.0
    %1545 = vmatpush1.msra.mxu0 0.0
    %1546 = vmatprep.subr.mxu0 0.0
    %1547 = vmatpush1.msra.mxu0 0.0
    %1548 = vmatprep.subr.mxu0 0.0
    %1549 = vmatpush1.msra.mxu0 0.0
    %1550 = vmatprep.subr.mxu0 0.0
    %1551 = vmatpush1.msra.mxu0 0.0
    %1552 = vmatprep.subr.mxu0 0.0
    %1553 = vmatpush1.msra.mxu0 0.0
    %1554 = vmatprep.subr.mxu0 0.0
    %1555 = vmatpush1.msra.mxu0 0.0
    %1556 = vmatprep.subr.mxu0 0.0
    %1557 = vmatpush1.msra.mxu0 0.0
    %1558 = vmatprep.subr.mxu0 0.0
    %1559 = vmatpush1.msra.mxu0 0.0
    %1560 = vmatprep.subr.mxu0 0.0
    %v1561 = vand.u32 %v1313, 4294901760
    %v1562 = vsub.f32 %v1313, %v1561
    %1563 = vmatpush1.msra.mxu0 %v1562
    %1564 = vmatprep.subr.mxu0 0.0
    %v1565 = vand.u32 %v1312, 4294901760
    %v1566 = vsub.f32 %v1312, %v1565
    %1567 = vmatpush1.msra.mxu0 %v1566
    %1568 = vmatprep.subr.mxu0 0.0
    %1569 = vmatpush2.msra.mxu0 0.0
    %1570 = vmatprep.subr.mxu0 0.0
    %1571 = vmatpush2.msra.mxu0 0.0
    %1572 = vmatprep.subr.mxu0 0.0
    %1573 = vmatpush2.msra.mxu0 0.0
    %1574 = vmatprep.subr.mxu0 0.0
    %1575 = vmatpush2.msra.mxu0 0.0
    %1576 = vmatprep.subr.mxu0 0.0
    %1577 = vmatpush2.msra.mxu0 0.0
    %1578 = vmatprep.subr.mxu0 0.0
    %1579 = vmatpush2.msra.mxu0 0.0
    %1580 = vmatprep.subr.mxu0 0.0
    %1581 = vmatpush2.msra.mxu0 0.0
    %1582 = vmatprep.subr.mxu0 0.0
    %1583 = vmatpush2.msra.mxu0 0.0
    %1584 = vmatprep.subr.mxu0 0.0
    %1585 = vmatpush2.msra.mxu0 0.0
    %1586 = vmatprep.subr.mxu0 0.0
    %1587 = vmatpush2.msra.mxu0 0.0
    %1588 = vmatprep.subr.mxu0 0.0
    %1589 = vmatpush2.msra.mxu0 0.0
    %1590 = vmatprep.subr.mxu0 0.0
    %1591 = vmatpush2.msra.mxu0 0.0
    %1592 = vmatprep.subr.mxu0 0.0
    %1593 = vmatpush2.msra.mxu0 0.0
    %1594 = vmatprep.subr.mxu0 0.0
    %1595 = vmatpush2.msra.mxu0 0.0
    %1596 = vmatprep.subr.mxu0 0.0
    %1597 = vmatpush2.msra.mxu0 0.0
    %1598 = vmatprep.subr.mxu0 0.0
    %1599 = vmatpush2.msra.mxu0 0.0
    %1600 = vmatprep.mubr.f32.mxu0 0.0
    %v1601 = vand.u32 %v1315, 4294901760
    %v1602 = vsub.f32 %v1315, %v1601
    %1603 = vmatmul.mubr.f32.gmra.mxu0 %v1602
    %v1604 = vpop.f32.mrf.mxu0
    %v1605 = vadd.f32 %v1511, %v1604
    %v1606 = vpop.f32.mrf.mxu0
    %1607 = vmatprep.mubr.f32.mxu0 0.0
    %v1608 = vand.u32 %v1318, 4294901760
    %v1609 = vsub.f32 %v1318, %v1608
    %1610 = vmatmul.mubr.f32.gmra.mxu0 %v1609
    %v1611 = vpop.f32.mrf.mxu0
    %v1612 = vadd.f32 %v1517, %v1611
    %v1613 = vpop.f32.mrf.mxu0
    %1614 = vmatprep.mubr.f32.mxu0 0.0
    %v1615 = vand.u32 %v1321, 4294901760
    %v1616 = vsub.f32 %v1321, %v1615
    %1617 = vmatmul.mubr.f32.gmra.mxu0 %v1616
    %v1618 = vpop.f32.mrf.mxu0
    %v1619 = vadd.f32 %v1523, %v1618
    %v1620 = vpop.f32.mrf.mxu0
    %1621 = vmatprep.mubr.f32.mxu0 0.0
    %v1622 = vand.u32 %v1324, 4294901760
    %v1623 = vsub.f32 %v1324, %v1622
    %1624 = vmatmul.mubr.f32.gmra.mxu0 %v1623
    %v1625 = vpop.f32.mrf.mxu0
    %v1626 = vadd.f32 %v1529, %v1625
    %v1627 = vpop.f32.mrf.mxu0
    %1628 = vdwg.mxu0
    %1629 = vmatprep.subr.mxu0 0.0
    %1630 = vmatpush1.msra.mxu0 0.0
    %1631 = vmatprep.subr.mxu0 0.0
    %1632 = vmatpush1.msra.mxu0 0.0
    %1633 = vmatprep.subr.mxu0 0.0
    %1634 = vmatpush1.msra.mxu0 0.0
    %1635 = vmatprep.subr.mxu0 0.0
    %1636 = vmatpush1.msra.mxu0 0.0
    %1637 = vmatprep.subr.mxu0 0.0
    %1638 = vmatpush1.msra.mxu0 0.0
    %1639 = vmatprep.subr.mxu0 0.0
    %1640 = vmatpush1.msra.mxu0 0.0
    %1641 = vmatprep.subr.mxu0 0.0
    %1642 = vmatpush1.msra.mxu0 0.0
    %1643 = vmatprep.subr.mxu0 0.0
    %1644 = vmatpush1.msra.mxu0 0.0
    %1645 = vmatprep.subr.mxu0 0.0
    %1646 = vmatpush1.msra.mxu0 0.0
    %1647 = vmatprep.subr.mxu0 0.0
    %1648 = vmatpush1.msra.mxu0 0.0
    %1649 = vmatprep.subr.mxu0 0.0
    %1650 = vmatpush1.msra.mxu0 0.0
    %1651 = vmatprep.subr.mxu0 0.0
    %1652 = vmatpush1.msra.mxu0 0.0
    %1653 = vmatprep.subr.mxu0 0.0
    %1654 = vmatpush1.msra.mxu0 0.0
    %1655 = vmatprep.subr.mxu0 0.0
    %1656 = vmatpush1.msra.mxu0 0.0
    %1657 = vmatprep.subr.mxu0 0.0
    %v1658 = vand.u32 %v1313, 4294901760
    %1659 = vmatpush1.msra.mxu0 %v1658
    %1660 = vmatprep.subr.mxu0 0.0
    %v1661 = vand.u32 %v1312, 4294901760
    %1662 = vmatpush1.msra.mxu0 %v1661
    %1663 = vmatprep.subr.mxu0 0.0
    %1664 = vmatpush2.msra.mxu0 0.0
    %1665 = vmatprep.subr.mxu0 0.0
    %1666 = vmatpush2.msra.mxu0 0.0
    %1667 = vmatprep.subr.mxu0 0.0
    %1668 = vmatpush2.msra.mxu0 0.0
    %1669 = vmatprep.subr.mxu0 0.0
    %1670 = vmatpush2.msra.mxu0 0.0
    %1671 = vmatprep.subr.mxu0 0.0
    %1672 = vmatpush2.msra.mxu0 0.0
    %1673 = vmatprep.subr.mxu0 0.0
    %1674 = vmatpush2.msra.mxu0 0.0
    %1675 = vmatprep.subr.mxu0 0.0
    %1676 = vmatpush2.msra.mxu0 0.0
    %1677 = vmatprep.subr.mxu0 0.0
    %1678 = vmatpush2.msra.mxu0 0.0
    %1679 = vmatprep.subr.mxu0 0.0
    %1680 = vmatpush2.msra.mxu0 0.0
    %1681 = vmatprep.subr.mxu0 0.0
    %1682 = vmatpush2.msra.mxu0 0.0
    %1683 = vmatprep.subr.mxu0 0.0
    %1684 = vmatpush2.msra.mxu0 0.0
    %1685 = vmatprep.subr.mxu0 0.0
    %1686 = vmatpush2.msra.mxu0 0.0
    %1687 = vmatprep.subr.mxu0 0.0
    %1688 = vmatpush2.msra.mxu0 0.0
    %1689 = vmatprep.subr.mxu0 0.0
    %1690 = vmatpush2.msra.mxu0 0.0
    %1691 = vmatprep.subr.mxu0 0.0
    %1692 = vmatpush2.msra.mxu0 0.0
    %1693 = vmatprep.subr.mxu0 0.0
    %1694 = vmatpush2.msra.mxu0 0.0
    %1695 = vmatprep.mubr.f32.mxu0 0.0
    %v1696 = vand.u32 %v1315, 4294901760
    %v1697 = vsub.f32 %v1315, %v1696
    %v1698 = vand.u32 %v1697, 4294901760
    %1699 = vmatmul.mubr.f32.gmra.mxu0 %v1698
    %v1700 = vpop.f32.mrf.mxu0
    %v1701 = vadd.f32 %v1605, %v1700
    %v1702 = vpop.f32.mrf.mxu0
    %1703 = vmatprep.mubr.f32.mxu0 0.0
    %v1704 = vand.u32 %v1318, 4294901760
    %v1705 = vsub.f32 %v1318, %v1704
    %v1706 = vand.u32 %v1705, 4294901760
    %1707 = vmatmul.mubr.f32.gmra.mxu0 %v1706
    %v1708 = vpop.f32.mrf.mxu0
    %v1709 = vadd.f32 %v1612, %v1708
    %v1710 = vpop.f32.mrf.mxu0
    %1711 = vmatprep.mubr.f32.mxu0 0.0
    %v1712 = vand.u32 %v1321, 4294901760
    %v1713 = vsub.f32 %v1321, %v1712
    %v1714 = vand.u32 %v1713, 4294901760
    %1715 = vmatmul.mubr.f32.gmra.mxu0 %v1714
    %v1716 = vpop.f32.mrf.mxu0
    %v1717 = vadd.f32 %v1619, %v1716
    %v1718 = vpop.f32.mrf.mxu0
    %1719 = vmatprep.mubr.f32.mxu0 0.0
    %v1720 = vand.u32 %v1324, 4294901760
    %v1721 = vsub.f32 %v1324, %v1720
    %v1722 = vand.u32 %v1721, 4294901760
    %1723 = vmatmul.mubr.f32.gmra.mxu0 %v1722
    %v1724 = vpop.f32.mrf.mxu0
    %v1725 = vadd.f32 %v1626, %v1724
    %v1726 = vpop.f32.mrf.mxu0
    %1727 = vdwg.mxu0
    %1728 = vmatprep.subr.mxu0 0.0
    %1729 = vmatpush1.msra.mxu0 0.0
    %1730 = vmatprep.subr.mxu0 0.0
    %1731 = vmatpush1.msra.mxu0 0.0
    %1732 = vmatprep.subr.mxu0 0.0
    %1733 = vmatpush1.msra.mxu0 0.0
    %1734 = vmatprep.subr.mxu0 0.0
    %1735 = vmatpush1.msra.mxu0 0.0
    %1736 = vmatprep.subr.mxu0 0.0
    %1737 = vmatpush1.msra.mxu0 0.0
    %1738 = vmatprep.subr.mxu0 0.0
    %1739 = vmatpush1.msra.mxu0 0.0
    %1740 = vmatprep.subr.mxu0 0.0
    %1741 = vmatpush1.msra.mxu0 0.0
    %1742 = vmatprep.subr.mxu0 0.0
    %1743 = vmatpush1.msra.mxu0 0.0
    %1744 = vmatprep.subr.mxu0 0.0
    %1745 = vmatpush1.msra.mxu0 0.0
    %1746 = vmatprep.subr.mxu0 0.0
    %1747 = vmatpush1.msra.mxu0 0.0
    %1748 = vmatprep.subr.mxu0 0.0
    %1749 = vmatpush1.msra.mxu0 0.0
    %1750 = vmatprep.subr.mxu0 0.0
    %1751 = vmatpush1.msra.mxu0 0.0
    %1752 = vmatprep.subr.mxu0 0.0
    %1753 = vmatpush1.msra.mxu0 0.0
    %1754 = vmatprep.subr.mxu0 0.0
    %1755 = vmatpush1.msra.mxu0 0.0
    %1756 = vmatprep.subr.mxu0 0.0
    %v1757 = vand.u32 %v1313, 4294901760
    %v1758 = vsub.f32 %v1313, %v1757
    %v1759 = vand.u32 %v1758, 4294901760
    %1760 = vmatpush1.msra.mxu0 %v1759
    %1761 = vmatprep.subr.mxu0 0.0
    %v1762 = vand.u32 %v1312, 4294901760
    %v1763 = vsub.f32 %v1312, %v1762
    %v1764 = vand.u32 %v1763, 4294901760
    %1765 = vmatpush1.msra.mxu0 %v1764
    %1766 = vmatprep.subr.mxu0 0.0
    %1767 = vmatpush2.msra.mxu0 0.0
    %1768 = vmatprep.subr.mxu0 0.0
    %1769 = vmatpush2.msra.mxu0 0.0
    %1770 = vmatprep.subr.mxu0 0.0
    %1771 = vmatpush2.msra.mxu0 0.0
    %1772 = vmatprep.subr.mxu0 0.0
    %1773 = vmatpush2.msra.mxu0 0.0
    %1774 = vmatprep.subr.mxu0 0.0
    %1775 = vmatpush2.msra.mxu0 0.0
    %1776 = vmatprep.subr.mxu0 0.0
    %1777 = vmatpush2.msra.mxu0 0.0
    %1778 = vmatprep.subr.mxu0 0.0
    %1779 = vmatpush2.msra.mxu0 0.0
    %1780 = vmatprep.subr.mxu0 0.0
    %1781 = vmatpush2.msra.mxu0 0.0
    %1782 = vmatprep.subr.mxu0 0.0
    %1783 = vmatpush2.msra.mxu0 0.0
    %1784 = vmatprep.subr.mxu0 0.0
    %1785 = vmatpush2.msra.mxu0 0.0
    %1786 = vmatprep.subr.mxu0 0.0
    %1787 = vmatpush2.msra.mxu0 0.0
    %1788 = vmatprep.subr.mxu0 0.0
    %1789 = vmatpush2.msra.mxu0 0.0
    %1790 = vmatprep.subr.mxu0 0.0
    %1791 = vmatpush2.msra.mxu0 0.0
    %1792 = vmatprep.subr.mxu0 0.0
    %1793 = vmatpush2.msra.mxu0 0.0
    %1794 = vmatprep.subr.mxu0 0.0
    %1795 = vmatpush2.msra.mxu0 0.0
    %1796 = vmatprep.subr.mxu0 0.0
    %1797 = vmatpush2.msra.mxu0 0.0
    %1798 = vmatprep.mubr.f32.mxu0 0.0
    %v1799 = vand.u32 %v1315, 4294901760
    %1800 = vmatmul.mubr.f32.gmra.mxu0 %v1799
    %v1801 = vpop.f32.mrf.mxu0
    %v1802 = vadd.f32 %v1701, %v1801
    %v1803 = vpop.f32.mrf.mxu0
    %1804 = vmatprep.mubr.f32.mxu0 0.0
    %v1805 = vand.u32 %v1318, 4294901760
    %1806 = vmatmul.mubr.f32.gmra.mxu0 %v1805
    %v1807 = vpop.f32.mrf.mxu0
    %v1808 = vadd.f32 %v1709, %v1807
    %v1809 = vpop.f32.mrf.mxu0
    %1810 = vmatprep.mubr.f32.mxu0 0.0
    %v1811 = vand.u32 %v1321, 4294901760
    %1812 = vmatmul.mubr.f32.gmra.mxu0 %v1811
    %v1813 = vpop.f32.mrf.mxu0
    %v1814 = vadd.f32 %v1717, %v1813
    %v1815 = vpop.f32.mrf.mxu0
    %1816 = vmatprep.mubr.f32.mxu0 0.0
    %v1817 = vand.u32 %v1324, 4294901760
    %1818 = vmatmul.mubr.f32.gmra.mxu0 %v1817
    %v1819 = vpop.f32.mrf.mxu0
    %v1820 = vadd.f32 %v1725, %v1819
    %v1821 = vpop.f32.mrf.mxu0
    %1822 = vdwg.mxu0
    %1823 = vmatprep.subr.mxu0 0.0
    %1824 = vmatpush1.msra.mxu0 0.0
    %1825 = vmatprep.subr.mxu0 0.0
    %1826 = vmatpush1.msra.mxu0 0.0
    %1827 = vmatprep.subr.mxu0 0.0
    %1828 = vmatpush1.msra.mxu0 0.0
    %1829 = vmatprep.subr.mxu0 0.0
    %1830 = vmatpush1.msra.mxu0 0.0
    %1831 = vmatprep.subr.mxu0 0.0
    %1832 = vmatpush1.msra.mxu0 0.0
    %1833 = vmatprep.subr.mxu0 0.0
    %1834 = vmatpush1.msra.mxu0 0.0
    %1835 = vmatprep.subr.mxu0 0.0
    %1836 = vmatpush1.msra.mxu0 0.0
    %1837 = vmatprep.subr.mxu0 0.0
    %1838 = vmatpush1.msra.mxu0 0.0
    %1839 = vmatprep.subr.mxu0 0.0
    %1840 = vmatpush1.msra.mxu0 0.0
    %1841 = vmatprep.subr.mxu0 0.0
    %1842 = vmatpush1.msra.mxu0 0.0
    %1843 = vmatprep.subr.mxu0 0.0
    %1844 = vmatpush1.msra.mxu0 0.0
    %1845 = vmatprep.subr.mxu0 0.0
    %1846 = vmatpush1.msra.mxu0 0.0
    %1847 = vmatprep.subr.mxu0 0.0
    %1848 = vmatpush1.msra.mxu0 0.0
    %1849 = vmatprep.subr.mxu0 0.0
    %1850 = vmatpush1.msra.mxu0 0.0
    %1851 = vmatprep.subr.mxu0 0.0
    %v1852 = vand.u32 %v1313, 4294901760
    %1853 = vmatpush1.msra.mxu0 %v1852
    %1854 = vmatprep.subr.mxu0 0.0
    %v1855 = vand.u32 %v1312, 4294901760
    %1856 = vmatpush1.msra.mxu0 %v1855
    %1857 = vmatprep.subr.mxu0 0.0
    %1858 = vmatpush2.msra.mxu0 0.0
    %1859 = vmatprep.subr.mxu0 0.0
    %1860 = vmatpush2.msra.mxu0 0.0
    %1861 = vmatprep.subr.mxu0 0.0
    %1862 = vmatpush2.msra.mxu0 0.0
    %1863 = vmatprep.subr.mxu0 0.0
    %1864 = vmatpush2.msra.mxu0 0.0
    %1865 = vmatprep.subr.mxu0 0.0
    %1866 = vmatpush2.msra.mxu0 0.0
    %1867 = vmatprep.subr.mxu0 0.0
    %1868 = vmatpush2.msra.mxu0 0.0
    %1869 = vmatprep.subr.mxu0 0.0
    %1870 = vmatpush2.msra.mxu0 0.0
    %1871 = vmatprep.subr.mxu0 0.0
    %1872 = vmatpush2.msra.mxu0 0.0
    %1873 = vmatprep.subr.mxu0 0.0
    %1874 = vmatpush2.msra.mxu0 0.0
    %1875 = vmatprep.subr.mxu0 0.0
    %1876 = vmatpush2.msra.mxu0 0.0
    %1877 = vmatprep.subr.mxu0 0.0
    %1878 = vmatpush2.msra.mxu0 0.0
    %1879 = vmatprep.subr.mxu0 0.0
    %1880 = vmatpush2.msra.mxu0 0.0
    %1881 = vmatprep.subr.mxu0 0.0
    %1882 = vmatpush2.msra.mxu0 0.0
    %1883 = vmatprep.subr.mxu0 0.0
    %1884 = vmatpush2.msra.mxu0 0.0
    %1885 = vmatprep.subr.mxu0 0.0
    %1886 = vmatpush2.msra.mxu0 0.0
    %1887 = vmatprep.subr.mxu0 0.0
    %1888 = vmatpush2.msra.mxu0 0.0
    %1889 = vmatprep.mubr.f32.mxu0 0.0
    %v1890 = vand.u32 %v1315, 4294901760
    %1891 = vmatmul.mubr.f32.gmra.mxu0 %v1890
    %v1892 = vpop.f32.mrf.mxu0
    %v1893 = vadd.f32 %v1802, %v1892
    %v1894 = vpop.f32.mrf.mxu0
    %1895 = vmatprep.mubr.f32.mxu0 0.0
    %v1896 = vand.u32 %v1318, 4294901760
    %1897 = vmatmul.mubr.f32.gmra.mxu0 %v1896
    %v1898 = vpop.f32.mrf.mxu0
    %v1899 = vadd.f32 %v1808, %v1898
    %v1900 = vpop.f32.mrf.mxu0
    %1901 = vmatprep.mubr.f32.mxu0 0.0
    %v1902 = vand.u32 %v1321, 4294901760
    %1903 = vmatmul.mubr.f32.gmra.mxu0 %v1902
    %v1904 = vpop.f32.mrf.mxu0
    %v1905 = vadd.f32 %v1814, %v1904
    %v1906 = vpop.f32.mrf.mxu0
    %1907 = vmatprep.mubr.f32.mxu0 0.0
    %v1908 = vand.u32 %v1324, 4294901760
    %1909 = vmatmul.mubr.f32.gmra.mxu0 %v1908
    %v1910 = vpop.f32.mrf.mxu0
    %v1911 = vadd.f32 %v1820, %v1910
    %v1912 = vpop.f32.mrf.mxu0
    %1913 = vdwg.mxu0
    %v1914 = vadd.f32 %v1286, %v1893
    %v1915 = vadd.f32 %v1292, %v1899
    %v1916 = vadd.f32 %v1298, %v1905
    %v1917 = vadd.f32 %v1304, %v1911
    %v1918 = vld [vmem:[#allocation2 + $0x3] sm:$0xff]
    %v1919 = vld [vmem:[#allocation2 + $0xb] sm:$0xff]
    %v1920 = vld [vmem:[#allocation2 + $0x1b] sm:$0xff]
    %v1921 = vld [vmem:[#allocation2 + $0x23] sm:$0xff]
    %s1922 = scalar_lea.vmem [#allocation9], 48
    %v1923 = vld [vmem:[%s1922] sm:$0xff]
    %v1924 = vld [vmem:[%s1922 + $0x8] sm:$0xff]
    %v1926 = vsel %vm89, %v1918, 0
    %v1929 = vsel %vm89, %v1919, 0
    %v1932 = vsel %vm89, %v1920, 0
    %v1935 = vsel %vm89, %v1921, 0
    %1937 = vmatprep.subr.mxu0 0.0
    %1938 = vmatpush1.msra.mxu0 0.0
    %1939 = vmatprep.subr.mxu0 0.0
    %1940 = vmatpush1.msra.mxu0 0.0
    %1941 = vmatprep.subr.mxu0 0.0
    %1942 = vmatpush1.msra.mxu0 0.0
    %1943 = vmatprep.subr.mxu0 0.0
    %1944 = vmatpush1.msra.mxu0 0.0
    %1945 = vmatprep.subr.mxu0 0.0
    %1946 = vmatpush1.msra.mxu0 0.0
    %1947 = vmatprep.subr.mxu0 0.0
    %1948 = vmatpush1.msra.mxu0 0.0
    %1949 = vmatprep.subr.mxu0 0.0
    %1950 = vmatpush1.msra.mxu0 0.0
    %1951 = vmatprep.subr.mxu0 0.0
    %1952 = vmatpush1.msra.mxu0 0.0
    %1953 = vmatprep.subr.mxu0 0.0
    %1954 = vmatpush1.msra.mxu0 0.0
    %1955 = vmatprep.subr.mxu0 0.0
    %1956 = vmatpush1.msra.mxu0 0.0
    %1957 = vmatprep.subr.mxu0 0.0
    %1958 = vmatpush1.msra.mxu0 0.0
    %1959 = vmatprep.subr.mxu0 0.0
    %1960 = vmatpush1.msra.mxu0 0.0
    %1961 = vmatprep.subr.mxu0 0.0
    %1962 = vmatpush1.msra.mxu0 0.0
    %1963 = vmatprep.subr.mxu0 0.0
    %1964 = vmatpush1.msra.mxu0 0.0
    %1965 = vmatprep.subr.mxu0 0.0
    %v1966 = vand.u32 %v1924, 4294901760
    %1967 = vmatpush1.msra.mxu0 %v1966
    %1968 = vmatprep.subr.mxu0 0.0
    %v1969 = vand.u32 %v1923, 4294901760
    %1970 = vmatpush1.msra.mxu0 %v1969
    %1971 = vmatprep.subr.mxu0 0.0
    %1972 = vmatpush2.msra.mxu0 0.0
    %1973 = vmatprep.subr.mxu0 0.0
    %1974 = vmatpush2.msra.mxu0 0.0
    %1975 = vmatprep.subr.mxu0 0.0
    %1976 = vmatpush2.msra.mxu0 0.0
    %1977 = vmatprep.subr.mxu0 0.0
    %1978 = vmatpush2.msra.mxu0 0.0
    %1979 = vmatprep.subr.mxu0 0.0
    %1980 = vmatpush2.msra.mxu0 0.0
    %1981 = vmatprep.subr.mxu0 0.0
    %1982 = vmatpush2.msra.mxu0 0.0
    %1983 = vmatprep.subr.mxu0 0.0
    %1984 = vmatpush2.msra.mxu0 0.0
    %1985 = vmatprep.subr.mxu0 0.0
    %1986 = vmatpush2.msra.mxu0 0.0
    %1987 = vmatprep.subr.mxu0 0.0
    %1988 = vmatpush2.msra.mxu0 0.0
    %1989 = vmatprep.subr.mxu0 0.0
    %1990 = vmatpush2.msra.mxu0 0.0
    %1991 = vmatprep.subr.mxu0 0.0
    %1992 = vmatpush2.msra.mxu0 0.0
    %1993 = vmatprep.subr.mxu0 0.0
    %1994 = vmatpush2.msra.mxu0 0.0
    %1995 = vmatprep.subr.mxu0 0.0
    %1996 = vmatpush2.msra.mxu0 0.0
    %1997 = vmatprep.subr.mxu0 0.0
    %1998 = vmatpush2.msra.mxu0 0.0
    %1999 = vmatprep.subr.mxu0 0.0
    %2000 = vmatpush2.msra.mxu0 0.0
    %2001 = vmatprep.subr.mxu0 0.0
    %2002 = vmatpush2.msra.mxu0 0.0
    %2003 = vmatprep.mubr.f32.mxu0 0.0
    %v2004 = vand.u32 %v1926, 4294901760
    %v2005 = vsub.f32 %v1926, %v2004
    %v2006 = vand.u32 %v2005, 4294901760
    %v2007 = vsub.f32 %v2005, %v2006
    %v2008 = vand.u32 %v2007, 4294901760
    %2009 = vmatmul.mubr.f32.gmra.mxu0 %v2008
    %v2010 = vpop.f32.mrf.mxu0
    %v2011 = vadd.f32 0.0, %v2010
    %v2012 = vpop.f32.mrf.mxu0
    %2013 = vmatprep.mubr.f32.mxu0 0.0
    %v2014 = vand.u32 %v1929, 4294901760
    %v2015 = vsub.f32 %v1929, %v2014
    %v2016 = vand.u32 %v2015, 4294901760
    %v2017 = vsub.f32 %v2015, %v2016
    %v2018 = vand.u32 %v2017, 4294901760
    %2019 = vmatmul.mubr.f32.gmra.mxu0 %v2018
    %v2020 = vpop.f32.mrf.mxu0
    %v2021 = vadd.f32 0.0, %v2020
    %v2022 = vpop.f32.mrf.mxu0
    %2023 = vmatprep.mubr.f32.mxu0 0.0
    %v2024 = vand.u32 %v1932, 4294901760
    %v2025 = vsub.f32 %v1932, %v2024
    %v2026 = vand.u32 %v2025, 4294901760
    %v2027 = vsub.f32 %v2025, %v2026
    %v2028 = vand.u32 %v2027, 4294901760
    %2029 = vmatmul.mubr.f32.gmra.mxu0 %v2028
    %v2030 = vpop.f32.mrf.mxu0
    %v2031 = vadd.f32 0.0, %v2030
    %v2032 = vpop.f32.mrf.mxu0
    %2033 = vmatprep.mubr.f32.mxu0 0.0
    %v2034 = vand.u32 %v1935, 4294901760
    %v2035 = vsub.f32 %v1935, %v2034
    %v2036 = vand.u32 %v2035, 4294901760
    %v2037 = vsub.f32 %v2035, %v2036
    %v2038 = vand.u32 %v2037, 4294901760
    %2039 = vmatmul.mubr.f32.gmra.mxu0 %v2038
    %v2040 = vpop.f32.mrf.mxu0
    %v2041 = vadd.f32 0.0, %v2040
    %v2042 = vpop.f32.mrf.mxu0
    %2043 = vdwg.mxu0
    %2044 = vmatprep.subr.mxu0 0.0
    %2045 = vmatpush1.msra.mxu0 0.0
    %2046 = vmatprep.subr.mxu0 0.0
    %2047 = vmatpush1.msra.mxu0 0.0
    %2048 = vmatprep.subr.mxu0 0.0
    %2049 = vmatpush1.msra.mxu0 0.0
    %2050 = vmatprep.subr.mxu0 0.0
    %2051 = vmatpush1.msra.mxu0 0.0
    %2052 = vmatprep.subr.mxu0 0.0
    %2053 = vmatpush1.msra.mxu0 0.0
    %2054 = vmatprep.subr.mxu0 0.0
    %2055 = vmatpush1.msra.mxu0 0.0
    %2056 = vmatprep.subr.mxu0 0.0
    %2057 = vmatpush1.msra.mxu0 0.0
    %2058 = vmatprep.subr.mxu0 0.0
    %2059 = vmatpush1.msra.mxu0 0.0
    %2060 = vmatprep.subr.mxu0 0.0
    %2061 = vmatpush1.msra.mxu0 0.0
    %2062 = vmatprep.subr.mxu0 0.0
    %2063 = vmatpush1.msra.mxu0 0.0
    %2064 = vmatprep.subr.mxu0 0.0
    %2065 = vmatpush1.msra.mxu0 0.0
    %2066 = vmatprep.subr.mxu0 0.0
    %2067 = vmatpush1.msra.mxu0 0.0
    %2068 = vmatprep.subr.mxu0 0.0
    %2069 = vmatpush1.msra.mxu0 0.0
    %2070 = vmatprep.subr.mxu0 0.0
    %2071 = vmatpush1.msra.mxu0 0.0
    %2072 = vmatprep.subr.mxu0 0.0
    %v2073 = vand.u32 %v1924, 4294901760
    %v2074 = vsub.f32 %v1924, %v2073
    %v2075 = vand.u32 %v2074, 4294901760
    %v2076 = vsub.f32 %v2074, %v2075
    %v2077 = vand.u32 %v2076, 4294901760
    %2078 = vmatpush1.msra.mxu0 %v2077
    %2079 = vmatprep.subr.mxu0 0.0
    %v2080 = vand.u32 %v1923, 4294901760
    %v2081 = vsub.f32 %v1923, %v2080
    %v2082 = vand.u32 %v2081, 4294901760
    %v2083 = vsub.f32 %v2081, %v2082
    %v2084 = vand.u32 %v2083, 4294901760
    %2085 = vmatpush1.msra.mxu0 %v2084
    %2086 = vmatprep.subr.mxu0 0.0
    %2087 = vmatpush2.msra.mxu0 0.0
    %2088 = vmatprep.subr.mxu0 0.0
    %2089 = vmatpush2.msra.mxu0 0.0
    %2090 = vmatprep.subr.mxu0 0.0
    %2091 = vmatpush2.msra.mxu0 0.0
    %2092 = vmatprep.subr.mxu0 0.0
    %2093 = vmatpush2.msra.mxu0 0.0
    %2094 = vmatprep.subr.mxu0 0.0
    %2095 = vmatpush2.msra.mxu0 0.0
    %2096 = vmatprep.subr.mxu0 0.0
    %2097 = vmatpush2.msra.mxu0 0.0
    %2098 = vmatprep.subr.mxu0 0.0
    %2099 = vmatpush2.msra.mxu0 0.0
    %2100 = vmatprep.subr.mxu0 0.0
    %2101 = vmatpush2.msra.mxu0 0.0
    %2102 = vmatprep.subr.mxu0 0.0
    %2103 = vmatpush2.msra.mxu0 0.0
    %2104 = vmatprep.subr.mxu0 0.0
    %2105 = vmatpush2.msra.mxu0 0.0
    %2106 = vmatprep.subr.mxu0 0.0
    %2107 = vmatpush2.msra.mxu0 0.0
    %2108 = vmatprep.subr.mxu0 0.0
    %2109 = vmatpush2.msra.mxu0 0.0
    %2110 = vmatprep.subr.mxu0 0.0
    %2111 = vmatpush2.msra.mxu0 0.0
    %2112 = vmatprep.subr.mxu0 0.0
    %2113 = vmatpush2.msra.mxu0 0.0
    %2114 = vmatprep.subr.mxu0 0.0
    %2115 = vmatpush2.msra.mxu0 0.0
    %2116 = vmatprep.subr.mxu0 0.0
    %2117 = vmatpush2.msra.mxu0 0.0
    %2118 = vmatprep.mubr.f32.mxu0 0.0
    %v2119 = vand.u32 %v1926, 4294901760
    %2120 = vmatmul.mubr.f32.gmra.mxu0 %v2119
    %v2121 = vpop.f32.mrf.mxu0
    %v2122 = vadd.f32 %v2011, %v2121
    %v2123 = vpop.f32.mrf.mxu0
    %2124 = vmatprep.mubr.f32.mxu0 0.0
    %v2125 = vand.u32 %v1929, 4294901760
    %2126 = vmatmul.mubr.f32.gmra.mxu0 %v2125
    %v2127 = vpop.f32.mrf.mxu0
    %v2128 = vadd.f32 %v2021, %v2127
    %v2129 = vpop.f32.mrf.mxu0
    %2130 = vmatprep.mubr.f32.mxu0 0.0
    %v2131 = vand.u32 %v1932, 4294901760
    %2132 = vmatmul.mubr.f32.gmra.mxu0 %v2131
    %v2133 = vpop.f32.mrf.mxu0
    %v2134 = vadd.f32 %v2031, %v2133
    %v2135 = vpop.f32.mrf.mxu0
    %2136 = vmatprep.mubr.f32.mxu0 0.0
    %v2137 = vand.u32 %v1935, 4294901760
    %2138 = vmatmul.mubr.f32.gmra.mxu0 %v2137
    %v2139 = vpop.f32.mrf.mxu0
    %v2140 = vadd.f32 %v2041, %v2139
    %v2141 = vpop.f32.mrf.mxu0
    %2142 = vdwg.mxu0
    %2143 = vmatprep.subr.mxu0 0.0
    %2144 = vmatpush1.msra.mxu0 0.0
    %2145 = vmatprep.subr.mxu0 0.0
    %2146 = vmatpush1.msra.mxu0 0.0
    %2147 = vmatprep.subr.mxu0 0.0
    %2148 = vmatpush1.msra.mxu0 0.0
    %2149 = vmatprep.subr.mxu0 0.0
    %2150 = vmatpush1.msra.mxu0 0.0
    %2151 = vmatprep.subr.mxu0 0.0
    %2152 = vmatpush1.msra.mxu0 0.0
    %2153 = vmatprep.subr.mxu0 0.0
    %2154 = vmatpush1.msra.mxu0 0.0
    %2155 = vmatprep.subr.mxu0 0.0
    %2156 = vmatpush1.msra.mxu0 0.0
    %2157 = vmatprep.subr.mxu0 0.0
    %2158 = vmatpush1.msra.mxu0 0.0
    %2159 = vmatprep.subr.mxu0 0.0
    %2160 = vmatpush1.msra.mxu0 0.0
    %2161 = vmatprep.subr.mxu0 0.0
    %2162 = vmatpush1.msra.mxu0 0.0
    %2163 = vmatprep.subr.mxu0 0.0
    %2164 = vmatpush1.msra.mxu0 0.0
    %2165 = vmatprep.subr.mxu0 0.0
    %2166 = vmatpush1.msra.mxu0 0.0
    %2167 = vmatprep.subr.mxu0 0.0
    %2168 = vmatpush1.msra.mxu0 0.0
    %2169 = vmatprep.subr.mxu0 0.0
    %2170 = vmatpush1.msra.mxu0 0.0
    %2171 = vmatprep.subr.mxu0 0.0
    %v2172 = vand.u32 %v1924, 4294901760
    %v2173 = vsub.f32 %v1924, %v2172
    %2174 = vmatpush1.msra.mxu0 %v2173
    %2175 = vmatprep.subr.mxu0 0.0
    %v2176 = vand.u32 %v1923, 4294901760
    %v2177 = vsub.f32 %v1923, %v2176
    %2178 = vmatpush1.msra.mxu0 %v2177
    %2179 = vmatprep.subr.mxu0 0.0
    %2180 = vmatpush2.msra.mxu0 0.0
    %2181 = vmatprep.subr.mxu0 0.0
    %2182 = vmatpush2.msra.mxu0 0.0
    %2183 = vmatprep.subr.mxu0 0.0
    %2184 = vmatpush2.msra.mxu0 0.0
    %2185 = vmatprep.subr.mxu0 0.0
    %2186 = vmatpush2.msra.mxu0 0.0
    %2187 = vmatprep.subr.mxu0 0.0
    %2188 = vmatpush2.msra.mxu0 0.0
    %2189 = vmatprep.subr.mxu0 0.0
    %2190 = vmatpush2.msra.mxu0 0.0
    %2191 = vmatprep.subr.mxu0 0.0
    %2192 = vmatpush2.msra.mxu0 0.0
    %2193 = vmatprep.subr.mxu0 0.0
    %2194 = vmatpush2.msra.mxu0 0.0
    %2195 = vmatprep.subr.mxu0 0.0
    %2196 = vmatpush2.msra.mxu0 0.0
    %2197 = vmatprep.subr.mxu0 0.0
    %2198 = vmatpush2.msra.mxu0 0.0
    %2199 = vmatprep.subr.mxu0 0.0
    %2200 = vmatpush2.msra.mxu0 0.0
    %2201 = vmatprep.subr.mxu0 0.0
    %2202 = vmatpush2.msra.mxu0 0.0
    %2203 = vmatprep.subr.mxu0 0.0
    %2204 = vmatpush2.msra.mxu0 0.0
    %2205 = vmatprep.subr.mxu0 0.0
    %2206 = vmatpush2.msra.mxu0 0.0
    %2207 = vmatprep.subr.mxu0 0.0
    %2208 = vmatpush2.msra.mxu0 0.0
    %2209 = vmatprep.subr.mxu0 0.0
    %2210 = vmatpush2.msra.mxu0 0.0
    %2211 = vmatprep.mubr.f32.mxu0 0.0
    %v2212 = vand.u32 %v1926, 4294901760
    %v2213 = vsub.f32 %v1926, %v2212
    %2214 = vmatmul.mubr.f32.gmra.mxu0 %v2213
    %v2215 = vpop.f32.mrf.mxu0
    %v2216 = vadd.f32 %v2122, %v2215
    %v2217 = vpop.f32.mrf.mxu0
    %2218 = vmatprep.mubr.f32.mxu0 0.0
    %v2219 = vand.u32 %v1929, 4294901760
    %v2220 = vsub.f32 %v1929, %v2219
    %2221 = vmatmul.mubr.f32.gmra.mxu0 %v2220
    %v2222 = vpop.f32.mrf.mxu0
    %v2223 = vadd.f32 %v2128, %v2222
    %v2224 = vpop.f32.mrf.mxu0
    %2225 = vmatprep.mubr.f32.mxu0 0.0
    %v2226 = vand.u32 %v1932, 4294901760
    %v2227 = vsub.f32 %v1932, %v2226
    %2228 = vmatmul.mubr.f32.gmra.mxu0 %v2227
    %v2229 = vpop.f32.mrf.mxu0
    %v2230 = vadd.f32 %v2134, %v2229
    %v2231 = vpop.f32.mrf.mxu0
    %2232 = vmatprep.mubr.f32.mxu0 0.0
    %v2233 = vand.u32 %v1935, 4294901760
    %v2234 = vsub.f32 %v1935, %v2233
    %2235 = vmatmul.mubr.f32.gmra.mxu0 %v2234
    %v2236 = vpop.f32.mrf.mxu0
    %v2237 = vadd.f32 %v2140, %v2236
    %v2238 = vpop.f32.mrf.mxu0
    %2239 = vdwg.mxu0
    %2240 = vmatprep.subr.mxu0 0.0
    %2241 = vmatpush1.msra.mxu0 0.0
    %2242 = vmatprep.subr.mxu0 0.0
    %2243 = vmatpush1.msra.mxu0 0.0
    %2244 = vmatprep.subr.mxu0 0.0
    %2245 = vmatpush1.msra.mxu0 0.0
    %2246 = vmatprep.subr.mxu0 0.0
    %2247 = vmatpush1.msra.mxu0 0.0
    %2248 = vmatprep.subr.mxu0 0.0
    %2249 = vmatpush1.msra.mxu0 0.0
    %2250 = vmatprep.subr.mxu0 0.0
    %2251 = vmatpush1.msra.mxu0 0.0
    %2252 = vmatprep.subr.mxu0 0.0
    %2253 = vmatpush1.msra.mxu0 0.0
    %2254 = vmatprep.subr.mxu0 0.0
    %2255 = vmatpush1.msra.mxu0 0.0
    %2256 = vmatprep.subr.mxu0 0.0
    %2257 = vmatpush1.msra.mxu0 0.0
    %2258 = vmatprep.subr.mxu0 0.0
    %2259 = vmatpush1.msra.mxu0 0.0
    %2260 = vmatprep.subr.mxu0 0.0
    %2261 = vmatpush1.msra.mxu0 0.0
    %2262 = vmatprep.subr.mxu0 0.0
    %2263 = vmatpush1.msra.mxu0 0.0
    %2264 = vmatprep.subr.mxu0 0.0
    %2265 = vmatpush1.msra.mxu0 0.0
    %2266 = vmatprep.subr.mxu0 0.0
    %2267 = vmatpush1.msra.mxu0 0.0
    %2268 = vmatprep.subr.mxu0 0.0
    %v2269 = vand.u32 %v1924, 4294901760
    %2270 = vmatpush1.msra.mxu0 %v2269
    %2271 = vmatprep.subr.mxu0 0.0
    %v2272 = vand.u32 %v1923, 4294901760
    %2273 = vmatpush1.msra.mxu0 %v2272
    %2274 = vmatprep.subr.mxu0 0.0
    %2275 = vmatpush2.msra.mxu0 0.0
    %2276 = vmatprep.subr.mxu0 0.0
    %2277 = vmatpush2.msra.mxu0 0.0
    %2278 = vmatprep.subr.mxu0 0.0
    %2279 = vmatpush2.msra.mxu0 0.0
    %2280 = vmatprep.subr.mxu0 0.0
    %2281 = vmatpush2.msra.mxu0 0.0
    %2282 = vmatprep.subr.mxu0 0.0
    %2283 = vmatpush2.msra.mxu0 0.0
    %2284 = vmatprep.subr.mxu0 0.0
    %2285 = vmatpush2.msra.mxu0 0.0
    %2286 = vmatprep.subr.mxu0 0.0
    %2287 = vmatpush2.msra.mxu0 0.0
    %2288 = vmatprep.subr.mxu0 0.0
    %2289 = vmatpush2.msra.mxu0 0.0
    %2290 = vmatprep.subr.mxu0 0.0
    %2291 = vmatpush2.msra.mxu0 0.0
    %2292 = vmatprep.subr.mxu0 0.0
    %2293 = vmatpush2.msra.mxu0 0.0
    %2294 = vmatprep.subr.mxu0 0.0
    %2295 = vmatpush2.msra.mxu0 0.0
    %2296 = vmatprep.subr.mxu0 0.0
    %2297 = vmatpush2.msra.mxu0 0.0
    %2298 = vmatprep.subr.mxu0 0.0
    %2299 = vmatpush2.msra.mxu0 0.0
    %2300 = vmatprep.subr.mxu0 0.0
    %2301 = vmatpush2.msra.mxu0 0.0
    %2302 = vmatprep.subr.mxu0 0.0
    %2303 = vmatpush2.msra.mxu0 0.0
    %2304 = vmatprep.subr.mxu0 0.0
    %2305 = vmatpush2.msra.mxu0 0.0
    %2306 = vmatprep.mubr.f32.mxu0 0.0
    %v2307 = vand.u32 %v1926, 4294901760
    %v2308 = vsub.f32 %v1926, %v2307
    %v2309 = vand.u32 %v2308, 4294901760
    %2310 = vmatmul.mubr.f32.gmra.mxu0 %v2309
    %v2311 = vpop.f32.mrf.mxu0
    %v2312 = vadd.f32 %v2216, %v2311
    %v2313 = vpop.f32.mrf.mxu0
    %2314 = vmatprep.mubr.f32.mxu0 0.0
    %v2315 = vand.u32 %v1929, 4294901760
    %v2316 = vsub.f32 %v1929, %v2315
    %v2317 = vand.u32 %v2316, 4294901760
    %2318 = vmatmul.mubr.f32.gmra.mxu0 %v2317
    %v2319 = vpop.f32.mrf.mxu0
    %v2320 = vadd.f32 %v2223, %v2319
    %v2321 = vpop.f32.mrf.mxu0
    %2322 = vmatprep.mubr.f32.mxu0 0.0
    %v2323 = vand.u32 %v1932, 4294901760
    %v2324 = vsub.f32 %v1932, %v2323
    %v2325 = vand.u32 %v2324, 4294901760
    %2326 = vmatmul.mubr.f32.gmra.mxu0 %v2325
    %v2327 = vpop.f32.mrf.mxu0
    %v2328 = vadd.f32 %v2230, %v2327
    %v2329 = vpop.f32.mrf.mxu0
    %2330 = vmatprep.mubr.f32.mxu0 0.0
    %v2331 = vand.u32 %v1935, 4294901760
    %v2332 = vsub.f32 %v1935, %v2331
    %v2333 = vand.u32 %v2332, 4294901760
    %2334 = vmatmul.mubr.f32.gmra.mxu0 %v2333
    %v2335 = vpop.f32.mrf.mxu0
    %v2336 = vadd.f32 %v2237, %v2335
    %v2337 = vpop.f32.mrf.mxu0
    %2338 = vdwg.mxu0
    %2339 = vmatprep.subr.mxu0 0.0
    %2340 = vmatpush1.msra.mxu0 0.0
    %2341 = vmatprep.subr.mxu0 0.0
    %2342 = vmatpush1.msra.mxu0 0.0
    %2343 = vmatprep.subr.mxu0 0.0
    %2344 = vmatpush1.msra.mxu0 0.0
    %2345 = vmatprep.subr.mxu0 0.0
    %2346 = vmatpush1.msra.mxu0 0.0
    %2347 = vmatprep.subr.mxu0 0.0
    %2348 = vmatpush1.msra.mxu0 0.0
    %2349 = vmatprep.subr.mxu0 0.0
    %2350 = vmatpush1.msra.mxu0 0.0
    %2351 = vmatprep.subr.mxu0 0.0
    %2352 = vmatpush1.msra.mxu0 0.0
    %2353 = vmatprep.subr.mxu0 0.0
    %2354 = vmatpush1.msra.mxu0 0.0
    %2355 = vmatprep.subr.mxu0 0.0
    %2356 = vmatpush1.msra.mxu0 0.0
    %2357 = vmatprep.subr.mxu0 0.0
    %2358 = vmatpush1.msra.mxu0 0.0
    %2359 = vmatprep.subr.mxu0 0.0
    %2360 = vmatpush1.msra.mxu0 0.0
    %2361 = vmatprep.subr.mxu0 0.0
    %2362 = vmatpush1.msra.mxu0 0.0
    %2363 = vmatprep.subr.mxu0 0.0
    %2364 = vmatpush1.msra.mxu0 0.0
    %2365 = vmatprep.subr.mxu0 0.0
    %2366 = vmatpush1.msra.mxu0 0.0
    %2367 = vmatprep.subr.mxu0 0.0
    %v2368 = vand.u32 %v1924, 4294901760
    %v2369 = vsub.f32 %v1924, %v2368
    %v2370 = vand.u32 %v2369, 4294901760
    %2371 = vmatpush1.msra.mxu0 %v2370
    %2372 = vmatprep.subr.mxu0 0.0
    %v2373 = vand.u32 %v1923, 4294901760
    %v2374 = vsub.f32 %v1923, %v2373
    %v2375 = vand.u32 %v2374, 4294901760
    %2376 = vmatpush1.msra.mxu0 %v2375
    %2377 = vmatprep.subr.mxu0 0.0
    %2378 = vmatpush2.msra.mxu0 0.0
    %2379 = vmatprep.subr.mxu0 0.0
    %2380 = vmatpush2.msra.mxu0 0.0
    %2381 = vmatprep.subr.mxu0 0.0
    %2382 = vmatpush2.msra.mxu0 0.0
    %2383 = vmatprep.subr.mxu0 0.0
    %2384 = vmatpush2.msra.mxu0 0.0
    %2385 = vmatprep.subr.mxu0 0.0
    %2386 = vmatpush2.msra.mxu0 0.0
    %2387 = vmatprep.subr.mxu0 0.0
    %2388 = vmatpush2.msra.mxu0 0.0
    %2389 = vmatprep.subr.mxu0 0.0
    %2390 = vmatpush2.msra.mxu0 0.0
    %2391 = vmatprep.subr.mxu0 0.0
    %2392 = vmatpush2.msra.mxu0 0.0
    %2393 = vmatprep.subr.mxu0 0.0
    %2394 = vmatpush2.msra.mxu0 0.0
    %2395 = vmatprep.subr.mxu0 0.0
    %2396 = vmatpush2.msra.mxu0 0.0
    %2397 = vmatprep.subr.mxu0 0.0
    %2398 = vmatpush2.msra.mxu0 0.0
    %2399 = vmatprep.subr.mxu0 0.0
    %2400 = vmatpush2.msra.mxu0 0.0
    %2401 = vmatprep.subr.mxu0 0.0
    %2402 = vmatpush2.msra.mxu0 0.0
    %2403 = vmatprep.subr.mxu0 0.0
    %2404 = vmatpush2.msra.mxu0 0.0
    %2405 = vmatprep.subr.mxu0 0.0
    %2406 = vmatpush2.msra.mxu0 0.0
    %2407 = vmatprep.subr.mxu0 0.0
    %2408 = vmatpush2.msra.mxu0 0.0
    %2409 = vmatprep.mubr.f32.mxu0 0.0
    %v2410 = vand.u32 %v1926, 4294901760
    %2411 = vmatmul.mubr.f32.gmra.mxu0 %v2410
    %v2412 = vpop.f32.mrf.mxu0
    %v2413 = vadd.f32 %v2312, %v2412
    %v2414 = vpop.f32.mrf.mxu0
    %2415 = vmatprep.mubr.f32.mxu0 0.0
    %v2416 = vand.u32 %v1929, 4294901760
    %2417 = vmatmul.mubr.f32.gmra.mxu0 %v2416
    %v2418 = vpop.f32.mrf.mxu0
    %v2419 = vadd.f32 %v2320, %v2418
    %v2420 = vpop.f32.mrf.mxu0
    %2421 = vmatprep.mubr.f32.mxu0 0.0
    %v2422 = vand.u32 %v1932, 4294901760
    %2423 = vmatmul.mubr.f32.gmra.mxu0 %v2422
    %v2424 = vpop.f32.mrf.mxu0
    %v2425 = vadd.f32 %v2328, %v2424
    %v2426 = vpop.f32.mrf.mxu0
    %2427 = vmatprep.mubr.f32.mxu0 0.0
    %v2428 = vand.u32 %v1935, 4294901760
    %2429 = vmatmul.mubr.f32.gmra.mxu0 %v2428
    %v2430 = vpop.f32.mrf.mxu0
    %v2431 = vadd.f32 %v2336, %v2430
    %v2432 = vpop.f32.mrf.mxu0
    %2433 = vdwg.mxu0
    %2434 = vmatprep.subr.mxu0 0.0
    %2435 = vmatpush1.msra.mxu0 0.0
    %2436 = vmatprep.subr.mxu0 0.0
    %2437 = vmatpush1.msra.mxu0 0.0
    %2438 = vmatprep.subr.mxu0 0.0
    %2439 = vmatpush1.msra.mxu0 0.0
    %2440 = vmatprep.subr.mxu0 0.0
    %2441 = vmatpush1.msra.mxu0 0.0
    %2442 = vmatprep.subr.mxu0 0.0
    %2443 = vmatpush1.msra.mxu0 0.0
    %2444 = vmatprep.subr.mxu0 0.0
    %2445 = vmatpush1.msra.mxu0 0.0
    %2446 = vmatprep.subr.mxu0 0.0
    %2447 = vmatpush1.msra.mxu0 0.0
    %2448 = vmatprep.subr.mxu0 0.0
    %2449 = vmatpush1.msra.mxu0 0.0
    %2450 = vmatprep.subr.mxu0 0.0
    %2451 = vmatpush1.msra.mxu0 0.0
    %2452 = vmatprep.subr.mxu0 0.0
    %2453 = vmatpush1.msra.mxu0 0.0
    %2454 = vmatprep.subr.mxu0 0.0
    %2455 = vmatpush1.msra.mxu0 0.0
    %2456 = vmatprep.subr.mxu0 0.0
    %2457 = vmatpush1.msra.mxu0 0.0
    %2458 = vmatprep.subr.mxu0 0.0
    %2459 = vmatpush1.msra.mxu0 0.0
    %2460 = vmatprep.subr.mxu0 0.0
    %2461 = vmatpush1.msra.mxu0 0.0
    %2462 = vmatprep.subr.mxu0 0.0
    %v2463 = vand.u32 %v1924, 4294901760
    %2464 = vmatpush1.msra.mxu0 %v2463
    %2465 = vmatprep.subr.mxu0 0.0
    %v2466 = vand.u32 %v1923, 4294901760
    %2467 = vmatpush1.msra.mxu0 %v2466
    %2468 = vmatprep.subr.mxu0 0.0
    %2469 = vmatpush2.msra.mxu0 0.0
    %2470 = vmatprep.subr.mxu0 0.0
    %2471 = vmatpush2.msra.mxu0 0.0
    %2472 = vmatprep.subr.mxu0 0.0
    %2473 = vmatpush2.msra.mxu0 0.0
    %2474 = vmatprep.subr.mxu0 0.0
    %2475 = vmatpush2.msra.mxu0 0.0
    %2476 = vmatprep.subr.mxu0 0.0
    %2477 = vmatpush2.msra.mxu0 0.0
    %2478 = vmatprep.subr.mxu0 0.0
    %2479 = vmatpush2.msra.mxu0 0.0
    %2480 = vmatprep.subr.mxu0 0.0
    %2481 = vmatpush2.msra.mxu0 0.0
    %2482 = vmatprep.subr.mxu0 0.0
    %2483 = vmatpush2.msra.mxu0 0.0
    %2484 = vmatprep.subr.mxu0 0.0
    %2485 = vmatpush2.msra.mxu0 0.0
    %2486 = vmatprep.subr.mxu0 0.0
    %2487 = vmatpush2.msra.mxu0 0.0
    %2488 = vmatprep.subr.mxu0 0.0
    %2489 = vmatpush2.msra.mxu0 0.0
    %2490 = vmatprep.subr.mxu0 0.0
    %2491 = vmatpush2.msra.mxu0 0.0
    %2492 = vmatprep.subr.mxu0 0.0
    %2493 = vmatpush2.msra.mxu0 0.0
    %2494 = vmatprep.subr.mxu0 0.0
    %2495 = vmatpush2.msra.mxu0 0.0
    %2496 = vmatprep.subr.mxu0 0.0
    %2497 = vmatpush2.msra.mxu0 0.0
    %2498 = vmatprep.subr.mxu0 0.0
    %2499 = vmatpush2.msra.mxu0 0.0
    %2500 = vmatprep.mubr.f32.mxu0 0.0
    %v2501 = vand.u32 %v1926, 4294901760
    %2502 = vmatmul.mubr.f32.gmra.mxu0 %v2501
    %v2503 = vpop.f32.mrf.mxu0
    %v2504 = vadd.f32 %v2413, %v2503
    %v2505 = vpop.f32.mrf.mxu0
    %2506 = vmatprep.mubr.f32.mxu0 0.0
    %v2507 = vand.u32 %v1929, 4294901760
    %2508 = vmatmul.mubr.f32.gmra.mxu0 %v2507
    %v2509 = vpop.f32.mrf.mxu0
    %v2510 = vadd.f32 %v2419, %v2509
    %v2511 = vpop.f32.mrf.mxu0
    %2512 = vmatprep.mubr.f32.mxu0 0.0
    %v2513 = vand.u32 %v1932, 4294901760
    %2514 = vmatmul.mubr.f32.gmra.mxu0 %v2513
    %v2515 = vpop.f32.mrf.mxu0
    %v2516 = vadd.f32 %v2425, %v2515
    %v2517 = vpop.f32.mrf.mxu0
    %2518 = vmatprep.mubr.f32.mxu0 0.0
    %v2519 = vand.u32 %v1935, 4294901760
    %2520 = vmatmul.mubr.f32.gmra.mxu0 %v2519
    %v2521 = vpop.f32.mrf.mxu0
    %v2522 = vadd.f32 %v2431, %v2521
    %v2523 = vpop.f32.mrf.mxu0
    %2524 = vdwg.mxu0
    %v2525 = vadd.f32 %v1914, %v2504
    %v2526 = vadd.f32 %v1915, %v2510
    %v2527 = vadd.f32 %v1916, %v2516
    %v2528 = vadd.f32 %v1917, %v2522
    %v2529 = vld [vmem:[#allocation2 + $0x4] sm:$0xff]
    %v2530 = vld [vmem:[#allocation2 + $0xc] sm:$0xff]
    %v2531 = vld [vmem:[#allocation2 + $0x1c] sm:$0xff]
    %v2532 = vld [vmem:[#allocation2 + $0x24] sm:$0xff]
    %s2533 = scalar_lea.vmem [#allocation9], 64
    %v2534 = vld [vmem:[%s2533] sm:$0xff]
    %v2535 = vld [vmem:[%s2533 + $0x8] sm:$0xff]
    %v2537 = vsel %vm89, %v2529, 0
    %v2540 = vsel %vm89, %v2530, 0
    %v2543 = vsel %vm89, %v2531, 0
    %v2546 = vsel %vm89, %v2532, 0
    %2548 = vmatprep.subr.mxu0 0.0
    %2549 = vmatpush1.msra.mxu0 0.0
    %2550 = vmatprep.subr.mxu0 0.0
    %2551 = vmatpush1.msra.mxu0 0.0
    %2552 = vmatprep.subr.mxu0 0.0
    %2553 = vmatpush1.msra.mxu0 0.0
    %2554 = vmatprep.subr.mxu0 0.0
    %2555 = vmatpush1.msra.mxu0 0.0
    %2556 = vmatprep.subr.mxu0 0.0
    %2557 = vmatpush1.msra.mxu0 0.0
    %2558 = vmatprep.subr.mxu0 0.0
    %2559 = vmatpush1.msra.mxu0 0.0
    %2560 = vmatprep.subr.mxu0 0.0
    %2561 = vmatpush1.msra.mxu0 0.0
    %2562 = vmatprep.subr.mxu0 0.0
    %2563 = vmatpush1.msra.mxu0 0.0
    %2564 = vmatprep.subr.mxu0 0.0
    %2565 = vmatpush1.msra.mxu0 0.0
    %2566 = vmatprep.subr.mxu0 0.0
    %2567 = vmatpush1.msra.mxu0 0.0
    %2568 = vmatprep.subr.mxu0 0.0
    %2569 = vmatpush1.msra.mxu0 0.0
    %2570 = vmatprep.subr.mxu0 0.0
    %2571 = vmatpush1.msra.mxu0 0.0
    %2572 = vmatprep.subr.mxu0 0.0
    %2573 = vmatpush1.msra.mxu0 0.0
    %2574 = vmatprep.subr.mxu0 0.0
    %2575 = vmatpush1.msra.mxu0 0.0
    %2576 = vmatprep.subr.mxu0 0.0
    %v2577 = vand.u32 %v2535, 4294901760
    %2578 = vmatpush1.msra.mxu0 %v2577
    %2579 = vmatprep.subr.mxu0 0.0
    %v2580 = vand.u32 %v2534, 4294901760
    %2581 = vmatpush1.msra.mxu0 %v2580
    %2582 = vmatprep.subr.mxu0 0.0
    %2583 = vmatpush2.msra.mxu0 0.0
    %2584 = vmatprep.subr.mxu0 0.0
    %2585 = vmatpush2.msra.mxu0 0.0
    %2586 = vmatprep.subr.mxu0 0.0
    %2587 = vmatpush2.msra.mxu0 0.0
    %2588 = vmatprep.subr.mxu0 0.0
    %2589 = vmatpush2.msra.mxu0 0.0
    %2590 = vmatprep.subr.mxu0 0.0
    %2591 = vmatpush2.msra.mxu0 0.0
    %2592 = vmatprep.subr.mxu0 0.0
    %2593 = vmatpush2.msra.mxu0 0.0
    %2594 = vmatprep.subr.mxu0 0.0
    %2595 = vmatpush2.msra.mxu0 0.0
    %2596 = vmatprep.subr.mxu0 0.0
    %2597 = vmatpush2.msra.mxu0 0.0
    %2598 = vmatprep.subr.mxu0 0.0
    %2599 = vmatpush2.msra.mxu0 0.0
    %2600 = vmatprep.subr.mxu0 0.0
    %2601 = vmatpush2.msra.mxu0 0.0
    %2602 = vmatprep.subr.mxu0 0.0
    %2603 = vmatpush2.msra.mxu0 0.0
    %2604 = vmatprep.subr.mxu0 0.0
    %2605 = vmatpush2.msra.mxu0 0.0
    %2606 = vmatprep.subr.mxu0 0.0
    %2607 = vmatpush2.msra.mxu0 0.0
    %2608 = vmatprep.subr.mxu0 0.0
    %2609 = vmatpush2.msra.mxu0 0.0
    %2610 = vmatprep.subr.mxu0 0.0
    %2611 = vmatpush2.msra.mxu0 0.0
    %2612 = vmatprep.subr.mxu0 0.0
    %2613 = vmatpush2.msra.mxu0 0.0
    %2614 = vmatprep.mubr.f32.mxu0 0.0
    %v2615 = vand.u32 %v2537, 4294901760
    %v2616 = vsub.f32 %v2537, %v2615
    %v2617 = vand.u32 %v2616, 4294901760
    %v2618 = vsub.f32 %v2616, %v2617
    %v2619 = vand.u32 %v2618, 4294901760
    %2620 = vmatmul.mubr.f32.gmra.mxu0 %v2619
    %v2621 = vpop.f32.mrf.mxu0
    %v2622 = vadd.f32 0.0, %v2621
    %v2623 = vpop.f32.mrf.mxu0
    %2624 = vmatprep.mubr.f32.mxu0 0.0
    %v2625 = vand.u32 %v2540, 4294901760
    %v2626 = vsub.f32 %v2540, %v2625
    %v2627 = vand.u32 %v2626, 4294901760
    %v2628 = vsub.f32 %v2626, %v2627
    %v2629 = vand.u32 %v2628, 4294901760
    %2630 = vmatmul.mubr.f32.gmra.mxu0 %v2629
    %v2631 = vpop.f32.mrf.mxu0
    %v2632 = vadd.f32 0.0, %v2631
    %v2633 = vpop.f32.mrf.mxu0
    %2634 = vmatprep.mubr.f32.mxu0 0.0
    %v2635 = vand.u32 %v2543, 4294901760
    %v2636 = vsub.f32 %v2543, %v2635
    %v2637 = vand.u32 %v2636, 4294901760
    %v2638 = vsub.f32 %v2636, %v2637
    %v2639 = vand.u32 %v2638, 4294901760
    %2640 = vmatmul.mubr.f32.gmra.mxu0 %v2639
    %v2641 = vpop.f32.mrf.mxu0
    %v2642 = vadd.f32 0.0, %v2641
    %v2643 = vpop.f32.mrf.mxu0
    %2644 = vmatprep.mubr.f32.mxu0 0.0
    %v2645 = vand.u32 %v2546, 4294901760
    %v2646 = vsub.f32 %v2546, %v2645
    %v2647 = vand.u32 %v2646, 4294901760
    %v2648 = vsub.f32 %v2646, %v2647
    %v2649 = vand.u32 %v2648, 4294901760
    %2650 = vmatmul.mubr.f32.gmra.mxu0 %v2649
    %v2651 = vpop.f32.mrf.mxu0
    %v2652 = vadd.f32 0.0, %v2651
    %v2653 = vpop.f32.mrf.mxu0
    %2654 = vdwg.mxu0
    %2655 = vmatprep.subr.mxu0 0.0
    %2656 = vmatpush1.msra.mxu0 0.0
    %2657 = vmatprep.subr.mxu0 0.0
    %2658 = vmatpush1.msra.mxu0 0.0
    %2659 = vmatprep.subr.mxu0 0.0
    %2660 = vmatpush1.msra.mxu0 0.0
    %2661 = vmatprep.subr.mxu0 0.0
    %2662 = vmatpush1.msra.mxu0 0.0
    %2663 = vmatprep.subr.mxu0 0.0
    %2664 = vmatpush1.msra.mxu0 0.0
    %2665 = vmatprep.subr.mxu0 0.0
    %2666 = vmatpush1.msra.mxu0 0.0
    %2667 = vmatprep.subr.mxu0 0.0
    %2668 = vmatpush1.msra.mxu0 0.0
    %2669 = vmatprep.subr.mxu0 0.0
    %2670 = vmatpush1.msra.mxu0 0.0
    %2671 = vmatprep.subr.mxu0 0.0
    %2672 = vmatpush1.msra.mxu0 0.0
    %2673 = vmatprep.subr.mxu0 0.0
    %2674 = vmatpush1.msra.mxu0 0.0
    %2675 = vmatprep.subr.mxu0 0.0
    %2676 = vmatpush1.msra.mxu0 0.0
    %2677 = vmatprep.subr.mxu0 0.0
    %2678 = vmatpush1.msra.mxu0 0.0
    %2679 = vmatprep.subr.mxu0 0.0
    %2680 = vmatpush1.msra.mxu0 0.0
    %2681 = vmatprep.subr.mxu0 0.0
    %2682 = vmatpush1.msra.mxu0 0.0
    %2683 = vmatprep.subr.mxu0 0.0
    %v2684 = vand.u32 %v2535, 4294901760
    %v2685 = vsub.f32 %v2535, %v2684
    %v2686 = vand.u32 %v2685, 4294901760
    %v2687 = vsub.f32 %v2685, %v2686
    %v2688 = vand.u32 %v2687, 4294901760
    %2689 = vmatpush1.msra.mxu0 %v2688
    %2690 = vmatprep.subr.mxu0 0.0
    %v2691 = vand.u32 %v2534, 4294901760
    %v2692 = vsub.f32 %v2534, %v2691
    %v2693 = vand.u32 %v2692, 4294901760
    %v2694 = vsub.f32 %v2692, %v2693
    %v2695 = vand.u32 %v2694, 4294901760
    %2696 = vmatpush1.msra.mxu0 %v2695
    %2697 = vmatprep.subr.mxu0 0.0
    %2698 = vmatpush2.msra.mxu0 0.0
    %2699 = vmatprep.subr.mxu0 0.0
    %2700 = vmatpush2.msra.mxu0 0.0
    %2701 = vmatprep.subr.mxu0 0.0
    %2702 = vmatpush2.msra.mxu0 0.0
    %2703 = vmatprep.subr.mxu0 0.0
    %2704 = vmatpush2.msra.mxu0 0.0
    %2705 = vmatprep.subr.mxu0 0.0
    %2706 = vmatpush2.msra.mxu0 0.0
    %2707 = vmatprep.subr.mxu0 0.0
    %2708 = vmatpush2.msra.mxu0 0.0
    %2709 = vmatprep.subr.mxu0 0.0
    %2710 = vmatpush2.msra.mxu0 0.0
    %2711 = vmatprep.subr.mxu0 0.0
    %2712 = vmatpush2.msra.mxu0 0.0
    %2713 = vmatprep.subr.mxu0 0.0
    %2714 = vmatpush2.msra.mxu0 0.0
    %2715 = vmatprep.subr.mxu0 0.0
    %2716 = vmatpush2.msra.mxu0 0.0
    %2717 = vmatprep.subr.mxu0 0.0
    %2718 = vmatpush2.msra.mxu0 0.0
    %2719 = vmatprep.subr.mxu0 0.0
    %2720 = vmatpush2.msra.mxu0 0.0
    %2721 = vmatprep.subr.mxu0 0.0
    %2722 = vmatpush2.msra.mxu0 0.0
    %2723 = vmatprep.subr.mxu0 0.0
    %2724 = vmatpush2.msra.mxu0 0.0
    %2725 = vmatprep.subr.mxu0 0.0
    %2726 = vmatpush2.msra.mxu0 0.0
    %2727 = vmatprep.subr.mxu0 0.0
    %2728 = vmatpush2.msra.mxu0 0.0
    %2729 = vmatprep.mubr.f32.mxu0 0.0
    %v2730 = vand.u32 %v2537, 4294901760
    %2731 = vmatmul.mubr.f32.gmra.mxu0 %v2730
    %v2732 = vpop.f32.mrf.mxu0
    %v2733 = vadd.f32 %v2622, %v2732
    %v2734 = vpop.f32.mrf.mxu0
    %2735 = vmatprep.mubr.f32.mxu0 0.0
    %v2736 = vand.u32 %v2540, 4294901760
    %2737 = vmatmul.mubr.f32.gmra.mxu0 %v2736
    %v2738 = vpop.f32.mrf.mxu0
    %v2739 = vadd.f32 %v2632, %v2738
    %v2740 = vpop.f32.mrf.mxu0
    %2741 = vmatprep.mubr.f32.mxu0 0.0
    %v2742 = vand.u32 %v2543, 4294901760
    %2743 = vmatmul.mubr.f32.gmra.mxu0 %v2742
    %v2744 = vpop.f32.mrf.mxu0
    %v2745 = vadd.f32 %v2642, %v2744
    %v2746 = vpop.f32.mrf.mxu0
    %2747 = vmatprep.mubr.f32.mxu0 0.0
    %v2748 = vand.u32 %v2546, 4294901760
    %2749 = vmatmul.mubr.f32.gmra.mxu0 %v2748
    %v2750 = vpop.f32.mrf.mxu0
    %v2751 = vadd.f32 %v2652, %v2750
    %v2752 = vpop.f32.mrf.mxu0
    %2753 = vdwg.mxu0
    %2754 = vmatprep.subr.mxu0 0.0
    %2755 = vmatpush1.msra.mxu0 0.0
    %2756 = vmatprep.subr.mxu0 0.0
    %2757 = vmatpush1.msra.mxu0 0.0
    %2758 = vmatprep.subr.mxu0 0.0
    %2759 = vmatpush1.msra.mxu0 0.0
    %2760 = vmatprep.subr.mxu0 0.0
    %2761 = vmatpush1.msra.mxu0 0.0
    %2762 = vmatprep.subr.mxu0 0.0
    %2763 = vmatpush1.msra.mxu0 0.0
    %2764 = vmatprep.subr.mxu0 0.0
    %2765 = vmatpush1.msra.mxu0 0.0
    %2766 = vmatprep.subr.mxu0 0.0
    %2767 = vmatpush1.msra.mxu0 0.0
    %2768 = vmatprep.subr.mxu0 0.0
    %2769 = vmatpush1.msra.mxu0 0.0
    %2770 = vmatprep.subr.mxu0 0.0
    %2771 = vmatpush1.msra.mxu0 0.0
    %2772 = vmatprep.subr.mxu0 0.0
    %2773 = vmatpush1.msra.mxu0 0.0
    %2774 = vmatprep.subr.mxu0 0.0
    %2775 = vmatpush1.msra.mxu0 0.0
    %2776 = vmatprep.subr.mxu0 0.0
    %2777 = vmatpush1.msra.mxu0 0.0
    %2778 = vmatprep.subr.mxu0 0.0
    %2779 = vmatpush1.msra.mxu0 0.0
    %2780 = vmatprep.subr.mxu0 0.0
    %2781 = vmatpush1.msra.mxu0 0.0
    %2782 = vmatprep.subr.mxu0 0.0
    %v2783 = vand.u32 %v2535, 4294901760
    %v2784 = vsub.f32 %v2535, %v2783
    %2785 = vmatpush1.msra.mxu0 %v2784
    %2786 = vmatprep.subr.mxu0 0.0
    %v2787 = vand.u32 %v2534, 4294901760
    %v2788 = vsub.f32 %v2534, %v2787
    %2789 = vmatpush1.msra.mxu0 %v2788
    %2790 = vmatprep.subr.mxu0 0.0
    %2791 = vmatpush2.msra.mxu0 0.0
    %2792 = vmatprep.subr.mxu0 0.0
    %2793 = vmatpush2.msra.mxu0 0.0
    %2794 = vmatprep.subr.mxu0 0.0
    %2795 = vmatpush2.msra.mxu0 0.0
    %2796 = vmatprep.subr.mxu0 0.0
    %2797 = vmatpush2.msra.mxu0 0.0
    %2798 = vmatprep.subr.mxu0 0.0
    %2799 = vmatpush2.msra.mxu0 0.0
    %2800 = vmatprep.subr.mxu0 0.0
    %2801 = vmatpush2.msra.mxu0 0.0
    %2802 = vmatprep.subr.mxu0 0.0
    %2803 = vmatpush2.msra.mxu0 0.0
    %2804 = vmatprep.subr.mxu0 0.0
    %2805 = vmatpush2.msra.mxu0 0.0
    %2806 = vmatprep.subr.mxu0 0.0
    %2807 = vmatpush2.msra.mxu0 0.0
    %2808 = vmatprep.subr.mxu0 0.0
    %2809 = vmatpush2.msra.mxu0 0.0
    %2810 = vmatprep.subr.mxu0 0.0
    %2811 = vmatpush2.msra.mxu0 0.0
    %2812 = vmatprep.subr.mxu0 0.0
    %2813 = vmatpush2.msra.mxu0 0.0
    %2814 = vmatprep.subr.mxu0 0.0
    %2815 = vmatpush2.msra.mxu0 0.0
    %2816 = vmatprep.subr.mxu0 0.0
    %2817 = vmatpush2.msra.mxu0 0.0
    %2818 = vmatprep.subr.mxu0 0.0
    %2819 = vmatpush2.msra.mxu0 0.0
    %2820 = vmatprep.subr.mxu0 0.0
    %2821 = vmatpush2.msra.mxu0 0.0
    %2822 = vmatprep.mubr.f32.mxu0 0.0
    %v2823 = vand.u32 %v2537, 4294901760
    %v2824 = vsub.f32 %v2537, %v2823
    %2825 = vmatmul.mubr.f32.gmra.mxu0 %v2824
    %v2826 = vpop.f32.mrf.mxu0
    %v2827 = vadd.f32 %v2733, %v2826
    %v2828 = vpop.f32.mrf.mxu0
    %2829 = vmatprep.mubr.f32.mxu0 0.0
    %v2830 = vand.u32 %v2540, 4294901760
    %v2831 = vsub.f32 %v2540, %v2830
    %2832 = vmatmul.mubr.f32.gmra.mxu0 %v2831
    %v2833 = vpop.f32.mrf.mxu0
    %v2834 = vadd.f32 %v2739, %v2833
    %v2835 = vpop.f32.mrf.mxu0
    %2836 = vmatprep.mubr.f32.mxu0 0.0
    %v2837 = vand.u32 %v2543, 4294901760
    %v2838 = vsub.f32 %v2543, %v2837
    %2839 = vmatmul.mubr.f32.gmra.mxu0 %v2838
    %v2840 = vpop.f32.mrf.mxu0
    %v2841 = vadd.f32 %v2745, %v2840
    %v2842 = vpop.f32.mrf.mxu0
    %2843 = vmatprep.mubr.f32.mxu0 0.0
    %v2844 = vand.u32 %v2546, 4294901760
    %v2845 = vsub.f32 %v2546, %v2844
    %2846 = vmatmul.mubr.f32.gmra.mxu0 %v2845
    %v2847 = vpop.f32.mrf.mxu0
    %v2848 = vadd.f32 %v2751, %v2847
    %v2849 = vpop.f32.mrf.mxu0
    %2850 = vdwg.mxu0
    %2851 = vmatprep.subr.mxu0 0.0
    %2852 = vmatpush1.msra.mxu0 0.0
    %2853 = vmatprep.subr.mxu0 0.0
    %2854 = vmatpush1.msra.mxu0 0.0
    %2855 = vmatprep.subr.mxu0 0.0
    %2856 = vmatpush1.msra.mxu0 0.0
    %2857 = vmatprep.subr.mxu0 0.0
    %2858 = vmatpush1.msra.mxu0 0.0
    %2859 = vmatprep.subr.mxu0 0.0
    %2860 = vmatpush1.msra.mxu0 0.0
    %2861 = vmatprep.subr.mxu0 0.0
    %2862 = vmatpush1.msra.mxu0 0.0
    %2863 = vmatprep.subr.mxu0 0.0
    %2864 = vmatpush1.msra.mxu0 0.0
    %2865 = vmatprep.subr.mxu0 0.0
    %2866 = vmatpush1.msra.mxu0 0.0
    %2867 = vmatprep.subr.mxu0 0.0
    %2868 = vmatpush1.msra.mxu0 0.0
    %2869 = vmatprep.subr.mxu0 0.0
    %2870 = vmatpush1.msra.mxu0 0.0
    %2871 = vmatprep.subr.mxu0 0.0
    %2872 = vmatpush1.msra.mxu0 0.0
    %2873 = vmatprep.subr.mxu0 0.0
    %2874 = vmatpush1.msra.mxu0 0.0
    %2875 = vmatprep.subr.mxu0 0.0
    %2876 = vmatpush1.msra.mxu0 0.0
    %2877 = vmatprep.subr.mxu0 0.0
    %2878 = vmatpush1.msra.mxu0 0.0
    %2879 = vmatprep.subr.mxu0 0.0
    %v2880 = vand.u32 %v2535, 4294901760
    %2881 = vmatpush1.msra.mxu0 %v2880
    %2882 = vmatprep.subr.mxu0 0.0
    %v2883 = vand.u32 %v2534, 4294901760
    %2884 = vmatpush1.msra.mxu0 %v2883
    %2885 = vmatprep.subr.mxu0 0.0
    %2886 = vmatpush2.msra.mxu0 0.0
    %2887 = vmatprep.subr.mxu0 0.0
    %2888 = vmatpush2.msra.mxu0 0.0
    %2889 = vmatprep.subr.mxu0 0.0
    %2890 = vmatpush2.msra.mxu0 0.0
    %2891 = vmatprep.subr.mxu0 0.0
    %2892 = vmatpush2.msra.mxu0 0.0
    %2893 = vmatprep.subr.mxu0 0.0
    %2894 = vmatpush2.msra.mxu0 0.0
    %2895 = vmatprep.subr.mxu0 0.0
    %2896 = vmatpush2.msra.mxu0 0.0
    %2897 = vmatprep.subr.mxu0 0.0
    %2898 = vmatpush2.msra.mxu0 0.0
    %2899 = vmatprep.subr.mxu0 0.0
    %2900 = vmatpush2.msra.mxu0 0.0
    %2901 = vmatprep.subr.mxu0 0.0
    %2902 = vmatpush2.msra.mxu0 0.0
    %2903 = vmatprep.subr.mxu0 0.0
    %2904 = vmatpush2.msra.mxu0 0.0
    %2905 = vmatprep.subr.mxu0 0.0
    %2906 = vmatpush2.msra.mxu0 0.0
    %2907 = vmatprep.subr.mxu0 0.0
    %2908 = vmatpush2.msra.mxu0 0.0
    %2909 = vmatprep.subr.mxu0 0.0
    %2910 = vmatpush2.msra.mxu0 0.0
    %2911 = vmatprep.subr.mxu0 0.0
    %2912 = vmatpush2.msra.mxu0 0.0
    %2913 = vmatprep.subr.mxu0 0.0
    %2914 = vmatpush2.msra.mxu0 0.0
    %2915 = vmatprep.subr.mxu0 0.0
    %2916 = vmatpush2.msra.mxu0 0.0
    %2917 = vmatprep.mubr.f32.mxu0 0.0
    %v2918 = vand.u32 %v2537, 4294901760
    %v2919 = vsub.f32 %v2537, %v2918
    %v2920 = vand.u32 %v2919, 4294901760
    %2921 = vmatmul.mubr.f32.gmra.mxu0 %v2920
    %v2922 = vpop.f32.mrf.mxu0
    %v2923 = vadd.f32 %v2827, %v2922
    %v2924 = vpop.f32.mrf.mxu0
    %2925 = vmatprep.mubr.f32.mxu0 0.0
    %v2926 = vand.u32 %v2540, 4294901760
    %v2927 = vsub.f32 %v2540, %v2926
    %v2928 = vand.u32 %v2927, 4294901760
    %2929 = vmatmul.mubr.f32.gmra.mxu0 %v2928
    %v2930 = vpop.f32.mrf.mxu0
    %v2931 = vadd.f32 %v2834, %v2930
    %v2932 = vpop.f32.mrf.mxu0
    %2933 = vmatprep.mubr.f32.mxu0 0.0
    %v2934 = vand.u32 %v2543, 4294901760
    %v2935 = vsub.f32 %v2543, %v2934
    %v2936 = vand.u32 %v2935, 4294901760
    %2937 = vmatmul.mubr.f32.gmra.mxu0 %v2936
    %v2938 = vpop.f32.mrf.mxu0
    %v2939 = vadd.f32 %v2841, %v2938
    %v2940 = vpop.f32.mrf.mxu0
    %2941 = vmatprep.mubr.f32.mxu0 0.0
    %v2942 = vand.u32 %v2546, 4294901760
    %v2943 = vsub.f32 %v2546, %v2942
    %v2944 = vand.u32 %v2943, 4294901760
    %2945 = vmatmul.mubr.f32.gmra.mxu0 %v2944
    %v2946 = vpop.f32.mrf.mxu0
    %v2947 = vadd.f32 %v2848, %v2946
    %v2948 = vpop.f32.mrf.mxu0
    %2949 = vdwg.mxu0
    %2950 = vmatprep.subr.mxu0 0.0
    %2951 = vmatpush1.msra.mxu0 0.0
    %2952 = vmatprep.subr.mxu0 0.0
    %2953 = vmatpush1.msra.mxu0 0.0
    %2954 = vmatprep.subr.mxu0 0.0
    %2955 = vmatpush1.msra.mxu0 0.0
    %2956 = vmatprep.subr.mxu0 0.0
    %2957 = vmatpush1.msra.mxu0 0.0
    %2958 = vmatprep.subr.mxu0 0.0
    %2959 = vmatpush1.msra.mxu0 0.0
    %2960 = vmatprep.subr.mxu0 0.0
    %2961 = vmatpush1.msra.mxu0 0.0
    %2962 = vmatprep.subr.mxu0 0.0
    %2963 = vmatpush1.msra.mxu0 0.0
    %2964 = vmatprep.subr.mxu0 0.0
    %2965 = vmatpush1.msra.mxu0 0.0
    %2966 = vmatprep.subr.mxu0 0.0
    %2967 = vmatpush1.msra.mxu0 0.0
    %2968 = vmatprep.subr.mxu0 0.0
    %2969 = vmatpush1.msra.mxu0 0.0
    %2970 = vmatprep.subr.mxu0 0.0
    %2971 = vmatpush1.msra.mxu0 0.0
    %2972 = vmatprep.subr.mxu0 0.0
    %2973 = vmatpush1.msra.mxu0 0.0
    %2974 = vmatprep.subr.mxu0 0.0
    %2975 = vmatpush1.msra.mxu0 0.0
    %2976 = vmatprep.subr.mxu0 0.0
    %2977 = vmatpush1.msra.mxu0 0.0
    %2978 = vmatprep.subr.mxu0 0.0
    %v2979 = vand.u32 %v2535, 4294901760
    %v2980 = vsub.f32 %v2535, %v2979
    %v2981 = vand.u32 %v2980, 4294901760
    %2982 = vmatpush1.msra.mxu0 %v2981
    %2983 = vmatprep.subr.mxu0 0.0
    %v2984 = vand.u32 %v2534, 4294901760
    %v2985 = vsub.f32 %v2534, %v2984
    %v2986 = vand.u32 %v2985, 4294901760
    %2987 = vmatpush1.msra.mxu0 %v2986
    %2988 = vmatprep.subr.mxu0 0.0
    %2989 = vmatpush2.msra.mxu0 0.0
    %2990 = vmatprep.subr.mxu0 0.0
    %2991 = vmatpush2.msra.mxu0 0.0
    %2992 = vmatprep.subr.mxu0 0.0
    %2993 = vmatpush2.msra.mxu0 0.0
    %2994 = vmatprep.subr.mxu0 0.0
    %2995 = vmatpush2.msra.mxu0 0.0
    %2996 = vmatprep.subr.mxu0 0.0
    %2997 = vmatpush2.msra.mxu0 0.0
    %2998 = vmatprep.subr.mxu0 0.0
    %2999 = vmatpush2.msra.mxu0 0.0
    %3000 = vmatprep.subr.mxu0 0.0
    %3001 = vmatpush2.msra.mxu0 0.0
    %3002 = vmatprep.subr.mxu0 0.0
    %3003 = vmatpush2.msra.mxu0 0.0
    %3004 = vmatprep.subr.mxu0 0.0
    %3005 = vmatpush2.msra.mxu0 0.0
    %3006 = vmatprep.subr.mxu0 0.0
    %3007 = vmatpush2.msra.mxu0 0.0
    %3008 = vmatprep.subr.mxu0 0.0
    %3009 = vmatpush2.msra.mxu0 0.0
    %3010 = vmatprep.subr.mxu0 0.0
    %3011 = vmatpush2.msra.mxu0 0.0
    %3012 = vmatprep.subr.mxu0 0.0
    %3013 = vmatpush2.msra.mxu0 0.0
    %3014 = vmatprep.subr.mxu0 0.0
    %3015 = vmatpush2.msra.mxu0 0.0
    %3016 = vmatprep.subr.mxu0 0.0
    %3017 = vmatpush2.msra.mxu0 0.0
    %3018 = vmatprep.subr.mxu0 0.0
    %3019 = vmatpush2.msra.mxu0 0.0
    %3020 = vmatprep.mubr.f32.mxu0 0.0
    %v3021 = vand.u32 %v2537, 4294901760
    %3022 = vmatmul.mubr.f32.gmra.mxu0 %v3021
    %v3023 = vpop.f32.mrf.mxu0
    %v3024 = vadd.f32 %v2923, %v3023
    %v3025 = vpop.f32.mrf.mxu0
    %3026 = vmatprep.mubr.f32.mxu0 0.0
    %v3027 = vand.u32 %v2540, 4294901760
    %3028 = vmatmul.mubr.f32.gmra.mxu0 %v3027
    %v3029 = vpop.f32.mrf.mxu0
    %v3030 = vadd.f32 %v2931, %v3029
    %v3031 = vpop.f32.mrf.mxu0
    %3032 = vmatprep.mubr.f32.mxu0 0.0
    %v3033 = vand.u32 %v2543, 4294901760
    %3034 = vmatmul.mubr.f32.gmra.mxu0 %v3033
    %v3035 = vpop.f32.mrf.mxu0
    %v3036 = vadd.f32 %v2939, %v3035
    %v3037 = vpop.f32.mrf.mxu0
    %3038 = vmatprep.mubr.f32.mxu0 0.0
    %v3039 = vand.u32 %v2546, 4294901760
    %3040 = vmatmul.mubr.f32.gmra.mxu0 %v3039
    %v3041 = vpop.f32.mrf.mxu0
    %v3042 = vadd.f32 %v2947, %v3041
    %v3043 = vpop.f32.mrf.mxu0
    %3044 = vdwg.mxu0
    %3045 = vmatprep.subr.mxu0 0.0
    %3046 = vmatpush1.msra.mxu0 0.0
    %3047 = vmatprep.subr.mxu0 0.0
    %3048 = vmatpush1.msra.mxu0 0.0
    %3049 = vmatprep.subr.mxu0 0.0
    %3050 = vmatpush1.msra.mxu0 0.0
    %3051 = vmatprep.subr.mxu0 0.0
    %3052 = vmatpush1.msra.mxu0 0.0
    %3053 = vmatprep.subr.mxu0 0.0
    %3054 = vmatpush1.msra.mxu0 0.0
    %3055 = vmatprep.subr.mxu0 0.0
    %3056 = vmatpush1.msra.mxu0 0.0
    %3057 = vmatprep.subr.mxu0 0.0
    %3058 = vmatpush1.msra.mxu0 0.0
    %3059 = vmatprep.subr.mxu0 0.0
    %3060 = vmatpush1.msra.mxu0 0.0
    %3061 = vmatprep.subr.mxu0 0.0
    %3062 = vmatpush1.msra.mxu0 0.0
    %3063 = vmatprep.subr.mxu0 0.0
    %3064 = vmatpush1.msra.mxu0 0.0
    %3065 = vmatprep.subr.mxu0 0.0
    %3066 = vmatpush1.msra.mxu0 0.0
    %3067 = vmatprep.subr.mxu0 0.0
    %3068 = vmatpush1.msra.mxu0 0.0
    %3069 = vmatprep.subr.mxu0 0.0
    %3070 = vmatpush1.msra.mxu0 0.0
    %3071 = vmatprep.subr.mxu0 0.0
    %3072 = vmatpush1.msra.mxu0 0.0
    %3073 = vmatprep.subr.mxu0 0.0
    %v3074 = vand.u32 %v2535, 4294901760
    %3075 = vmatpush1.msra.mxu0 %v3074
    %3076 = vmatprep.subr.mxu0 0.0
    %v3077 = vand.u32 %v2534, 4294901760
    %3078 = vmatpush1.msra.mxu0 %v3077
    %3079 = vmatprep.subr.mxu0 0.0
    %3080 = vmatpush2.msra.mxu0 0.0
    %3081 = vmatprep.subr.mxu0 0.0
    %3082 = vmatpush2.msra.mxu0 0.0
    %3083 = vmatprep.subr.mxu0 0.0
    %3084 = vmatpush2.msra.mxu0 0.0
    %3085 = vmatprep.subr.mxu0 0.0
    %3086 = vmatpush2.msra.mxu0 0.0
    %3087 = vmatprep.subr.mxu0 0.0
    %3088 = vmatpush2.msra.mxu0 0.0
    %3089 = vmatprep.subr.mxu0 0.0
    %3090 = vmatpush2.msra.mxu0 0.0
    %3091 = vmatprep.subr.mxu0 0.0
    %3092 = vmatpush2.msra.mxu0 0.0
    %3093 = vmatprep.subr.mxu0 0.0
    %3094 = vmatpush2.msra.mxu0 0.0
    %3095 = vmatprep.subr.mxu0 0.0
    %3096 = vmatpush2.msra.mxu0 0.0
    %3097 = vmatprep.subr.mxu0 0.0
    %3098 = vmatpush2.msra.mxu0 0.0
    %3099 = vmatprep.subr.mxu0 0.0
    %3100 = vmatpush2.msra.mxu0 0.0
    %3101 = vmatprep.subr.mxu0 0.0
    %3102 = vmatpush2.msra.mxu0 0.0
    %3103 = vmatprep.subr.mxu0 0.0
    %3104 = vmatpush2.msra.mxu0 0.0
    %3105 = vmatprep.subr.mxu0 0.0
    %3106 = vmatpush2.msra.mxu0 0.0
    %3107 = vmatprep.subr.mxu0 0.0
    %3108 = vmatpush2.msra.mxu0 0.0
    %3109 = vmatprep.subr.mxu0 0.0
    %3110 = vmatpush2.msra.mxu0 0.0
    %3111 = vmatprep.mubr.f32.mxu0 0.0
    %v3112 = vand.u32 %v2537, 4294901760
    %3113 = vmatmul.mubr.f32.gmra.mxu0 %v3112
    %v3114 = vpop.f32.mrf.mxu0
    %v3115 = vadd.f32 %v3024, %v3114
    %v3116 = vpop.f32.mrf.mxu0
    %3117 = vmatprep.mubr.f32.mxu0 0.0
    %v3118 = vand.u32 %v2540, 4294901760
    %3119 = vmatmul.mubr.f32.gmra.mxu0 %v3118
    %v3120 = vpop.f32.mrf.mxu0
    %v3121 = vadd.f32 %v3030, %v3120
    %v3122 = vpop.f32.mrf.mxu0
    %3123 = vmatprep.mubr.f32.mxu0 0.0
    %v3124 = vand.u32 %v2543, 4294901760
    %3125 = vmatmul.mubr.f32.gmra.mxu0 %v3124
    %v3126 = vpop.f32.mrf.mxu0
    %v3127 = vadd.f32 %v3036, %v3126
    %v3128 = vpop.f32.mrf.mxu0
    %3129 = vmatprep.mubr.f32.mxu0 0.0
    %v3130 = vand.u32 %v2546, 4294901760
    %3131 = vmatmul.mubr.f32.gmra.mxu0 %v3130
    %v3132 = vpop.f32.mrf.mxu0
    %v3133 = vadd.f32 %v3042, %v3132
    %v3134 = vpop.f32.mrf.mxu0
    %3135 = vdwg.mxu0
    %v3136 = vadd.f32 %v2525, %v3115
    %v3137 = vadd.f32 %v2526, %v3121
    %v3138 = vadd.f32 %v2527, %v3127
    %v3139 = vadd.f32 %v2528, %v3133
    %s3140 = sld [smem:[#allocation4]]
    %v3141 = vstv %s3140
    %v3142 = vadd.f32 %v3136, %v3141
    %v3143 = vadd.f32 %v3137, %v3141
    %v3144 = vadd.f32 %v3138, %v3141
    %v3145 = vadd.f32 %v3139, %v3141
    %v3146 = vmax.f32 %v3142, 0.0
    %v3147 = vmax.f32 %v3143, 0.0
    %v3148 = vmax.f32 %v3144, 0.0
    %v3149 = vmax.f32 %v3145, 0.0
    %v3151 = vsel %vm89, %v3146, 0
    %v3154 = vsel %vm89, %v3147, 0
    %v3157 = vsel %vm89, %v3148, 0
    %v3160 = vsel %vm89, %v3149, 0
    %3162 = vmatprep.subr.mxu0 0.0
    %3163 = vmatpush1.msra.mxu0 0.0
    %3164 = vmatprep.subr.mxu0 0.0
    %3165 = vmatpush1.msra.mxu0 0.0
    %3166 = vmatprep.subr.mxu0 0.0
    %3167 = vmatpush1.msra.mxu0 0.0
    %3168 = vmatprep.subr.mxu0 0.0
    %3169 = vmatpush1.msra.mxu0 0.0
    %3170 = vmatprep.subr.mxu0 0.0
    %3171 = vmatpush1.msra.mxu0 0.0
    %3172 = vmatprep.subr.mxu0 0.0
    %3173 = vmatpush1.msra.mxu0 0.0
    %3174 = vmatprep.subr.mxu0 0.0
    %3175 = vmatpush1.msra.mxu0 0.0
    %3176 = vmatprep.subr.mxu0 0.0
    %3177 = vmatpush1.msra.mxu0 0.0
    %3178 = vmatprep.subr.mxu0 0.0
    %3179 = vmatpush1.msra.mxu0 0.0
    %3180 = vmatprep.subr.mxu0 0.0
    %3181 = vmatpush1.msra.mxu0 0.0
    %3182 = vmatprep.subr.mxu0 0.0
    %3183 = vmatpush1.msra.mxu0 0.0
    %3184 = vmatprep.subr.mxu0 0.0
    %3185 = vmatpush1.msra.mxu0 0.0
    %3186 = vmatprep.subr.mxu0 0.0
    %3187 = vmatpush1.msra.mxu0 0.0
    %3188 = vmatprep.subr.mxu0 0.0
    %3189 = vmatpush1.msra.mxu0 0.0
    %3190 = vmatprep.subr.mxu0 0.0
    %v3191 = vand.u32 %v81, 4294901760
    %3192 = vmatpush1.msra.mxu0 %v3191
    %3193 = vmatprep.subr.mxu0 0.0
    %v3194 = vand.u32 %v80, 4294901760
    %3195 = vmatpush1.msra.mxu0 %v3194
    %3196 = vmatprep.subr.mxu0 0.0
    %3197 = vmatpush2.msra.mxu0 0.0
    %3198 = vmatprep.subr.mxu0 0.0
    %3199 = vmatpush2.msra.mxu0 0.0
    %3200 = vmatprep.subr.mxu0 0.0
    %3201 = vmatpush2.msra.mxu0 0.0
    %3202 = vmatprep.subr.mxu0 0.0
    %3203 = vmatpush2.msra.mxu0 0.0
    %3204 = vmatprep.subr.mxu0 0.0
    %3205 = vmatpush2.msra.mxu0 0.0
    %3206 = vmatprep.subr.mxu0 0.0
    %3207 = vmatpush2.msra.mxu0 0.0
    %3208 = vmatprep.subr.mxu0 0.0
    %3209 = vmatpush2.msra.mxu0 0.0
    %3210 = vmatprep.subr.mxu0 0.0
    %3211 = vmatpush2.msra.mxu0 0.0
    %3212 = vmatprep.subr.mxu0 0.0
    %3213 = vmatpush2.msra.mxu0 0.0
    %3214 = vmatprep.subr.mxu0 0.0
    %3215 = vmatpush2.msra.mxu0 0.0
    %3216 = vmatprep.subr.mxu0 0.0
    %3217 = vmatpush2.msra.mxu0 0.0
    %3218 = vmatprep.subr.mxu0 0.0
    %3219 = vmatpush2.msra.mxu0 0.0
    %3220 = vmatprep.subr.mxu0 0.0
    %3221 = vmatpush2.msra.mxu0 0.0
    %3222 = vmatprep.subr.mxu0 0.0
    %3223 = vmatpush2.msra.mxu0 0.0
    %3224 = vmatprep.subr.mxu0 0.0
    %3225 = vmatpush2.msra.mxu0 0.0
    %3226 = vmatprep.subr.mxu0 0.0
    %3227 = vmatpush2.msra.mxu0 0.0
    %3228 = vmatprep.mubr.f32.mxu0 0.0
    %v3229 = vand.u32 %v3151, 4294901760
    %v3230 = vsub.f32 %v3151, %v3229
    %v3231 = vand.u32 %v3230, 4294901760
    %v3232 = vsub.f32 %v3230, %v3231
    %v3233 = vand.u32 %v3232, 4294901760
    %3234 = vmatmul.mubr.f32.gmra.mxu0 %v3233
    %v3235 = vpop.f32.mrf.mxu0
    %v3236 = vadd.f32 0.0, %v3235
    %v3237 = vpop.f32.mrf.mxu0
    %3238 = vmatprep.mubr.f32.mxu0 0.0
    %v3239 = vand.u32 %v3154, 4294901760
    %v3240 = vsub.f32 %v3154, %v3239
    %v3241 = vand.u32 %v3240, 4294901760
    %v3242 = vsub.f32 %v3240, %v3241
    %v3243 = vand.u32 %v3242, 4294901760
    %3244 = vmatmul.mubr.f32.gmra.mxu0 %v3243
    %v3245 = vpop.f32.mrf.mxu0
    %v3246 = vadd.f32 0.0, %v3245
    %v3247 = vpop.f32.mrf.mxu0
    %3248 = vmatprep.mubr.f32.mxu0 0.0
    %v3249 = vand.u32 %v3157, 4294901760
    %v3250 = vsub.f32 %v3157, %v3249
    %v3251 = vand.u32 %v3250, 4294901760
    %v3252 = vsub.f32 %v3250, %v3251
    %v3253 = vand.u32 %v3252, 4294901760
    %3254 = vmatmul.mubr.f32.gmra.mxu0 %v3253
    %v3255 = vpop.f32.mrf.mxu0
    %v3256 = vadd.f32 0.0, %v3255
    %v3257 = vpop.f32.mrf.mxu0
    %3258 = vmatprep.mubr.f32.mxu0 0.0
    %v3259 = vand.u32 %v3160, 4294901760
    %v3260 = vsub.f32 %v3160, %v3259
    %v3261 = vand.u32 %v3260, 4294901760
    %v3262 = vsub.f32 %v3260, %v3261
    %v3263 = vand.u32 %v3262, 4294901760
    %3264 = vmatmul.mubr.f32.gmra.mxu0 %v3263
    %v3265 = vpop.f32.mrf.mxu0
    %v3266 = vadd.f32 0.0, %v3265
    %v3267 = vpop.f32.mrf.mxu0
    %3268 = vdwg.mxu0
    %3269 = vmatprep.subr.mxu0 0.0
    %3270 = vmatpush1.msra.mxu0 0.0
    %3271 = vmatprep.subr.mxu0 0.0
    %3272 = vmatpush1.msra.mxu0 0.0
    %3273 = vmatprep.subr.mxu0 0.0
    %3274 = vmatpush1.msra.mxu0 0.0
    %3275 = vmatprep.subr.mxu0 0.0
    %3276 = vmatpush1.msra.mxu0 0.0
    %3277 = vmatprep.subr.mxu0 0.0
    %3278 = vmatpush1.msra.mxu0 0.0
    %3279 = vmatprep.subr.mxu0 0.0
    %3280 = vmatpush1.msra.mxu0 0.0
    %3281 = vmatprep.subr.mxu0 0.0
    %3282 = vmatpush1.msra.mxu0 0.0
    %3283 = vmatprep.subr.mxu0 0.0
    %3284 = vmatpush1.msra.mxu0 0.0
    %3285 = vmatprep.subr.mxu0 0.0
    %3286 = vmatpush1.msra.mxu0 0.0
    %3287 = vmatprep.subr.mxu0 0.0
    %3288 = vmatpush1.msra.mxu0 0.0
    %3289 = vmatprep.subr.mxu0 0.0
    %3290 = vmatpush1.msra.mxu0 0.0
    %3291 = vmatprep.subr.mxu0 0.0
    %3292 = vmatpush1.msra.mxu0 0.0
    %3293 = vmatprep.subr.mxu0 0.0
    %3294 = vmatpush1.msra.mxu0 0.0
    %3295 = vmatprep.subr.mxu0 0.0
    %3296 = vmatpush1.msra.mxu0 0.0
    %3297 = vmatprep.subr.mxu0 0.0
    %v3298 = vand.u32 %v81, 4294901760
    %v3299 = vsub.f32 %v81, %v3298
    %v3300 = vand.u32 %v3299, 4294901760
    %v3301 = vsub.f32 %v3299, %v3300
    %v3302 = vand.u32 %v3301, 4294901760
    %3303 = vmatpush1.msra.mxu0 %v3302
    %3304 = vmatprep.subr.mxu0 0.0
    %v3305 = vand.u32 %v80, 4294901760
    %v3306 = vsub.f32 %v80, %v3305
    %v3307 = vand.u32 %v3306, 4294901760
    %v3308 = vsub.f32 %v3306, %v3307
    %v3309 = vand.u32 %v3308, 4294901760
    %3310 = vmatpush1.msra.mxu0 %v3309
    %3311 = vmatprep.subr.mxu0 0.0
    %3312 = vmatpush2.msra.mxu0 0.0
    %3313 = vmatprep.subr.mxu0 0.0
    %3314 = vmatpush2.msra.mxu0 0.0
    %3315 = vmatprep.subr.mxu0 0.0
    %3316 = vmatpush2.msra.mxu0 0.0
    %3317 = vmatprep.subr.mxu0 0.0
    %3318 = vmatpush2.msra.mxu0 0.0
    %3319 = vmatprep.subr.mxu0 0.0
    %3320 = vmatpush2.msra.mxu0 0.0
    %3321 = vmatprep.subr.mxu0 0.0
    %3322 = vmatpush2.msra.mxu0 0.0
    %3323 = vmatprep.subr.mxu0 0.0
    %3324 = vmatpush2.msra.mxu0 0.0
    %3325 = vmatprep.subr.mxu0 0.0
    %3326 = vmatpush2.msra.mxu0 0.0
    %3327 = vmatprep.subr.mxu0 0.0
    %3328 = vmatpush2.msra.mxu0 0.0
    %3329 = vmatprep.subr.mxu0 0.0
    %3330 = vmatpush2.msra.mxu0 0.0
    %3331 = vmatprep.subr.mxu0 0.0
    %3332 = vmatpush2.msra.mxu0 0.0
    %3333 = vmatprep.subr.mxu0 0.0
    %3334 = vmatpush2.msra.mxu0 0.0
    %3335 = vmatprep.subr.mxu0 0.0
    %3336 = vmatpush2.msra.mxu0 0.0
    %3337 = vmatprep.subr.mxu0 0.0
    %3338 = vmatpush2.msra.mxu0 0.0
    %3339 = vmatprep.subr.mxu0 0.0
    %3340 = vmatpush2.msra.mxu0 0.0
    %3341 = vmatprep.subr.mxu0 0.0
    %3342 = vmatpush2.msra.mxu0 0.0
    %3343 = vmatprep.mubr.f32.mxu0 0.0
    %v3344 = vand.u32 %v3151, 4294901760
    %3345 = vmatmul.mubr.f32.gmra.mxu0 %v3344
    %v3346 = vpop.f32.mrf.mxu0
    %v3347 = vadd.f32 %v3236, %v3346
    %v3348 = vpop.f32.mrf.mxu0
    %3349 = vmatprep.mubr.f32.mxu0 0.0
    %v3350 = vand.u32 %v3154, 4294901760
    %3351 = vmatmul.mubr.f32.gmra.mxu0 %v3350
    %v3352 = vpop.f32.mrf.mxu0
    %v3353 = vadd.f32 %v3246, %v3352
    %v3354 = vpop.f32.mrf.mxu0
    %3355 = vmatprep.mubr.f32.mxu0 0.0
    %v3356 = vand.u32 %v3157, 4294901760
    %3357 = vmatmul.mubr.f32.gmra.mxu0 %v3356
    %v3358 = vpop.f32.mrf.mxu0
    %v3359 = vadd.f32 %v3256, %v3358
    %v3360 = vpop.f32.mrf.mxu0
    %3361 = vmatprep.mubr.f32.mxu0 0.0
    %v3362 = vand.u32 %v3160, 4294901760
    %3363 = vmatmul.mubr.f32.gmra.mxu0 %v3362
    %v3364 = vpop.f32.mrf.mxu0
    %v3365 = vadd.f32 %v3266, %v3364
    %v3366 = vpop.f32.mrf.mxu0
    %3367 = vdwg.mxu0
    %3368 = vmatprep.subr.mxu0 0.0
    %3369 = vmatpush1.msra.mxu0 0.0
    %3370 = vmatprep.subr.mxu0 0.0
    %3371 = vmatpush1.msra.mxu0 0.0
    %3372 = vmatprep.subr.mxu0 0.0
    %3373 = vmatpush1.msra.mxu0 0.0
    %3374 = vmatprep.subr.mxu0 0.0
    %3375 = vmatpush1.msra.mxu0 0.0
    %3376 = vmatprep.subr.mxu0 0.0
    %3377 = vmatpush1.msra.mxu0 0.0
    %3378 = vmatprep.subr.mxu0 0.0
    %3379 = vmatpush1.msra.mxu0 0.0
    %3380 = vmatprep.subr.mxu0 0.0
    %3381 = vmatpush1.msra.mxu0 0.0
    %3382 = vmatprep.subr.mxu0 0.0
    %3383 = vmatpush1.msra.mxu0 0.0
    %3384 = vmatprep.subr.mxu0 0.0
    %3385 = vmatpush1.msra.mxu0 0.0
    %3386 = vmatprep.subr.mxu0 0.0
    %3387 = vmatpush1.msra.mxu0 0.0
    %3388 = vmatprep.subr.mxu0 0.0
    %3389 = vmatpush1.msra.mxu0 0.0
    %3390 = vmatprep.subr.mxu0 0.0
    %3391 = vmatpush1.msra.mxu0 0.0
    %3392 = vmatprep.subr.mxu0 0.0
    %3393 = vmatpush1.msra.mxu0 0.0
    %3394 = vmatprep.subr.mxu0 0.0
    %3395 = vmatpush1.msra.mxu0 0.0
    %3396 = vmatprep.subr.mxu0 0.0
    %v3397 = vand.u32 %v81, 4294901760
    %v3398 = vsub.f32 %v81, %v3397
    %3399 = vmatpush1.msra.mxu0 %v3398
    %3400 = vmatprep.subr.mxu0 0.0
    %v3401 = vand.u32 %v80, 4294901760
    %v3402 = vsub.f32 %v80, %v3401
    %3403 = vmatpush1.msra.mxu0 %v3402
    %3404 = vmatprep.subr.mxu0 0.0
    %3405 = vmatpush2.msra.mxu0 0.0
    %3406 = vmatprep.subr.mxu0 0.0
    %3407 = vmatpush2.msra.mxu0 0.0
    %3408 = vmatprep.subr.mxu0 0.0
    %3409 = vmatpush2.msra.mxu0 0.0
    %3410 = vmatprep.subr.mxu0 0.0
    %3411 = vmatpush2.msra.mxu0 0.0
    %3412 = vmatprep.subr.mxu0 0.0
    %3413 = vmatpush2.msra.mxu0 0.0
    %3414 = vmatprep.subr.mxu0 0.0
    %3415 = vmatpush2.msra.mxu0 0.0
    %3416 = vmatprep.subr.mxu0 0.0
    %3417 = vmatpush2.msra.mxu0 0.0
    %3418 = vmatprep.subr.mxu0 0.0
    %3419 = vmatpush2.msra.mxu0 0.0
    %3420 = vmatprep.subr.mxu0 0.0
    %3421 = vmatpush2.msra.mxu0 0.0
    %3422 = vmatprep.subr.mxu0 0.0
    %3423 = vmatpush2.msra.mxu0 0.0
    %3424 = vmatprep.subr.mxu0 0.0
    %3425 = vmatpush2.msra.mxu0 0.0
    %3426 = vmatprep.subr.mxu0 0.0
    %3427 = vmatpush2.msra.mxu0 0.0
    %3428 = vmatprep.subr.mxu0 0.0
    %3429 = vmatpush2.msra.mxu0 0.0
    %3430 = vmatprep.subr.mxu0 0.0
    %3431 = vmatpush2.msra.mxu0 0.0
    %3432 = vmatprep.subr.mxu0 0.0
    %3433 = vmatpush2.msra.mxu0 0.0
    %3434 = vmatprep.subr.mxu0 0.0
    %3435 = vmatpush2.msra.mxu0 0.0
    %3436 = vmatprep.mubr.f32.mxu0 0.0
    %v3437 = vand.u32 %v3151, 4294901760
    %v3438 = vsub.f32 %v3151, %v3437
    %3439 = vmatmul.mubr.f32.gmra.mxu0 %v3438
    %v3440 = vpop.f32.mrf.mxu0
    %v3441 = vadd.f32 %v3347, %v3440
    %v3442 = vpop.f32.mrf.mxu0
    %3443 = vmatprep.mubr.f32.mxu0 0.0
    %v3444 = vand.u32 %v3154, 4294901760
    %v3445 = vsub.f32 %v3154, %v3444
    %3446 = vmatmul.mubr.f32.gmra.mxu0 %v3445
    %v3447 = vpop.f32.mrf.mxu0
    %v3448 = vadd.f32 %v3353, %v3447
    %v3449 = vpop.f32.mrf.mxu0
    %3450 = vmatprep.mubr.f32.mxu0 0.0
    %v3451 = vand.u32 %v3157, 4294901760
    %v3452 = vsub.f32 %v3157, %v3451
    %3453 = vmatmul.mubr.f32.gmra.mxu0 %v3452
    %v3454 = vpop.f32.mrf.mxu0
    %v3455 = vadd.f32 %v3359, %v3454
    %v3456 = vpop.f32.mrf.mxu0
    %3457 = vmatprep.mubr.f32.mxu0 0.0
    %v3458 = vand.u32 %v3160, 4294901760
    %v3459 = vsub.f32 %v3160, %v3458
    %3460 = vmatmul.mubr.f32.gmra.mxu0 %v3459
    %v3461 = vpop.f32.mrf.mxu0
    %v3462 = vadd.f32 %v3365, %v3461
    %v3463 = vpop.f32.mrf.mxu0
    %3464 = vdwg.mxu0
    %3465 = vmatprep.subr.mxu0 0.0
    %3466 = vmatpush1.msra.mxu0 0.0
    %3467 = vmatprep.subr.mxu0 0.0
    %3468 = vmatpush1.msra.mxu0 0.0
    %3469 = vmatprep.subr.mxu0 0.0
    %3470 = vmatpush1.msra.mxu0 0.0
    %3471 = vmatprep.subr.mxu0 0.0
    %3472 = vmatpush1.msra.mxu0 0.0
    %3473 = vmatprep.subr.mxu0 0.0
    %3474 = vmatpush1.msra.mxu0 0.0
    %3475 = vmatprep.subr.mxu0 0.0
    %3476 = vmatpush1.msra.mxu0 0.0
    %3477 = vmatprep.subr.mxu0 0.0
    %3478 = vmatpush1.msra.mxu0 0.0
    %3479 = vmatprep.subr.mxu0 0.0
    %3480 = vmatpush1.msra.mxu0 0.0
    %3481 = vmatprep.subr.mxu0 0.0
    %3482 = vmatpush1.msra.mxu0 0.0
    %3483 = vmatprep.subr.mxu0 0.0
    %3484 = vmatpush1.msra.mxu0 0.0
    %3485 = vmatprep.subr.mxu0 0.0
    %3486 = vmatpush1.msra.mxu0 0.0
    %3487 = vmatprep.subr.mxu0 0.0
    %3488 = vmatpush1.msra.mxu0 0.0
    %3489 = vmatprep.subr.mxu0 0.0
    %3490 = vmatpush1.msra.mxu0 0.0
    %3491 = vmatprep.subr.mxu0 0.0
    %3492 = vmatpush1.msra.mxu0 0.0
    %3493 = vmatprep.subr.mxu0 0.0
    %v3494 = vand.u32 %v81, 4294901760
    %3495 = vmatpush1.msra.mxu0 %v3494
    %3496 = vmatprep.subr.mxu0 0.0
    %v3497 = vand.u32 %v80, 4294901760
    %3498 = vmatpush1.msra.mxu0 %v3497
    %3499 = vmatprep.subr.mxu0 0.0
    %3500 = vmatpush2.msra.mxu0 0.0
    %3501 = vmatprep.subr.mxu0 0.0
    %3502 = vmatpush2.msra.mxu0 0.0
    %3503 = vmatprep.subr.mxu0 0.0
    %3504 = vmatpush2.msra.mxu0 0.0
    %3505 = vmatprep.subr.mxu0 0.0
    %3506 = vmatpush2.msra.mxu0 0.0
    %3507 = vmatprep.subr.mxu0 0.0
    %3508 = vmatpush2.msra.mxu0 0.0
    %3509 = vmatprep.subr.mxu0 0.0
    %3510 = vmatpush2.msra.mxu0 0.0
    %3511 = vmatprep.subr.mxu0 0.0
    %3512 = vmatpush2.msra.mxu0 0.0
    %3513 = vmatprep.subr.mxu0 0.0
    %3514 = vmatpush2.msra.mxu0 0.0
    %3515 = vmatprep.subr.mxu0 0.0
    %3516 = vmatpush2.msra.mxu0 0.0
    %3517 = vmatprep.subr.mxu0 0.0
    %3518 = vmatpush2.msra.mxu0 0.0
    %3519 = vmatprep.subr.mxu0 0.0
    %3520 = vmatpush2.msra.mxu0 0.0
    %3521 = vmatprep.subr.mxu0 0.0
    %3522 = vmatpush2.msra.mxu0 0.0
    %3523 = vmatprep.subr.mxu0 0.0
    %3524 = vmatpush2.msra.mxu0 0.0
    %3525 = vmatprep.subr.mxu0 0.0
    %3526 = vmatpush2.msra.mxu0 0.0
    %3527 = vmatprep.subr.mxu0 0.0
    %3528 = vmatpush2.msra.mxu0 0.0
    %3529 = vmatprep.subr.mxu0 0.0
    %3530 = vmatpush2.msra.mxu0 0.0
    %3531 = vmatprep.mubr.f32.mxu0 0.0
    %v3532 = vand.u32 %v3151, 4294901760
    %v3533 = vsub.f32 %v3151, %v3532
    %v3534 = vand.u32 %v3533, 4294901760
    %3535 = vmatmul.mubr.f32.gmra.mxu0 %v3534
    %v3536 = vpop.f32.mrf.mxu0
    %v3537 = vadd.f32 %v3441, %v3536
    %v3538 = vpop.f32.mrf.mxu0
    %3539 = vmatprep.mubr.f32.mxu0 0.0
    %v3540 = vand.u32 %v3154, 4294901760
    %v3541 = vsub.f32 %v3154, %v3540
    %v3542 = vand.u32 %v3541, 4294901760
    %3543 = vmatmul.mubr.f32.gmra.mxu0 %v3542
    %v3544 = vpop.f32.mrf.mxu0
    %v3545 = vadd.f32 %v3448, %v3544
    %v3546 = vpop.f32.mrf.mxu0
    %3547 = vmatprep.mubr.f32.mxu0 0.0
    %v3548 = vand.u32 %v3157, 4294901760
    %v3549 = vsub.f32 %v3157, %v3548
    %v3550 = vand.u32 %v3549, 4294901760
    %3551 = vmatmul.mubr.f32.gmra.mxu0 %v3550
    %v3552 = vpop.f32.mrf.mxu0
    %v3553 = vadd.f32 %v3455, %v3552
    %v3554 = vpop.f32.mrf.mxu0
    %3555 = vmatprep.mubr.f32.mxu0 0.0
    %v3556 = vand.u32 %v3160, 4294901760
    %v3557 = vsub.f32 %v3160, %v3556
    %v3558 = vand.u32 %v3557, 4294901760
    %3559 = vmatmul.mubr.f32.gmra.mxu0 %v3558
    %v3560 = vpop.f32.mrf.mxu0
    %v3561 = vadd.f32 %v3462, %v3560
    %v3562 = vpop.f32.mrf.mxu0
    %3563 = vdwg.mxu0
    %3564 = vmatprep.subr.mxu0 0.0
    %3565 = vmatpush1.msra.mxu0 0.0
    %3566 = vmatprep.subr.mxu0 0.0
    %3567 = vmatpush1.msra.mxu0 0.0
    %3568 = vmatprep.subr.mxu0 0.0
    %3569 = vmatpush1.msra.mxu0 0.0
    %3570 = vmatprep.subr.mxu0 0.0
    %3571 = vmatpush1.msra.mxu0 0.0
    %3572 = vmatprep.subr.mxu0 0.0
    %3573 = vmatpush1.msra.mxu0 0.0
    %3574 = vmatprep.subr.mxu0 0.0
    %3575 = vmatpush1.msra.mxu0 0.0
    %3576 = vmatprep.subr.mxu0 0.0
    %3577 = vmatpush1.msra.mxu0 0.0
    %3578 = vmatprep.subr.mxu0 0.0
    %3579 = vmatpush1.msra.mxu0 0.0
    %3580 = vmatprep.subr.mxu0 0.0
    %3581 = vmatpush1.msra.mxu0 0.0
    %3582 = vmatprep.subr.mxu0 0.0
    %3583 = vmatpush1.msra.mxu0 0.0
    %3584 = vmatprep.subr.mxu0 0.0
    %3585 = vmatpush1.msra.mxu0 0.0
    %3586 = vmatprep.subr.mxu0 0.0
    %3587 = vmatpush1.msra.mxu0 0.0
    %3588 = vmatprep.subr.mxu0 0.0
    %3589 = vmatpush1.msra.mxu0 0.0
    %3590 = vmatprep.subr.mxu0 0.0
    %3591 = vmatpush1.msra.mxu0 0.0
    %3592 = vmatprep.subr.mxu0 0.0
    %v3593 = vand.u32 %v81, 4294901760
    %v3594 = vsub.f32 %v81, %v3593
    %v3595 = vand.u32 %v3594, 4294901760
    %3596 = vmatpush1.msra.mxu0 %v3595
    %3597 = vmatprep.subr.mxu0 0.0
    %v3598 = vand.u32 %v80, 4294901760
    %v3599 = vsub.f32 %v80, %v3598
    %v3600 = vand.u32 %v3599, 4294901760
    %3601 = vmatpush1.msra.mxu0 %v3600
    %3602 = vmatprep.subr.mxu0 0.0
    %3603 = vmatpush2.msra.mxu0 0.0
    %3604 = vmatprep.subr.mxu0 0.0
    %3605 = vmatpush2.msra.mxu0 0.0
    %3606 = vmatprep.subr.mxu0 0.0
    %3607 = vmatpush2.msra.mxu0 0.0
    %3608 = vmatprep.subr.mxu0 0.0
    %3609 = vmatpush2.msra.mxu0 0.0
    %3610 = vmatprep.subr.mxu0 0.0
    %3611 = vmatpush2.msra.mxu0 0.0
    %3612 = vmatprep.subr.mxu0 0.0
    %3613 = vmatpush2.msra.mxu0 0.0
    %3614 = vmatprep.subr.mxu0 0.0
    %3615 = vmatpush2.msra.mxu0 0.0
    %3616 = vmatprep.subr.mxu0 0.0
    %3617 = vmatpush2.msra.mxu0 0.0
    %3618 = vmatprep.subr.mxu0 0.0
    %3619 = vmatpush2.msra.mxu0 0.0
    %3620 = vmatprep.subr.mxu0 0.0
    %3621 = vmatpush2.msra.mxu0 0.0
    %3622 = vmatprep.subr.mxu0 0.0
    %3623 = vmatpush2.msra.mxu0 0.0
    %3624 = vmatprep.subr.mxu0 0.0
    %3625 = vmatpush2.msra.mxu0 0.0
    %3626 = vmatprep.subr.mxu0 0.0
    %3627 = vmatpush2.msra.mxu0 0.0
    %3628 = vmatprep.subr.mxu0 0.0
    %3629 = vmatpush2.msra.mxu0 0.0
    %3630 = vmatprep.subr.mxu0 0.0
    %3631 = vmatpush2.msra.mxu0 0.0
    %3632 = vmatprep.subr.mxu0 0.0
    %3633 = vmatpush2.msra.mxu0 0.0
    %3634 = vmatprep.mubr.f32.mxu0 0.0
    %v3635 = vand.u32 %v3151, 4294901760
    %3636 = vmatmul.mubr.f32.gmra.mxu0 %v3635
    %v3637 = vpop.f32.mrf.mxu0
    %v3638 = vadd.f32 %v3537, %v3637
    %v3639 = vpop.f32.mrf.mxu0
    %3640 = vmatprep.mubr.f32.mxu0 0.0
    %v3641 = vand.u32 %v3154, 4294901760
    %3642 = vmatmul.mubr.f32.gmra.mxu0 %v3641
    %v3643 = vpop.f32.mrf.mxu0
    %v3644 = vadd.f32 %v3545, %v3643
    %v3645 = vpop.f32.mrf.mxu0
    %3646 = vmatprep.mubr.f32.mxu0 0.0
    %v3647 = vand.u32 %v3157, 4294901760
    %3648 = vmatmul.mubr.f32.gmra.mxu0 %v3647
    %v3649 = vpop.f32.mrf.mxu0
    %v3650 = vadd.f32 %v3553, %v3649
    %v3651 = vpop.f32.mrf.mxu0
    %3652 = vmatprep.mubr.f32.mxu0 0.0
    %v3653 = vand.u32 %v3160, 4294901760
    %3654 = vmatmul.mubr.f32.gmra.mxu0 %v3653
    %v3655 = vpop.f32.mrf.mxu0
    %v3656 = vadd.f32 %v3561, %v3655
    %v3657 = vpop.f32.mrf.mxu0
    %3658 = vdwg.mxu0
    %3659 = vmatprep.subr.mxu0 0.0
    %3660 = vmatpush1.msra.mxu0 0.0
    %3661 = vmatprep.subr.mxu0 0.0
    %3662 = vmatpush1.msra.mxu0 0.0
    %3663 = vmatprep.subr.mxu0 0.0
    %3664 = vmatpush1.msra.mxu0 0.0
    %3665 = vmatprep.subr.mxu0 0.0
    %3666 = vmatpush1.msra.mxu0 0.0
    %3667 = vmatprep.subr.mxu0 0.0
    %3668 = vmatpush1.msra.mxu0 0.0
    %3669 = vmatprep.subr.mxu0 0.0
    %3670 = vmatpush1.msra.mxu0 0.0
    %3671 = vmatprep.subr.mxu0 0.0
    %3672 = vmatpush1.msra.mxu0 0.0
    %3673 = vmatprep.subr.mxu0 0.0
    %3674 = vmatpush1.msra.mxu0 0.0
    %3675 = vmatprep.subr.mxu0 0.0
    %3676 = vmatpush1.msra.mxu0 0.0
    %3677 = vmatprep.subr.mxu0 0.0
    %3678 = vmatpush1.msra.mxu0 0.0
    %3679 = vmatprep.subr.mxu0 0.0
    %3680 = vmatpush1.msra.mxu0 0.0
    %3681 = vmatprep.subr.mxu0 0.0
    %3682 = vmatpush1.msra.mxu0 0.0
    %3683 = vmatprep.subr.mxu0 0.0
    %3684 = vmatpush1.msra.mxu0 0.0
    %3685 = vmatprep.subr.mxu0 0.0
    %3686 = vmatpush1.msra.mxu0 0.0
    %3687 = vmatprep.subr.mxu0 0.0
    %v3688 = vand.u32 %v81, 4294901760
    %3689 = vmatpush1.msra.mxu0 %v3688
    %3690 = vmatprep.subr.mxu0 0.0
    %v3691 = vand.u32 %v80, 4294901760
    %3692 = vmatpush1.msra.mxu0 %v3691
    %3693 = vmatprep.subr.mxu0 0.0
    %3694 = vmatpush2.msra.mxu0 0.0
    %3695 = vmatprep.subr.mxu0 0.0
    %3696 = vmatpush2.msra.mxu0 0.0
    %3697 = vmatprep.subr.mxu0 0.0
    %3698 = vmatpush2.msra.mxu0 0.0
    %3699 = vmatprep.subr.mxu0 0.0
    %3700 = vmatpush2.msra.mxu0 0.0
    %3701 = vmatprep.subr.mxu0 0.0
    %3702 = vmatpush2.msra.mxu0 0.0
    %3703 = vmatprep.subr.mxu0 0.0
    %3704 = vmatpush2.msra.mxu0 0.0
    %3705 = vmatprep.subr.mxu0 0.0
    %3706 = vmatpush2.msra.mxu0 0.0
    %3707 = vmatprep.subr.mxu0 0.0
    %3708 = vmatpush2.msra.mxu0 0.0
    %3709 = vmatprep.subr.mxu0 0.0
    %3710 = vmatpush2.msra.mxu0 0.0
    %3711 = vmatprep.subr.mxu0 0.0
    %3712 = vmatpush2.msra.mxu0 0.0
    %3713 = vmatprep.subr.mxu0 0.0
    %3714 = vmatpush2.msra.mxu0 0.0
    %3715 = vmatprep.subr.mxu0 0.0
    %3716 = vmatpush2.msra.mxu0 0.0
    %3717 = vmatprep.subr.mxu0 0.0
    %3718 = vmatpush2.msra.mxu0 0.0
    %3719 = vmatprep.subr.mxu0 0.0
    %3720 = vmatpush2.msra.mxu0 0.0
    %3721 = vmatprep.subr.mxu0 0.0
    %3722 = vmatpush2.msra.mxu0 0.0
    %3723 = vmatprep.subr.mxu0 0.0
    %3724 = vmatpush2.msra.mxu0 0.0
    %3725 = vmatprep.mubr.f32.mxu0 0.0
    %v3726 = vand.u32 %v3151, 4294901760
    %3727 = vmatmul.mubr.f32.gmra.mxu0 %v3726
    %v3728 = vpop.f32.mrf.mxu0
    %v3729 = vadd.f32 %v3638, %v3728
    %v3730 = vpop.f32.mrf.mxu0
    %3731 = vmatprep.mubr.f32.mxu0 0.0
    %v3732 = vand.u32 %v3154, 4294901760
    %3733 = vmatmul.mubr.f32.gmra.mxu0 %v3732
    %v3734 = vpop.f32.mrf.mxu0
    %v3735 = vadd.f32 %v3644, %v3734
    %v3736 = vpop.f32.mrf.mxu0
    %3737 = vmatprep.mubr.f32.mxu0 0.0
    %v3738 = vand.u32 %v3157, 4294901760
    %3739 = vmatmul.mubr.f32.gmra.mxu0 %v3738
    %v3740 = vpop.f32.mrf.mxu0
    %v3741 = vadd.f32 %v3650, %v3740
    %v3742 = vpop.f32.mrf.mxu0
    %3743 = vmatprep.mubr.f32.mxu0 0.0
    %v3744 = vand.u32 %v3160, 4294901760
    %3745 = vmatmul.mubr.f32.gmra.mxu0 %v3744
    %v3746 = vpop.f32.mrf.mxu0
    %v3747 = vadd.f32 %v3656, %v3746
    %v3748 = vpop.f32.mrf.mxu0
    %3749 = vdwg.mxu0
    %vm3750 = vcmask 261120
    %v3752 = vsel %vm3750, %v82, 0
    %v3755 = vsel %vm3750, %v83, 0
    %3757 = vmatprep.subr.mxu0 0.0
    %3758 = vmatpush1.msra.mxu0 0.0
    %3759 = vmatprep.subr.mxu0 0.0
    %3760 = vmatpush1.msra.mxu0 0.0
    %3761 = vmatprep.subr.mxu0 0.0
    %3762 = vmatpush1.msra.mxu0 0.0
    %3763 = vmatprep.subr.mxu0 0.0
    %3764 = vmatpush1.msra.mxu0 0.0
    %3765 = vmatprep.subr.mxu0 0.0
    %3766 = vmatpush1.msra.mxu0 0.0
    %3767 = vmatprep.subr.mxu0 0.0
    %3768 = vmatpush1.msra.mxu0 0.0
    %3769 = vmatprep.subr.mxu0 0.0
    %3770 = vmatpush1.msra.mxu0 0.0
    %3771 = vmatprep.subr.mxu0 0.0
    %3772 = vmatpush1.msra.mxu0 0.0
    %3773 = vmatprep.subr.mxu0 0.0
    %3774 = vmatpush1.msra.mxu0 0.0
    %3775 = vmatprep.subr.mxu0 0.0
    %3776 = vmatpush1.msra.mxu0 0.0
    %3777 = vmatprep.subr.mxu0 0.0
    %3778 = vmatpush1.msra.mxu0 0.0
    %3779 = vmatprep.subr.mxu0 0.0
    %3780 = vmatpush1.msra.mxu0 0.0
    %3781 = vmatprep.subr.mxu0 0.0
    %v3782 = vand.u32 %v3747, 4294901760
    %3783 = vmatpush1.msra.mxu0 %v3782
    %3784 = vmatprep.subr.mxu0 0.0
    %v3785 = vand.u32 %v3741, 4294901760
    %3786 = vmatpush1.msra.mxu0 %v3785
    %3787 = vmatprep.subr.mxu0 0.0
    %v3788 = vand.u32 %v3735, 4294901760
    %3789 = vmatpush1.msra.mxu0 %v3788
    %3790 = vmatprep.subr.mxu0 0.0
    %v3791 = vand.u32 %v3729, 4294901760
    %3792 = vmatpush1.msra.mxu0 %v3791
    %3793 = vmatprep.subr.mxu0 0.0
    %3794 = vmatpush2.msra.mxu0 0.0
    %3795 = vmatprep.subr.mxu0 0.0
    %3796 = vmatpush2.msra.mxu0 0.0
    %3797 = vmatprep.subr.mxu0 0.0
    %3798 = vmatpush2.msra.mxu0 0.0
    %3799 = vmatprep.subr.mxu0 0.0
    %3800 = vmatpush2.msra.mxu0 0.0
    %3801 = vmatprep.subr.mxu0 0.0
    %3802 = vmatpush2.msra.mxu0 0.0
    %3803 = vmatprep.subr.mxu0 0.0
    %3804 = vmatpush2.msra.mxu0 0.0
    %3805 = vmatprep.subr.mxu0 0.0
    %3806 = vmatpush2.msra.mxu0 0.0
    %3807 = vmatprep.subr.mxu0 0.0
    %3808 = vmatpush2.msra.mxu0 0.0
    %3809 = vmatprep.subr.mxu0 0.0
    %3810 = vmatpush2.msra.mxu0 0.0
    %3811 = vmatprep.subr.mxu0 0.0
    %3812 = vmatpush2.msra.mxu0 0.0
    %3813 = vmatprep.subr.mxu0 0.0
    %3814 = vmatpush2.msra.mxu0 0.0
    %3815 = vmatprep.subr.mxu0 0.0
    %3816 = vmatpush2.msra.mxu0 0.0
    %3817 = vmatprep.subr.mxu0 0.0
    %3818 = vmatpush2.msra.mxu0 0.0
    %3819 = vmatprep.subr.mxu0 0.0
    %3820 = vmatpush2.msra.mxu0 0.0
    %3821 = vmatprep.subr.mxu0 0.0
    %3822 = vmatpush2.msra.mxu0 0.0
    %3823 = vmatprep.subr.mxu0 0.0
    %3824 = vmatpush2.msra.mxu0 0.0
    %3825 = vmatprep.mubr.f32.mxu0 0.0
    %v3826 = vand.u32 %v3752, 4294901760
    %v3827 = vsub.f32 %v3752, %v3826
    %v3828 = vand.u32 %v3827, 4294901760
    %v3829 = vsub.f32 %v3827, %v3828
    %v3830 = vand.u32 %v3829, 4294901760
    %3831 = vmatmul.mubr.f32.gmra.mxu0 %v3830
    %v3832 = vpop.f32.mrf.mxu0
    %v3833 = vadd.f32 0.0, %v3832
    %v3834 = vpop.f32.mrf.mxu0
    %3835 = vmatprep.mubr.f32.mxu0 0.0
    %v3836 = vand.u32 %v3755, 4294901760
    %v3837 = vsub.f32 %v3755, %v3836
    %v3838 = vand.u32 %v3837, 4294901760
    %v3839 = vsub.f32 %v3837, %v3838
    %v3840 = vand.u32 %v3839, 4294901760
    %3841 = vmatmul.mubr.f32.gmra.mxu0 %v3840
    %v3842 = vpop.f32.mrf.mxu0
    %v3843 = vadd.f32 0.0, %v3842
    %v3844 = vpop.f32.mrf.mxu0
    %3845 = vdwg.mxu0
    %3846 = vmatprep.subr.mxu0 0.0
    %3847 = vmatpush1.msra.mxu0 0.0
    %3848 = vmatprep.subr.mxu0 0.0
    %3849 = vmatpush1.msra.mxu0 0.0
    %3850 = vmatprep.subr.mxu0 0.0
    %3851 = vmatpush1.msra.mxu0 0.0
    %3852 = vmatprep.subr.mxu0 0.0
    %3853 = vmatpush1.msra.mxu0 0.0
    %3854 = vmatprep.subr.mxu0 0.0
    %3855 = vmatpush1.msra.mxu0 0.0
    %3856 = vmatprep.subr.mxu0 0.0
    %3857 = vmatpush1.msra.mxu0 0.0
    %3858 = vmatprep.subr.mxu0 0.0
    %3859 = vmatpush1.msra.mxu0 0.0
    %3860 = vmatprep.subr.mxu0 0.0
    %3861 = vmatpush1.msra.mxu0 0.0
    %3862 = vmatprep.subr.mxu0 0.0
    %3863 = vmatpush1.msra.mxu0 0.0
    %3864 = vmatprep.subr.mxu0 0.0
    %3865 = vmatpush1.msra.mxu0 0.0
    %3866 = vmatprep.subr.mxu0 0.0
    %3867 = vmatpush1.msra.mxu0 0.0
    %3868 = vmatprep.subr.mxu0 0.0
    %3869 = vmatpush1.msra.mxu0 0.0
    %3870 = vmatprep.subr.mxu0 0.0
    %v3871 = vand.u32 %v3747, 4294901760
    %v3872 = vsub.f32 %v3747, %v3871
    %v3873 = vand.u32 %v3872, 4294901760
    %v3874 = vsub.f32 %v3872, %v3873
    %v3875 = vand.u32 %v3874, 4294901760
    %3876 = vmatpush1.msra.mxu0 %v3875
    %3877 = vmatprep.subr.mxu0 0.0
    %v3878 = vand.u32 %v3741, 4294901760
    %v3879 = vsub.f32 %v3741, %v3878
    %v3880 = vand.u32 %v3879, 4294901760
    %v3881 = vsub.f32 %v3879, %v3880
    %v3882 = vand.u32 %v3881, 4294901760
    %3883 = vmatpush1.msra.mxu0 %v3882
    %3884 = vmatprep.subr.mxu0 0.0
    %v3885 = vand.u32 %v3735, 4294901760
    %v3886 = vsub.f32 %v3735, %v3885
    %v3887 = vand.u32 %v3886, 4294901760
    %v3888 = vsub.f32 %v3886, %v3887
    %v3889 = vand.u32 %v3888, 4294901760
    %3890 = vmatpush1.msra.mxu0 %v3889
    %3891 = vmatprep.subr.mxu0 0.0
    %v3892 = vand.u32 %v3729, 4294901760
    %v3893 = vsub.f32 %v3729, %v3892
    %v3894 = vand.u32 %v3893, 4294901760
    %v3895 = vsub.f32 %v3893, %v3894
    %v3896 = vand.u32 %v3895, 4294901760
    %3897 = vmatpush1.msra.mxu0 %v3896
    %3898 = vmatprep.subr.mxu0 0.0
    %3899 = vmatpush2.msra.mxu0 0.0
    %3900 = vmatprep.subr.mxu0 0.0
    %3901 = vmatpush2.msra.mxu0 0.0
    %3902 = vmatprep.subr.mxu0 0.0
    %3903 = vmatpush2.msra.mxu0 0.0
    %3904 = vmatprep.subr.mxu0 0.0
    %3905 = vmatpush2.msra.mxu0 0.0
    %3906 = vmatprep.subr.mxu0 0.0
    %3907 = vmatpush2.msra.mxu0 0.0
    %3908 = vmatprep.subr.mxu0 0.0
    %3909 = vmatpush2.msra.mxu0 0.0
    %3910 = vmatprep.subr.mxu0 0.0
    %3911 = vmatpush2.msra.mxu0 0.0
    %3912 = vmatprep.subr.mxu0 0.0
    %3913 = vmatpush2.msra.mxu0 0.0
    %3914 = vmatprep.subr.mxu0 0.0
    %3915 = vmatpush2.msra.mxu0 0.0
    %3916 = vmatprep.subr.mxu0 0.0
    %3917 = vmatpush2.msra.mxu0 0.0
    %3918 = vmatprep.subr.mxu0 0.0
    %3919 = vmatpush2.msra.mxu0 0.0
    %3920 = vmatprep.subr.mxu0 0.0
    %3921 = vmatpush2.msra.mxu0 0.0
    %3922 = vmatprep.subr.mxu0 0.0
    %3923 = vmatpush2.msra.mxu0 0.0
    %3924 = vmatprep.subr.mxu0 0.0
    %3925 = vmatpush2.msra.mxu0 0.0
    %3926 = vmatprep.subr.mxu0 0.0
    %3927 = vmatpush2.msra.mxu0 0.0
    %3928 = vmatprep.subr.mxu0 0.0
    %3929 = vmatpush2.msra.mxu0 0.0
    %3930 = vmatprep.mubr.f32.mxu0 0.0
    %v3931 = vand.u32 %v3752, 4294901760
    %3932 = vmatmul.mubr.f32.gmra.mxu0 %v3931
    %v3933 = vpop.f32.mrf.mxu0
    %v3934 = vadd.f32 %v3833, %v3933
    %v3935 = vpop.f32.mrf.mxu0
    %3936 = vmatprep.mubr.f32.mxu0 0.0
    %v3937 = vand.u32 %v3755, 4294901760
    %3938 = vmatmul.mubr.f32.gmra.mxu0 %v3937
    %v3939 = vpop.f32.mrf.mxu0
    %v3940 = vadd.f32 %v3843, %v3939
    %v3941 = vpop.f32.mrf.mxu0
    %3942 = vdwg.mxu0
    %3943 = vmatprep.subr.mxu0 0.0
    %3944 = vmatpush1.msra.mxu0 0.0
    %3945 = vmatprep.subr.mxu0 0.0
    %3946 = vmatpush1.msra.mxu0 0.0
    %3947 = vmatprep.subr.mxu0 0.0
    %3948 = vmatpush1.msra.mxu0 0.0
    %3949 = vmatprep.subr.mxu0 0.0
    %3950 = vmatpush1.msra.mxu0 0.0
    %3951 = vmatprep.subr.mxu0 0.0
    %3952 = vmatpush1.msra.mxu0 0.0
    %3953 = vmatprep.subr.mxu0 0.0
    %3954 = vmatpush1.msra.mxu0 0.0
    %3955 = vmatprep.subr.mxu0 0.0
    %3956 = vmatpush1.msra.mxu0 0.0
    %3957 = vmatprep.subr.mxu0 0.0
    %3958 = vmatpush1.msra.mxu0 0.0
    %3959 = vmatprep.subr.mxu0 0.0
    %3960 = vmatpush1.msra.mxu0 0.0
    %3961 = vmatprep.subr.mxu0 0.0
    %3962 = vmatpush1.msra.mxu0 0.0
    %3963 = vmatprep.subr.mxu0 0.0
    %3964 = vmatpush1.msra.mxu0 0.0
    %3965 = vmatprep.subr.mxu0 0.0
    %3966 = vmatpush1.msra.mxu0 0.0
    %3967 = vmatprep.subr.mxu0 0.0
    %v3968 = vand.u32 %v3747, 4294901760
    %v3969 = vsub.f32 %v3747, %v3968
    %3970 = vmatpush1.msra.mxu0 %v3969
    %3971 = vmatprep.subr.mxu0 0.0
    %v3972 = vand.u32 %v3741, 4294901760
    %v3973 = vsub.f32 %v3741, %v3972
    %3974 = vmatpush1.msra.mxu0 %v3973
    %3975 = vmatprep.subr.mxu0 0.0
    %v3976 = vand.u32 %v3735, 4294901760
    %v3977 = vsub.f32 %v3735, %v3976
    %3978 = vmatpush1.msra.mxu0 %v3977
    %3979 = vmatprep.subr.mxu0 0.0
    %v3980 = vand.u32 %v3729, 4294901760
    %v3981 = vsub.f32 %v3729, %v3980
    %3982 = vmatpush1.msra.mxu0 %v3981
    %3983 = vmatprep.subr.mxu0 0.0
    %3984 = vmatpush2.msra.mxu0 0.0
    %3985 = vmatprep.subr.mxu0 0.0
    %3986 = vmatpush2.msra.mxu0 0.0
    %3987 = vmatprep.subr.mxu0 0.0
    %3988 = vmatpush2.msra.mxu0 0.0
    %3989 = vmatprep.subr.mxu0 0.0
    %3990 = vmatpush2.msra.mxu0 0.0
    %3991 = vmatprep.subr.mxu0 0.0
    %3992 = vmatpush2.msra.mxu0 0.0
    %3993 = vmatprep.subr.mxu0 0.0
    %3994 = vmatpush2.msra.mxu0 0.0
    %3995 = vmatprep.subr.mxu0 0.0
    %3996 = vmatpush2.msra.mxu0 0.0
    %3997 = vmatprep.subr.mxu0 0.0
    %3998 = vmatpush2.msra.mxu0 0.0
    %3999 = vmatprep.subr.mxu0 0.0
    %4000 = vmatpush2.msra.mxu0 0.0
    %4001 = vmatprep.subr.mxu0 0.0
    %4002 = vmatpush2.msra.mxu0 0.0
    %4003 = vmatprep.subr.mxu0 0.0
    %4004 = vmatpush2.msra.mxu0 0.0
    %4005 = vmatprep.subr.mxu0 0.0
    %4006 = vmatpush2.msra.mxu0 0.0
    %4007 = vmatprep.subr.mxu0 0.0
    %4008 = vmatpush2.msra.mxu0 0.0
    %4009 = vmatprep.subr.mxu0 0.0
    %4010 = vmatpush2.msra.mxu0 0.0
    %4011 = vmatprep.subr.mxu0 0.0
    %4012 = vmatpush2.msra.mxu0 0.0
    %4013 = vmatprep.subr.mxu0 0.0
    %4014 = vmatpush2.msra.mxu0 0.0
    %4015 = vmatprep.mubr.f32.mxu0 0.0
    %v4016 = vand.u32 %v3752, 4294901760
    %v4017 = vsub.f32 %v3752, %v4016
    %4018 = vmatmul.mubr.f32.gmra.mxu0 %v4017
    %v4019 = vpop.f32.mrf.mxu0
    %v4020 = vadd.f32 %v3934, %v4019
    %v4021 = vpop.f32.mrf.mxu0
    %4022 = vmatprep.mubr.f32.mxu0 0.0
    %v4023 = vand.u32 %v3755, 4294901760
    %v4024 = vsub.f32 %v3755, %v4023
    %4025 = vmatmul.mubr.f32.gmra.mxu0 %v4024
    %v4026 = vpop.f32.mrf.mxu0
    %v4027 = vadd.f32 %v3940, %v4026
    %v4028 = vpop.f32.mrf.mxu0
    %4029 = vdwg.mxu0
    %4030 = vmatprep.subr.mxu0 0.0
    %4031 = vmatpush1.msra.mxu0 0.0
    %4032 = vmatprep.subr.mxu0 0.0
    %4033 = vmatpush1.msra.mxu0 0.0
    %4034 = vmatprep.subr.mxu0 0.0
    %4035 = vmatpush1.msra.mxu0 0.0
    %4036 = vmatprep.subr.mxu0 0.0
    %4037 = vmatpush1.msra.mxu0 0.0
    %4038 = vmatprep.subr.mxu0 0.0
    %4039 = vmatpush1.msra.mxu0 0.0
    %4040 = vmatprep.subr.mxu0 0.0
    %4041 = vmatpush1.msra.mxu0 0.0
    %4042 = vmatprep.subr.mxu0 0.0
    %4043 = vmatpush1.msra.mxu0 0.0
    %4044 = vmatprep.subr.mxu0 0.0
    %4045 = vmatpush1.msra.mxu0 0.0
    %4046 = vmatprep.subr.mxu0 0.0
    %4047 = vmatpush1.msra.mxu0 0.0
    %4048 = vmatprep.subr.mxu0 0.0
    %4049 = vmatpush1.msra.mxu0 0.0
    %4050 = vmatprep.subr.mxu0 0.0
    %4051 = vmatpush1.msra.mxu0 0.0
    %4052 = vmatprep.subr.mxu0 0.0
    %4053 = vmatpush1.msra.mxu0 0.0
    %4054 = vmatprep.subr.mxu0 0.0
    %v4055 = vand.u32 %v3747, 4294901760
    %4056 = vmatpush1.msra.mxu0 %v4055
    %4057 = vmatprep.subr.mxu0 0.0
    %v4058 = vand.u32 %v3741, 4294901760
    %4059 = vmatpush1.msra.mxu0 %v4058
    %4060 = vmatprep.subr.mxu0 0.0
    %v4061 = vand.u32 %v3735, 4294901760
    %4062 = vmatpush1.msra.mxu0 %v4061
    %4063 = vmatprep.subr.mxu0 0.0
    %v4064 = vand.u32 %v3729, 4294901760
    %4065 = vmatpush1.msra.mxu0 %v4064
    %4066 = vmatprep.subr.mxu0 0.0
    %4067 = vmatpush2.msra.mxu0 0.0
    %4068 = vmatprep.subr.mxu0 0.0
    %4069 = vmatpush2.msra.mxu0 0.0
    %4070 = vmatprep.subr.mxu0 0.0
    %4071 = vmatpush2.msra.mxu0 0.0
    %4072 = vmatprep.subr.mxu0 0.0
    %4073 = vmatpush2.msra.mxu0 0.0
    %4074 = vmatprep.subr.mxu0 0.0
    %4075 = vmatpush2.msra.mxu0 0.0
    %4076 = vmatprep.subr.mxu0 0.0
    %4077 = vmatpush2.msra.mxu0 0.0
    %4078 = vmatprep.subr.mxu0 0.0
    %4079 = vmatpush2.msra.mxu0 0.0
    %4080 = vmatprep.subr.mxu0 0.0
    %4081 = vmatpush2.msra.mxu0 0.0
    %4082 = vmatprep.subr.mxu0 0.0
    %4083 = vmatpush2.msra.mxu0 0.0
    %4084 = vmatprep.subr.mxu0 0.0
    %4085 = vmatpush2.msra.mxu0 0.0
    %4086 = vmatprep.subr.mxu0 0.0
    %4087 = vmatpush2.msra.mxu0 0.0
    %4088 = vmatprep.subr.mxu0 0.0
    %4089 = vmatpush2.msra.mxu0 0.0
    %4090 = vmatprep.subr.mxu0 0.0
    %4091 = vmatpush2.msra.mxu0 0.0
    %4092 = vmatprep.subr.mxu0 0.0
    %4093 = vmatpush2.msra.mxu0 0.0
    %4094 = vmatprep.subr.mxu0 0.0
    %4095 = vmatpush2.msra.mxu0 0.0
    %4096 = vmatprep.subr.mxu0 0.0
    %4097 = vmatpush2.msra.mxu0 0.0
    %4098 = vmatprep.mubr.f32.mxu0 0.0
    %v4099 = vand.u32 %v3752, 4294901760
    %v4100 = vsub.f32 %v3752, %v4099
    %v4101 = vand.u32 %v4100, 4294901760
    %4102 = vmatmul.mubr.f32.gmra.mxu0 %v4101
    %v4103 = vpop.f32.mrf.mxu0
    %v4104 = vadd.f32 %v4020, %v4103
    %v4105 = vpop.f32.mrf.mxu0
    %4106 = vmatprep.mubr.f32.mxu0 0.0
    %v4107 = vand.u32 %v3755, 4294901760
    %v4108 = vsub.f32 %v3755, %v4107
    %v4109 = vand.u32 %v4108, 4294901760
    %4110 = vmatmul.mubr.f32.gmra.mxu0 %v4109
    %v4111 = vpop.f32.mrf.mxu0
    %v4112 = vadd.f32 %v4027, %v4111
    %v4113 = vpop.f32.mrf.mxu0
    %4114 = vdwg.mxu0
    %4115 = vmatprep.subr.mxu0 0.0
    %4116 = vmatpush1.msra.mxu0 0.0
    %4117 = vmatprep.subr.mxu0 0.0
    %4118 = vmatpush1.msra.mxu0 0.0
    %4119 = vmatprep.subr.mxu0 0.0
    %4120 = vmatpush1.msra.mxu0 0.0
    %4121 = vmatprep.subr.mxu0 0.0
    %4122 = vmatpush1.msra.mxu0 0.0
    %4123 = vmatprep.subr.mxu0 0.0
    %4124 = vmatpush1.msra.mxu0 0.0
    %4125 = vmatprep.subr.mxu0 0.0
    %4126 = vmatpush1.msra.mxu0 0.0
    %4127 = vmatprep.subr.mxu0 0.0
    %4128 = vmatpush1.msra.mxu0 0.0
    %4129 = vmatprep.subr.mxu0 0.0
    %4130 = vmatpush1.msra.mxu0 0.0
    %4131 = vmatprep.subr.mxu0 0.0
    %4132 = vmatpush1.msra.mxu0 0.0
    %4133 = vmatprep.subr.mxu0 0.0
    %4134 = vmatpush1.msra.mxu0 0.0
    %4135 = vmatprep.subr.mxu0 0.0
    %4136 = vmatpush1.msra.mxu0 0.0
    %4137 = vmatprep.subr.mxu0 0.0
    %4138 = vmatpush1.msra.mxu0 0.0
    %4139 = vmatprep.subr.mxu0 0.0
    %v4140 = vand.u32 %v3747, 4294901760
    %v4141 = vsub.f32 %v3747, %v4140
    %v4142 = vand.u32 %v4141, 4294901760
    %4143 = vmatpush1.msra.mxu0 %v4142
    %4144 = vmatprep.subr.mxu0 0.0
    %v4145 = vand.u32 %v3741, 4294901760
    %v4146 = vsub.f32 %v3741, %v4145
    %v4147 = vand.u32 %v4146, 4294901760
    %4148 = vmatpush1.msra.mxu0 %v4147
    %4149 = vmatprep.subr.mxu0 0.0
    %v4150 = vand.u32 %v3735, 4294901760
    %v4151 = vsub.f32 %v3735, %v4150
    %v4152 = vand.u32 %v4151, 4294901760
    %4153 = vmatpush1.msra.mxu0 %v4152
    %4154 = vmatprep.subr.mxu0 0.0
    %v4155 = vand.u32 %v3729, 4294901760
    %v4156 = vsub.f32 %v3729, %v4155
    %v4157 = vand.u32 %v4156, 4294901760
    %4158 = vmatpush1.msra.mxu0 %v4157
    %4159 = vmatprep.subr.mxu0 0.0
    %4160 = vmatpush2.msra.mxu0 0.0
    %4161 = vmatprep.subr.mxu0 0.0
    %4162 = vmatpush2.msra.mxu0 0.0
    %4163 = vmatprep.subr.mxu0 0.0
    %4164 = vmatpush2.msra.mxu0 0.0
    %4165 = vmatprep.subr.mxu0 0.0
    %4166 = vmatpush2.msra.mxu0 0.0
    %4167 = vmatprep.subr.mxu0 0.0
    %4168 = vmatpush2.msra.mxu0 0.0
    %4169 = vmatprep.subr.mxu0 0.0
    %4170 = vmatpush2.msra.mxu0 0.0
    %4171 = vmatprep.subr.mxu0 0.0
    %4172 = vmatpush2.msra.mxu0 0.0
    %4173 = vmatprep.subr.mxu0 0.0
    %4174 = vmatpush2.msra.mxu0 0.0
    %4175 = vmatprep.subr.mxu0 0.0
    %4176 = vmatpush2.msra.mxu0 0.0
    %4177 = vmatprep.subr.mxu0 0.0
    %4178 = vmatpush2.msra.mxu0 0.0
    %4179 = vmatprep.subr.mxu0 0.0
    %4180 = vmatpush2.msra.mxu0 0.0
    %4181 = vmatprep.subr.mxu0 0.0
    %4182 = vmatpush2.msra.mxu0 0.0
    %4183 = vmatprep.subr.mxu0 0.0
    %4184 = vmatpush2.msra.mxu0 0.0
    %4185 = vmatprep.subr.mxu0 0.0
    %4186 = vmatpush2.msra.mxu0 0.0
    %4187 = vmatprep.subr.mxu0 0.0
    %4188 = vmatpush2.msra.mxu0 0.0
    %4189 = vmatprep.subr.mxu0 0.0
    %4190 = vmatpush2.msra.mxu0 0.0
    %4191 = vmatprep.mubr.f32.mxu0 0.0
    %v4192 = vand.u32 %v3752, 4294901760
    %4193 = vmatmul.mubr.f32.gmra.mxu0 %v4192
    %v4194 = vpop.f32.mrf.mxu0
    %v4195 = vadd.f32 %v4104, %v4194
    %v4196 = vpop.f32.mrf.mxu0
    %4197 = vmatprep.mubr.f32.mxu0 0.0
    %v4198 = vand.u32 %v3755, 4294901760
    %4199 = vmatmul.mubr.f32.gmra.mxu0 %v4198
    %v4200 = vpop.f32.mrf.mxu0
    %v4201 = vadd.f32 %v4112, %v4200
    %v4202 = vpop.f32.mrf.mxu0
    %4203 = vdwg.mxu0
    %4204 = vmatprep.subr.mxu0 0.0
    %4205 = vmatpush1.msra.mxu0 0.0
    %4206 = vmatprep.subr.mxu0 0.0
    %4207 = vmatpush1.msra.mxu0 0.0
    %4208 = vmatprep.subr.mxu0 0.0
    %4209 = vmatpush1.msra.mxu0 0.0
    %4210 = vmatprep.subr.mxu0 0.0
    %4211 = vmatpush1.msra.mxu0 0.0
    %4212 = vmatprep.subr.mxu0 0.0
    %4213 = vmatpush1.msra.mxu0 0.0
    %4214 = vmatprep.subr.mxu0 0.0
    %4215 = vmatpush1.msra.mxu0 0.0
    %4216 = vmatprep.subr.mxu0 0.0
    %4217 = vmatpush1.msra.mxu0 0.0
    %4218 = vmatprep.subr.mxu0 0.0
    %4219 = vmatpush1.msra.mxu0 0.0
    %4220 = vmatprep.subr.mxu0 0.0
    %4221 = vmatpush1.msra.mxu0 0.0
    %4222 = vmatprep.subr.mxu0 0.0
    %4223 = vmatpush1.msra.mxu0 0.0
    %4224 = vmatprep.subr.mxu0 0.0
    %4225 = vmatpush1.msra.mxu0 0.0
    %4226 = vmatprep.subr.mxu0 0.0
    %4227 = vmatpush1.msra.mxu0 0.0
    %4228 = vmatprep.subr.mxu0 0.0
    %v4229 = vand.u32 %v3747, 4294901760
    %4230 = vmatpush1.msra.mxu0 %v4229
    %4231 = vmatprep.subr.mxu0 0.0
    %v4232 = vand.u32 %v3741, 4294901760
    %4233 = vmatpush1.msra.mxu0 %v4232
    %4234 = vmatprep.subr.mxu0 0.0
    %v4235 = vand.u32 %v3735, 4294901760
    %4236 = vmatpush1.msra.mxu0 %v4235
    %4237 = vmatprep.subr.mxu0 0.0
    %v4238 = vand.u32 %v3729, 4294901760
    %4239 = vmatpush1.msra.mxu0 %v4238
    %4240 = vmatprep.subr.mxu0 0.0
    %4241 = vmatpush2.msra.mxu0 0.0
    %4242 = vmatprep.subr.mxu0 0.0
    %4243 = vmatpush2.msra.mxu0 0.0
    %4244 = vmatprep.subr.mxu0 0.0
    %4245 = vmatpush2.msra.mxu0 0.0
    %4246 = vmatprep.subr.mxu0 0.0
    %4247 = vmatpush2.msra.mxu0 0.0
    %4248 = vmatprep.subr.mxu0 0.0
    %4249 = vmatpush2.msra.mxu0 0.0
    %4250 = vmatprep.subr.mxu0 0.0
    %4251 = vmatpush2.msra.mxu0 0.0
    %4252 = vmatprep.subr.mxu0 0.0
    %4253 = vmatpush2.msra.mxu0 0.0
    %4254 = vmatprep.subr.mxu0 0.0
    %4255 = vmatpush2.msra.mxu0 0.0
    %4256 = vmatprep.subr.mxu0 0.0
    %4257 = vmatpush2.msra.mxu0 0.0
    %4258 = vmatprep.subr.mxu0 0.0
    %4259 = vmatpush2.msra.mxu0 0.0
    %4260 = vmatprep.subr.mxu0 0.0
    %4261 = vmatpush2.msra.mxu0 0.0
    %4262 = vmatprep.subr.mxu0 0.0
    %4263 = vmatpush2.msra.mxu0 0.0
    %4264 = vmatprep.subr.mxu0 0.0
    %4265 = vmatpush2.msra.mxu0 0.0
    %4266 = vmatprep.subr.mxu0 0.0
    %4267 = vmatpush2.msra.mxu0 0.0
    %4268 = vmatprep.subr.mxu0 0.0
    %4269 = vmatpush2.msra.mxu0 0.0
    %4270 = vmatprep.subr.mxu0 0.0
    %4271 = vmatpush2.msra.mxu0 0.0
    %4272 = vmatprep.mubr.f32.mxu0 0.0
    %v4273 = vand.u32 %v3752, 4294901760
    %4274 = vmatmul.mubr.f32.gmra.mxu0 %v4273
    %v4275 = vpop.f32.mrf.mxu0
    %v4276 = vadd.f32 %v4195, %v4275
    %v4277 = vpop.f32.mrf.mxu0
    %4278 = vmatprep.mubr.f32.mxu0 0.0
    %v4279 = vand.u32 %v3755, 4294901760
    %4280 = vmatmul.mubr.f32.gmra.mxu0 %v4279
    %v4281 = vpop.f32.mrf.mxu0
    %v4282 = vadd.f32 %v4201, %v4281
    %v4283 = vpop.f32.mrf.mxu0
    %4284 = vdwg.mxu0
    %v4285 = vld [vmem:[%s5] sm:$0xff]
    %v4286 = vld [vmem:[%s6] sm:$0xff]
    %vm4287 = vcmask 58368
    %4288 = vst.msk [vmem:[#allocation3] sm:$0x3] %vm4287, 0.0
    %4289 = vst.msk [vmem:[#allocation3 + $0x10] sm:$0x3] %vm4287, 0.0
    %4290 = vst.msk [vmem:[#allocation3 + $0xa] sm:$0x3] %vm4287, 0.0
    %4291 = vst.msk [vmem:[#allocation3 + $0x1a] sm:$0x3] %vm4287, 0.0
    %vm4292 = vcmask 64512
    %4293 = vst.msk [vmem:[#allocation3 + $0x2] sm:$0xff] %vm4292, %v4276
    %4294 = vst.msk [vmem:[#allocation3 + $0x12] sm:$0xff] %vm4292, %v4282
    %v4295 = vld [vmem:[#allocation3] sm:$0xff]
    %v4296 = vld [vmem:[#allocation3 + $0x10] sm:$0xff]
    %v4297 = vld [vmem:[%s2] sm:$0xff]
    %v4298 = vld [vmem:[#allocation3 + $0x1] sm:$0xff]
    %v4299 = vld [vmem:[#allocation3 + $0x11] sm:$0xff]
    %s4300 = scalar_lea.vmem %s2, 8
    %v4301 = vld [vmem:[%s4300] sm:$0xff]
    %v4303 = vsel %vm4292, %v4298, 0
    %v4306 = vsel %vm4292, %v4299, 0
    %4308 = vmatprep.subr.mxu0 0.0
    %4309 = vmatpush1.msra.mxu0 0.0
    %4310 = vmatprep.subr.mxu0 0.0
    %4311 = vmatpush1.msra.mxu0 0.0
    %4312 = vmatprep.subr.mxu0 0.0
    %4313 = vmatpush1.msra.mxu0 0.0
    %4314 = vmatprep.subr.mxu0 0.0
    %4315 = vmatpush1.msra.mxu0 0.0
    %4316 = vmatprep.subr.mxu0 0.0
    %4317 = vmatpush1.msra.mxu0 0.0
    %4318 = vmatprep.subr.mxu0 0.0
    %4319 = vmatpush1.msra.mxu0 0.0
    %4320 = vmatprep.subr.mxu0 0.0
    %4321 = vmatpush1.msra.mxu0 0.0
    %4322 = vmatprep.subr.mxu0 0.0
    %4323 = vmatpush1.msra.mxu0 0.0
    %4324 = vmatprep.subr.mxu0 0.0
    %4325 = vmatpush1.msra.mxu0 0.0
    %4326 = vmatprep.subr.mxu0 0.0
    %4327 = vmatpush1.msra.mxu0 0.0
    %4328 = vmatprep.subr.mxu0 0.0
    %4329 = vmatpush1.msra.mxu0 0.0
    %4330 = vmatprep.subr.mxu0 0.0
    %4331 = vmatpush1.msra.mxu0 0.0
    %4332 = vmatprep.subr.mxu0 0.0
    %4333 = vmatpush1.msra.mxu0 0.0
    %4334 = vmatprep.subr.mxu0 0.0
    %4335 = vmatpush1.msra.mxu0 0.0
    %4336 = vmatprep.subr.mxu0 0.0
    %4337 = vmatpush1.msra.mxu0 0.0
    %4338 = vmatprep.subr.mxu0 0.0
    %v4339 = vand.u32 %v4301, 4294901760
    %4340 = vmatpush1.msra.mxu0 %v4339
    %4341 = vmatprep.subr.mxu0 0.0
    %4342 = vmatpush2.msra.mxu0 0.0
    %4343 = vmatprep.subr.mxu0 0.0
    %4344 = vmatpush2.msra.mxu0 0.0
    %4345 = vmatprep.subr.mxu0 0.0
    %4346 = vmatpush2.msra.mxu0 0.0
    %4347 = vmatprep.subr.mxu0 0.0
    %4348 = vmatpush2.msra.mxu0 0.0
    %4349 = vmatprep.subr.mxu0 0.0
    %4350 = vmatpush2.msra.mxu0 0.0
    %4351 = vmatprep.subr.mxu0 0.0
    %4352 = vmatpush2.msra.mxu0 0.0
    %4353 = vmatprep.subr.mxu0 0.0
    %4354 = vmatpush2.msra.mxu0 0.0
    %4355 = vmatprep.subr.mxu0 0.0
    %4356 = vmatpush2.msra.mxu0 0.0
    %4357 = vmatprep.subr.mxu0 0.0
    %4358 = vmatpush2.msra.mxu0 0.0
    %4359 = vmatprep.subr.mxu0 0.0
    %4360 = vmatpush2.msra.mxu0 0.0
    %4361 = vmatprep.subr.mxu0 0.0
    %4362 = vmatpush2.msra.mxu0 0.0
    %4363 = vmatprep.subr.mxu0 0.0
    %4364 = vmatpush2.msra.mxu0 0.0
    %4365 = vmatprep.subr.mxu0 0.0
    %4366 = vmatpush2.msra.mxu0 0.0
    %4367 = vmatprep.subr.mxu0 0.0
    %4368 = vmatpush2.msra.mxu0 0.0
    %4369 = vmatprep.subr.mxu0 0.0
    %4370 = vmatpush2.msra.mxu0 0.0
    %4371 = vmatprep.subr.mxu0 0.0
    %4372 = vmatpush2.msra.mxu0 0.0
    %4373 = vmatprep.mubr.f32.mxu0 0.0
    %v4374 = vand.u32 %v4303, 4294901760
    %v4375 = vsub.f32 %v4303, %v4374
    %v4376 = vand.u32 %v4375, 4294901760
    %v4377 = vsub.f32 %v4375, %v4376
    %v4378 = vand.u32 %v4377, 4294901760
    %4379 = vmatmul.mubr.f32.gmra.mxu0 %v4378
    %v4380 = vpop.f32.mrf.mxu0
    %v4381 = vadd.f32 0.0, %v4380
    %v4382 = vpop.f32.mrf.mxu0
    %4383 = vmatprep.mubr.f32.mxu0 0.0
    %v4384 = vand.u32 %v4306, 4294901760
    %v4385 = vsub.f32 %v4306, %v4384
    %v4386 = vand.u32 %v4385, 4294901760
    %v4387 = vsub.f32 %v4385, %v4386
    %v4388 = vand.u32 %v4387, 4294901760
    %4389 = vmatmul.mubr.f32.gmra.mxu0 %v4388
    %v4390 = vpop.f32.mrf.mxu0
    %v4391 = vadd.f32 0.0, %v4390
    %v4392 = vpop.f32.mrf.mxu0
    %4393 = vdwg.mxu0
    %4394 = vmatprep.subr.mxu0 0.0
    %4395 = vmatpush1.msra.mxu0 0.0
    %4396 = vmatprep.subr.mxu0 0.0
    %4397 = vmatpush1.msra.mxu0 0.0
    %4398 = vmatprep.subr.mxu0 0.0
    %4399 = vmatpush1.msra.mxu0 0.0
    %4400 = vmatprep.subr.mxu0 0.0
    %4401 = vmatpush1.msra.mxu0 0.0
    %4402 = vmatprep.subr.mxu0 0.0
    %4403 = vmatpush1.msra.mxu0 0.0
    %4404 = vmatprep.subr.mxu0 0.0
    %4405 = vmatpush1.msra.mxu0 0.0
    %4406 = vmatprep.subr.mxu0 0.0
    %4407 = vmatpush1.msra.mxu0 0.0
    %4408 = vmatprep.subr.mxu0 0.0
    %4409 = vmatpush1.msra.mxu0 0.0
    %4410 = vmatprep.subr.mxu0 0.0
    %4411 = vmatpush1.msra.mxu0 0.0
    %4412 = vmatprep.subr.mxu0 0.0
    %4413 = vmatpush1.msra.mxu0 0.0
    %4414 = vmatprep.subr.mxu0 0.0
    %4415 = vmatpush1.msra.mxu0 0.0
    %4416 = vmatprep.subr.mxu0 0.0
    %4417 = vmatpush1.msra.mxu0 0.0
    %4418 = vmatprep.subr.mxu0 0.0
    %4419 = vmatpush1.msra.mxu0 0.0
    %4420 = vmatprep.subr.mxu0 0.0
    %4421 = vmatpush1.msra.mxu0 0.0
    %4422 = vmatprep.subr.mxu0 0.0
    %4423 = vmatpush1.msra.mxu0 0.0
    %4424 = vmatprep.subr.mxu0 0.0
    %v4425 = vand.u32 %v4301, 4294901760
    %v4426 = vsub.f32 %v4301, %v4425
    %v4427 = vand.u32 %v4426, 4294901760
    %v4428 = vsub.f32 %v4426, %v4427
    %v4429 = vand.u32 %v4428, 4294901760
    %4430 = vmatpush1.msra.mxu0 %v4429
    %4431 = vmatprep.subr.mxu0 0.0
    %4432 = vmatpush2.msra.mxu0 0.0
    %4433 = vmatprep.subr.mxu0 0.0
    %4434 = vmatpush2.msra.mxu0 0.0
    %4435 = vmatprep.subr.mxu0 0.0
    %4436 = vmatpush2.msra.mxu0 0.0
    %4437 = vmatprep.subr.mxu0 0.0
    %4438 = vmatpush2.msra.mxu0 0.0
    %4439 = vmatprep.subr.mxu0 0.0
    %4440 = vmatpush2.msra.mxu0 0.0
    %4441 = vmatprep.subr.mxu0 0.0
    %4442 = vmatpush2.msra.mxu0 0.0
    %4443 = vmatprep.subr.mxu0 0.0
    %4444 = vmatpush2.msra.mxu0 0.0
    %4445 = vmatprep.subr.mxu0 0.0
    %4446 = vmatpush2.msra.mxu0 0.0
    %4447 = vmatprep.subr.mxu0 0.0
    %4448 = vmatpush2.msra.mxu0 0.0
    %4449 = vmatprep.subr.mxu0 0.0
    %4450 = vmatpush2.msra.mxu0 0.0
    %4451 = vmatprep.subr.mxu0 0.0
    %4452 = vmatpush2.msra.mxu0 0.0
    %4453 = vmatprep.subr.mxu0 0.0
    %4454 = vmatpush2.msra.mxu0 0.0
    %4455 = vmatprep.subr.mxu0 0.0
    %4456 = vmatpush2.msra.mxu0 0.0
    %4457 = vmatprep.subr.mxu0 0.0
    %4458 = vmatpush2.msra.mxu0 0.0
    %4459 = vmatprep.subr.mxu0 0.0
    %4460 = vmatpush2.msra.mxu0 0.0
    %4461 = vmatprep.subr.mxu0 0.0
    %4462 = vmatpush2.msra.mxu0 0.0
    %4463 = vmatprep.mubr.f32.mxu0 0.0
    %v4464 = vand.u32 %v4303, 4294901760
    %4465 = vmatmul.mubr.f32.gmra.mxu0 %v4464
    %v4466 = vpop.f32.mrf.mxu0
    %v4467 = vadd.f32 %v4381, %v4466
    %v4468 = vpop.f32.mrf.mxu0
    %4469 = vmatprep.mubr.f32.mxu0 0.0
    %v4470 = vand.u32 %v4306, 4294901760
    %4471 = vmatmul.mubr.f32.gmra.mxu0 %v4470
    %v4472 = vpop.f32.mrf.mxu0
    %v4473 = vadd.f32 %v4391, %v4472
    %v4474 = vpop.f32.mrf.mxu0
    %4475 = vdwg.mxu0
    %4476 = vmatprep.subr.mxu0 0.0
    %4477 = vmatpush1.msra.mxu0 0.0
    %4478 = vmatprep.subr.mxu0 0.0
    %4479 = vmatpush1.msra.mxu0 0.0
    %4480 = vmatprep.subr.mxu0 0.0
    %4481 = vmatpush1.msra.mxu0 0.0
    %4482 = vmatprep.subr.mxu0 0.0
    %4483 = vmatpush1.msra.mxu0 0.0
    %4484 = vmatprep.subr.mxu0 0.0
    %4485 = vmatpush1.msra.mxu0 0.0
    %4486 = vmatprep.subr.mxu0 0.0
    %4487 = vmatpush1.msra.mxu0 0.0
    %4488 = vmatprep.subr.mxu0 0.0
    %4489 = vmatpush1.msra.mxu0 0.0
    %4490 = vmatprep.subr.mxu0 0.0
    %4491 = vmatpush1.msra.mxu0 0.0
    %4492 = vmatprep.subr.mxu0 0.0
    %4493 = vmatpush1.msra.mxu0 0.0
    %4494 = vmatprep.subr.mxu0 0.0
    %4495 = vmatpush1.msra.mxu0 0.0
    %4496 = vmatprep.subr.mxu0 0.0
    %4497 = vmatpush1.msra.mxu0 0.0
    %4498 = vmatprep.subr.mxu0 0.0
    %4499 = vmatpush1.msra.mxu0 0.0
    %4500 = vmatprep.subr.mxu0 0.0
    %4501 = vmatpush1.msra.mxu0 0.0
    %4502 = vmatprep.subr.mxu0 0.0
    %4503 = vmatpush1.msra.mxu0 0.0
    %4504 = vmatprep.subr.mxu0 0.0
    %4505 = vmatpush1.msra.mxu0 0.0
    %4506 = vmatprep.subr.mxu0 0.0
    %v4507 = vand.u32 %v4301, 4294901760
    %v4508 = vsub.f32 %v4301, %v4507
    %4509 = vmatpush1.msra.mxu0 %v4508
    %4510 = vmatprep.subr.mxu0 0.0
    %4511 = vmatpush2.msra.mxu0 0.0
    %4512 = vmatprep.subr.mxu0 0.0
    %4513 = vmatpush2.msra.mxu0 0.0
    %4514 = vmatprep.subr.mxu0 0.0
    %4515 = vmatpush2.msra.mxu0 0.0
    %4516 = vmatprep.subr.mxu0 0.0
    %4517 = vmatpush2.msra.mxu0 0.0
    %4518 = vmatprep.subr.mxu0 0.0
    %4519 = vmatpush2.msra.mxu0 0.0
    %4520 = vmatprep.subr.mxu0 0.0
    %4521 = vmatpush2.msra.mxu0 0.0
    %4522 = vmatprep.subr.mxu0 0.0
    %4523 = vmatpush2.msra.mxu0 0.0
    %4524 = vmatprep.subr.mxu0 0.0
    %4525 = vmatpush2.msra.mxu0 0.0
    %4526 = vmatprep.subr.mxu0 0.0
    %4527 = vmatpush2.msra.mxu0 0.0
    %4528 = vmatprep.subr.mxu0 0.0
    %4529 = vmatpush2.msra.mxu0 0.0
    %4530 = vmatprep.subr.mxu0 0.0
    %4531 = vmatpush2.msra.mxu0 0.0
    %4532 = vmatprep.subr.mxu0 0.0
    %4533 = vmatpush2.msra.mxu0 0.0
    %4534 = vmatprep.subr.mxu0 0.0
    %4535 = vmatpush2.msra.mxu0 0.0
    %4536 = vmatprep.subr.mxu0 0.0
    %4537 = vmatpush2.msra.mxu0 0.0
    %4538 = vmatprep.subr.mxu0 0.0
    %4539 = vmatpush2.msra.mxu0 0.0
    %4540 = vmatprep.subr.mxu0 0.0
    %4541 = vmatpush2.msra.mxu0 0.0
    %4542 = vmatprep.mubr.f32.mxu0 0.0
    %v4543 = vand.u32 %v4303, 4294901760
    %v4544 = vsub.f32 %v4303, %v4543
    %4545 = vmatmul.mubr.f32.gmra.mxu0 %v4544
    %v4546 = vpop.f32.mrf.mxu0
    %v4547 = vadd.f32 %v4467, %v4546
    %v4548 = vpop.f32.mrf.mxu0
    %4549 = vmatprep.mubr.f32.mxu0 0.0
    %v4550 = vand.u32 %v4306, 4294901760
    %v4551 = vsub.f32 %v4306, %v4550
    %4552 = vmatmul.mubr.f32.gmra.mxu0 %v4551
    %v4553 = vpop.f32.mrf.mxu0
    %v4554 = vadd.f32 %v4473, %v4553
    %v4555 = vpop.f32.mrf.mxu0
    %4556 = vdwg.mxu0
    %4557 = vmatprep.subr.mxu0 0.0
    %4558 = vmatpush1.msra.mxu0 0.0
    %4559 = vmatprep.subr.mxu0 0.0
    %4560 = vmatpush1.msra.mxu0 0.0
    %4561 = vmatprep.subr.mxu0 0.0
    %4562 = vmatpush1.msra.mxu0 0.0
    %4563 = vmatprep.subr.mxu0 0.0
    %4564 = vmatpush1.msra.mxu0 0.0
    %4565 = vmatprep.subr.mxu0 0.0
    %4566 = vmatpush1.msra.mxu0 0.0
    %4567 = vmatprep.subr.mxu0 0.0
    %4568 = vmatpush1.msra.mxu0 0.0
    %4569 = vmatprep.subr.mxu0 0.0
    %4570 = vmatpush1.msra.mxu0 0.0
    %4571 = vmatprep.subr.mxu0 0.0
    %4572 = vmatpush1.msra.mxu0 0.0
    %4573 = vmatprep.subr.mxu0 0.0
    %4574 = vmatpush1.msra.mxu0 0.0
    %4575 = vmatprep.subr.mxu0 0.0
    %4576 = vmatpush1.msra.mxu0 0.0
    %4577 = vmatprep.subr.mxu0 0.0
    %4578 = vmatpush1.msra.mxu0 0.0
    %4579 = vmatprep.subr.mxu0 0.0
    %4580 = vmatpush1.msra.mxu0 0.0
    %4581 = vmatprep.subr.mxu0 0.0
    %4582 = vmatpush1.msra.mxu0 0.0
    %4583 = vmatprep.subr.mxu0 0.0
    %4584 = vmatpush1.msra.mxu0 0.0
    %4585 = vmatprep.subr.mxu0 0.0
    %4586 = vmatpush1.msra.mxu0 0.0
    %4587 = vmatprep.subr.mxu0 0.0
    %v4588 = vand.u32 %v4301, 4294901760
    %4589 = vmatpush1.msra.mxu0 %v4588
    %4590 = vmatprep.subr.mxu0 0.0
    %4591 = vmatpush2.msra.mxu0 0.0
    %4592 = vmatprep.subr.mxu0 0.0
    %4593 = vmatpush2.msra.mxu0 0.0
    %4594 = vmatprep.subr.mxu0 0.0
    %4595 = vmatpush2.msra.mxu0 0.0
    %4596 = vmatprep.subr.mxu0 0.0
    %4597 = vmatpush2.msra.mxu0 0.0
    %4598 = vmatprep.subr.mxu0 0.0
    %4599 = vmatpush2.msra.mxu0 0.0
    %4600 = vmatprep.subr.mxu0 0.0
    %4601 = vmatpush2.msra.mxu0 0.0
    %4602 = vmatprep.subr.mxu0 0.0
    %4603 = vmatpush2.msra.mxu0 0.0
    %4604 = vmatprep.subr.mxu0 0.0
    %4605 = vmatpush2.msra.mxu0 0.0
    %4606 = vmatprep.subr.mxu0 0.0
    %4607 = vmatpush2.msra.mxu0 0.0
    %4608 = vmatprep.subr.mxu0 0.0
    %4609 = vmatpush2.msra.mxu0 0.0
    %4610 = vmatprep.subr.mxu0 0.0
    %4611 = vmatpush2.msra.mxu0 0.0
    %4612 = vmatprep.subr.mxu0 0.0
    %4613 = vmatpush2.msra.mxu0 0.0
    %4614 = vmatprep.subr.mxu0 0.0
    %4615 = vmatpush2.msra.mxu0 0.0
    %4616 = vmatprep.subr.mxu0 0.0
    %4617 = vmatpush2.msra.mxu0 0.0
    %4618 = vmatprep.subr.mxu0 0.0
    %4619 = vmatpush2.msra.mxu0 0.0
    %4620 = vmatprep.subr.mxu0 0.0
    %4621 = vmatpush2.msra.mxu0 0.0
    %4622 = vmatprep.mubr.f32.mxu0 0.0
    %v4623 = vand.u32 %v4303, 4294901760
    %v4624 = vsub.f32 %v4303, %v4623
    %v4625 = vand.u32 %v4624, 4294901760
    %4626 = vmatmul.mubr.f32.gmra.mxu0 %v4625
    %v4627 = vpop.f32.mrf.mxu0
    %v4628 = vadd.f32 %v4547, %v4627
    %v4629 = vpop.f32.mrf.mxu0
    %4630 = vmatprep.mubr.f32.mxu0 0.0
    %v4631 = vand.u32 %v4306, 4294901760
    %v4632 = vsub.f32 %v4306, %v4631
    %v4633 = vand.u32 %v4632, 4294901760
    %4634 = vmatmul.mubr.f32.gmra.mxu0 %v4633
    %v4635 = vpop.f32.mrf.mxu0
    %v4636 = vadd.f32 %v4554, %v4635
    %v4637 = vpop.f32.mrf.mxu0
    %4638 = vdwg.mxu0
    %4639 = vmatprep.subr.mxu0 0.0
    %4640 = vmatpush1.msra.mxu0 0.0
    %4641 = vmatprep.subr.mxu0 0.0
    %4642 = vmatpush1.msra.mxu0 0.0
    %4643 = vmatprep.subr.mxu0 0.0
    %4644 = vmatpush1.msra.mxu0 0.0
    %4645 = vmatprep.subr.mxu0 0.0
    %4646 = vmatpush1.msra.mxu0 0.0
    %4647 = vmatprep.subr.mxu0 0.0
    %4648 = vmatpush1.msra.mxu0 0.0
    %4649 = vmatprep.subr.mxu0 0.0
    %4650 = vmatpush1.msra.mxu0 0.0
    %4651 = vmatprep.subr.mxu0 0.0
    %4652 = vmatpush1.msra.mxu0 0.0
    %4653 = vmatprep.subr.mxu0 0.0
    %4654 = vmatpush1.msra.mxu0 0.0
    %4655 = vmatprep.subr.mxu0 0.0
    %4656 = vmatpush1.msra.mxu0 0.0
    %4657 = vmatprep.subr.mxu0 0.0
    %4658 = vmatpush1.msra.mxu0 0.0
    %4659 = vmatprep.subr.mxu0 0.0
    %4660 = vmatpush1.msra.mxu0 0.0
    %4661 = vmatprep.subr.mxu0 0.0
    %4662 = vmatpush1.msra.mxu0 0.0
    %4663 = vmatprep.subr.mxu0 0.0
    %4664 = vmatpush1.msra.mxu0 0.0
    %4665 = vmatprep.subr.mxu0 0.0
    %4666 = vmatpush1.msra.mxu0 0.0
    %4667 = vmatprep.subr.mxu0 0.0
    %4668 = vmatpush1.msra.mxu0 0.0
    %4669 = vmatprep.subr.mxu0 0.0
    %v4670 = vand.u32 %v4301, 4294901760
    %v4671 = vsub.f32 %v4301, %v4670
    %v4672 = vand.u32 %v4671, 4294901760
    %4673 = vmatpush1.msra.mxu0 %v4672
    %4674 = vmatprep.subr.mxu0 0.0
    %4675 = vmatpush2.msra.mxu0 0.0
    %4676 = vmatprep.subr.mxu0 0.0
    %4677 = vmatpush2.msra.mxu0 0.0
    %4678 = vmatprep.subr.mxu0 0.0
    %4679 = vmatpush2.msra.mxu0 0.0
    %4680 = vmatprep.subr.mxu0 0.0
    %4681 = vmatpush2.msra.mxu0 0.0
    %4682 = vmatprep.subr.mxu0 0.0
    %4683 = vmatpush2.msra.mxu0 0.0
    %4684 = vmatprep.subr.mxu0 0.0
    %4685 = vmatpush2.msra.mxu0 0.0
    %4686 = vmatprep.subr.mxu0 0.0
    %4687 = vmatpush2.msra.mxu0 0.0
    %4688 = vmatprep.subr.mxu0 0.0
    %4689 = vmatpush2.msra.mxu0 0.0
    %4690 = vmatprep.subr.mxu0 0.0
    %4691 = vmatpush2.msra.mxu0 0.0
    %4692 = vmatprep.subr.mxu0 0.0
    %4693 = vmatpush2.msra.mxu0 0.0
    %4694 = vmatprep.subr.mxu0 0.0
    %4695 = vmatpush2.msra.mxu0 0.0
    %4696 = vmatprep.subr.mxu0 0.0
    %4697 = vmatpush2.msra.mxu0 0.0
    %4698 = vmatprep.subr.mxu0 0.0
    %4699 = vmatpush2.msra.mxu0 0.0
    %4700 = vmatprep.subr.mxu0 0.0
    %4701 = vmatpush2.msra.mxu0 0.0
    %4702 = vmatprep.subr.mxu0 0.0
    %4703 = vmatpush2.msra.mxu0 0.0
    %4704 = vmatprep.subr.mxu0 0.0
    %4705 = vmatpush2.msra.mxu0 0.0
    %4706 = vmatprep.mubr.f32.mxu0 0.0
    %v4707 = vand.u32 %v4303, 4294901760
    %4708 = vmatmul.mubr.f32.gmra.mxu0 %v4707
    %v4709 = vpop.f32.mrf.mxu0
    %v4710 = vadd.f32 %v4628, %v4709
    %v4711 = vpop.f32.mrf.mxu0
    %4712 = vmatprep.mubr.f32.mxu0 0.0
    %v4713 = vand.u32 %v4306, 4294901760
    %4714 = vmatmul.mubr.f32.gmra.mxu0 %v4713
    %v4715 = vpop.f32.mrf.mxu0
    %v4716 = vadd.f32 %v4636, %v4715
    %v4717 = vpop.f32.mrf.mxu0
    %4718 = vdwg.mxu0
    %4719 = vmatprep.subr.mxu0 0.0
    %4720 = vmatpush1.msra.mxu0 0.0
    %4721 = vmatprep.subr.mxu0 0.0
    %4722 = vmatpush1.msra.mxu0 0.0
    %4723 = vmatprep.subr.mxu0 0.0
    %4724 = vmatpush1.msra.mxu0 0.0
    %4725 = vmatprep.subr.mxu0 0.0
    %4726 = vmatpush1.msra.mxu0 0.0
    %4727 = vmatprep.subr.mxu0 0.0
    %4728 = vmatpush1.msra.mxu0 0.0
    %4729 = vmatprep.subr.mxu0 0.0
    %4730 = vmatpush1.msra.mxu0 0.0
    %4731 = vmatprep.subr.mxu0 0.0
    %4732 = vmatpush1.msra.mxu0 0.0
    %4733 = vmatprep.subr.mxu0 0.0
    %4734 = vmatpush1.msra.mxu0 0.0
    %4735 = vmatprep.subr.mxu0 0.0
    %4736 = vmatpush1.msra.mxu0 0.0
    %4737 = vmatprep.subr.mxu0 0.0
    %4738 = vmatpush1.msra.mxu0 0.0
    %4739 = vmatprep.subr.mxu0 0.0
    %4740 = vmatpush1.msra.mxu0 0.0
    %4741 = vmatprep.subr.mxu0 0.0
    %4742 = vmatpush1.msra.mxu0 0.0
    %4743 = vmatprep.subr.mxu0 0.0
    %4744 = vmatpush1.msra.mxu0 0.0
    %4745 = vmatprep.subr.mxu0 0.0
    %4746 = vmatpush1.msra.mxu0 0.0
    %4747 = vmatprep.subr.mxu0 0.0
    %4748 = vmatpush1.msra.mxu0 0.0
    %4749 = vmatprep.subr.mxu0 0.0
    %v4750 = vand.u32 %v4301, 4294901760
    %4751 = vmatpush1.msra.mxu0 %v4750
    %4752 = vmatprep.subr.mxu0 0.0
    %4753 = vmatpush2.msra.mxu0 0.0
    %4754 = vmatprep.subr.mxu0 0.0
    %4755 = vmatpush2.msra.mxu0 0.0
    %4756 = vmatprep.subr.mxu0 0.0
    %4757 = vmatpush2.msra.mxu0 0.0
    %4758 = vmatprep.subr.mxu0 0.0
    %4759 = vmatpush2.msra.mxu0 0.0
    %4760 = vmatprep.subr.mxu0 0.0
    %4761 = vmatpush2.msra.mxu0 0.0
    %4762 = vmatprep.subr.mxu0 0.0
    %4763 = vmatpush2.msra.mxu0 0.0
    %4764 = vmatprep.subr.mxu0 0.0
    %4765 = vmatpush2.msra.mxu0 0.0
    %4766 = vmatprep.subr.mxu0 0.0
    %4767 = vmatpush2.msra.mxu0 0.0
    %4768 = vmatprep.subr.mxu0 0.0
    %4769 = vmatpush2.msra.mxu0 0.0
    %4770 = vmatprep.subr.mxu0 0.0
    %4771 = vmatpush2.msra.mxu0 0.0
    %4772 = vmatprep.subr.mxu0 0.0
    %4773 = vmatpush2.msra.mxu0 0.0
    %4774 = vmatprep.subr.mxu0 0.0
    %4775 = vmatpush2.msra.mxu0 0.0
    %4776 = vmatprep.subr.mxu0 0.0
    %4777 = vmatpush2.msra.mxu0 0.0
    %4778 = vmatprep.subr.mxu0 0.0
    %4779 = vmatpush2.msra.mxu0 0.0
    %4780 = vmatprep.subr.mxu0 0.0
    %4781 = vmatpush2.msra.mxu0 0.0
    %4782 = vmatprep.subr.mxu0 0.0
    %4783 = vmatpush2.msra.mxu0 0.0
    %4784 = vmatprep.mubr.f32.mxu0 0.0
    %v4785 = vand.u32 %v4303, 4294901760
    %4786 = vmatmul.mubr.f32.gmra.mxu0 %v4785
    %v4787 = vpop.f32.mrf.mxu0
    %v4788 = vadd.f32 %v4710, %v4787
    %v4789 = vpop.f32.mrf.mxu0
    %4790 = vmatprep.mubr.f32.mxu0 0.0
    %v4791 = vand.u32 %v4306, 4294901760
    %4792 = vmatmul.mubr.f32.gmra.mxu0 %v4791
    %v4793 = vpop.f32.mrf.mxu0
    %v4794 = vadd.f32 %v4716, %v4793
    %v4795 = vpop.f32.mrf.mxu0
    %4796 = vdwg.mxu0
    %v4798 = vsel %vm4292, %v4295, 0
    %v4801 = vsel %vm4292, %v4296, 0
    %4803 = vmatprep.subr.mxu0 0.0
    %4804 = vmatpush1.msra.mxu0 0.0
    %4805 = vmatprep.subr.mxu0 0.0
    %4806 = vmatpush1.msra.mxu0 0.0
    %4807 = vmatprep.subr.mxu0 0.0
    %4808 = vmatpush1.msra.mxu0 0.0
    %4809 = vmatprep.subr.mxu0 0.0
    %4810 = vmatpush1.msra.mxu0 0.0
    %4811 = vmatprep.subr.mxu0 0.0
    %4812 = vmatpush1.msra.mxu0 0.0
    %4813 = vmatprep.subr.mxu0 0.0
    %4814 = vmatpush1.msra.mxu0 0.0
    %4815 = vmatprep.subr.mxu0 0.0
    %4816 = vmatpush1.msra.mxu0 0.0
    %4817 = vmatprep.subr.mxu0 0.0
    %4818 = vmatpush1.msra.mxu0 0.0
    %4819 = vmatprep.subr.mxu0 0.0
    %4820 = vmatpush1.msra.mxu0 0.0
    %4821 = vmatprep.subr.mxu0 0.0
    %4822 = vmatpush1.msra.mxu0 0.0
    %4823 = vmatprep.subr.mxu0 0.0
    %4824 = vmatpush1.msra.mxu0 0.0
    %4825 = vmatprep.subr.mxu0 0.0
    %4826 = vmatpush1.msra.mxu0 0.0
    %4827 = vmatprep.subr.mxu0 0.0
    %4828 = vmatpush1.msra.mxu0 0.0
    %4829 = vmatprep.subr.mxu0 0.0
    %4830 = vmatpush1.msra.mxu0 0.0
    %4831 = vmatprep.subr.mxu0 0.0
    %4832 = vmatpush1.msra.mxu0 0.0
    %4833 = vmatprep.subr.mxu0 0.0
    %v4834 = vand.u32 %v4297, 4294901760
    %4835 = vmatpush1.msra.mxu0 %v4834
    %4836 = vmatprep.subr.mxu0 0.0
    %4837 = vmatpush2.msra.mxu0 0.0
    %4838 = vmatprep.subr.mxu0 0.0
    %4839 = vmatpush2.msra.mxu0 0.0
    %4840 = vmatprep.subr.mxu0 0.0
    %4841 = vmatpush2.msra.mxu0 0.0
    %4842 = vmatprep.subr.mxu0 0.0
    %4843 = vmatpush2.msra.mxu0 0.0
    %4844 = vmatprep.subr.mxu0 0.0
    %4845 = vmatpush2.msra.mxu0 0.0
    %4846 = vmatprep.subr.mxu0 0.0
    %4847 = vmatpush2.msra.mxu0 0.0
    %4848 = vmatprep.subr.mxu0 0.0
    %4849 = vmatpush2.msra.mxu0 0.0
    %4850 = vmatprep.subr.mxu0 0.0
    %4851 = vmatpush2.msra.mxu0 0.0
    %4852 = vmatprep.subr.mxu0 0.0
    %4853 = vmatpush2.msra.mxu0 0.0
    %4854 = vmatprep.subr.mxu0 0.0
    %4855 = vmatpush2.msra.mxu0 0.0
    %4856 = vmatprep.subr.mxu0 0.0
    %4857 = vmatpush2.msra.mxu0 0.0
    %4858 = vmatprep.subr.mxu0 0.0
    %4859 = vmatpush2.msra.mxu0 0.0
    %4860 = vmatprep.subr.mxu0 0.0
    %4861 = vmatpush2.msra.mxu0 0.0
    %4862 = vmatprep.subr.mxu0 0.0
    %4863 = vmatpush2.msra.mxu0 0.0
    %4864 = vmatprep.subr.mxu0 0.0
    %4865 = vmatpush2.msra.mxu0 0.0
    %4866 = vmatprep.subr.mxu0 0.0
    %4867 = vmatpush2.msra.mxu0 0.0
    %4868 = vmatprep.mubr.f32.mxu0 0.0
    %v4869 = vand.u32 %v4798, 4294901760
    %v4870 = vsub.f32 %v4798, %v4869
    %v4871 = vand.u32 %v4870, 4294901760
    %v4872 = vsub.f32 %v4870, %v4871
    %v4873 = vand.u32 %v4872, 4294901760
    %4874 = vmatmul.mubr.f32.gmra.mxu0 %v4873
    %v4875 = vpop.f32.mrf.mxu0
    %v4876 = vadd.f32 %v4788, %v4875
    %v4877 = vpop.f32.mrf.mxu0
    %4878 = vmatprep.mubr.f32.mxu0 0.0
    %v4879 = vand.u32 %v4801, 4294901760
    %v4880 = vsub.f32 %v4801, %v4879
    %v4881 = vand.u32 %v4880, 4294901760
    %v4882 = vsub.f32 %v4880, %v4881
    %v4883 = vand.u32 %v4882, 4294901760
    %4884 = vmatmul.mubr.f32.gmra.mxu0 %v4883
    %v4885 = vpop.f32.mrf.mxu0
    %v4886 = vadd.f32 %v4794, %v4885
    %v4887 = vpop.f32.mrf.mxu0
    %4888 = vdwg.mxu0
    %4889 = vmatprep.subr.mxu0 0.0
    %4890 = vmatpush1.msra.mxu0 0.0
    %4891 = vmatprep.subr.mxu0 0.0
    %4892 = vmatpush1.msra.mxu0 0.0
    %4893 = vmatprep.subr.mxu0 0.0
    %4894 = vmatpush1.msra.mxu0 0.0
    %4895 = vmatprep.subr.mxu0 0.0
    %4896 = vmatpush1.msra.mxu0 0.0
    %4897 = vmatprep.subr.mxu0 0.0
    %4898 = vmatpush1.msra.mxu0 0.0
    %4899 = vmatprep.subr.mxu0 0.0
    %4900 = vmatpush1.msra.mxu0 0.0
    %4901 = vmatprep.subr.mxu0 0.0
    %4902 = vmatpush1.msra.mxu0 0.0
    %4903 = vmatprep.subr.mxu0 0.0
    %4904 = vmatpush1.msra.mxu0 0.0
    %4905 = vmatprep.subr.mxu0 0.0
    %4906 = vmatpush1.msra.mxu0 0.0
    %4907 = vmatprep.subr.mxu0 0.0
    %4908 = vmatpush1.msra.mxu0 0.0
    %4909 = vmatprep.subr.mxu0 0.0
    %4910 = vmatpush1.msra.mxu0 0.0
    %4911 = vmatprep.subr.mxu0 0.0
    %4912 = vmatpush1.msra.mxu0 0.0
    %4913 = vmatprep.subr.mxu0 0.0
    %4914 = vmatpush1.msra.mxu0 0.0
    %4915 = vmatprep.subr.mxu0 0.0
    %4916 = vmatpush1.msra.mxu0 0.0
    %4917 = vmatprep.subr.mxu0 0.0
    %4918 = vmatpush1.msra.mxu0 0.0
    %4919 = vmatprep.subr.mxu0 0.0
    %v4920 = vand.u32 %v4297, 4294901760
    %v4921 = vsub.f32 %v4297, %v4920
    %v4922 = vand.u32 %v4921, 4294901760
    %v4923 = vsub.f32 %v4921, %v4922
    %v4924 = vand.u32 %v4923, 4294901760
    %4925 = vmatpush1.msra.mxu0 %v4924
    %4926 = vmatprep.subr.mxu0 0.0
    %4927 = vmatpush2.msra.mxu0 0.0
    %4928 = vmatprep.subr.mxu0 0.0
    %4929 = vmatpush2.msra.mxu0 0.0
    %4930 = vmatprep.subr.mxu0 0.0
    %4931 = vmatpush2.msra.mxu0 0.0
    %4932 = vmatprep.subr.mxu0 0.0
    %4933 = vmatpush2.msra.mxu0 0.0
    %4934 = vmatprep.subr.mxu0 0.0
    %4935 = vmatpush2.msra.mxu0 0.0
    %4936 = vmatprep.subr.mxu0 0.0
    %4937 = vmatpush2.msra.mxu0 0.0
    %4938 = vmatprep.subr.mxu0 0.0
    %4939 = vmatpush2.msra.mxu0 0.0
    %4940 = vmatprep.subr.mxu0 0.0
    %4941 = vmatpush2.msra.mxu0 0.0
    %4942 = vmatprep.subr.mxu0 0.0
    %4943 = vmatpush2.msra.mxu0 0.0
    %4944 = vmatprep.subr.mxu0 0.0
    %4945 = vmatpush2.msra.mxu0 0.0
    %4946 = vmatprep.subr.mxu0 0.0
    %4947 = vmatpush2.msra.mxu0 0.0
    %4948 = vmatprep.subr.mxu0 0.0
    %4949 = vmatpush2.msra.mxu0 0.0
    %4950 = vmatprep.subr.mxu0 0.0
    %4951 = vmatpush2.msra.mxu0 0.0
    %4952 = vmatprep.subr.mxu0 0.0
    %4953 = vmatpush2.msra.mxu0 0.0
    %4954 = vmatprep.subr.mxu0 0.0
    %4955 = vmatpush2.msra.mxu0 0.0
    %4956 = vmatprep.subr.mxu0 0.0
    %4957 = vmatpush2.msra.mxu0 0.0
    %4958 = vmatprep.mubr.f32.mxu0 0.0
    %v4959 = vand.u32 %v4798, 4294901760
    %4960 = vmatmul.mubr.f32.gmra.mxu0 %v4959
    %v4961 = vpop.f32.mrf.mxu0
    %v4962 = vadd.f32 %v4876, %v4961
    %v4963 = vpop.f32.mrf.mxu0
    %4964 = vmatprep.mubr.f32.mxu0 0.0
    %v4965 = vand.u32 %v4801, 4294901760
    %4966 = vmatmul.mubr.f32.gmra.mxu0 %v4965
    %v4967 = vpop.f32.mrf.mxu0
    %v4968 = vadd.f32 %v4886, %v4967
    %v4969 = vpop.f32.mrf.mxu0
    %4970 = vdwg.mxu0
    %4971 = vmatprep.subr.mxu0 0.0
    %4972 = vmatpush1.msra.mxu0 0.0
    %4973 = vmatprep.subr.mxu0 0.0
    %4974 = vmatpush1.msra.mxu0 0.0
    %4975 = vmatprep.subr.mxu0 0.0
    %4976 = vmatpush1.msra.mxu0 0.0
    %4977 = vmatprep.subr.mxu0 0.0
    %4978 = vmatpush1.msra.mxu0 0.0
    %4979 = vmatprep.subr.mxu0 0.0
    %4980 = vmatpush1.msra.mxu0 0.0
    %4981 = vmatprep.subr.mxu0 0.0
    %4982 = vmatpush1.msra.mxu0 0.0
    %4983 = vmatprep.subr.mxu0 0.0
    %4984 = vmatpush1.msra.mxu0 0.0
    %4985 = vmatprep.subr.mxu0 0.0
    %4986 = vmatpush1.msra.mxu0 0.0
    %4987 = vmatprep.subr.mxu0 0.0
    %4988 = vmatpush1.msra.mxu0 0.0
    %4989 = vmatprep.subr.mxu0 0.0
    %4990 = vmatpush1.msra.mxu0 0.0
    %4991 = vmatprep.subr.mxu0 0.0
    %4992 = vmatpush1.msra.mxu0 0.0
    %4993 = vmatprep.subr.mxu0 0.0
    %4994 = vmatpush1.msra.mxu0 0.0
    %4995 = vmatprep.subr.mxu0 0.0
    %4996 = vmatpush1.msra.mxu0 0.0
    %4997 = vmatprep.subr.mxu0 0.0
    %4998 = vmatpush1.msra.mxu0 0.0
    %4999 = vmatprep.subr.mxu0 0.0
    %5000 = vmatpush1.msra.mxu0 0.0
    %5001 = vmatprep.subr.mxu0 0.0
    %v5002 = vand.u32 %v4297, 4294901760
    %v5003 = vsub.f32 %v4297, %v5002
    %5004 = vmatpush1.msra.mxu0 %v5003
    %5005 = vmatprep.subr.mxu0 0.0
    %5006 = vmatpush2.msra.mxu0 0.0
    %5007 = vmatprep.subr.mxu0 0.0
    %5008 = vmatpush2.msra.mxu0 0.0
    %5009 = vmatprep.subr.mxu0 0.0
    %5010 = vmatpush2.msra.mxu0 0.0
    %5011 = vmatprep.subr.mxu0 0.0
    %5012 = vmatpush2.msra.mxu0 0.0
    %5013 = vmatprep.subr.mxu0 0.0
    %5014 = vmatpush2.msra.mxu0 0.0
    %5015 = vmatprep.subr.mxu0 0.0
    %5016 = vmatpush2.msra.mxu0 0.0
    %5017 = vmatprep.subr.mxu0 0.0
    %5018 = vmatpush2.msra.mxu0 0.0
    %5019 = vmatprep.subr.mxu0 0.0
    %5020 = vmatpush2.msra.mxu0 0.0
    %5021 = vmatprep.subr.mxu0 0.0
    %5022 = vmatpush2.msra.mxu0 0.0
    %5023 = vmatprep.subr.mxu0 0.0
    %5024 = vmatpush2.msra.mxu0 0.0
    %5025 = vmatprep.subr.mxu0 0.0
    %5026 = vmatpush2.msra.mxu0 0.0
    %5027 = vmatprep.subr.mxu0 0.0
    %5028 = vmatpush2.msra.mxu0 0.0
    %5029 = vmatprep.subr.mxu0 0.0
    %5030 = vmatpush2.msra.mxu0 0.0
    %5031 = vmatprep.subr.mxu0 0.0
    %5032 = vmatpush2.msra.mxu0 0.0
    %5033 = vmatprep.subr.mxu0 0.0
    %5034 = vmatpush2.msra.mxu0 0.0
    %5035 = vmatprep.subr.mxu0 0.0
    %5036 = vmatpush2.msra.mxu0 0.0
    %5037 = vmatprep.mubr.f32.mxu0 0.0
    %v5038 = vand.u32 %v4798, 4294901760
    %v5039 = vsub.f32 %v4798, %v5038
    %5040 = vmatmul.mubr.f32.gmra.mxu0 %v5039
    %v5041 = vpop.f32.mrf.mxu0
    %v5042 = vadd.f32 %v4962, %v5041
    %v5043 = vpop.f32.mrf.mxu0
    %5044 = vmatprep.mubr.f32.mxu0 0.0
    %v5045 = vand.u32 %v4801, 4294901760
    %v5046 = vsub.f32 %v4801, %v5045
    %5047 = vmatmul.mubr.f32.gmra.mxu0 %v5046
    %v5048 = vpop.f32.mrf.mxu0
    %v5049 = vadd.f32 %v4968, %v5048
    %v5050 = vpop.f32.mrf.mxu0
    %5051 = vdwg.mxu0
    %5052 = vmatprep.subr.mxu0 0.0
    %5053 = vmatpush1.msra.mxu0 0.0
    %5054 = vmatprep.subr.mxu0 0.0
    %5055 = vmatpush1.msra.mxu0 0.0
    %5056 = vmatprep.subr.mxu0 0.0
    %5057 = vmatpush1.msra.mxu0 0.0
    %5058 = vmatprep.subr.mxu0 0.0
    %5059 = vmatpush1.msra.mxu0 0.0
    %5060 = vmatprep.subr.mxu0 0.0
    %5061 = vmatpush1.msra.mxu0 0.0
    %5062 = vmatprep.subr.mxu0 0.0
    %5063 = vmatpush1.msra.mxu0 0.0
    %5064 = vmatprep.subr.mxu0 0.0
    %5065 = vmatpush1.msra.mxu0 0.0
    %5066 = vmatprep.subr.mxu0 0.0
    %5067 = vmatpush1.msra.mxu0 0.0
    %5068 = vmatprep.subr.mxu0 0.0
    %5069 = vmatpush1.msra.mxu0 0.0
    %5070 = vmatprep.subr.mxu0 0.0
    %5071 = vmatpush1.msra.mxu0 0.0
    %5072 = vmatprep.subr.mxu0 0.0
    %5073 = vmatpush1.msra.mxu0 0.0
    %5074 = vmatprep.subr.mxu0 0.0
    %5075 = vmatpush1.msra.mxu0 0.0
    %5076 = vmatprep.subr.mxu0 0.0
    %5077 = vmatpush1.msra.mxu0 0.0
    %5078 = vmatprep.subr.mxu0 0.0
    %5079 = vmatpush1.msra.mxu0 0.0
    %5080 = vmatprep.subr.mxu0 0.0
    %5081 = vmatpush1.msra.mxu0 0.0
    %5082 = vmatprep.subr.mxu0 0.0
    %v5083 = vand.u32 %v4297, 4294901760
    %5084 = vmatpush1.msra.mxu0 %v5083
    %5085 = vmatprep.subr.mxu0 0.0
    %5086 = vmatpush2.msra.mxu0 0.0
    %5087 = vmatprep.subr.mxu0 0.0
    %5088 = vmatpush2.msra.mxu0 0.0
    %5089 = vmatprep.subr.mxu0 0.0
    %5090 = vmatpush2.msra.mxu0 0.0
    %5091 = vmatprep.subr.mxu0 0.0
    %5092 = vmatpush2.msra.mxu0 0.0
    %5093 = vmatprep.subr.mxu0 0.0
    %5094 = vmatpush2.msra.mxu0 0.0
    %5095 = vmatprep.subr.mxu0 0.0
    %5096 = vmatpush2.msra.mxu0 0.0
    %5097 = vmatprep.subr.mxu0 0.0
    %5098 = vmatpush2.msra.mxu0 0.0
    %5099 = vmatprep.subr.mxu0 0.0
    %5100 = vmatpush2.msra.mxu0 0.0
    %5101 = vmatprep.subr.mxu0 0.0
    %5102 = vmatpush2.msra.mxu0 0.0
    %5103 = vmatprep.subr.mxu0 0.0
    %5104 = vmatpush2.msra.mxu0 0.0
    %5105 = vmatprep.subr.mxu0 0.0
    %5106 = vmatpush2.msra.mxu0 0.0
    %5107 = vmatprep.subr.mxu0 0.0
    %5108 = vmatpush2.msra.mxu0 0.0
    %5109 = vmatprep.subr.mxu0 0.0
    %5110 = vmatpush2.msra.mxu0 0.0
    %5111 = vmatprep.subr.mxu0 0.0
    %5112 = vmatpush2.msra.mxu0 0.0
    %5113 = vmatprep.subr.mxu0 0.0
    %5114 = vmatpush2.msra.mxu0 0.0
    %5115 = vmatprep.subr.mxu0 0.0
    %5116 = vmatpush2.msra.mxu0 0.0
    %5117 = vmatprep.mubr.f32.mxu0 0.0
    %v5118 = vand.u32 %v4798, 4294901760
    %v5119 = vsub.f32 %v4798, %v5118
    %v5120 = vand.u32 %v5119, 4294901760
    %5121 = vmatmul.mubr.f32.gmra.mxu0 %v5120
    %v5122 = vpop.f32.mrf.mxu0
    %v5123 = vadd.f32 %v5042, %v5122
    %v5124 = vpop.f32.mrf.mxu0
    %5125 = vmatprep.mubr.f32.mxu0 0.0
    %v5126 = vand.u32 %v4801, 4294901760
    %v5127 = vsub.f32 %v4801, %v5126
    %v5128 = vand.u32 %v5127, 4294901760
    %5129 = vmatmul.mubr.f32.gmra.mxu0 %v5128
    %v5130 = vpop.f32.mrf.mxu0
    %v5131 = vadd.f32 %v5049, %v5130
    %v5132 = vpop.f32.mrf.mxu0
    %5133 = vdwg.mxu0
    %5134 = vmatprep.subr.mxu0 0.0
    %5135 = vmatpush1.msra.mxu0 0.0
    %5136 = vmatprep.subr.mxu0 0.0
    %5137 = vmatpush1.msra.mxu0 0.0
    %5138 = vmatprep.subr.mxu0 0.0
    %5139 = vmatpush1.msra.mxu0 0.0
    %5140 = vmatprep.subr.mxu0 0.0
    %5141 = vmatpush1.msra.mxu0 0.0
    %5142 = vmatprep.subr.mxu0 0.0
    %5143 = vmatpush1.msra.mxu0 0.0
    %5144 = vmatprep.subr.mxu0 0.0
    %5145 = vmatpush1.msra.mxu0 0.0
    %5146 = vmatprep.subr.mxu0 0.0
    %5147 = vmatpush1.msra.mxu0 0.0
    %5148 = vmatprep.subr.mxu0 0.0
    %5149 = vmatpush1.msra.mxu0 0.0
    %5150 = vmatprep.subr.mxu0 0.0
    %5151 = vmatpush1.msra.mxu0 0.0
    %5152 = vmatprep.subr.mxu0 0.0
    %5153 = vmatpush1.msra.mxu0 0.0
    %5154 = vmatprep.subr.mxu0 0.0
    %5155 = vmatpush1.msra.mxu0 0.0
    %5156 = vmatprep.subr.mxu0 0.0
    %5157 = vmatpush1.msra.mxu0 0.0
    %5158 = vmatprep.subr.mxu0 0.0
    %5159 = vmatpush1.msra.mxu0 0.0
    %5160 = vmatprep.subr.mxu0 0.0
    %5161 = vmatpush1.msra.mxu0 0.0
    %5162 = vmatprep.subr.mxu0 0.0
    %5163 = vmatpush1.msra.mxu0 0.0
    %5164 = vmatprep.subr.mxu0 0.0
    %v5165 = vand.u32 %v4297, 4294901760
    %v5166 = vsub.f32 %v4297, %v5165
    %v5167 = vand.u32 %v5166, 4294901760
    %5168 = vmatpush1.msra.mxu0 %v5167
    %5169 = vmatprep.subr.mxu0 0.0
    %5170 = vmatpush2.msra.mxu0 0.0
    %5171 = vmatprep.subr.mxu0 0.0
    %5172 = vmatpush2.msra.mxu0 0.0
    %5173 = vmatprep.subr.mxu0 0.0
    %5174 = vmatpush2.msra.mxu0 0.0
    %5175 = vmatprep.subr.mxu0 0.0
    %5176 = vmatpush2.msra.mxu0 0.0
    %5177 = vmatprep.subr.mxu0 0.0
    %5178 = vmatpush2.msra.mxu0 0.0
    %5179 = vmatprep.subr.mxu0 0.0
    %5180 = vmatpush2.msra.mxu0 0.0
    %5181 = vmatprep.subr.mxu0 0.0
    %5182 = vmatpush2.msra.mxu0 0.0
    %5183 = vmatprep.subr.mxu0 0.0
    %5184 = vmatpush2.msra.mxu0 0.0
    %5185 = vmatprep.subr.mxu0 0.0
    %5186 = vmatpush2.msra.mxu0 0.0
    %5187 = vmatprep.subr.mxu0 0.0
    %5188 = vmatpush2.msra.mxu0 0.0
    %5189 = vmatprep.subr.mxu0 0.0
    %5190 = vmatpush2.msra.mxu0 0.0
    %5191 = vmatprep.subr.mxu0 0.0
    %5192 = vmatpush2.msra.mxu0 0.0
    %5193 = vmatprep.subr.mxu0 0.0
    %5194 = vmatpush2.msra.mxu0 0.0
    %5195 = vmatprep.subr.mxu0 0.0
    %5196 = vmatpush2.msra.mxu0 0.0
    %5197 = vmatprep.subr.mxu0 0.0
    %5198 = vmatpush2.msra.mxu0 0.0
    %5199 = vmatprep.subr.mxu0 0.0
    %5200 = vmatpush2.msra.mxu0 0.0
    %5201 = vmatprep.mubr.f32.mxu0 0.0
    %v5202 = vand.u32 %v4798, 4294901760
    %5203 = vmatmul.mubr.f32.gmra.mxu0 %v5202
    %v5204 = vpop.f32.mrf.mxu0
    %v5205 = vadd.f32 %v5123, %v5204
    %v5206 = vpop.f32.mrf.mxu0
    %5207 = vmatprep.mubr.f32.mxu0 0.0
    %v5208 = vand.u32 %v4801, 4294901760
    %5209 = vmatmul.mubr.f32.gmra.mxu0 %v5208
    %v5210 = vpop.f32.mrf.mxu0
    %v5211 = vadd.f32 %v5131, %v5210
    %v5212 = vpop.f32.mrf.mxu0
    %5213 = vdwg.mxu0
    %5214 = vmatprep.subr.mxu0 0.0
    %5215 = vmatpush1.msra.mxu0 0.0
    %5216 = vmatprep.subr.mxu0 0.0
    %5217 = vmatpush1.msra.mxu0 0.0
    %5218 = vmatprep.subr.mxu0 0.0
    %5219 = vmatpush1.msra.mxu0 0.0
    %5220 = vmatprep.subr.mxu0 0.0
    %5221 = vmatpush1.msra.mxu0 0.0
    %5222 = vmatprep.subr.mxu0 0.0
    %5223 = vmatpush1.msra.mxu0 0.0
    %5224 = vmatprep.subr.mxu0 0.0
    %5225 = vmatpush1.msra.mxu0 0.0
    %5226 = vmatprep.subr.mxu0 0.0
    %5227 = vmatpush1.msra.mxu0 0.0
    %5228 = vmatprep.subr.mxu0 0.0
    %5229 = vmatpush1.msra.mxu0 0.0
    %5230 = vmatprep.subr.mxu0 0.0
    %5231 = vmatpush1.msra.mxu0 0.0
    %5232 = vmatprep.subr.mxu0 0.0
    %5233 = vmatpush1.msra.mxu0 0.0
    %5234 = vmatprep.subr.mxu0 0.0
    %5235 = vmatpush1.msra.mxu0 0.0
    %5236 = vmatprep.subr.mxu0 0.0
    %5237 = vmatpush1.msra.mxu0 0.0
    %5238 = vmatprep.subr.mxu0 0.0
    %5239 = vmatpush1.msra.mxu0 0.0
    %5240 = vmatprep.subr.mxu0 0.0
    %5241 = vmatpush1.msra.mxu0 0.0
    %5242 = vmatprep.subr.mxu0 0.0
    %5243 = vmatpush1.msra.mxu0 0.0
    %5244 = vmatprep.subr.mxu0 0.0
    %v5245 = vand.u32 %v4297, 4294901760
    %5246 = vmatpush1.msra.mxu0 %v5245
    %5247 = vmatprep.subr.mxu0 0.0
    %5248 = vmatpush2.msra.mxu0 0.0
    %5249 = vmatprep.subr.mxu0 0.0
    %5250 = vmatpush2.msra.mxu0 0.0
    %5251 = vmatprep.subr.mxu0 0.0
    %5252 = vmatpush2.msra.mxu0 0.0
    %5253 = vmatprep.subr.mxu0 0.0
    %5254 = vmatpush2.msra.mxu0 0.0
    %5255 = vmatprep.subr.mxu0 0.0
    %5256 = vmatpush2.msra.mxu0 0.0
    %5257 = vmatprep.subr.mxu0 0.0
    %5258 = vmatpush2.msra.mxu0 0.0
    %5259 = vmatprep.subr.mxu0 0.0
    %5260 = vmatpush2.msra.mxu0 0.0
    %5261 = vmatprep.subr.mxu0 0.0
    %5262 = vmatpush2.msra.mxu0 0.0
    %5263 = vmatprep.subr.mxu0 0.0
    %5264 = vmatpush2.msra.mxu0 0.0
    %5265 = vmatprep.subr.mxu0 0.0
    %5266 = vmatpush2.msra.mxu0 0.0
    %5267 = vmatprep.subr.mxu0 0.0
    %5268 = vmatpush2.msra.mxu0 0.0
    %5269 = vmatprep.subr.mxu0 0.0
    %5270 = vmatpush2.msra.mxu0 0.0
    %5271 = vmatprep.subr.mxu0 0.0
    %5272 = vmatpush2.msra.mxu0 0.0
    %5273 = vmatprep.subr.mxu0 0.0
    %5274 = vmatpush2.msra.mxu0 0.0
    %5275 = vmatprep.subr.mxu0 0.0
    %5276 = vmatpush2.msra.mxu0 0.0
    %5277 = vmatprep.subr.mxu0 0.0
    %5278 = vmatpush2.msra.mxu0 0.0
    %5279 = vmatprep.mubr.f32.mxu0 0.0
    %v5280 = vand.u32 %v4798, 4294901760
    %5281 = vmatmul.mubr.f32.gmra.mxu0 %v5280
    %v5282 = vpop.f32.mrf.mxu0
    %v5283 = vadd.f32 %v5205, %v5282
    %v5284 = vpop.f32.mrf.mxu0
    %5285 = vmatprep.mubr.f32.mxu0 0.0
    %v5286 = vand.u32 %v4801, 4294901760
    %5287 = vmatmul.mubr.f32.gmra.mxu0 %v5286
    %v5288 = vpop.f32.mrf.mxu0
    %v5289 = vadd.f32 %v5211, %v5288
    %v5290 = vpop.f32.mrf.mxu0
    %5291 = vdwg.mxu0
    %v5292 = vld [vmem:[#allocation3 + $0x2] sm:$0xff]
    %v5293 = vld [vmem:[#allocation3 + $0x12] sm:$0xff]
    %s5294 = scalar_lea.vmem %s2, 16
    %v5295 = vld [vmem:[%s5294] sm:$0xff]
    %v5297 = vsel %vm4292, %v5292, 0
    %v5300 = vsel %vm4292, %v5293, 0
    %5302 = vmatprep.subr.mxu0 0.0
    %5303 = vmatpush1.msra.mxu0 0.0
    %5304 = vmatprep.subr.mxu0 0.0
    %5305 = vmatpush1.msra.mxu0 0.0
    %5306 = vmatprep.subr.mxu0 0.0
    %5307 = vmatpush1.msra.mxu0 0.0
    %5308 = vmatprep.subr.mxu0 0.0
    %5309 = vmatpush1.msra.mxu0 0.0
    %5310 = vmatprep.subr.mxu0 0.0
    %5311 = vmatpush1.msra.mxu0 0.0
    %5312 = vmatprep.subr.mxu0 0.0
    %5313 = vmatpush1.msra.mxu0 0.0
    %5314 = vmatprep.subr.mxu0 0.0
    %5315 = vmatpush1.msra.mxu0 0.0
    %5316 = vmatprep.subr.mxu0 0.0
    %5317 = vmatpush1.msra.mxu0 0.0
    %5318 = vmatprep.subr.mxu0 0.0
    %5319 = vmatpush1.msra.mxu0 0.0
    %5320 = vmatprep.subr.mxu0 0.0
    %5321 = vmatpush1.msra.mxu0 0.0
    %5322 = vmatprep.subr.mxu0 0.0
    %5323 = vmatpush1.msra.mxu0 0.0
    %5324 = vmatprep.subr.mxu0 0.0
    %5325 = vmatpush1.msra.mxu0 0.0
    %5326 = vmatprep.subr.mxu0 0.0
    %5327 = vmatpush1.msra.mxu0 0.0
    %5328 = vmatprep.subr.mxu0 0.0
    %5329 = vmatpush1.msra.mxu0 0.0
    %5330 = vmatprep.subr.mxu0 0.0
    %5331 = vmatpush1.msra.mxu0 0.0
    %5332 = vmatprep.subr.mxu0 0.0
    %v5333 = vand.u32 %v5295, 4294901760
    %5334 = vmatpush1.msra.mxu0 %v5333
    %5335 = vmatprep.subr.mxu0 0.0
    %5336 = vmatpush2.msra.mxu0 0.0
    %5337 = vmatprep.subr.mxu0 0.0
    %5338 = vmatpush2.msra.mxu0 0.0
    %5339 = vmatprep.subr.mxu0 0.0
    %5340 = vmatpush2.msra.mxu0 0.0
    %5341 = vmatprep.subr.mxu0 0.0
    %5342 = vmatpush2.msra.mxu0 0.0
    %5343 = vmatprep.subr.mxu0 0.0
    %5344 = vmatpush2.msra.mxu0 0.0
    %5345 = vmatprep.subr.mxu0 0.0
    %5346 = vmatpush2.msra.mxu0 0.0
    %5347 = vmatprep.subr.mxu0 0.0
    %5348 = vmatpush2.msra.mxu0 0.0
    %5349 = vmatprep.subr.mxu0 0.0
    %5350 = vmatpush2.msra.mxu0 0.0
    %5351 = vmatprep.subr.mxu0 0.0
    %5352 = vmatpush2.msra.mxu0 0.0
    %5353 = vmatprep.subr.mxu0 0.0
    %5354 = vmatpush2.msra.mxu0 0.0
    %5355 = vmatprep.subr.mxu0 0.0
    %5356 = vmatpush2.msra.mxu0 0.0
    %5357 = vmatprep.subr.mxu0 0.0
    %5358 = vmatpush2.msra.mxu0 0.0
    %5359 = vmatprep.subr.mxu0 0.0
    %5360 = vmatpush2.msra.mxu0 0.0
    %5361 = vmatprep.subr.mxu0 0.0
    %5362 = vmatpush2.msra.mxu0 0.0
    %5363 = vmatprep.subr.mxu0 0.0
    %5364 = vmatpush2.msra.mxu0 0.0
    %5365 = vmatprep.subr.mxu0 0.0
    %5366 = vmatpush2.msra.mxu0 0.0
    %5367 = vmatprep.mubr.f32.mxu0 0.0
    %v5368 = vand.u32 %v5297, 4294901760
    %v5369 = vsub.f32 %v5297, %v5368
    %v5370 = vand.u32 %v5369, 4294901760
    %v5371 = vsub.f32 %v5369, %v5370
    %v5372 = vand.u32 %v5371, 4294901760
    %5373 = vmatmul.mubr.f32.gmra.mxu0 %v5372
    %v5374 = vpop.f32.mrf.mxu0
    %v5375 = vadd.f32 0.0, %v5374
    %v5376 = vpop.f32.mrf.mxu0
    %5377 = vmatprep.mubr.f32.mxu0 0.0
    %v5378 = vand.u32 %v5300, 4294901760
    %v5379 = vsub.f32 %v5300, %v5378
    %v5380 = vand.u32 %v5379, 4294901760
    %v5381 = vsub.f32 %v5379, %v5380
    %v5382 = vand.u32 %v5381, 4294901760
    %5383 = vmatmul.mubr.f32.gmra.mxu0 %v5382
    %v5384 = vpop.f32.mrf.mxu0
    %v5385 = vadd.f32 0.0, %v5384
    %v5386 = vpop.f32.mrf.mxu0
    %5387 = vdwg.mxu0
    %5388 = vmatprep.subr.mxu0 0.0
    %5389 = vmatpush1.msra.mxu0 0.0
    %5390 = vmatprep.subr.mxu0 0.0
    %5391 = vmatpush1.msra.mxu0 0.0
    %5392 = vmatprep.subr.mxu0 0.0
    %5393 = vmatpush1.msra.mxu0 0.0
    %5394 = vmatprep.subr.mxu0 0.0
    %5395 = vmatpush1.msra.mxu0 0.0
    %5396 = vmatprep.subr.mxu0 0.0
    %5397 = vmatpush1.msra.mxu0 0.0
    %5398 = vmatprep.subr.mxu0 0.0
    %5399 = vmatpush1.msra.mxu0 0.0
    %5400 = vmatprep.subr.mxu0 0.0
    %5401 = vmatpush1.msra.mxu0 0.0
    %5402 = vmatprep.subr.mxu0 0.0
    %5403 = vmatpush1.msra.mxu0 0.0
    %5404 = vmatprep.subr.mxu0 0.0
    %5405 = vmatpush1.msra.mxu0 0.0
    %5406 = vmatprep.subr.mxu0 0.0
    %5407 = vmatpush1.msra.mxu0 0.0
    %5408 = vmatprep.subr.mxu0 0.0
    %5409 = vmatpush1.msra.mxu0 0.0
    %5410 = vmatprep.subr.mxu0 0.0
    %5411 = vmatpush1.msra.mxu0 0.0
    %5412 = vmatprep.subr.mxu0 0.0
    %5413 = vmatpush1.msra.mxu0 0.0
    %5414 = vmatprep.subr.mxu0 0.0
    %5415 = vmatpush1.msra.mxu0 0.0
    %5416 = vmatprep.subr.mxu0 0.0
    %5417 = vmatpush1.msra.mxu0 0.0
    %5418 = vmatprep.subr.mxu0 0.0
    %v5419 = vand.u32 %v5295, 4294901760
    %v5420 = vsub.f32 %v5295, %v5419
    %v5421 = vand.u32 %v5420, 4294901760
    %v5422 = vsub.f32 %v5420, %v5421
    %v5423 = vand.u32 %v5422, 4294901760
    %5424 = vmatpush1.msra.mxu0 %v5423
    %5425 = vmatprep.subr.mxu0 0.0
    %5426 = vmatpush2.msra.mxu0 0.0
    %5427 = vmatprep.subr.mxu0 0.0
    %5428 = vmatpush2.msra.mxu0 0.0
    %5429 = vmatprep.subr.mxu0 0.0
    %5430 = vmatpush2.msra.mxu0 0.0
    %5431 = vmatprep.subr.mxu0 0.0
    %5432 = vmatpush2.msra.mxu0 0.0
    %5433 = vmatprep.subr.mxu0 0.0
    %5434 = vmatpush2.msra.mxu0 0.0
    %5435 = vmatprep.subr.mxu0 0.0
    %5436 = vmatpush2.msra.mxu0 0.0
    %5437 = vmatprep.subr.mxu0 0.0
    %5438 = vmatpush2.msra.mxu0 0.0
    %5439 = vmatprep.subr.mxu0 0.0
    %5440 = vmatpush2.msra.mxu0 0.0
    %5441 = vmatprep.subr.mxu0 0.0
    %5442 = vmatpush2.msra.mxu0 0.0
    %5443 = vmatprep.subr.mxu0 0.0
    %5444 = vmatpush2.msra.mxu0 0.0
    %5445 = vmatprep.subr.mxu0 0.0
    %5446 = vmatpush2.msra.mxu0 0.0
    %5447 = vmatprep.subr.mxu0 0.0
    %5448 = vmatpush2.msra.mxu0 0.0
    %5449 = vmatprep.subr.mxu0 0.0
    %5450 = vmatpush2.msra.mxu0 0.0
    %5451 = vmatprep.subr.mxu0 0.0
    %5452 = vmatpush2.msra.mxu0 0.0
    %5453 = vmatprep.subr.mxu0 0.0
    %5454 = vmatpush2.msra.mxu0 0.0
    %5455 = vmatprep.subr.mxu0 0.0
    %5456 = vmatpush2.msra.mxu0 0.0
    %5457 = vmatprep.mubr.f32.mxu0 0.0
    %v5458 = vand.u32 %v5297, 4294901760
    %5459 = vmatmul.mubr.f32.gmra.mxu0 %v5458
    %v5460 = vpop.f32.mrf.mxu0
    %v5461 = vadd.f32 %v5375, %v5460
    %v5462 = vpop.f32.mrf.mxu0
    %5463 = vmatprep.mubr.f32.mxu0 0.0
    %v5464 = vand.u32 %v5300, 4294901760
    %5465 = vmatmul.mubr.f32.gmra.mxu0 %v5464
    %v5466 = vpop.f32.mrf.mxu0
    %v5467 = vadd.f32 %v5385, %v5466
    %v5468 = vpop.f32.mrf.mxu0
    %5469 = vdwg.mxu0
    %5470 = vmatprep.subr.mxu0 0.0
    %5471 = vmatpush1.msra.mxu0 0.0
    %5472 = vmatprep.subr.mxu0 0.0
    %5473 = vmatpush1.msra.mxu0 0.0
    %5474 = vmatprep.subr.mxu0 0.0
    %5475 = vmatpush1.msra.mxu0 0.0
    %5476 = vmatprep.subr.mxu0 0.0
    %5477 = vmatpush1.msra.mxu0 0.0
    %5478 = vmatprep.subr.mxu0 0.0
    %5479 = vmatpush1.msra.mxu0 0.0
    %5480 = vmatprep.subr.mxu0 0.0
    %5481 = vmatpush1.msra.mxu0 0.0
    %5482 = vmatprep.subr.mxu0 0.0
    %5483 = vmatpush1.msra.mxu0 0.0
    %5484 = vmatprep.subr.mxu0 0.0
    %5485 = vmatpush1.msra.mxu0 0.0
    %5486 = vmatprep.subr.mxu0 0.0
    %5487 = vmatpush1.msra.mxu0 0.0
    %5488 = vmatprep.subr.mxu0 0.0
    %5489 = vmatpush1.msra.mxu0 0.0
    %5490 = vmatprep.subr.mxu0 0.0
    %5491 = vmatpush1.msra.mxu0 0.0
    %5492 = vmatprep.subr.mxu0 0.0
    %5493 = vmatpush1.msra.mxu0 0.0
    %5494 = vmatprep.subr.mxu0 0.0
    %5495 = vmatpush1.msra.mxu0 0.0
    %5496 = vmatprep.subr.mxu0 0.0
    %5497 = vmatpush1.msra.mxu0 0.0
    %5498 = vmatprep.subr.mxu0 0.0
    %5499 = vmatpush1.msra.mxu0 0.0
    %5500 = vmatprep.subr.mxu0 0.0
    %v5501 = vand.u32 %v5295, 4294901760
    %v5502 = vsub.f32 %v5295, %v5501
    %5503 = vmatpush1.msra.mxu0 %v5502
    %5504 = vmatprep.subr.mxu0 0.0
    %5505 = vmatpush2.msra.mxu0 0.0
    %5506 = vmatprep.subr.mxu0 0.0
    %5507 = vmatpush2.msra.mxu0 0.0
    %5508 = vmatprep.subr.mxu0 0.0
    %5509 = vmatpush2.msra.mxu0 0.0
    %5510 = vmatprep.subr.mxu0 0.0
    %5511 = vmatpush2.msra.mxu0 0.0
    %5512 = vmatprep.subr.mxu0 0.0
    %5513 = vmatpush2.msra.mxu0 0.0
    %5514 = vmatprep.subr.mxu0 0.0
    %5515 = vmatpush2.msra.mxu0 0.0
    %5516 = vmatprep.subr.mxu0 0.0
    %5517 = vmatpush2.msra.mxu0 0.0
    %5518 = vmatprep.subr.mxu0 0.0
    %5519 = vmatpush2.msra.mxu0 0.0
    %5520 = vmatprep.subr.mxu0 0.0
    %5521 = vmatpush2.msra.mxu0 0.0
    %5522 = vmatprep.subr.mxu0 0.0
    %5523 = vmatpush2.msra.mxu0 0.0
    %5524 = vmatprep.subr.mxu0 0.0
    %5525 = vmatpush2.msra.mxu0 0.0
    %5526 = vmatprep.subr.mxu0 0.0
    %5527 = vmatpush2.msra.mxu0 0.0
    %5528 = vmatprep.subr.mxu0 0.0
    %5529 = vmatpush2.msra.mxu0 0.0
    %5530 = vmatprep.subr.mxu0 0.0
    %5531 = vmatpush2.msra.mxu0 0.0
    %5532 = vmatprep.subr.mxu0 0.0
    %5533 = vmatpush2.msra.mxu0 0.0
    %5534 = vmatprep.subr.mxu0 0.0
    %5535 = vmatpush2.msra.mxu0 0.0
    %5536 = vmatprep.mubr.f32.mxu0 0.0
    %v5537 = vand.u32 %v5297, 4294901760
    %v5538 = vsub.f32 %v5297, %v5537
    %5539 = vmatmul.mubr.f32.gmra.mxu0 %v5538
    %v5540 = vpop.f32.mrf.mxu0
    %v5541 = vadd.f32 %v5461, %v5540
    %v5542 = vpop.f32.mrf.mxu0
    %5543 = vmatprep.mubr.f32.mxu0 0.0
    %v5544 = vand.u32 %v5300, 4294901760
    %v5545 = vsub.f32 %v5300, %v5544
    %5546 = vmatmul.mubr.f32.gmra.mxu0 %v5545
    %v5547 = vpop.f32.mrf.mxu0
    %v5548 = vadd.f32 %v5467, %v5547
    %v5549 = vpop.f32.mrf.mxu0
    %5550 = vdwg.mxu0
    %5551 = vmatprep.subr.mxu0 0.0
    %5552 = vmatpush1.msra.mxu0 0.0
    %5553 = vmatprep.subr.mxu0 0.0
    %5554 = vmatpush1.msra.mxu0 0.0
    %5555 = vmatprep.subr.mxu0 0.0
    %5556 = vmatpush1.msra.mxu0 0.0
    %5557 = vmatprep.subr.mxu0 0.0
    %5558 = vmatpush1.msra.mxu0 0.0
    %5559 = vmatprep.subr.mxu0 0.0
    %5560 = vmatpush1.msra.mxu0 0.0
    %5561 = vmatprep.subr.mxu0 0.0
    %5562 = vmatpush1.msra.mxu0 0.0
    %5563 = vmatprep.subr.mxu0 0.0
    %5564 = vmatpush1.msra.mxu0 0.0
    %5565 = vmatprep.subr.mxu0 0.0
    %5566 = vmatpush1.msra.mxu0 0.0
    %5567 = vmatprep.subr.mxu0 0.0
    %5568 = vmatpush1.msra.mxu0 0.0
    %5569 = vmatprep.subr.mxu0 0.0
    %5570 = vmatpush1.msra.mxu0 0.0
    %5571 = vmatprep.subr.mxu0 0.0
    %5572 = vmatpush1.msra.mxu0 0.0
    %5573 = vmatprep.subr.mxu0 0.0
    %5574 = vmatpush1.msra.mxu0 0.0
    %5575 = vmatprep.subr.mxu0 0.0
    %5576 = vmatpush1.msra.mxu0 0.0
    %5577 = vmatprep.subr.mxu0 0.0
    %5578 = vmatpush1.msra.mxu0 0.0
    %5579 = vmatprep.subr.mxu0 0.0
    %5580 = vmatpush1.msra.mxu0 0.0
    %5581 = vmatprep.subr.mxu0 0.0
    %v5582 = vand.u32 %v5295, 4294901760
    %5583 = vmatpush1.msra.mxu0 %v5582
    %5584 = vmatprep.subr.mxu0 0.0
    %5585 = vmatpush2.msra.mxu0 0.0
    %5586 = vmatprep.subr.mxu0 0.0
    %5587 = vmatpush2.msra.mxu0 0.0
    %5588 = vmatprep.subr.mxu0 0.0
    %5589 = vmatpush2.msra.mxu0 0.0
    %5590 = vmatprep.subr.mxu0 0.0
    %5591 = vmatpush2.msra.mxu0 0.0
    %5592 = vmatprep.subr.mxu0 0.0
    %5593 = vmatpush2.msra.mxu0 0.0
    %5594 = vmatprep.subr.mxu0 0.0
    %5595 = vmatpush2.msra.mxu0 0.0
    %5596 = vmatprep.subr.mxu0 0.0
    %5597 = vmatpush2.msra.mxu0 0.0
    %5598 = vmatprep.subr.mxu0 0.0
    %5599 = vmatpush2.msra.mxu0 0.0
    %5600 = vmatprep.subr.mxu0 0.0
    %5601 = vmatpush2.msra.mxu0 0.0
    %5602 = vmatprep.subr.mxu0 0.0
    %5603 = vmatpush2.msra.mxu0 0.0
    %5604 = vmatprep.subr.mxu0 0.0
    %5605 = vmatpush2.msra.mxu0 0.0
    %5606 = vmatprep.subr.mxu0 0.0
    %5607 = vmatpush2.msra.mxu0 0.0
    %5608 = vmatprep.subr.mxu0 0.0
    %5609 = vmatpush2.msra.mxu0 0.0
    %5610 = vmatprep.subr.mxu0 0.0
    %5611 = vmatpush2.msra.mxu0 0.0
    %5612 = vmatprep.subr.mxu0 0.0
    %5613 = vmatpush2.msra.mxu0 0.0
    %5614 = vmatprep.subr.mxu0 0.0
    %5615 = vmatpush2.msra.mxu0 0.0
    %5616 = vmatprep.mubr.f32.mxu0 0.0
    %v5617 = vand.u32 %v5297, 4294901760
    %v5618 = vsub.f32 %v5297, %v5617
    %v5619 = vand.u32 %v5618, 4294901760
    %5620 = vmatmul.mubr.f32.gmra.mxu0 %v5619
    %v5621 = vpop.f32.mrf.mxu0
    %v5622 = vadd.f32 %v5541, %v5621
    %v5623 = vpop.f32.mrf.mxu0
    %5624 = vmatprep.mubr.f32.mxu0 0.0
    %v5625 = vand.u32 %v5300, 4294901760
    %v5626 = vsub.f32 %v5300, %v5625
    %v5627 = vand.u32 %v5626, 4294901760
    %5628 = vmatmul.mubr.f32.gmra.mxu0 %v5627
    %v5629 = vpop.f32.mrf.mxu0
    %v5630 = vadd.f32 %v5548, %v5629
    %v5631 = vpop.f32.mrf.mxu0
    %5632 = vdwg.mxu0
    %5633 = vmatprep.subr.mxu0 0.0
    %5634 = vmatpush1.msra.mxu0 0.0
    %5635 = vmatprep.subr.mxu0 0.0
    %5636 = vmatpush1.msra.mxu0 0.0
    %5637 = vmatprep.subr.mxu0 0.0
    %5638 = vmatpush1.msra.mxu0 0.0
    %5639 = vmatprep.subr.mxu0 0.0
    %5640 = vmatpush1.msra.mxu0 0.0
    %5641 = vmatprep.subr.mxu0 0.0
    %5642 = vmatpush1.msra.mxu0 0.0
    %5643 = vmatprep.subr.mxu0 0.0
    %5644 = vmatpush1.msra.mxu0 0.0
    %5645 = vmatprep.subr.mxu0 0.0
    %5646 = vmatpush1.msra.mxu0 0.0
    %5647 = vmatprep.subr.mxu0 0.0
    %5648 = vmatpush1.msra.mxu0 0.0
    %5649 = vmatprep.subr.mxu0 0.0
    %5650 = vmatpush1.msra.mxu0 0.0
    %5651 = vmatprep.subr.mxu0 0.0
    %5652 = vmatpush1.msra.mxu0 0.0
    %5653 = vmatprep.subr.mxu0 0.0
    %5654 = vmatpush1.msra.mxu0 0.0
    %5655 = vmatprep.subr.mxu0 0.0
    %5656 = vmatpush1.msra.mxu0 0.0
    %5657 = vmatprep.subr.mxu0 0.0
    %5658 = vmatpush1.msra.mxu0 0.0
    %5659 = vmatprep.subr.mxu0 0.0
    %5660 = vmatpush1.msra.mxu0 0.0
    %5661 = vmatprep.subr.mxu0 0.0
    %5662 = vmatpush1.msra.mxu0 0.0
    %5663 = vmatprep.subr.mxu0 0.0
    %v5664 = vand.u32 %v5295, 4294901760
    %v5665 = vsub.f32 %v5295, %v5664
    %v5666 = vand.u32 %v5665, 4294901760
    %5667 = vmatpush1.msra.mxu0 %v5666
    %5668 = vmatprep.subr.mxu0 0.0
    %5669 = vmatpush2.msra.mxu0 0.0
    %5670 = vmatprep.subr.mxu0 0.0
    %5671 = vmatpush2.msra.mxu0 0.0
    %5672 = vmatprep.subr.mxu0 0.0
    %5673 = vmatpush2.msra.mxu0 0.0
    %5674 = vmatprep.subr.mxu0 0.0
    %5675 = vmatpush2.msra.mxu0 0.0
    %5676 = vmatprep.subr.mxu0 0.0
    %5677 = vmatpush2.msra.mxu0 0.0
    %5678 = vmatprep.subr.mxu0 0.0
    %5679 = vmatpush2.msra.mxu0 0.0
    %5680 = vmatprep.subr.mxu0 0.0
    %5681 = vmatpush2.msra.mxu0 0.0
    %5682 = vmatprep.subr.mxu0 0.0
    %5683 = vmatpush2.msra.mxu0 0.0
    %5684 = vmatprep.subr.mxu0 0.0
    %5685 = vmatpush2.msra.mxu0 0.0
    %5686 = vmatprep.subr.mxu0 0.0
    %5687 = vmatpush2.msra.mxu0 0.0
    %5688 = vmatprep.subr.mxu0 0.0
    %5689 = vmatpush2.msra.mxu0 0.0
    %5690 = vmatprep.subr.mxu0 0.0
    %5691 = vmatpush2.msra.mxu0 0.0
    %5692 = vmatprep.subr.mxu0 0.0
    %5693 = vmatpush2.msra.mxu0 0.0
    %5694 = vmatprep.subr.mxu0 0.0
    %5695 = vmatpush2.msra.mxu0 0.0
    %5696 = vmatprep.subr.mxu0 0.0
    %5697 = vmatpush2.msra.mxu0 0.0
    %5698 = vmatprep.subr.mxu0 0.0
    %5699 = vmatpush2.msra.mxu0 0.0
    %5700 = vmatprep.mubr.f32.mxu0 0.0
    %v5701 = vand.u32 %v5297, 4294901760
    %5702 = vmatmul.mubr.f32.gmra.mxu0 %v5701
    %v5703 = vpop.f32.mrf.mxu0
    %v5704 = vadd.f32 %v5622, %v5703
    %v5705 = vpop.f32.mrf.mxu0
    %5706 = vmatprep.mubr.f32.mxu0 0.0
    %v5707 = vand.u32 %v5300, 4294901760
    %5708 = vmatmul.mubr.f32.gmra.mxu0 %v5707
    %v5709 = vpop.f32.mrf.mxu0
    %v5710 = vadd.f32 %v5630, %v5709
    %v5711 = vpop.f32.mrf.mxu0
    %5712 = vdwg.mxu0
    %5713 = vmatprep.subr.mxu0 0.0
    %5714 = vmatpush1.msra.mxu0 0.0
    %5715 = vmatprep.subr.mxu0 0.0
    %5716 = vmatpush1.msra.mxu0 0.0
    %5717 = vmatprep.subr.mxu0 0.0
    %5718 = vmatpush1.msra.mxu0 0.0
    %5719 = vmatprep.subr.mxu0 0.0
    %5720 = vmatpush1.msra.mxu0 0.0
    %5721 = vmatprep.subr.mxu0 0.0
    %5722 = vmatpush1.msra.mxu0 0.0
    %5723 = vmatprep.subr.mxu0 0.0
    %5724 = vmatpush1.msra.mxu0 0.0
    %5725 = vmatprep.subr.mxu0 0.0
    %5726 = vmatpush1.msra.mxu0 0.0
    %5727 = vmatprep.subr.mxu0 0.0
    %5728 = vmatpush1.msra.mxu0 0.0
    %5729 = vmatprep.subr.mxu0 0.0
    %5730 = vmatpush1.msra.mxu0 0.0
    %5731 = vmatprep.subr.mxu0 0.0
    %5732 = vmatpush1.msra.mxu0 0.0
    %5733 = vmatprep.subr.mxu0 0.0
    %5734 = vmatpush1.msra.mxu0 0.0
    %5735 = vmatprep.subr.mxu0 0.0
    %5736 = vmatpush1.msra.mxu0 0.0
    %5737 = vmatprep.subr.mxu0 0.0
    %5738 = vmatpush1.msra.mxu0 0.0
    %5739 = vmatprep.subr.mxu0 0.0
    %5740 = vmatpush1.msra.mxu0 0.0
    %5741 = vmatprep.subr.mxu0 0.0
    %5742 = vmatpush1.msra.mxu0 0.0
    %5743 = vmatprep.subr.mxu0 0.0
    %v5744 = vand.u32 %v5295, 4294901760
    %5745 = vmatpush1.msra.mxu0 %v5744
    %5746 = vmatprep.subr.mxu0 0.0
    %5747 = vmatpush2.msra.mxu0 0.0
    %5748 = vmatprep.subr.mxu0 0.0
    %5749 = vmatpush2.msra.mxu0 0.0
    %5750 = vmatprep.subr.mxu0 0.0
    %5751 = vmatpush2.msra.mxu0 0.0
    %5752 = vmatprep.subr.mxu0 0.0
    %5753 = vmatpush2.msra.mxu0 0.0
    %5754 = vmatprep.subr.mxu0 0.0
    %5755 = vmatpush2.msra.mxu0 0.0
    %5756 = vmatprep.subr.mxu0 0.0
    %5757 = vmatpush2.msra.mxu0 0.0
    %5758 = vmatprep.subr.mxu0 0.0
    %5759 = vmatpush2.msra.mxu0 0.0
    %5760 = vmatprep.subr.mxu0 0.0
    %5761 = vmatpush2.msra.mxu0 0.0
    %5762 = vmatprep.subr.mxu0 0.0
    %5763 = vmatpush2.msra.mxu0 0.0
    %5764 = vmatprep.subr.mxu0 0.0
    %5765 = vmatpush2.msra.mxu0 0.0
    %5766 = vmatprep.subr.mxu0 0.0
    %5767 = vmatpush2.msra.mxu0 0.0
    %5768 = vmatprep.subr.mxu0 0.0
    %5769 = vmatpush2.msra.mxu0 0.0
    %5770 = vmatprep.subr.mxu0 0.0
    %5771 = vmatpush2.msra.mxu0 0.0
    %5772 = vmatprep.subr.mxu0 0.0
    %5773 = vmatpush2.msra.mxu0 0.0
    %5774 = vmatprep.subr.mxu0 0.0
    %5775 = vmatpush2.msra.mxu0 0.0
    %5776 = vmatprep.subr.mxu0 0.0
    %5777 = vmatpush2.msra.mxu0 0.0
    %5778 = vmatprep.mubr.f32.mxu0 0.0
    %v5779 = vand.u32 %v5297, 4294901760
    %5780 = vmatmul.mubr.f32.gmra.mxu0 %v5779
    %v5781 = vpop.f32.mrf.mxu0
    %v5782 = vadd.f32 %v5704, %v5781
    %v5783 = vpop.f32.mrf.mxu0
    %5784 = vmatprep.mubr.f32.mxu0 0.0
    %v5785 = vand.u32 %v5300, 4294901760
    %5786 = vmatmul.mubr.f32.gmra.mxu0 %v5785
    %v5787 = vpop.f32.mrf.mxu0
    %v5788 = vadd.f32 %v5710, %v5787
    %v5789 = vpop.f32.mrf.mxu0
    %5790 = vdwg.mxu0
    %v5791 = vadd.f32 %v5283, %v5782
    %v5792 = vadd.f32 %v5289, %v5788
    %v5793 = vld [vmem:[#allocation3 + $0x3] sm:$0xff]
    %v5794 = vld [vmem:[#allocation3 + $0x13] sm:$0xff]
    %s5795 = scalar_lea.vmem %s2, 24
    %v5796 = vld [vmem:[%s5795] sm:$0xff]
    %v5798 = vsel %vm4292, %v5793, 0
    %v5801 = vsel %vm4292, %v5794, 0
    %5803 = vmatprep.subr.mxu0 0.0
    %5804 = vmatpush1.msra.mxu0 0.0
    %5805 = vmatprep.subr.mxu0 0.0
    %5806 = vmatpush1.msra.mxu0 0.0
    %5807 = vmatprep.subr.mxu0 0.0
    %5808 = vmatpush1.msra.mxu0 0.0
    %5809 = vmatprep.subr.mxu0 0.0
    %5810 = vmatpush1.msra.mxu0 0.0
    %5811 = vmatprep.subr.mxu0 0.0
    %5812 = vmatpush1.msra.mxu0 0.0
    %5813 = vmatprep.subr.mxu0 0.0
    %5814 = vmatpush1.msra.mxu0 0.0
    %5815 = vmatprep.subr.mxu0 0.0
    %5816 = vmatpush1.msra.mxu0 0.0
    %5817 = vmatprep.subr.mxu0 0.0
    %5818 = vmatpush1.msra.mxu0 0.0
    %5819 = vmatprep.subr.mxu0 0.0
    %5820 = vmatpush1.msra.mxu0 0.0
    %5821 = vmatprep.subr.mxu0 0.0
    %5822 = vmatpush1.msra.mxu0 0.0
    %5823 = vmatprep.subr.mxu0 0.0
    %5824 = vmatpush1.msra.mxu0 0.0
    %5825 = vmatprep.subr.mxu0 0.0
    %5826 = vmatpush1.msra.mxu0 0.0
    %5827 = vmatprep.subr.mxu0 0.0
    %5828 = vmatpush1.msra.mxu0 0.0
    %5829 = vmatprep.subr.mxu0 0.0
    %5830 = vmatpush1.msra.mxu0 0.0
    %5831 = vmatprep.subr.mxu0 0.0
    %5832 = vmatpush1.msra.mxu0 0.0
    %5833 = vmatprep.subr.mxu0 0.0
    %v5834 = vand.u32 %v5796, 4294901760
    %5835 = vmatpush1.msra.mxu0 %v5834
    %5836 = vmatprep.subr.mxu0 0.0
    %5837 = vmatpush2.msra.mxu0 0.0
    %5838 = vmatprep.subr.mxu0 0.0
    %5839 = vmatpush2.msra.mxu0 0.0
    %5840 = vmatprep.subr.mxu0 0.0
    %5841 = vmatpush2.msra.mxu0 0.0
    %5842 = vmatprep.subr.mxu0 0.0
    %5843 = vmatpush2.msra.mxu0 0.0
    %5844 = vmatprep.subr.mxu0 0.0
    %5845 = vmatpush2.msra.mxu0 0.0
    %5846 = vmatprep.subr.mxu0 0.0
    %5847 = vmatpush2.msra.mxu0 0.0
    %5848 = vmatprep.subr.mxu0 0.0
    %5849 = vmatpush2.msra.mxu0 0.0
    %5850 = vmatprep.subr.mxu0 0.0
    %5851 = vmatpush2.msra.mxu0 0.0
    %5852 = vmatprep.subr.mxu0 0.0
    %5853 = vmatpush2.msra.mxu0 0.0
    %5854 = vmatprep.subr.mxu0 0.0
    %5855 = vmatpush2.msra.mxu0 0.0
    %5856 = vmatprep.subr.mxu0 0.0
    %5857 = vmatpush2.msra.mxu0 0.0
    %5858 = vmatprep.subr.mxu0 0.0
    %5859 = vmatpush2.msra.mxu0 0.0
    %5860 = vmatprep.subr.mxu0 0.0
    %5861 = vmatpush2.msra.mxu0 0.0
    %5862 = vmatprep.subr.mxu0 0.0
    %5863 = vmatpush2.msra.mxu0 0.0
    %5864 = vmatprep.subr.mxu0 0.0
    %5865 = vmatpush2.msra.mxu0 0.0
    %5866 = vmatprep.subr.mxu0 0.0
    %5867 = vmatpush2.msra.mxu0 0.0
    %5868 = vmatprep.mubr.f32.mxu0 0.0
    %v5869 = vand.u32 %v5798, 4294901760
    %v5870 = vsub.f32 %v5798, %v5869
    %v5871 = vand.u32 %v5870, 4294901760
    %v5872 = vsub.f32 %v5870, %v5871
    %v5873 = vand.u32 %v5872, 4294901760
    %5874 = vmatmul.mubr.f32.gmra.mxu0 %v5873
    %v5875 = vpop.f32.mrf.mxu0
    %v5876 = vadd.f32 0.0, %v5875
    %v5877 = vpop.f32.mrf.mxu0
    %5878 = vmatprep.mubr.f32.mxu0 0.0
    %v5879 = vand.u32 %v5801, 4294901760
    %v5880 = vsub.f32 %v5801, %v5879
    %v5881 = vand.u32 %v5880, 4294901760
    %v5882 = vsub.f32 %v5880, %v5881
    %v5883 = vand.u32 %v5882, 4294901760
    %5884 = vmatmul.mubr.f32.gmra.mxu0 %v5883
    %v5885 = vpop.f32.mrf.mxu0
    %v5886 = vadd.f32 0.0, %v5885
    %v5887 = vpop.f32.mrf.mxu0
    %5888 = vdwg.mxu0
    %5889 = vmatprep.subr.mxu0 0.0
    %5890 = vmatpush1.msra.mxu0 0.0
    %5891 = vmatprep.subr.mxu0 0.0
    %5892 = vmatpush1.msra.mxu0 0.0
    %5893 = vmatprep.subr.mxu0 0.0
    %5894 = vmatpush1.msra.mxu0 0.0
    %5895 = vmatprep.subr.mxu0 0.0
    %5896 = vmatpush1.msra.mxu0 0.0
    %5897 = vmatprep.subr.mxu0 0.0
    %5898 = vmatpush1.msra.mxu0 0.0
    %5899 = vmatprep.subr.mxu0 0.0
    %5900 = vmatpush1.msra.mxu0 0.0
    %5901 = vmatprep.subr.mxu0 0.0
    %5902 = vmatpush1.msra.mxu0 0.0
    %5903 = vmatprep.subr.mxu0 0.0
    %5904 = vmatpush1.msra.mxu0 0.0
    %5905 = vmatprep.subr.mxu0 0.0
    %5906 = vmatpush1.msra.mxu0 0.0
    %5907 = vmatprep.subr.mxu0 0.0
    %5908 = vmatpush1.msra.mxu0 0.0
    %5909 = vmatprep.subr.mxu0 0.0
    %5910 = vmatpush1.msra.mxu0 0.0
    %5911 = vmatprep.subr.mxu0 0.0
    %5912 = vmatpush1.msra.mxu0 0.0
    %5913 = vmatprep.subr.mxu0 0.0
    %5914 = vmatpush1.msra.mxu0 0.0
    %5915 = vmatprep.subr.mxu0 0.0
    %5916 = vmatpush1.msra.mxu0 0.0
    %5917 = vmatprep.subr.mxu0 0.0
    %5918 = vmatpush1.msra.mxu0 0.0
    %5919 = vmatprep.subr.mxu0 0.0
    %v5920 = vand.u32 %v5796, 4294901760
    %v5921 = vsub.f32 %v5796, %v5920
    %v5922 = vand.u32 %v5921, 4294901760
    %v5923 = vsub.f32 %v5921, %v5922
    %v5924 = vand.u32 %v5923, 4294901760
    %5925 = vmatpush1.msra.mxu0 %v5924
    %5926 = vmatprep.subr.mxu0 0.0
    %5927 = vmatpush2.msra.mxu0 0.0
    %5928 = vmatprep.subr.mxu0 0.0
    %5929 = vmatpush2.msra.mxu0 0.0
    %5930 = vmatprep.subr.mxu0 0.0
    %5931 = vmatpush2.msra.mxu0 0.0
    %5932 = vmatprep.subr.mxu0 0.0
    %5933 = vmatpush2.msra.mxu0 0.0
    %5934 = vmatprep.subr.mxu0 0.0
    %5935 = vmatpush2.msra.mxu0 0.0
    %5936 = vmatprep.subr.mxu0 0.0
    %5937 = vmatpush2.msra.mxu0 0.0
    %5938 = vmatprep.subr.mxu0 0.0
    %5939 = vmatpush2.msra.mxu0 0.0
    %5940 = vmatprep.subr.mxu0 0.0
    %5941 = vmatpush2.msra.mxu0 0.0
    %5942 = vmatprep.subr.mxu0 0.0
    %5943 = vmatpush2.msra.mxu0 0.0
    %5944 = vmatprep.subr.mxu0 0.0
    %5945 = vmatpush2.msra.mxu0 0.0
    %5946 = vmatprep.subr.mxu0 0.0
    %5947 = vmatpush2.msra.mxu0 0.0
    %5948 = vmatprep.subr.mxu0 0.0
    %5949 = vmatpush2.msra.mxu0 0.0
    %5950 = vmatprep.subr.mxu0 0.0
    %5951 = vmatpush2.msra.mxu0 0.0
    %5952 = vmatprep.subr.mxu0 0.0
    %5953 = vmatpush2.msra.mxu0 0.0
    %5954 = vmatprep.subr.mxu0 0.0
    %5955 = vmatpush2.msra.mxu0 0.0
    %5956 = vmatprep.subr.mxu0 0.0
    %5957 = vmatpush2.msra.mxu0 0.0
    %5958 = vmatprep.mubr.f32.mxu0 0.0
    %v5959 = vand.u32 %v5798, 4294901760
    %5960 = vmatmul.mubr.f32.gmra.mxu0 %v5959
    %v5961 = vpop.f32.mrf.mxu0
    %v5962 = vadd.f32 %v5876, %v5961
    %v5963 = vpop.f32.mrf.mxu0
    %5964 = vmatprep.mubr.f32.mxu0 0.0
    %v5965 = vand.u32 %v5801, 4294901760
    %5966 = vmatmul.mubr.f32.gmra.mxu0 %v5965
    %v5967 = vpop.f32.mrf.mxu0
    %v5968 = vadd.f32 %v5886, %v5967
    %v5969 = vpop.f32.mrf.mxu0
    %5970 = vdwg.mxu0
    %5971 = vmatprep.subr.mxu0 0.0
    %5972 = vmatpush1.msra.mxu0 0.0
    %5973 = vmatprep.subr.mxu0 0.0
    %5974 = vmatpush1.msra.mxu0 0.0
    %5975 = vmatprep.subr.mxu0 0.0
    %5976 = vmatpush1.msra.mxu0 0.0
    %5977 = vmatprep.subr.mxu0 0.0
    %5978 = vmatpush1.msra.mxu0 0.0
    %5979 = vmatprep.subr.mxu0 0.0
    %5980 = vmatpush1.msra.mxu0 0.0
    %5981 = vmatprep.subr.mxu0 0.0
    %5982 = vmatpush1.msra.mxu0 0.0
    %5983 = vmatprep.subr.mxu0 0.0
    %5984 = vmatpush1.msra.mxu0 0.0
    %5985 = vmatprep.subr.mxu0 0.0
    %5986 = vmatpush1.msra.mxu0 0.0
    %5987 = vmatprep.subr.mxu0 0.0
    %5988 = vmatpush1.msra.mxu0 0.0
    %5989 = vmatprep.subr.mxu0 0.0
    %5990 = vmatpush1.msra.mxu0 0.0
    %5991 = vmatprep.subr.mxu0 0.0
    %5992 = vmatpush1.msra.mxu0 0.0
    %5993 = vmatprep.subr.mxu0 0.0
    %5994 = vmatpush1.msra.mxu0 0.0
    %5995 = vmatprep.subr.mxu0 0.0
    %5996 = vmatpush1.msra.mxu0 0.0
    %5997 = vmatprep.subr.mxu0 0.0
    %5998 = vmatpush1.msra.mxu0 0.0
    %5999 = vmatprep.subr.mxu0 0.0
    %6000 = vmatpush1.msra.mxu0 0.0
    %6001 = vmatprep.subr.mxu0 0.0
    %v6002 = vand.u32 %v5796, 4294901760
    %v6003 = vsub.f32 %v5796, %v6002
    %6004 = vmatpush1.msra.mxu0 %v6003
    %6005 = vmatprep.subr.mxu0 0.0
    %6006 = vmatpush2.msra.mxu0 0.0
    %6007 = vmatprep.subr.mxu0 0.0
    %6008 = vmatpush2.msra.mxu0 0.0
    %6009 = vmatprep.subr.mxu0 0.0
    %6010 = vmatpush2.msra.mxu0 0.0
    %6011 = vmatprep.subr.mxu0 0.0
    %6012 = vmatpush2.msra.mxu0 0.0
    %6013 = vmatprep.subr.mxu0 0.0
    %6014 = vmatpush2.msra.mxu0 0.0
    %6015 = vmatprep.subr.mxu0 0.0
    %6016 = vmatpush2.msra.mxu0 0.0
    %6017 = vmatprep.subr.mxu0 0.0
    %6018 = vmatpush2.msra.mxu0 0.0
    %6019 = vmatprep.subr.mxu0 0.0
    %6020 = vmatpush2.msra.mxu0 0.0
    %6021 = vmatprep.subr.mxu0 0.0
    %6022 = vmatpush2.msra.mxu0 0.0
    %6023 = vmatprep.subr.mxu0 0.0
    %6024 = vmatpush2.msra.mxu0 0.0
    %6025 = vmatprep.subr.mxu0 0.0
    %6026 = vmatpush2.msra.mxu0 0.0
    %6027 = vmatprep.subr.mxu0 0.0
    %6028 = vmatpush2.msra.mxu0 0.0
    %6029 = vmatprep.subr.mxu0 0.0
    %6030 = vmatpush2.msra.mxu0 0.0
    %6031 = vmatprep.subr.mxu0 0.0
    %6032 = vmatpush2.msra.mxu0 0.0
    %6033 = vmatprep.subr.mxu0 0.0
    %6034 = vmatpush2.msra.mxu0 0.0
    %6035 = vmatprep.subr.mxu0 0.0
    %6036 = vmatpush2.msra.mxu0 0.0
    %6037 = vmatprep.mubr.f32.mxu0 0.0
    %v6038 = vand.u32 %v5798, 4294901760
    %v6039 = vsub.f32 %v5798, %v6038
    %6040 = vmatmul.mubr.f32.gmra.mxu0 %v6039
    %v6041 = vpop.f32.mrf.mxu0
    %v6042 = vadd.f32 %v5962, %v6041
    %v6043 = vpop.f32.mrf.mxu0
    %6044 = vmatprep.mubr.f32.mxu0 0.0
    %v6045 = vand.u32 %v5801, 4294901760
    %v6046 = vsub.f32 %v5801, %v6045
    %6047 = vmatmul.mubr.f32.gmra.mxu0 %v6046
    %v6048 = vpop.f32.mrf.mxu0
    %v6049 = vadd.f32 %v5968, %v6048
    %v6050 = vpop.f32.mrf.mxu0
    %6051 = vdwg.mxu0
    %6052 = vmatprep.subr.mxu0 0.0
    %6053 = vmatpush1.msra.mxu0 0.0
    %6054 = vmatprep.subr.mxu0 0.0
    %6055 = vmatpush1.msra.mxu0 0.0
    %6056 = vmatprep.subr.mxu0 0.0
    %6057 = vmatpush1.msra.mxu0 0.0
    %6058 = vmatprep.subr.mxu0 0.0
    %6059 = vmatpush1.msra.mxu0 0.0
    %6060 = vmatprep.subr.mxu0 0.0
    %6061 = vmatpush1.msra.mxu0 0.0
    %6062 = vmatprep.subr.mxu0 0.0
    %6063 = vmatpush1.msra.mxu0 0.0
    %6064 = vmatprep.subr.mxu0 0.0
    %6065 = vmatpush1.msra.mxu0 0.0
    %6066 = vmatprep.subr.mxu0 0.0
    %6067 = vmatpush1.msra.mxu0 0.0
    %6068 = vmatprep.subr.mxu0 0.0
    %6069 = vmatpush1.msra.mxu0 0.0
    %6070 = vmatprep.subr.mxu0 0.0
    %6071 = vmatpush1.msra.mxu0 0.0
    %6072 = vmatprep.subr.mxu0 0.0
    %6073 = vmatpush1.msra.mxu0 0.0
    %6074 = vmatprep.subr.mxu0 0.0
    %6075 = vmatpush1.msra.mxu0 0.0
    %6076 = vmatprep.subr.mxu0 0.0
    %6077 = vmatpush1.msra.mxu0 0.0
    %6078 = vmatprep.subr.mxu0 0.0
    %6079 = vmatpush1.msra.mxu0 0.0
    %6080 = vmatprep.subr.mxu0 0.0
    %6081 = vmatpush1.msra.mxu0 0.0
    %6082 = vmatprep.subr.mxu0 0.0
    %v6083 = vand.u32 %v5796, 4294901760
    %6084 = vmatpush1.msra.mxu0 %v6083
    %6085 = vmatprep.subr.mxu0 0.0
    %6086 = vmatpush2.msra.mxu0 0.0
    %6087 = vmatprep.subr.mxu0 0.0
    %6088 = vmatpush2.msra.mxu0 0.0
    %6089 = vmatprep.subr.mxu0 0.0
    %6090 = vmatpush2.msra.mxu0 0.0
    %6091 = vmatprep.subr.mxu0 0.0
    %6092 = vmatpush2.msra.mxu0 0.0
    %6093 = vmatprep.subr.mxu0 0.0
    %6094 = vmatpush2.msra.mxu0 0.0
    %6095 = vmatprep.subr.mxu0 0.0
    %6096 = vmatpush2.msra.mxu0 0.0
    %6097 = vmatprep.subr.mxu0 0.0
    %6098 = vmatpush2.msra.mxu0 0.0
    %6099 = vmatprep.subr.mxu0 0.0
    %6100 = vmatpush2.msra.mxu0 0.0
    %6101 = vmatprep.subr.mxu0 0.0
    %6102 = vmatpush2.msra.mxu0 0.0
    %6103 = vmatprep.subr.mxu0 0.0
    %6104 = vmatpush2.msra.mxu0 0.0
    %6105 = vmatprep.subr.mxu0 0.0
    %6106 = vmatpush2.msra.mxu0 0.0
    %6107 = vmatprep.subr.mxu0 0.0
    %6108 = vmatpush2.msra.mxu0 0.0
    %6109 = vmatprep.subr.mxu0 0.0
    %6110 = vmatpush2.msra.mxu0 0.0
    %6111 = vmatprep.subr.mxu0 0.0
    %6112 = vmatpush2.msra.mxu0 0.0
    %6113 = vmatprep.subr.mxu0 0.0
    %6114 = vmatpush2.msra.mxu0 0.0
    %6115 = vmatprep.subr.mxu0 0.0
    %6116 = vmatpush2.msra.mxu0 0.0
    %6117 = vmatprep.mubr.f32.mxu0 0.0
    %v6118 = vand.u32 %v5798, 4294901760
    %v6119 = vsub.f32 %v5798, %v6118
    %v6120 = vand.u32 %v6119, 4294901760
    %6121 = vmatmul.mubr.f32.gmra.mxu0 %v6120
    %v6122 = vpop.f32.mrf.mxu0
    %v6123 = vadd.f32 %v6042, %v6122
    %v6124 = vpop.f32.mrf.mxu0
    %6125 = vmatprep.mubr.f32.mxu0 0.0
    %v6126 = vand.u32 %v5801, 4294901760
    %v6127 = vsub.f32 %v5801, %v6126
    %v6128 = vand.u32 %v6127, 4294901760
    %6129 = vmatmul.mubr.f32.gmra.mxu0 %v6128
    %v6130 = vpop.f32.mrf.mxu0
    %v6131 = vadd.f32 %v6049, %v6130
    %v6132 = vpop.f32.mrf.mxu0
    %6133 = vdwg.mxu0
    %6134 = vmatprep.subr.mxu0 0.0
    %6135 = vmatpush1.msra.mxu0 0.0
    %6136 = vmatprep.subr.mxu0 0.0
    %6137 = vmatpush1.msra.mxu0 0.0
    %6138 = vmatprep.subr.mxu0 0.0
    %6139 = vmatpush1.msra.mxu0 0.0
    %6140 = vmatprep.subr.mxu0 0.0
    %6141 = vmatpush1.msra.mxu0 0.0
    %6142 = vmatprep.subr.mxu0 0.0
    %6143 = vmatpush1.msra.mxu0 0.0
    %6144 = vmatprep.subr.mxu0 0.0
    %6145 = vmatpush1.msra.mxu0 0.0
    %6146 = vmatprep.subr.mxu0 0.0
    %6147 = vmatpush1.msra.mxu0 0.0
    %6148 = vmatprep.subr.mxu0 0.0
    %6149 = vmatpush1.msra.mxu0 0.0
    %6150 = vmatprep.subr.mxu0 0.0
    %6151 = vmatpush1.msra.mxu0 0.0
    %6152 = vmatprep.subr.mxu0 0.0
    %6153 = vmatpush1.msra.mxu0 0.0
    %6154 = vmatprep.subr.mxu0 0.0
    %6155 = vmatpush1.msra.mxu0 0.0
    %6156 = vmatprep.subr.mxu0 0.0
    %6157 = vmatpush1.msra.mxu0 0.0
    %6158 = vmatprep.subr.mxu0 0.0
    %6159 = vmatpush1.msra.mxu0 0.0
    %6160 = vmatprep.subr.mxu0 0.0
    %6161 = vmatpush1.msra.mxu0 0.0
    %6162 = vmatprep.subr.mxu0 0.0
    %6163 = vmatpush1.msra.mxu0 0.0
    %6164 = vmatprep.subr.mxu0 0.0
    %v6165 = vand.u32 %v5796, 4294901760
    %v6166 = vsub.f32 %v5796, %v6165
    %v6167 = vand.u32 %v6166, 4294901760
    %6168 = vmatpush1.msra.mxu0 %v6167
    %6169 = vmatprep.subr.mxu0 0.0
    %6170 = vmatpush2.msra.mxu0 0.0
    %6171 = vmatprep.subr.mxu0 0.0
    %6172 = vmatpush2.msra.mxu0 0.0
    %6173 = vmatprep.subr.mxu0 0.0
    %6174 = vmatpush2.msra.mxu0 0.0
    %6175 = vmatprep.subr.mxu0 0.0
    %6176 = vmatpush2.msra.mxu0 0.0
    %6177 = vmatprep.subr.mxu0 0.0
    %6178 = vmatpush2.msra.mxu0 0.0
    %6179 = vmatprep.subr.mxu0 0.0
    %6180 = vmatpush2.msra.mxu0 0.0
    %6181 = vmatprep.subr.mxu0 0.0
    %6182 = vmatpush2.msra.mxu0 0.0
    %6183 = vmatprep.subr.mxu0 0.0
    %6184 = vmatpush2.msra.mxu0 0.0
    %6185 = vmatprep.subr.mxu0 0.0
    %6186 = vmatpush2.msra.mxu0 0.0
    %6187 = vmatprep.subr.mxu0 0.0
    %6188 = vmatpush2.msra.mxu0 0.0
    %6189 = vmatprep.subr.mxu0 0.0
    %6190 = vmatpush2.msra.mxu0 0.0
    %6191 = vmatprep.subr.mxu0 0.0
    %6192 = vmatpush2.msra.mxu0 0.0
    %6193 = vmatprep.subr.mxu0 0.0
    %6194 = vmatpush2.msra.mxu0 0.0
    %6195 = vmatprep.subr.mxu0 0.0
    %6196 = vmatpush2.msra.mxu0 0.0
    %6197 = vmatprep.subr.mxu0 0.0
    %6198 = vmatpush2.msra.mxu0 0.0
    %6199 = vmatprep.subr.mxu0 0.0
    %6200 = vmatpush2.msra.mxu0 0.0
    %6201 = vmatprep.mubr.f32.mxu0 0.0
    %v6202 = vand.u32 %v5798, 4294901760
    %6203 = vmatmul.mubr.f32.gmra.mxu0 %v6202
    %v6204 = vpop.f32.mrf.mxu0
    %v6205 = vadd.f32 %v6123, %v6204
    %v6206 = vpop.f32.mrf.mxu0
    %6207 = vmatprep.mubr.f32.mxu0 0.0
    %v6208 = vand.u32 %v5801, 4294901760
    %6209 = vmatmul.mubr.f32.gmra.mxu0 %v6208
    %v6210 = vpop.f32.mrf.mxu0
    %v6211 = vadd.f32 %v6131, %v6210
    %v6212 = vpop.f32.mrf.mxu0
    %6213 = vdwg.mxu0
    %6214 = vmatprep.subr.mxu0 0.0
    %6215 = vmatpush1.msra.mxu0 0.0
    %6216 = vmatprep.subr.mxu0 0.0
    %6217 = vmatpush1.msra.mxu0 0.0
    %6218 = vmatprep.subr.mxu0 0.0
    %6219 = vmatpush1.msra.mxu0 0.0
    %6220 = vmatprep.subr.mxu0 0.0
    %6221 = vmatpush1.msra.mxu0 0.0
    %6222 = vmatprep.subr.mxu0 0.0
    %6223 = vmatpush1.msra.mxu0 0.0
    %6224 = vmatprep.subr.mxu0 0.0
    %6225 = vmatpush1.msra.mxu0 0.0
    %6226 = vmatprep.subr.mxu0 0.0
    %6227 = vmatpush1.msra.mxu0 0.0
    %6228 = vmatprep.subr.mxu0 0.0
    %6229 = vmatpush1.msra.mxu0 0.0
    %6230 = vmatprep.subr.mxu0 0.0
    %6231 = vmatpush1.msra.mxu0 0.0
    %6232 = vmatprep.subr.mxu0 0.0
    %6233 = vmatpush1.msra.mxu0 0.0
    %6234 = vmatprep.subr.mxu0 0.0
    %6235 = vmatpush1.msra.mxu0 0.0
    %6236 = vmatprep.subr.mxu0 0.0
    %6237 = vmatpush1.msra.mxu0 0.0
    %6238 = vmatprep.subr.mxu0 0.0
    %6239 = vmatpush1.msra.mxu0 0.0
    %6240 = vmatprep.subr.mxu0 0.0
    %6241 = vmatpush1.msra.mxu0 0.0
    %6242 = vmatprep.subr.mxu0 0.0
    %6243 = vmatpush1.msra.mxu0 0.0
    %6244 = vmatprep.subr.mxu0 0.0
    %v6245 = vand.u32 %v5796, 4294901760
    %6246 = vmatpush1.msra.mxu0 %v6245
    %6247 = vmatprep.subr.mxu0 0.0
    %6248 = vmatpush2.msra.mxu0 0.0
    %6249 = vmatprep.subr.mxu0 0.0
    %6250 = vmatpush2.msra.mxu0 0.0
    %6251 = vmatprep.subr.mxu0 0.0
    %6252 = vmatpush2.msra.mxu0 0.0
    %6253 = vmatprep.subr.mxu0 0.0
    %6254 = vmatpush2.msra.mxu0 0.0
    %6255 = vmatprep.subr.mxu0 0.0
    %6256 = vmatpush2.msra.mxu0 0.0
    %6257 = vmatprep.subr.mxu0 0.0
    %6258 = vmatpush2.msra.mxu0 0.0
    %6259 = vmatprep.subr.mxu0 0.0
    %6260 = vmatpush2.msra.mxu0 0.0
    %6261 = vmatprep.subr.mxu0 0.0
    %6262 = vmatpush2.msra.mxu0 0.0
    %6263 = vmatprep.subr.mxu0 0.0
    %6264 = vmatpush2.msra.mxu0 0.0
    %6265 = vmatprep.subr.mxu0 0.0
    %6266 = vmatpush2.msra.mxu0 0.0
    %6267 = vmatprep.subr.mxu0 0.0
    %6268 = vmatpush2.msra.mxu0 0.0
    %6269 = vmatprep.subr.mxu0 0.0
    %6270 = vmatpush2.msra.mxu0 0.0
    %6271 = vmatprep.subr.mxu0 0.0
    %6272 = vmatpush2.msra.mxu0 0.0
    %6273 = vmatprep.subr.mxu0 0.0
    %6274 = vmatpush2.msra.mxu0 0.0
    %6275 = vmatprep.subr.mxu0 0.0
    %6276 = vmatpush2.msra.mxu0 0.0
    %6277 = vmatprep.subr.mxu0 0.0
    %6278 = vmatpush2.msra.mxu0 0.0
    %6279 = vmatprep.mubr.f32.mxu0 0.0
    %v6280 = vand.u32 %v5798, 4294901760
    %6281 = vmatmul.mubr.f32.gmra.mxu0 %v6280
    %v6282 = vpop.f32.mrf.mxu0
    %v6283 = vadd.f32 %v6205, %v6282
    %v6284 = vpop.f32.mrf.mxu0
    %6285 = vmatprep.mubr.f32.mxu0 0.0
    %v6286 = vand.u32 %v5801, 4294901760
    %6287 = vmatmul.mubr.f32.gmra.mxu0 %v6286
    %v6288 = vpop.f32.mrf.mxu0
    %v6289 = vadd.f32 %v6211, %v6288
    %v6290 = vpop.f32.mrf.mxu0
    %6291 = vdwg.mxu0
    %v6292 = vadd.f32 %v5791, %v6283
    %v6293 = vadd.f32 %v5792, %v6289
    %v6294 = vld [vmem:[#allocation3 + $0x4] sm:$0xff]
    %v6295 = vld [vmem:[#allocation3 + $0x14] sm:$0xff]
    %s6296 = scalar_lea.vmem %s2, 32
    %v6297 = vld [vmem:[%s6296] sm:$0xff]
    %v6299 = vsel %vm4292, %v6294, 0
    %v6302 = vsel %vm4292, %v6295, 0
    %6304 = vmatprep.subr.mxu0 0.0
    %6305 = vmatpush1.msra.mxu0 0.0
    %6306 = vmatprep.subr.mxu0 0.0
    %6307 = vmatpush1.msra.mxu0 0.0
    %6308 = vmatprep.subr.mxu0 0.0
    %6309 = vmatpush1.msra.mxu0 0.0
    %6310 = vmatprep.subr.mxu0 0.0
    %6311 = vmatpush1.msra.mxu0 0.0
    %6312 = vmatprep.subr.mxu0 0.0
    %6313 = vmatpush1.msra.mxu0 0.0
    %6314 = vmatprep.subr.mxu0 0.0
    %6315 = vmatpush1.msra.mxu0 0.0
    %6316 = vmatprep.subr.mxu0 0.0
    %6317 = vmatpush1.msra.mxu0 0.0
    %6318 = vmatprep.subr.mxu0 0.0
    %6319 = vmatpush1.msra.mxu0 0.0
    %6320 = vmatprep.subr.mxu0 0.0
    %6321 = vmatpush1.msra.mxu0 0.0
    %6322 = vmatprep.subr.mxu0 0.0
    %6323 = vmatpush1.msra.mxu0 0.0
    %6324 = vmatprep.subr.mxu0 0.0
    %6325 = vmatpush1.msra.mxu0 0.0
    %6326 = vmatprep.subr.mxu0 0.0
    %6327 = vmatpush1.msra.mxu0 0.0
    %6328 = vmatprep.subr.mxu0 0.0
    %6329 = vmatpush1.msra.mxu0 0.0
    %6330 = vmatprep.subr.mxu0 0.0
    %6331 = vmatpush1.msra.mxu0 0.0
    %6332 = vmatprep.subr.mxu0 0.0
    %6333 = vmatpush1.msra.mxu0 0.0
    %6334 = vmatprep.subr.mxu0 0.0
    %v6335 = vand.u32 %v6297, 4294901760
    %6336 = vmatpush1.msra.mxu0 %v6335
    %6337 = vmatprep.subr.mxu0 0.0
    %6338 = vmatpush2.msra.mxu0 0.0
    %6339 = vmatprep.subr.mxu0 0.0
    %6340 = vmatpush2.msra.mxu0 0.0
    %6341 = vmatprep.subr.mxu0 0.0
    %6342 = vmatpush2.msra.mxu0 0.0
    %6343 = vmatprep.subr.mxu0 0.0
    %6344 = vmatpush2.msra.mxu0 0.0
    %6345 = vmatprep.subr.mxu0 0.0
    %6346 = vmatpush2.msra.mxu0 0.0
    %6347 = vmatprep.subr.mxu0 0.0
    %6348 = vmatpush2.msra.mxu0 0.0
    %6349 = vmatprep.subr.mxu0 0.0
    %6350 = vmatpush2.msra.mxu0 0.0
    %6351 = vmatprep.subr.mxu0 0.0
    %6352 = vmatpush2.msra.mxu0 0.0
    %6353 = vmatprep.subr.mxu0 0.0
    %6354 = vmatpush2.msra.mxu0 0.0
    %6355 = vmatprep.subr.mxu0 0.0
    %6356 = vmatpush2.msra.mxu0 0.0
    %6357 = vmatprep.subr.mxu0 0.0
    %6358 = vmatpush2.msra.mxu0 0.0
    %6359 = vmatprep.subr.mxu0 0.0
    %6360 = vmatpush2.msra.mxu0 0.0
    %6361 = vmatprep.subr.mxu0 0.0
    %6362 = vmatpush2.msra.mxu0 0.0
    %6363 = vmatprep.subr.mxu0 0.0
    %6364 = vmatpush2.msra.mxu0 0.0
    %6365 = vmatprep.subr.mxu0 0.0
    %6366 = vmatpush2.msra.mxu0 0.0
    %6367 = vmatprep.subr.mxu0 0.0
    %6368 = vmatpush2.msra.mxu0 0.0
    %6369 = vmatprep.mubr.f32.mxu0 0.0
    %v6370 = vand.u32 %v6299, 4294901760
    %v6371 = vsub.f32 %v6299, %v6370
    %v6372 = vand.u32 %v6371, 4294901760
    %v6373 = vsub.f32 %v6371, %v6372
    %v6374 = vand.u32 %v6373, 4294901760
    %6375 = vmatmul.mubr.f32.gmra.mxu0 %v6374
    %v6376 = vpop.f32.mrf.mxu0
    %v6377 = vadd.f32 0.0, %v6376
    %v6378 = vpop.f32.mrf.mxu0
    %6379 = vmatprep.mubr.f32.mxu0 0.0
    %v6380 = vand.u32 %v6302, 4294901760
    %v6381 = vsub.f32 %v6302, %v6380
    %v6382 = vand.u32 %v6381, 4294901760
    %v6383 = vsub.f32 %v6381, %v6382
    %v6384 = vand.u32 %v6383, 4294901760
    %6385 = vmatmul.mubr.f32.gmra.mxu0 %v6384
    %v6386 = vpop.f32.mrf.mxu0
    %v6387 = vadd.f32 0.0, %v6386
    %v6388 = vpop.f32.mrf.mxu0
    %6389 = vdwg.mxu0
    %6390 = vmatprep.subr.mxu0 0.0
    %6391 = vmatpush1.msra.mxu0 0.0
    %6392 = vmatprep.subr.mxu0 0.0
    %6393 = vmatpush1.msra.mxu0 0.0
    %6394 = vmatprep.subr.mxu0 0.0
    %6395 = vmatpush1.msra.mxu0 0.0
    %6396 = vmatprep.subr.mxu0 0.0
    %6397 = vmatpush1.msra.mxu0 0.0
    %6398 = vmatprep.subr.mxu0 0.0
    %6399 = vmatpush1.msra.mxu0 0.0
    %6400 = vmatprep.subr.mxu0 0.0
    %6401 = vmatpush1.msra.mxu0 0.0
    %6402 = vmatprep.subr.mxu0 0.0
    %6403 = vmatpush1.msra.mxu0 0.0
    %6404 = vmatprep.subr.mxu0 0.0
    %6405 = vmatpush1.msra.mxu0 0.0
    %6406 = vmatprep.subr.mxu0 0.0
    %6407 = vmatpush1.msra.mxu0 0.0
    %6408 = vmatprep.subr.mxu0 0.0
    %6409 = vmatpush1.msra.mxu0 0.0
    %6410 = vmatprep.subr.mxu0 0.0
    %6411 = vmatpush1.msra.mxu0 0.0
    %6412 = vmatprep.subr.mxu0 0.0
    %6413 = vmatpush1.msra.mxu0 0.0
    %6414 = vmatprep.subr.mxu0 0.0
    %6415 = vmatpush1.msra.mxu0 0.0
    %6416 = vmatprep.subr.mxu0 0.0
    %6417 = vmatpush1.msra.mxu0 0.0
    %6418 = vmatprep.subr.mxu0 0.0
    %6419 = vmatpush1.msra.mxu0 0.0
    %6420 = vmatprep.subr.mxu0 0.0
    %v6421 = vand.u32 %v6297, 4294901760
    %v6422 = vsub.f32 %v6297, %v6421
    %v6423 = vand.u32 %v6422, 4294901760
    %v6424 = vsub.f32 %v6422, %v6423
    %v6425 = vand.u32 %v6424, 4294901760
    %6426 = vmatpush1.msra.mxu0 %v6425
    %6427 = vmatprep.subr.mxu0 0.0
    %6428 = vmatpush2.msra.mxu0 0.0
    %6429 = vmatprep.subr.mxu0 0.0
    %6430 = vmatpush2.msra.mxu0 0.0
    %6431 = vmatprep.subr.mxu0 0.0
    %6432 = vmatpush2.msra.mxu0 0.0
    %6433 = vmatprep.subr.mxu0 0.0
    %6434 = vmatpush2.msra.mxu0 0.0
    %6435 = vmatprep.subr.mxu0 0.0
    %6436 = vmatpush2.msra.mxu0 0.0
    %6437 = vmatprep.subr.mxu0 0.0
    %6438 = vmatpush2.msra.mxu0 0.0
    %6439 = vmatprep.subr.mxu0 0.0
    %6440 = vmatpush2.msra.mxu0 0.0
    %6441 = vmatprep.subr.mxu0 0.0
    %6442 = vmatpush2.msra.mxu0 0.0
    %6443 = vmatprep.subr.mxu0 0.0
    %6444 = vmatpush2.msra.mxu0 0.0
    %6445 = vmatprep.subr.mxu0 0.0
    %6446 = vmatpush2.msra.mxu0 0.0
    %6447 = vmatprep.subr.mxu0 0.0
    %6448 = vmatpush2.msra.mxu0 0.0
    %6449 = vmatprep.subr.mxu0 0.0
    %6450 = vmatpush2.msra.mxu0 0.0
    %6451 = vmatprep.subr.mxu0 0.0
    %6452 = vmatpush2.msra.mxu0 0.0
    %6453 = vmatprep.subr.mxu0 0.0
    %6454 = vmatpush2.msra.mxu0 0.0
    %6455 = vmatprep.subr.mxu0 0.0
    %6456 = vmatpush2.msra.mxu0 0.0
    %6457 = vmatprep.subr.mxu0 0.0
    %6458 = vmatpush2.msra.mxu0 0.0
    %6459 = vmatprep.mubr.f32.mxu0 0.0
    %v6460 = vand.u32 %v6299, 4294901760
    %6461 = vmatmul.mubr.f32.gmra.mxu0 %v6460
    %v6462 = vpop.f32.mrf.mxu0
    %v6463 = vadd.f32 %v6377, %v6462
    %v6464 = vpop.f32.mrf.mxu0
    %6465 = vmatprep.mubr.f32.mxu0 0.0
    %v6466 = vand.u32 %v6302, 4294901760
    %6467 = vmatmul.mubr.f32.gmra.mxu0 %v6466
    %v6468 = vpop.f32.mrf.mxu0
    %v6469 = vadd.f32 %v6387, %v6468
    %v6470 = vpop.f32.mrf.mxu0
    %6471 = vdwg.mxu0
    %6472 = vmatprep.subr.mxu0 0.0
    %6473 = vmatpush1.msra.mxu0 0.0
    %6474 = vmatprep.subr.mxu0 0.0
    %6475 = vmatpush1.msra.mxu0 0.0
    %6476 = vmatprep.subr.mxu0 0.0
    %6477 = vmatpush1.msra.mxu0 0.0
    %6478 = vmatprep.subr.mxu0 0.0
    %6479 = vmatpush1.msra.mxu0 0.0
    %6480 = vmatprep.subr.mxu0 0.0
    %6481 = vmatpush1.msra.mxu0 0.0
    %6482 = vmatprep.subr.mxu0 0.0
    %6483 = vmatpush1.msra.mxu0 0.0
    %6484 = vmatprep.subr.mxu0 0.0
    %6485 = vmatpush1.msra.mxu0 0.0
    %6486 = vmatprep.subr.mxu0 0.0
    %6487 = vmatpush1.msra.mxu0 0.0
    %6488 = vmatprep.subr.mxu0 0.0
    %6489 = vmatpush1.msra.mxu0 0.0
    %6490 = vmatprep.subr.mxu0 0.0
    %6491 = vmatpush1.msra.mxu0 0.0
    %6492 = vmatprep.subr.mxu0 0.0
    %6493 = vmatpush1.msra.mxu0 0.0
    %6494 = vmatprep.subr.mxu0 0.0
    %6495 = vmatpush1.msra.mxu0 0.0
    %6496 = vmatprep.subr.mxu0 0.0
    %6497 = vmatpush1.msra.mxu0 0.0
    %6498 = vmatprep.subr.mxu0 0.0
    %6499 = vmatpush1.msra.mxu0 0.0
    %6500 = vmatprep.subr.mxu0 0.0
    %6501 = vmatpush1.msra.mxu0 0.0
    %6502 = vmatprep.subr.mxu0 0.0
    %v6503 = vand.u32 %v6297, 4294901760
    %v6504 = vsub.f32 %v6297, %v6503
    %6505 = vmatpush1.msra.mxu0 %v6504
    %6506 = vmatprep.subr.mxu0 0.0
    %6507 = vmatpush2.msra.mxu0 0.0
    %6508 = vmatprep.subr.mxu0 0.0
    %6509 = vmatpush2.msra.mxu0 0.0
    %6510 = vmatprep.subr.mxu0 0.0
    %6511 = vmatpush2.msra.mxu0 0.0
    %6512 = vmatprep.subr.mxu0 0.0
    %6513 = vmatpush2.msra.mxu0 0.0
    %6514 = vmatprep.subr.mxu0 0.0
    %6515 = vmatpush2.msra.mxu0 0.0
    %6516 = vmatprep.subr.mxu0 0.0
    %6517 = vmatpush2.msra.mxu0 0.0
    %6518 = vmatprep.subr.mxu0 0.0
    %6519 = vmatpush2.msra.mxu0 0.0
    %6520 = vmatprep.subr.mxu0 0.0
    %6521 = vmatpush2.msra.mxu0 0.0
    %6522 = vmatprep.subr.mxu0 0.0
    %6523 = vmatpush2.msra.mxu0 0.0
    %6524 = vmatprep.subr.mxu0 0.0
    %6525 = vmatpush2.msra.mxu0 0.0
    %6526 = vmatprep.subr.mxu0 0.0
    %6527 = vmatpush2.msra.mxu0 0.0
    %6528 = vmatprep.subr.mxu0 0.0
    %6529 = vmatpush2.msra.mxu0 0.0
    %6530 = vmatprep.subr.mxu0 0.0
    %6531 = vmatpush2.msra.mxu0 0.0
    %6532 = vmatprep.subr.mxu0 0.0
    %6533 = vmatpush2.msra.mxu0 0.0
    %6534 = vmatprep.subr.mxu0 0.0
    %6535 = vmatpush2.msra.mxu0 0.0
    %6536 = vmatprep.subr.mxu0 0.0
    %6537 = vmatpush2.msra.mxu0 0.0
    %6538 = vmatprep.mubr.f32.mxu0 0.0
    %v6539 = vand.u32 %v6299, 4294901760
    %v6540 = vsub.f32 %v6299, %v6539
    %6541 = vmatmul.mubr.f32.gmra.mxu0 %v6540
    %v6542 = vpop.f32.mrf.mxu0
    %v6543 = vadd.f32 %v6463, %v6542
    %v6544 = vpop.f32.mrf.mxu0
    %6545 = vmatprep.mubr.f32.mxu0 0.0
    %v6546 = vand.u32 %v6302, 4294901760
    %v6547 = vsub.f32 %v6302, %v6546
    %6548 = vmatmul.mubr.f32.gmra.mxu0 %v6547
    %v6549 = vpop.f32.mrf.mxu0
    %v6550 = vadd.f32 %v6469, %v6549
    %v6551 = vpop.f32.mrf.mxu0
    %6552 = vdwg.mxu0
    %6553 = vmatprep.subr.mxu0 0.0
    %6554 = vmatpush1.msra.mxu0 0.0
    %6555 = vmatprep.subr.mxu0 0.0
    %6556 = vmatpush1.msra.mxu0 0.0
    %6557 = vmatprep.subr.mxu0 0.0
    %6558 = vmatpush1.msra.mxu0 0.0
    %6559 = vmatprep.subr.mxu0 0.0
    %6560 = vmatpush1.msra.mxu0 0.0
    %6561 = vmatprep.subr.mxu0 0.0
    %6562 = vmatpush1.msra.mxu0 0.0
    %6563 = vmatprep.subr.mxu0 0.0
    %6564 = vmatpush1.msra.mxu0 0.0
    %6565 = vmatprep.subr.mxu0 0.0
    %6566 = vmatpush1.msra.mxu0 0.0
    %6567 = vmatprep.subr.mxu0 0.0
    %6568 = vmatpush1.msra.mxu0 0.0
    %6569 = vmatprep.subr.mxu0 0.0
    %6570 = vmatpush1.msra.mxu0 0.0
    %6571 = vmatprep.subr.mxu0 0.0
    %6572 = vmatpush1.msra.mxu0 0.0
    %6573 = vmatprep.subr.mxu0 0.0
    %6574 = vmatpush1.msra.mxu0 0.0
    %6575 = vmatprep.subr.mxu0 0.0
    %6576 = vmatpush1.msra.mxu0 0.0
    %6577 = vmatprep.subr.mxu0 0.0
    %6578 = vmatpush1.msra.mxu0 0.0
    %6579 = vmatprep.subr.mxu0 0.0
    %6580 = vmatpush1.msra.mxu0 0.0
    %6581 = vmatprep.subr.mxu0 0.0
    %6582 = vmatpush1.msra.mxu0 0.0
    %6583 = vmatprep.subr.mxu0 0.0
    %v6584 = vand.u32 %v6297, 4294901760
    %6585 = vmatpush1.msra.mxu0 %v6584
    %6586 = vmatprep.subr.mxu0 0.0
    %6587 = vmatpush2.msra.mxu0 0.0
    %6588 = vmatprep.subr.mxu0 0.0
    %6589 = vmatpush2.msra.mxu0 0.0
    %6590 = vmatprep.subr.mxu0 0.0
    %6591 = vmatpush2.msra.mxu0 0.0
    %6592 = vmatprep.subr.mxu0 0.0
    %6593 = vmatpush2.msra.mxu0 0.0
    %6594 = vmatprep.subr.mxu0 0.0
    %6595 = vmatpush2.msra.mxu0 0.0
    %6596 = vmatprep.subr.mxu0 0.0
    %6597 = vmatpush2.msra.mxu0 0.0
    %6598 = vmatprep.subr.mxu0 0.0
    %6599 = vmatpush2.msra.mxu0 0.0
    %6600 = vmatprep.subr.mxu0 0.0
    %6601 = vmatpush2.msra.mxu0 0.0
    %6602 = vmatprep.subr.mxu0 0.0
    %6603 = vmatpush2.msra.mxu0 0.0
    %6604 = vmatprep.subr.mxu0 0.0
    %6605 = vmatpush2.msra.mxu0 0.0
    %6606 = vmatprep.subr.mxu0 0.0
    %6607 = vmatpush2.msra.mxu0 0.0
    %6608 = vmatprep.subr.mxu0 0.0
    %6609 = vmatpush2.msra.mxu0 0.0
    %6610 = vmatprep.subr.mxu0 0.0
    %6611 = vmatpush2.msra.mxu0 0.0
    %6612 = vmatprep.subr.mxu0 0.0
    %6613 = vmatpush2.msra.mxu0 0.0
    %6614 = vmatprep.subr.mxu0 0.0
    %6615 = vmatpush2.msra.mxu0 0.0
    %6616 = vmatprep.subr.mxu0 0.0
    %6617 = vmatpush2.msra.mxu0 0.0
    %6618 = vmatprep.mubr.f32.mxu0 0.0
    %v6619 = vand.u32 %v6299, 4294901760
    %v6620 = vsub.f32 %v6299, %v6619
    %v6621 = vand.u32 %v6620, 4294901760
    %6622 = vmatmul.mubr.f32.gmra.mxu0 %v6621
    %v6623 = vpop.f32.mrf.mxu0
    %v6624 = vadd.f32 %v6543, %v6623
    %v6625 = vpop.f32.mrf.mxu0
    %6626 = vmatprep.mubr.f32.mxu0 0.0
    %v6627 = vand.u32 %v6302, 4294901760
    %v6628 = vsub.f32 %v6302, %v6627
    %v6629 = vand.u32 %v6628, 4294901760
    %6630 = vmatmul.mubr.f32.gmra.mxu0 %v6629
    %v6631 = vpop.f32.mrf.mxu0
    %v6632 = vadd.f32 %v6550, %v6631
    %v6633 = vpop.f32.mrf.mxu0
    %6634 = vdwg.mxu0
    %6635 = vmatprep.subr.mxu0 0.0
    %6636 = vmatpush1.msra.mxu0 0.0
    %6637 = vmatprep.subr.mxu0 0.0
    %6638 = vmatpush1.msra.mxu0 0.0
    %6639 = vmatprep.subr.mxu0 0.0
    %6640 = vmatpush1.msra.mxu0 0.0
    %6641 = vmatprep.subr.mxu0 0.0
    %6642 = vmatpush1.msra.mxu0 0.0
    %6643 = vmatprep.subr.mxu0 0.0
    %6644 = vmatpush1.msra.mxu0 0.0
    %6645 = vmatprep.subr.mxu0 0.0
    %6646 = vmatpush1.msra.mxu0 0.0
    %6647 = vmatprep.subr.mxu0 0.0
    %6648 = vmatpush1.msra.mxu0 0.0
    %6649 = vmatprep.subr.mxu0 0.0
    %6650 = vmatpush1.msra.mxu0 0.0
    %6651 = vmatprep.subr.mxu0 0.0
    %6652 = vmatpush1.msra.mxu0 0.0
    %6653 = vmatprep.subr.mxu0 0.0
    %6654 = vmatpush1.msra.mxu0 0.0
    %6655 = vmatprep.subr.mxu0 0.0
    %6656 = vmatpush1.msra.mxu0 0.0
    %6657 = vmatprep.subr.mxu0 0.0
    %6658 = vmatpush1.msra.mxu0 0.0
    %6659 = vmatprep.subr.mxu0 0.0
    %6660 = vmatpush1.msra.mxu0 0.0
    %6661 = vmatprep.subr.mxu0 0.0
    %6662 = vmatpush1.msra.mxu0 0.0
    %6663 = vmatprep.subr.mxu0 0.0
    %6664 = vmatpush1.msra.mxu0 0.0
    %6665 = vmatprep.subr.mxu0 0.0
    %v6666 = vand.u32 %v6297, 4294901760
    %v6667 = vsub.f32 %v6297, %v6666
    %v6668 = vand.u32 %v6667, 4294901760
    %6669 = vmatpush1.msra.mxu0 %v6668
    %6670 = vmatprep.subr.mxu0 0.0
    %6671 = vmatpush2.msra.mxu0 0.0
    %6672 = vmatprep.subr.mxu0 0.0
    %6673 = vmatpush2.msra.mxu0 0.0
    %6674 = vmatprep.subr.mxu0 0.0
    %6675 = vmatpush2.msra.mxu0 0.0
    %6676 = vmatprep.subr.mxu0 0.0
    %6677 = vmatpush2.msra.mxu0 0.0
    %6678 = vmatprep.subr.mxu0 0.0
    %6679 = vmatpush2.msra.mxu0 0.0
    %6680 = vmatprep.subr.mxu0 0.0
    %6681 = vmatpush2.msra.mxu0 0.0
    %6682 = vmatprep.subr.mxu0 0.0
    %6683 = vmatpush2.msra.mxu0 0.0
    %6684 = vmatprep.subr.mxu0 0.0
    %6685 = vmatpush2.msra.mxu0 0.0
    %6686 = vmatprep.subr.mxu0 0.0
    %6687 = vmatpush2.msra.mxu0 0.0
    %6688 = vmatprep.subr.mxu0 0.0
    %6689 = vmatpush2.msra.mxu0 0.0
    %6690 = vmatprep.subr.mxu0 0.0
    %6691 = vmatpush2.msra.mxu0 0.0
    %6692 = vmatprep.subr.mxu0 0.0
    %6693 = vmatpush2.msra.mxu0 0.0
    %6694 = vmatprep.subr.mxu0 0.0
    %6695 = vmatpush2.msra.mxu0 0.0
    %6696 = vmatprep.subr.mxu0 0.0
    %6697 = vmatpush2.msra.mxu0 0.0
    %6698 = vmatprep.subr.mxu0 0.0
    %6699 = vmatpush2.msra.mxu0 0.0
    %6700 = vmatprep.subr.mxu0 0.0
    %6701 = vmatpush2.msra.mxu0 0.0
    %6702 = vmatprep.mubr.f32.mxu0 0.0
    %v6703 = vand.u32 %v6299, 4294901760
    %6704 = vmatmul.mubr.f32.gmra.mxu0 %v6703
    %v6705 = vpop.f32.mrf.mxu0
    %v6706 = vadd.f32 %v6624, %v6705
    %v6707 = vpop.f32.mrf.mxu0
    %6708 = vmatprep.mubr.f32.mxu0 0.0
    %v6709 = vand.u32 %v6302, 4294901760
    %6710 = vmatmul.mubr.f32.gmra.mxu0 %v6709
    %v6711 = vpop.f32.mrf.mxu0
    %v6712 = vadd.f32 %v6632, %v6711
    %v6713 = vpop.f32.mrf.mxu0
    %6714 = vdwg.mxu0
    %6715 = vmatprep.subr.mxu0 0.0
    %6716 = vmatpush1.msra.mxu0 0.0
    %6717 = vmatprep.subr.mxu0 0.0
    %6718 = vmatpush1.msra.mxu0 0.0
    %6719 = vmatprep.subr.mxu0 0.0
    %6720 = vmatpush1.msra.mxu0 0.0
    %6721 = vmatprep.subr.mxu0 0.0
    %6722 = vmatpush1.msra.mxu0 0.0
    %6723 = vmatprep.subr.mxu0 0.0
    %6724 = vmatpush1.msra.mxu0 0.0
    %6725 = vmatprep.subr.mxu0 0.0
    %6726 = vmatpush1.msra.mxu0 0.0
    %6727 = vmatprep.subr.mxu0 0.0
    %6728 = vmatpush1.msra.mxu0 0.0
    %6729 = vmatprep.subr.mxu0 0.0
    %6730 = vmatpush1.msra.mxu0 0.0
    %6731 = vmatprep.subr.mxu0 0.0
    %6732 = vmatpush1.msra.mxu0 0.0
    %6733 = vmatprep.subr.mxu0 0.0
    %6734 = vmatpush1.msra.mxu0 0.0
    %6735 = vmatprep.subr.mxu0 0.0
    %6736 = vmatpush1.msra.mxu0 0.0
    %6737 = vmatprep.subr.mxu0 0.0
    %6738 = vmatpush1.msra.mxu0 0.0
    %6739 = vmatprep.subr.mxu0 0.0
    %6740 = vmatpush1.msra.mxu0 0.0
    %6741 = vmatprep.subr.mxu0 0.0
    %6742 = vmatpush1.msra.mxu0 0.0
    %6743 = vmatprep.subr.mxu0 0.0
    %6744 = vmatpush1.msra.mxu0 0.0
    %6745 = vmatprep.subr.mxu0 0.0
    %v6746 = vand.u32 %v6297, 4294901760
    %6747 = vmatpush1.msra.mxu0 %v6746
    %6748 = vmatprep.subr.mxu0 0.0
    %6749 = vmatpush2.msra.mxu0 0.0
    %6750 = vmatprep.subr.mxu0 0.0
    %6751 = vmatpush2.msra.mxu0 0.0
    %6752 = vmatprep.subr.mxu0 0.0
    %6753 = vmatpush2.msra.mxu0 0.0
    %6754 = vmatprep.subr.mxu0 0.0
    %6755 = vmatpush2.msra.mxu0 0.0
    %6756 = vmatprep.subr.mxu0 0.0
    %6757 = vmatpush2.msra.mxu0 0.0
    %6758 = vmatprep.subr.mxu0 0.0
    %6759 = vmatpush2.msra.mxu0 0.0
    %6760 = vmatprep.subr.mxu0 0.0
    %6761 = vmatpush2.msra.mxu0 0.0
    %6762 = vmatprep.subr.mxu0 0.0
    %6763 = vmatpush2.msra.mxu0 0.0
    %6764 = vmatprep.subr.mxu0 0.0
    %6765 = vmatpush2.msra.mxu0 0.0
    %6766 = vmatprep.subr.mxu0 0.0
    %6767 = vmatpush2.msra.mxu0 0.0
    %6768 = vmatprep.subr.mxu0 0.0
    %6769 = vmatpush2.msra.mxu0 0.0
    %6770 = vmatprep.subr.mxu0 0.0
    %6771 = vmatpush2.msra.mxu0 0.0
    %6772 = vmatprep.subr.mxu0 0.0
    %6773 = vmatpush2.msra.mxu0 0.0
    %6774 = vmatprep.subr.mxu0 0.0
    %6775 = vmatpush2.msra.mxu0 0.0
    %6776 = vmatprep.subr.mxu0 0.0
    %6777 = vmatpush2.msra.mxu0 0.0
    %6778 = vmatprep.subr.mxu0 0.0
    %6779 = vmatpush2.msra.mxu0 0.0
    %6780 = vmatprep.mubr.f32.mxu0 0.0
    %v6781 = vand.u32 %v6299, 4294901760
    %6782 = vmatmul.mubr.f32.gmra.mxu0 %v6781
    %v6783 = vpop.f32.mrf.mxu0
    %v6784 = vadd.f32 %v6706, %v6783
    %v6785 = vpop.f32.mrf.mxu0
    %6786 = vmatprep.mubr.f32.mxu0 0.0
    %v6787 = vand.u32 %v6302, 4294901760
    %6788 = vmatmul.mubr.f32.gmra.mxu0 %v6787
    %v6789 = vpop.f32.mrf.mxu0
    %v6790 = vadd.f32 %v6712, %v6789
    %v6791 = vpop.f32.mrf.mxu0
    %6792 = vdwg.mxu0
    %v6793 = vadd.f32 %v6292, %v6784
    %v6794 = vadd.f32 %v6293, %v6790
    %s6795 = sld [smem:[#allocation5]]
    %v6796 = vstv %s6795
    %v6797 = vadd.f32 %v6793, %v6796
    %v6798 = vadd.f32 %v6794, %v6796
    %v6799 = vmax.f32 %v6797, 0.0
    %v6800 = vmax.f32 %v6798, 0.0
    %v6802 = vsel %vm4292, %v6799, 0
    %v6805 = vsel %vm4292, %v6800, 0
    %6807 = vmatprep.subr.mxu0 0.0
    %6808 = vmatpush1.msra.mxu0 0.0
    %6809 = vmatprep.subr.mxu0 0.0
    %6810 = vmatpush1.msra.mxu0 0.0
    %6811 = vmatprep.subr.mxu0 0.0
    %6812 = vmatpush1.msra.mxu0 0.0
    %6813 = vmatprep.subr.mxu0 0.0
    %6814 = vmatpush1.msra.mxu0 0.0
    %6815 = vmatprep.subr.mxu0 0.0
    %6816 = vmatpush1.msra.mxu0 0.0
    %6817 = vmatprep.subr.mxu0 0.0
    %6818 = vmatpush1.msra.mxu0 0.0
    %6819 = vmatprep.subr.mxu0 0.0
    %6820 = vmatpush1.msra.mxu0 0.0
    %6821 = vmatprep.subr.mxu0 0.0
    %6822 = vmatpush1.msra.mxu0 0.0
    %6823 = vmatprep.subr.mxu0 0.0
    %6824 = vmatpush1.msra.mxu0 0.0
    %6825 = vmatprep.subr.mxu0 0.0
    %6826 = vmatpush1.msra.mxu0 0.0
    %6827 = vmatprep.subr.mxu0 0.0
    %6828 = vmatpush1.msra.mxu0 0.0
    %6829 = vmatprep.subr.mxu0 0.0
    %6830 = vmatpush1.msra.mxu0 0.0
    %6831 = vmatprep.subr.mxu0 0.0
    %6832 = vmatpush1.msra.mxu0 0.0
    %6833 = vmatprep.subr.mxu0 0.0
    %6834 = vmatpush1.msra.mxu0 0.0
    %6835 = vmatprep.subr.mxu0 0.0
    %6836 = vmatpush1.msra.mxu0 0.0
    %6837 = vmatprep.subr.mxu0 0.0
    %v6838 = vand.u32 %v4285, 4294901760
    %6839 = vmatpush1.msra.mxu0 %v6838
    %6840 = vmatprep.subr.mxu0 0.0
    %6841 = vmatpush2.msra.mxu0 0.0
    %6842 = vmatprep.subr.mxu0 0.0
    %6843 = vmatpush2.msra.mxu0 0.0
    %6844 = vmatprep.subr.mxu0 0.0
    %6845 = vmatpush2.msra.mxu0 0.0
    %6846 = vmatprep.subr.mxu0 0.0
    %6847 = vmatpush2.msra.mxu0 0.0
    %6848 = vmatprep.subr.mxu0 0.0
    %6849 = vmatpush2.msra.mxu0 0.0
    %6850 = vmatprep.subr.mxu0 0.0
    %6851 = vmatpush2.msra.mxu0 0.0
    %6852 = vmatprep.subr.mxu0 0.0
    %6853 = vmatpush2.msra.mxu0 0.0
    %6854 = vmatprep.subr.mxu0 0.0
    %6855 = vmatpush2.msra.mxu0 0.0
    %6856 = vmatprep.subr.mxu0 0.0
    %6857 = vmatpush2.msra.mxu0 0.0
    %6858 = vmatprep.subr.mxu0 0.0
    %6859 = vmatpush2.msra.mxu0 0.0
    %6860 = vmatprep.subr.mxu0 0.0
    %6861 = vmatpush2.msra.mxu0 0.0
    %6862 = vmatprep.subr.mxu0 0.0
    %6863 = vmatpush2.msra.mxu0 0.0
    %6864 = vmatprep.subr.mxu0 0.0
    %6865 = vmatpush2.msra.mxu0 0.0
    %6866 = vmatprep.subr.mxu0 0.0
    %6867 = vmatpush2.msra.mxu0 0.0
    %6868 = vmatprep.subr.mxu0 0.0
    %6869 = vmatpush2.msra.mxu0 0.0
    %6870 = vmatprep.subr.mxu0 0.0
    %6871 = vmatpush2.msra.mxu0 0.0
    %6872 = vmatprep.mubr.f32.mxu0 0.0
    %v6873 = vand.u32 %v6802, 4294901760
    %v6874 = vsub.f32 %v6802, %v6873
    %v6875 = vand.u32 %v6874, 4294901760
    %v6876 = vsub.f32 %v6874, %v6875
    %v6877 = vand.u32 %v6876, 4294901760
    %6878 = vmatmul.mubr.f32.gmra.mxu0 %v6877
    %v6879 = vpop.f32.mrf.mxu0
    %v6880 = vadd.f32 0.0, %v6879
    %v6881 = vpop.f32.mrf.mxu0
    %6882 = vmatprep.mubr.f32.mxu0 0.0
    %v6883 = vand.u32 %v6805, 4294901760
    %v6884 = vsub.f32 %v6805, %v6883
    %v6885 = vand.u32 %v6884, 4294901760
    %v6886 = vsub.f32 %v6884, %v6885
    %v6887 = vand.u32 %v6886, 4294901760
    %6888 = vmatmul.mubr.f32.gmra.mxu0 %v6887
    %v6889 = vpop.f32.mrf.mxu0
    %v6890 = vadd.f32 0.0, %v6889
    %v6891 = vpop.f32.mrf.mxu0
    %6892 = vdwg.mxu0
    %6893 = vmatprep.subr.mxu0 0.0
    %6894 = vmatpush1.msra.mxu0 0.0
    %6895 = vmatprep.subr.mxu0 0.0
    %6896 = vmatpush1.msra.mxu0 0.0
    %6897 = vmatprep.subr.mxu0 0.0
    %6898 = vmatpush1.msra.mxu0 0.0
    %6899 = vmatprep.subr.mxu0 0.0
    %6900 = vmatpush1.msra.mxu0 0.0
    %6901 = vmatprep.subr.mxu0 0.0
    %6902 = vmatpush1.msra.mxu0 0.0
    %6903 = vmatprep.subr.mxu0 0.0
    %6904 = vmatpush1.msra.mxu0 0.0
    %6905 = vmatprep.subr.mxu0 0.0
    %6906 = vmatpush1.msra.mxu0 0.0
    %6907 = vmatprep.subr.mxu0 0.0
    %6908 = vmatpush1.msra.mxu0 0.0
    %6909 = vmatprep.subr.mxu0 0.0
    %6910 = vmatpush1.msra.mxu0 0.0
    %6911 = vmatprep.subr.mxu0 0.0
    %6912 = vmatpush1.msra.mxu0 0.0
    %6913 = vmatprep.subr.mxu0 0.0
    %6914 = vmatpush1.msra.mxu0 0.0
    %6915 = vmatprep.subr.mxu0 0.0
    %6916 = vmatpush1.msra.mxu0 0.0
    %6917 = vmatprep.subr.mxu0 0.0
    %6918 = vmatpush1.msra.mxu0 0.0
    %6919 = vmatprep.subr.mxu0 0.0
    %6920 = vmatpush1.msra.mxu0 0.0
    %6921 = vmatprep.subr.mxu0 0.0
    %6922 = vmatpush1.msra.mxu0 0.0
    %6923 = vmatprep.subr.mxu0 0.0
    %v6924 = vand.u32 %v4285, 4294901760
    %v6925 = vsub.f32 %v4285, %v6924
    %v6926 = vand.u32 %v6925, 4294901760
    %v6927 = vsub.f32 %v6925, %v6926
    %v6928 = vand.u32 %v6927, 4294901760
    %6929 = vmatpush1.msra.mxu0 %v6928
    %6930 = vmatprep.subr.mxu0 0.0
    %6931 = vmatpush2.msra.mxu0 0.0
    %6932 = vmatprep.subr.mxu0 0.0
    %6933 = vmatpush2.msra.mxu0 0.0
    %6934 = vmatprep.subr.mxu0 0.0
    %6935 = vmatpush2.msra.mxu0 0.0
    %6936 = vmatprep.subr.mxu0 0.0
    %6937 = vmatpush2.msra.mxu0 0.0
    %6938 = vmatprep.subr.mxu0 0.0
    %6939 = vmatpush2.msra.mxu0 0.0
    %6940 = vmatprep.subr.mxu0 0.0
    %6941 = vmatpush2.msra.mxu0 0.0
    %6942 = vmatprep.subr.mxu0 0.0
    %6943 = vmatpush2.msra.mxu0 0.0
    %6944 = vmatprep.subr.mxu0 0.0
    %6945 = vmatpush2.msra.mxu0 0.0
    %6946 = vmatprep.subr.mxu0 0.0
    %6947 = vmatpush2.msra.mxu0 0.0
    %6948 = vmatprep.subr.mxu0 0.0
    %6949 = vmatpush2.msra.mxu0 0.0
    %6950 = vmatprep.subr.mxu0 0.0
    %6951 = vmatpush2.msra.mxu0 0.0
    %6952 = vmatprep.subr.mxu0 0.0
    %6953 = vmatpush2.msra.mxu0 0.0
    %6954 = vmatprep.subr.mxu0 0.0
    %6955 = vmatpush2.msra.mxu0 0.0
    %6956 = vmatprep.subr.mxu0 0.0
    %6957 = vmatpush2.msra.mxu0 0.0
    %6958 = vmatprep.subr.mxu0 0.0
    %6959 = vmatpush2.msra.mxu0 0.0
    %6960 = vmatprep.subr.mxu0 0.0
    %6961 = vmatpush2.msra.mxu0 0.0
    %6962 = vmatprep.mubr.f32.mxu0 0.0
    %v6963 = vand.u32 %v6802, 4294901760
    %6964 = vmatmul.mubr.f32.gmra.mxu0 %v6963
    %v6965 = vpop.f32.mrf.mxu0
    %v6966 = vadd.f32 %v6880, %v6965
    %v6967 = vpop.f32.mrf.mxu0
    %6968 = vmatprep.mubr.f32.mxu0 0.0
    %v6969 = vand.u32 %v6805, 4294901760
    %6970 = vmatmul.mubr.f32.gmra.mxu0 %v6969
    %v6971 = vpop.f32.mrf.mxu0
    %v6972 = vadd.f32 %v6890, %v6971
    %v6973 = vpop.f32.mrf.mxu0
    %6974 = vdwg.mxu0
    %6975 = vmatprep.subr.mxu0 0.0
    %6976 = vmatpush1.msra.mxu0 0.0
    %6977 = vmatprep.subr.mxu0 0.0
    %6978 = vmatpush1.msra.mxu0 0.0
    %6979 = vmatprep.subr.mxu0 0.0
    %6980 = vmatpush1.msra.mxu0 0.0
    %6981 = vmatprep.subr.mxu0 0.0
    %6982 = vmatpush1.msra.mxu0 0.0
    %6983 = vmatprep.subr.mxu0 0.0
    %6984 = vmatpush1.msra.mxu0 0.0
    %6985 = vmatprep.subr.mxu0 0.0
    %6986 = vmatpush1.msra.mxu0 0.0
    %6987 = vmatprep.subr.mxu0 0.0
    %6988 = vmatpush1.msra.mxu0 0.0
    %6989 = vmatprep.subr.mxu0 0.0
    %6990 = vmatpush1.msra.mxu0 0.0
    %6991 = vmatprep.subr.mxu0 0.0
    %6992 = vmatpush1.msra.mxu0 0.0
    %6993 = vmatprep.subr.mxu0 0.0
    %6994 = vmatpush1.msra.mxu0 0.0
    %6995 = vmatprep.subr.mxu0 0.0
    %6996 = vmatpush1.msra.mxu0 0.0
    %6997 = vmatprep.subr.mxu0 0.0
    %6998 = vmatpush1.msra.mxu0 0.0
    %6999 = vmatprep.subr.mxu0 0.0
    %7000 = vmatpush1.msra.mxu0 0.0
    %7001 = vmatprep.subr.mxu0 0.0
    %7002 = vmatpush1.msra.mxu0 0.0
    %7003 = vmatprep.subr.mxu0 0.0
    %7004 = vmatpush1.msra.mxu0 0.0
    %7005 = vmatprep.subr.mxu0 0.0
    %v7006 = vand.u32 %v4285, 4294901760
    %v7007 = vsub.f32 %v4285, %v7006
    %7008 = vmatpush1.msra.mxu0 %v7007
    %7009 = vmatprep.subr.mxu0 0.0
    %7010 = vmatpush2.msra.mxu0 0.0
    %7011 = vmatprep.subr.mxu0 0.0
    %7012 = vmatpush2.msra.mxu0 0.0
    %7013 = vmatprep.subr.mxu0 0.0
    %7014 = vmatpush2.msra.mxu0 0.0
    %7015 = vmatprep.subr.mxu0 0.0
    %7016 = vmatpush2.msra.mxu0 0.0
    %7017 = vmatprep.subr.mxu0 0.0
    %7018 = vmatpush2.msra.mxu0 0.0
    %7019 = vmatprep.subr.mxu0 0.0
    %7020 = vmatpush2.msra.mxu0 0.0
    %7021 = vmatprep.subr.mxu0 0.0
    %7022 = vmatpush2.msra.mxu0 0.0
    %7023 = vmatprep.subr.mxu0 0.0
    %7024 = vmatpush2.msra.mxu0 0.0
    %7025 = vmatprep.subr.mxu0 0.0
    %7026 = vmatpush2.msra.mxu0 0.0
    %7027 = vmatprep.subr.mxu0 0.0
    %7028 = vmatpush2.msra.mxu0 0.0
    %7029 = vmatprep.subr.mxu0 0.0
    %7030 = vmatpush2.msra.mxu0 0.0
    %7031 = vmatprep.subr.mxu0 0.0
    %7032 = vmatpush2.msra.mxu0 0.0
    %7033 = vmatprep.subr.mxu0 0.0
    %7034 = vmatpush2.msra.mxu0 0.0
    %7035 = vmatprep.subr.mxu0 0.0
    %7036 = vmatpush2.msra.mxu0 0.0
    %7037 = vmatprep.subr.mxu0 0.0
    %7038 = vmatpush2.msra.mxu0 0.0
    %7039 = vmatprep.subr.mxu0 0.0
    %7040 = vmatpush2.msra.mxu0 0.0
    %7041 = vmatprep.mubr.f32.mxu0 0.0
    %v7042 = vand.u32 %v6802, 4294901760
    %v7043 = vsub.f32 %v6802, %v7042
    %7044 = vmatmul.mubr.f32.gmra.mxu0 %v7043
    %v7045 = vpop.f32.mrf.mxu0
    %v7046 = vadd.f32 %v6966, %v7045
    %v7047 = vpop.f32.mrf.mxu0
    %7048 = vmatprep.mubr.f32.mxu0 0.0
    %v7049 = vand.u32 %v6805, 4294901760
    %v7050 = vsub.f32 %v6805, %v7049
    %7051 = vmatmul.mubr.f32.gmra.mxu0 %v7050
    %v7052 = vpop.f32.mrf.mxu0
    %v7053 = vadd.f32 %v6972, %v7052
    %v7054 = vpop.f32.mrf.mxu0
    %7055 = vdwg.mxu0
    %7056 = vmatprep.subr.mxu0 0.0
    %7057 = vmatpush1.msra.mxu0 0.0
    %7058 = vmatprep.subr.mxu0 0.0
    %7059 = vmatpush1.msra.mxu0 0.0
    %7060 = vmatprep.subr.mxu0 0.0
    %7061 = vmatpush1.msra.mxu0 0.0
    %7062 = vmatprep.subr.mxu0 0.0
    %7063 = vmatpush1.msra.mxu0 0.0
    %7064 = vmatprep.subr.mxu0 0.0
    %7065 = vmatpush1.msra.mxu0 0.0
    %7066 = vmatprep.subr.mxu0 0.0
    %7067 = vmatpush1.msra.mxu0 0.0
    %7068 = vmatprep.subr.mxu0 0.0
    %7069 = vmatpush1.msra.mxu0 0.0
    %7070 = vmatprep.subr.mxu0 0.0
    %7071 = vmatpush1.msra.mxu0 0.0
    %7072 = vmatprep.subr.mxu0 0.0
    %7073 = vmatpush1.msra.mxu0 0.0
    %7074 = vmatprep.subr.mxu0 0.0
    %7075 = vmatpush1.msra.mxu0 0.0
    %7076 = vmatprep.subr.mxu0 0.0
    %7077 = vmatpush1.msra.mxu0 0.0
    %7078 = vmatprep.subr.mxu0 0.0
    %7079 = vmatpush1.msra.mxu0 0.0
    %7080 = vmatprep.subr.mxu0 0.0
    %7081 = vmatpush1.msra.mxu0 0.0
    %7082 = vmatprep.subr.mxu0 0.0
    %7083 = vmatpush1.msra.mxu0 0.0
    %7084 = vmatprep.subr.mxu0 0.0
    %7085 = vmatpush1.msra.mxu0 0.0
    %7086 = vmatprep.subr.mxu0 0.0
    %v7087 = vand.u32 %v4285, 4294901760
    %7088 = vmatpush1.msra.mxu0 %v7087
    %7089 = vmatprep.subr.mxu0 0.0
    %7090 = vmatpush2.msra.mxu0 0.0
    %7091 = vmatprep.subr.mxu0 0.0
    %7092 = vmatpush2.msra.mxu0 0.0
    %7093 = vmatprep.subr.mxu0 0.0
    %7094 = vmatpush2.msra.mxu0 0.0
    %7095 = vmatprep.subr.mxu0 0.0
    %7096 = vmatpush2.msra.mxu0 0.0
    %7097 = vmatprep.subr.mxu0 0.0
    %7098 = vmatpush2.msra.mxu0 0.0
    %7099 = vmatprep.subr.mxu0 0.0
    %7100 = vmatpush2.msra.mxu0 0.0
    %7101 = vmatprep.subr.mxu0 0.0
    %7102 = vmatpush2.msra.mxu0 0.0
    %7103 = vmatprep.subr.mxu0 0.0
    %7104 = vmatpush2.msra.mxu0 0.0
    %7105 = vmatprep.subr.mxu0 0.0
    %7106 = vmatpush2.msra.mxu0 0.0
    %7107 = vmatprep.subr.mxu0 0.0
    %7108 = vmatpush2.msra.mxu0 0.0
    %7109 = vmatprep.subr.mxu0 0.0
    %7110 = vmatpush2.msra.mxu0 0.0
    %7111 = vmatprep.subr.mxu0 0.0
    %7112 = vmatpush2.msra.mxu0 0.0
    %7113 = vmatprep.subr.mxu0 0.0
    %7114 = vmatpush2.msra.mxu0 0.0
    %7115 = vmatprep.subr.mxu0 0.0
    %7116 = vmatpush2.msra.mxu0 0.0
    %7117 = vmatprep.subr.mxu0 0.0
    %7118 = vmatpush2.msra.mxu0 0.0
    %7119 = vmatprep.subr.mxu0 0.0
    %7120 = vmatpush2.msra.mxu0 0.0
    %7121 = vmatprep.mubr.f32.mxu0 0.0
    %v7122 = vand.u32 %v6802, 4294901760
    %v7123 = vsub.f32 %v6802, %v7122
    %v7124 = vand.u32 %v7123, 4294901760
    %7125 = vmatmul.mubr.f32.gmra.mxu0 %v7124
    %v7126 = vpop.f32.mrf.mxu0
    %v7127 = vadd.f32 %v7046, %v7126
    %v7128 = vpop.f32.mrf.mxu0
    %7129 = vmatprep.mubr.f32.mxu0 0.0
    %v7130 = vand.u32 %v6805, 4294901760
    %v7131 = vsub.f32 %v6805, %v7130
    %v7132 = vand.u32 %v7131, 4294901760
    %7133 = vmatmul.mubr.f32.gmra.mxu0 %v7132
    %v7134 = vpop.f32.mrf.mxu0
    %v7135 = vadd.f32 %v7053, %v7134
    %v7136 = vpop.f32.mrf.mxu0
    %7137 = vdwg.mxu0
    %7138 = vmatprep.subr.mxu0 0.0
    %7139 = vmatpush1.msra.mxu0 0.0
    %7140 = vmatprep.subr.mxu0 0.0
    %7141 = vmatpush1.msra.mxu0 0.0
    %7142 = vmatprep.subr.mxu0 0.0
    %7143 = vmatpush1.msra.mxu0 0.0
    %7144 = vmatprep.subr.mxu0 0.0
    %7145 = vmatpush1.msra.mxu0 0.0
    %7146 = vmatprep.subr.mxu0 0.0
    %7147 = vmatpush1.msra.mxu0 0.0
    %7148 = vmatprep.subr.mxu0 0.0
    %7149 = vmatpush1.msra.mxu0 0.0
    %7150 = vmatprep.subr.mxu0 0.0
    %7151 = vmatpush1.msra.mxu0 0.0
    %7152 = vmatprep.subr.mxu0 0.0
    %7153 = vmatpush1.msra.mxu0 0.0
    %7154 = vmatprep.subr.mxu0 0.0
    %7155 = vmatpush1.msra.mxu0 0.0
    %7156 = vmatprep.subr.mxu0 0.0
    %7157 = vmatpush1.msra.mxu0 0.0
    %7158 = vmatprep.subr.mxu0 0.0
    %7159 = vmatpush1.msra.mxu0 0.0
    %7160 = vmatprep.subr.mxu0 0.0
    %7161 = vmatpush1.msra.mxu0 0.0
    %7162 = vmatprep.subr.mxu0 0.0
    %7163 = vmatpush1.msra.mxu0 0.0
    %7164 = vmatprep.subr.mxu0 0.0
    %7165 = vmatpush1.msra.mxu0 0.0
    %7166 = vmatprep.subr.mxu0 0.0
    %7167 = vmatpush1.msra.mxu0 0.0
    %7168 = vmatprep.subr.mxu0 0.0
    %v7169 = vand.u32 %v4285, 4294901760
    %v7170 = vsub.f32 %v4285, %v7169
    %v7171 = vand.u32 %v7170, 4294901760
    %7172 = vmatpush1.msra.mxu0 %v7171
    %7173 = vmatprep.subr.mxu0 0.0
    %7174 = vmatpush2.msra.mxu0 0.0
    %7175 = vmatprep.subr.mxu0 0.0
    %7176 = vmatpush2.msra.mxu0 0.0
    %7177 = vmatprep.subr.mxu0 0.0
    %7178 = vmatpush2.msra.mxu0 0.0
    %7179 = vmatprep.subr.mxu0 0.0
    %7180 = vmatpush2.msra.mxu0 0.0
    %7181 = vmatprep.subr.mxu0 0.0
    %7182 = vmatpush2.msra.mxu0 0.0
    %7183 = vmatprep.subr.mxu0 0.0
    %7184 = vmatpush2.msra.mxu0 0.0
    %7185 = vmatprep.subr.mxu0 0.0
    %7186 = vmatpush2.msra.mxu0 0.0
    %7187 = vmatprep.subr.mxu0 0.0
    %7188 = vmatpush2.msra.mxu0 0.0
    %7189 = vmatprep.subr.mxu0 0.0
    %7190 = vmatpush2.msra.mxu0 0.0
    %7191 = vmatprep.subr.mxu0 0.0
    %7192 = vmatpush2.msra.mxu0 0.0
    %7193 = vmatprep.subr.mxu0 0.0
    %7194 = vmatpush2.msra.mxu0 0.0
    %7195 = vmatprep.subr.mxu0 0.0
    %7196 = vmatpush2.msra.mxu0 0.0
    %7197 = vmatprep.subr.mxu0 0.0
    %7198 = vmatpush2.msra.mxu0 0.0
    %7199 = vmatprep.subr.mxu0 0.0
    %7200 = vmatpush2.msra.mxu0 0.0
    %7201 = vmatprep.subr.mxu0 0.0
    %7202 = vmatpush2.msra.mxu0 0.0
    %7203 = vmatprep.subr.mxu0 0.0
    %7204 = vmatpush2.msra.mxu0 0.0
    %7205 = vmatprep.mubr.f32.mxu0 0.0
    %v7206 = vand.u32 %v6802, 4294901760
    %7207 = vmatmul.mubr.f32.gmra.mxu0 %v7206
    %v7208 = vpop.f32.mrf.mxu0
    %v7209 = vadd.f32 %v7127, %v7208
    %v7210 = vpop.f32.mrf.mxu0
    %7211 = vmatprep.mubr.f32.mxu0 0.0
    %v7212 = vand.u32 %v6805, 4294901760
    %7213 = vmatmul.mubr.f32.gmra.mxu0 %v7212
    %v7214 = vpop.f32.mrf.mxu0
    %v7215 = vadd.f32 %v7135, %v7214
    %v7216 = vpop.f32.mrf.mxu0
    %7217 = vdwg.mxu0
    %7218 = vmatprep.subr.mxu0 0.0
    %7219 = vmatpush1.msra.mxu0 0.0
    %7220 = vmatprep.subr.mxu0 0.0
    %7221 = vmatpush1.msra.mxu0 0.0
    %7222 = vmatprep.subr.mxu0 0.0
    %7223 = vmatpush1.msra.mxu0 0.0
    %7224 = vmatprep.subr.mxu0 0.0
    %7225 = vmatpush1.msra.mxu0 0.0
    %7226 = vmatprep.subr.mxu0 0.0
    %7227 = vmatpush1.msra.mxu0 0.0
    %7228 = vmatprep.subr.mxu0 0.0
    %7229 = vmatpush1.msra.mxu0 0.0
    %7230 = vmatprep.subr.mxu0 0.0
    %7231 = vmatpush1.msra.mxu0 0.0
    %7232 = vmatprep.subr.mxu0 0.0
    %7233 = vmatpush1.msra.mxu0 0.0
    %7234 = vmatprep.subr.mxu0 0.0
    %7235 = vmatpush1.msra.mxu0 0.0
    %7236 = vmatprep.subr.mxu0 0.0
    %7237 = vmatpush1.msra.mxu0 0.0
    %7238 = vmatprep.subr.mxu0 0.0
    %7239 = vmatpush1.msra.mxu0 0.0
    %7240 = vmatprep.subr.mxu0 0.0
    %7241 = vmatpush1.msra.mxu0 0.0
    %7242 = vmatprep.subr.mxu0 0.0
    %7243 = vmatpush1.msra.mxu0 0.0
    %7244 = vmatprep.subr.mxu0 0.0
    %7245 = vmatpush1.msra.mxu0 0.0
    %7246 = vmatprep.subr.mxu0 0.0
    %7247 = vmatpush1.msra.mxu0 0.0
    %7248 = vmatprep.subr.mxu0 0.0
    %v7249 = vand.u32 %v4285, 4294901760
    %7250 = vmatpush1.msra.mxu0 %v7249
    %7251 = vmatprep.subr.mxu0 0.0
    %7252 = vmatpush2.msra.mxu0 0.0
    %7253 = vmatprep.subr.mxu0 0.0
    %7254 = vmatpush2.msra.mxu0 0.0
    %7255 = vmatprep.subr.mxu0 0.0
    %7256 = vmatpush2.msra.mxu0 0.0
    %7257 = vmatprep.subr.mxu0 0.0
    %7258 = vmatpush2.msra.mxu0 0.0
    %7259 = vmatprep.subr.mxu0 0.0
    %7260 = vmatpush2.msra.mxu0 0.0
    %7261 = vmatprep.subr.mxu0 0.0
    %7262 = vmatpush2.msra.mxu0 0.0
    %7263 = vmatprep.subr.mxu0 0.0
    %7264 = vmatpush2.msra.mxu0 0.0
    %7265 = vmatprep.subr.mxu0 0.0
    %7266 = vmatpush2.msra.mxu0 0.0
    %7267 = vmatprep.subr.mxu0 0.0
    %7268 = vmatpush2.msra.mxu0 0.0
    %7269 = vmatprep.subr.mxu0 0.0
    %7270 = vmatpush2.msra.mxu0 0.0
    %7271 = vmatprep.subr.mxu0 0.0
    %7272 = vmatpush2.msra.mxu0 0.0
    %7273 = vmatprep.subr.mxu0 0.0
    %7274 = vmatpush2.msra.mxu0 0.0
    %7275 = vmatprep.subr.mxu0 0.0
    %7276 = vmatpush2.msra.mxu0 0.0
    %7277 = vmatprep.subr.mxu0 0.0
    %7278 = vmatpush2.msra.mxu0 0.0
    %7279 = vmatprep.subr.mxu0 0.0
    %7280 = vmatpush2.msra.mxu0 0.0
    %7281 = vmatprep.subr.mxu0 0.0
    %7282 = vmatpush2.msra.mxu0 0.0
    %7283 = vmatprep.mubr.f32.mxu0 0.0
    %v7284 = vand.u32 %v6802, 4294901760
    %7285 = vmatmul.mubr.f32.gmra.mxu0 %v7284
    %v7286 = vpop.f32.mrf.mxu0
    %v7287 = vadd.f32 %v7209, %v7286
    %v7288 = vpop.f32.mrf.mxu0
    %7289 = vmatprep.mubr.f32.mxu0 0.0
    %v7290 = vand.u32 %v6805, 4294901760
    %7291 = vmatmul.mubr.f32.gmra.mxu0 %v7290
    %v7292 = vpop.f32.mrf.mxu0
    %v7293 = vadd.f32 %v7215, %v7292
    %v7294 = vpop.f32.mrf.mxu0
    %7295 = vdwg.mxu0
    %v7297 = vsel %vm89, %v4286, 0
    %7299 = vmatprep.subr.mxu0 0.0
    %7300 = vmatpush1.msra.mxu0 0.0
    %7301 = vmatprep.subr.mxu0 0.0
    %7302 = vmatpush1.msra.mxu0 0.0
    %7303 = vmatprep.subr.mxu0 0.0
    %7304 = vmatpush1.msra.mxu0 0.0
    %7305 = vmatprep.subr.mxu0 0.0
    %7306 = vmatpush1.msra.mxu0 0.0
    %7307 = vmatprep.subr.mxu0 0.0
    %7308 = vmatpush1.msra.mxu0 0.0
    %7309 = vmatprep.subr.mxu0 0.0
    %7310 = vmatpush1.msra.mxu0 0.0
    %7311 = vmatprep.subr.mxu0 0.0
    %7312 = vmatpush1.msra.mxu0 0.0
    %7313 = vmatprep.subr.mxu0 0.0
    %7314 = vmatpush1.msra.mxu0 0.0
    %7315 = vmatprep.subr.mxu0 0.0
    %7316 = vmatpush1.msra.mxu0 0.0
    %7317 = vmatprep.subr.mxu0 0.0
    %7318 = vmatpush1.msra.mxu0 0.0
    %7319 = vmatprep.subr.mxu0 0.0
    %7320 = vmatpush1.msra.mxu0 0.0
    %7321 = vmatprep.subr.mxu0 0.0
    %7322 = vmatpush1.msra.mxu0 0.0
    %7323 = vmatprep.subr.mxu0 0.0
    %7324 = vmatpush1.msra.mxu0 0.0
    %7325 = vmatprep.subr.mxu0 0.0
    %7326 = vmatpush1.msra.mxu0 0.0
    %7327 = vmatprep.subr.mxu0 0.0
    %v7328 = vand.u32 %v7293, 4294901760
    %7329 = vmatpush1.msra.mxu0 %v7328
    %7330 = vmatprep.subr.mxu0 0.0
    %v7331 = vand.u32 %v7287, 4294901760
    %7332 = vmatpush1.msra.mxu0 %v7331
    %7333 = vmatprep.subr.mxu0 0.0
    %7334 = vmatpush2.msra.mxu0 0.0
    %7335 = vmatprep.subr.mxu0 0.0
    %7336 = vmatpush2.msra.mxu0 0.0
    %7337 = vmatprep.subr.mxu0 0.0
    %7338 = vmatpush2.msra.mxu0 0.0
    %7339 = vmatprep.subr.mxu0 0.0
    %7340 = vmatpush2.msra.mxu0 0.0
    %7341 = vmatprep.subr.mxu0 0.0
    %7342 = vmatpush2.msra.mxu0 0.0
    %7343 = vmatprep.subr.mxu0 0.0
    %7344 = vmatpush2.msra.mxu0 0.0
    %7345 = vmatprep.subr.mxu0 0.0
    %7346 = vmatpush2.msra.mxu0 0.0
    %7347 = vmatprep.subr.mxu0 0.0
    %7348 = vmatpush2.msra.mxu0 0.0
    %7349 = vmatprep.subr.mxu0 0.0
    %7350 = vmatpush2.msra.mxu0 0.0
    %7351 = vmatprep.subr.mxu0 0.0
    %7352 = vmatpush2.msra.mxu0 0.0
    %7353 = vmatprep.subr.mxu0 0.0
    %7354 = vmatpush2.msra.mxu0 0.0
    %7355 = vmatprep.subr.mxu0 0.0
    %7356 = vmatpush2.msra.mxu0 0.0
    %7357 = vmatprep.subr.mxu0 0.0
    %7358 = vmatpush2.msra.mxu0 0.0
    %7359 = vmatprep.subr.mxu0 0.0
    %7360 = vmatpush2.msra.mxu0 0.0
    %7361 = vmatprep.subr.mxu0 0.0
    %7362 = vmatpush2.msra.mxu0 0.0
    %7363 = vmatprep.subr.mxu0 0.0
    %7364 = vmatpush2.msra.mxu0 0.0
    %7365 = vmatprep.mubr.f32.mxu0 0.0
    %v7366 = vand.u32 %v7297, 4294901760
    %v7367 = vsub.f32 %v7297, %v7366
    %v7368 = vand.u32 %v7367, 4294901760
    %v7369 = vsub.f32 %v7367, %v7368
    %v7370 = vand.u32 %v7369, 4294901760
    %7371 = vmatmul.mubr.f32.gmra.mxu0 %v7370
    %v7372 = vpop.f32.mrf.mxu0
    %v7373 = vadd.f32 0.0, %v7372
    %v7374 = vpop.f32.mrf.mxu0
    %7375 = vdwg.mxu0
    %7376 = vmatprep.subr.mxu0 0.0
    %7377 = vmatpush1.msra.mxu0 0.0
    %7378 = vmatprep.subr.mxu0 0.0
    %7379 = vmatpush1.msra.mxu0 0.0
    %7380 = vmatprep.subr.mxu0 0.0
    %7381 = vmatpush1.msra.mxu0 0.0
    %7382 = vmatprep.subr.mxu0 0.0
    %7383 = vmatpush1.msra.mxu0 0.0
    %7384 = vmatprep.subr.mxu0 0.0
    %7385 = vmatpush1.msra.mxu0 0.0
    %7386 = vmatprep.subr.mxu0 0.0
    %7387 = vmatpush1.msra.mxu0 0.0
    %7388 = vmatprep.subr.mxu0 0.0
    %7389 = vmatpush1.msra.mxu0 0.0
    %7390 = vmatprep.subr.mxu0 0.0
    %7391 = vmatpush1.msra.mxu0 0.0
    %7392 = vmatprep.subr.mxu0 0.0
    %7393 = vmatpush1.msra.mxu0 0.0
    %7394 = vmatprep.subr.mxu0 0.0
    %7395 = vmatpush1.msra.mxu0 0.0
    %7396 = vmatprep.subr.mxu0 0.0
    %7397 = vmatpush1.msra.mxu0 0.0
    %7398 = vmatprep.subr.mxu0 0.0
    %7399 = vmatpush1.msra.mxu0 0.0
    %7400 = vmatprep.subr.mxu0 0.0
    %7401 = vmatpush1.msra.mxu0 0.0
    %7402 = vmatprep.subr.mxu0 0.0
    %7403 = vmatpush1.msra.mxu0 0.0
    %7404 = vmatprep.subr.mxu0 0.0
    %v7405 = vand.u32 %v7293, 4294901760
    %v7406 = vsub.f32 %v7293, %v7405
    %v7407 = vand.u32 %v7406, 4294901760
    %v7408 = vsub.f32 %v7406, %v7407
    %v7409 = vand.u32 %v7408, 4294901760
    %7410 = vmatpush1.msra.mxu0 %v7409
    %7411 = vmatprep.subr.mxu0 0.0
    %v7412 = vand.u32 %v7287, 4294901760
    %v7413 = vsub.f32 %v7287, %v7412
    %v7414 = vand.u32 %v7413, 4294901760
    %v7415 = vsub.f32 %v7413, %v7414
    %v7416 = vand.u32 %v7415, 4294901760
    %7417 = vmatpush1.msra.mxu0 %v7416
    %7418 = vmatprep.subr.mxu0 0.0
    %7419 = vmatpush2.msra.mxu0 0.0
    %7420 = vmatprep.subr.mxu0 0.0
    %7421 = vmatpush2.msra.mxu0 0.0
    %7422 = vmatprep.subr.mxu0 0.0
    %7423 = vmatpush2.msra.mxu0 0.0
    %7424 = vmatprep.subr.mxu0 0.0
    %7425 = vmatpush2.msra.mxu0 0.0
    %7426 = vmatprep.subr.mxu0 0.0
    %7427 = vmatpush2.msra.mxu0 0.0
    %7428 = vmatprep.subr.mxu0 0.0
    %7429 = vmatpush2.msra.mxu0 0.0
    %7430 = vmatprep.subr.mxu0 0.0
    %7431 = vmatpush2.msra.mxu0 0.0
    %7432 = vmatprep.subr.mxu0 0.0
    %7433 = vmatpush2.msra.mxu0 0.0
    %7434 = vmatprep.subr.mxu0 0.0
    %7435 = vmatpush2.msra.mxu0 0.0
    %7436 = vmatprep.subr.mxu0 0.0
    %7437 = vmatpush2.msra.mxu0 0.0
    %7438 = vmatprep.subr.mxu0 0.0
    %7439 = vmatpush2.msra.mxu0 0.0
    %7440 = vmatprep.subr.mxu0 0.0
    %7441 = vmatpush2.msra.mxu0 0.0
    %7442 = vmatprep.subr.mxu0 0.0
    %7443 = vmatpush2.msra.mxu0 0.0
    %7444 = vmatprep.subr.mxu0 0.0
    %7445 = vmatpush2.msra.mxu0 0.0
    %7446 = vmatprep.subr.mxu0 0.0
    %7447 = vmatpush2.msra.mxu0 0.0
    %7448 = vmatprep.subr.mxu0 0.0
    %7449 = vmatpush2.msra.mxu0 0.0
    %7450 = vmatprep.mubr.f32.mxu0 0.0
    %v7451 = vand.u32 %v7297, 4294901760
    %7452 = vmatmul.mubr.f32.gmra.mxu0 %v7451
    %v7453 = vpop.f32.mrf.mxu0
    %v7454 = vadd.f32 %v7373, %v7453
    %v7455 = vpop.f32.mrf.mxu0
    %7456 = vdwg.mxu0
    %7457 = vmatprep.subr.mxu0 0.0
    %7458 = vmatpush1.msra.mxu0 0.0
    %7459 = vmatprep.subr.mxu0 0.0
    %7460 = vmatpush1.msra.mxu0 0.0
    %7461 = vmatprep.subr.mxu0 0.0
    %7462 = vmatpush1.msra.mxu0 0.0
    %7463 = vmatprep.subr.mxu0 0.0
    %7464 = vmatpush1.msra.mxu0 0.0
    %7465 = vmatprep.subr.mxu0 0.0
    %7466 = vmatpush1.msra.mxu0 0.0
    %7467 = vmatprep.subr.mxu0 0.0
    %7468 = vmatpush1.msra.mxu0 0.0
    %7469 = vmatprep.subr.mxu0 0.0
    %7470 = vmatpush1.msra.mxu0 0.0
    %7471 = vmatprep.subr.mxu0 0.0
    %7472 = vmatpush1.msra.mxu0 0.0
    %7473 = vmatprep.subr.mxu0 0.0
    %7474 = vmatpush1.msra.mxu0 0.0
    %7475 = vmatprep.subr.mxu0 0.0
    %7476 = vmatpush1.msra.mxu0 0.0
    %7477 = vmatprep.subr.mxu0 0.0
    %7478 = vmatpush1.msra.mxu0 0.0
    %7479 = vmatprep.subr.mxu0 0.0
    %7480 = vmatpush1.msra.mxu0 0.0
    %7481 = vmatprep.subr.mxu0 0.0
    %7482 = vmatpush1.msra.mxu0 0.0
    %7483 = vmatprep.subr.mxu0 0.0
    %7484 = vmatpush1.msra.mxu0 0.0
    %7485 = vmatprep.subr.mxu0 0.0
    %v7486 = vand.u32 %v7293, 4294901760
    %v7487 = vsub.f32 %v7293, %v7486
    %7488 = vmatpush1.msra.mxu0 %v7487
    %7489 = vmatprep.subr.mxu0 0.0
    %v7490 = vand.u32 %v7287, 4294901760
    %v7491 = vsub.f32 %v7287, %v7490
    %7492 = vmatpush1.msra.mxu0 %v7491
    %7493 = vmatprep.subr.mxu0 0.0
    %7494 = vmatpush2.msra.mxu0 0.0
    %7495 = vmatprep.subr.mxu0 0.0
    %7496 = vmatpush2.msra.mxu0 0.0
    %7497 = vmatprep.subr.mxu0 0.0
    %7498 = vmatpush2.msra.mxu0 0.0
    %7499 = vmatprep.subr.mxu0 0.0
    %7500 = vmatpush2.msra.mxu0 0.0
    %7501 = vmatprep.subr.mxu0 0.0
    %7502 = vmatpush2.msra.mxu0 0.0
    %7503 = vmatprep.subr.mxu0 0.0
    %7504 = vmatpush2.msra.mxu0 0.0
    %7505 = vmatprep.subr.mxu0 0.0
    %7506 = vmatpush2.msra.mxu0 0.0
    %7507 = vmatprep.subr.mxu0 0.0
    %7508 = vmatpush2.msra.mxu0 0.0
    %7509 = vmatprep.subr.mxu0 0.0
    %7510 = vmatpush2.msra.mxu0 0.0
    %7511 = vmatprep.subr.mxu0 0.0
    %7512 = vmatpush2.msra.mxu0 0.0
    %7513 = vmatprep.subr.mxu0 0.0
    %7514 = vmatpush2.msra.mxu0 0.0
    %7515 = vmatprep.subr.mxu0 0.0
    %7516 = vmatpush2.msra.mxu0 0.0
    %7517 = vmatprep.subr.mxu0 0.0
    %7518 = vmatpush2.msra.mxu0 0.0
    %7519 = vmatprep.subr.mxu0 0.0
    %7520 = vmatpush2.msra.mxu0 0.0
    %7521 = vmatprep.subr.mxu0 0.0
    %7522 = vmatpush2.msra.mxu0 0.0
    %7523 = vmatprep.subr.mxu0 0.0
    %7524 = vmatpush2.msra.mxu0 0.0
    %7525 = vmatprep.mubr.f32.mxu0 0.0
    %v7526 = vand.u32 %v7297, 4294901760
    %v7527 = vsub.f32 %v7297, %v7526
    %7528 = vmatmul.mubr.f32.gmra.mxu0 %v7527
    %v7529 = vpop.f32.mrf.mxu0
    %v7530 = vadd.f32 %v7454, %v7529
    %v7531 = vpop.f32.mrf.mxu0
    %7532 = vdwg.mxu0
    %7533 = vmatprep.subr.mxu0 0.0
    %7534 = vmatpush1.msra.mxu0 0.0
    %7535 = vmatprep.subr.mxu0 0.0
    %7536 = vmatpush1.msra.mxu0 0.0
    %7537 = vmatprep.subr.mxu0 0.0
    %7538 = vmatpush1.msra.mxu0 0.0
    %7539 = vmatprep.subr.mxu0 0.0
    %7540 = vmatpush1.msra.mxu0 0.0
    %7541 = vmatprep.subr.mxu0 0.0
    %7542 = vmatpush1.msra.mxu0 0.0
    %7543 = vmatprep.subr.mxu0 0.0
    %7544 = vmatpush1.msra.mxu0 0.0
    %7545 = vmatprep.subr.mxu0 0.0
    %7546 = vmatpush1.msra.mxu0 0.0
    %7547 = vmatprep.subr.mxu0 0.0
    %7548 = vmatpush1.msra.mxu0 0.0
    %7549 = vmatprep.subr.mxu0 0.0
    %7550 = vmatpush1.msra.mxu0 0.0
    %7551 = vmatprep.subr.mxu0 0.0
    %7552 = vmatpush1.msra.mxu0 0.0
    %7553 = vmatprep.subr.mxu0 0.0
    %7554 = vmatpush1.msra.mxu0 0.0
    %7555 = vmatprep.subr.mxu0 0.0
    %7556 = vmatpush1.msra.mxu0 0.0
    %7557 = vmatprep.subr.mxu0 0.0
    %7558 = vmatpush1.msra.mxu0 0.0
    %7559 = vmatprep.subr.mxu0 0.0
    %7560 = vmatpush1.msra.mxu0 0.0
    %7561 = vmatprep.subr.mxu0 0.0
    %v7562 = vand.u32 %v7293, 4294901760
    %7563 = vmatpush1.msra.mxu0 %v7562
    %7564 = vmatprep.subr.mxu0 0.0
    %v7565 = vand.u32 %v7287, 4294901760
    %7566 = vmatpush1.msra.mxu0 %v7565
    %7567 = vmatprep.subr.mxu0 0.0
    %7568 = vmatpush2.msra.mxu0 0.0
    %7569 = vmatprep.subr.mxu0 0.0
    %7570 = vmatpush2.msra.mxu0 0.0
    %7571 = vmatprep.subr.mxu0 0.0
    %7572 = vmatpush2.msra.mxu0 0.0
    %7573 = vmatprep.subr.mxu0 0.0
    %7574 = vmatpush2.msra.mxu0 0.0
    %7575 = vmatprep.subr.mxu0 0.0
    %7576 = vmatpush2.msra.mxu0 0.0
    %7577 = vmatprep.subr.mxu0 0.0
    %7578 = vmatpush2.msra.mxu0 0.0
    %7579 = vmatprep.subr.mxu0 0.0
    %7580 = vmatpush2.msra.mxu0 0.0
    %7581 = vmatprep.subr.mxu0 0.0
    %7582 = vmatpush2.msra.mxu0 0.0
    %7583 = vmatprep.subr.mxu0 0.0
    %7584 = vmatpush2.msra.mxu0 0.0
    %7585 = vmatprep.subr.mxu0 0.0
    %7586 = vmatpush2.msra.mxu0 0.0
    %7587 = vmatprep.subr.mxu0 0.0
    %7588 = vmatpush2.msra.mxu0 0.0
    %7589 = vmatprep.subr.mxu0 0.0
    %7590 = vmatpush2.msra.mxu0 0.0
    %7591 = vmatprep.subr.mxu0 0.0
    %7592 = vmatpush2.msra.mxu0 0.0
    %7593 = vmatprep.subr.mxu0 0.0
    %7594 = vmatpush2.msra.mxu0 0.0
    %7595 = vmatprep.subr.mxu0 0.0
    %7596 = vmatpush2.msra.mxu0 0.0
    %7597 = vmatprep.subr.mxu0 0.0
    %7598 = vmatpush2.msra.mxu0 0.0
    %7599 = vmatprep.mubr.f32.mxu0 0.0
    %v7600 = vand.u32 %v7297, 4294901760
    %v7601 = vsub.f32 %v7297, %v7600
    %v7602 = vand.u32 %v7601, 4294901760
    %7603 = vmatmul.mubr.f32.gmra.mxu0 %v7602
    %v7604 = vpop.f32.mrf.mxu0
    %v7605 = vadd.f32 %v7530, %v7604
    %v7606 = vpop.f32.mrf.mxu0
    %7607 = vdwg.mxu0
    %7608 = vmatprep.subr.mxu0 0.0
    %7609 = vmatpush1.msra.mxu0 0.0
    %7610 = vmatprep.subr.mxu0 0.0
    %7611 = vmatpush1.msra.mxu0 0.0
    %7612 = vmatprep.subr.mxu0 0.0
    %7613 = vmatpush1.msra.mxu0 0.0
    %7614 = vmatprep.subr.mxu0 0.0
    %7615 = vmatpush1.msra.mxu0 0.0
    %7616 = vmatprep.subr.mxu0 0.0
    %7617 = vmatpush1.msra.mxu0 0.0
    %7618 = vmatprep.subr.mxu0 0.0
    %7619 = vmatpush1.msra.mxu0 0.0
    %7620 = vmatprep.subr.mxu0 0.0
    %7621 = vmatpush1.msra.mxu0 0.0
    %7622 = vmatprep.subr.mxu0 0.0
    %7623 = vmatpush1.msra.mxu0 0.0
    %7624 = vmatprep.subr.mxu0 0.0
    %7625 = vmatpush1.msra.mxu0 0.0
    %7626 = vmatprep.subr.mxu0 0.0
    %7627 = vmatpush1.msra.mxu0 0.0
    %7628 = vmatprep.subr.mxu0 0.0
    %7629 = vmatpush1.msra.mxu0 0.0
    %7630 = vmatprep.subr.mxu0 0.0
    %7631 = vmatpush1.msra.mxu0 0.0
    %7632 = vmatprep.subr.mxu0 0.0
    %7633 = vmatpush1.msra.mxu0 0.0
    %7634 = vmatprep.subr.mxu0 0.0
    %7635 = vmatpush1.msra.mxu0 0.0
    %7636 = vmatprep.subr.mxu0 0.0
    %v7637 = vand.u32 %v7293, 4294901760
    %v7638 = vsub.f32 %v7293, %v7637
    %v7639 = vand.u32 %v7638, 4294901760
    %7640 = vmatpush1.msra.mxu0 %v7639
    %7641 = vmatprep.subr.mxu0 0.0
    %v7642 = vand.u32 %v7287, 4294901760
    %v7643 = vsub.f32 %v7287, %v7642
    %v7644 = vand.u32 %v7643, 4294901760
    %7645 = vmatpush1.msra.mxu0 %v7644
    %7646 = vmatprep.subr.mxu0 0.0
    %7647 = vmatpush2.msra.mxu0 0.0
    %7648 = vmatprep.subr.mxu0 0.0
    %7649 = vmatpush2.msra.mxu0 0.0
    %7650 = vmatprep.subr.mxu0 0.0
    %7651 = vmatpush2.msra.mxu0 0.0
    %7652 = vmatprep.subr.mxu0 0.0
    %7653 = vmatpush2.msra.mxu0 0.0
    %7654 = vmatprep.subr.mxu0 0.0
    %7655 = vmatpush2.msra.mxu0 0.0
    %7656 = vmatprep.subr.mxu0 0.0
    %7657 = vmatpush2.msra.mxu0 0.0
    %7658 = vmatprep.subr.mxu0 0.0
    %7659 = vmatpush2.msra.mxu0 0.0
    %7660 = vmatprep.subr.mxu0 0.0
    %7661 = vmatpush2.msra.mxu0 0.0
    %7662 = vmatprep.subr.mxu0 0.0
    %7663 = vmatpush2.msra.mxu0 0.0
    %7664 = vmatprep.subr.mxu0 0.0
    %7665 = vmatpush2.msra.mxu0 0.0
    %7666 = vmatprep.subr.mxu0 0.0
    %7667 = vmatpush2.msra.mxu0 0.0
    %7668 = vmatprep.subr.mxu0 0.0
    %7669 = vmatpush2.msra.mxu0 0.0
    %7670 = vmatprep.subr.mxu0 0.0
    %7671 = vmatpush2.msra.mxu0 0.0
    %7672 = vmatprep.subr.mxu0 0.0
    %7673 = vmatpush2.msra.mxu0 0.0
    %7674 = vmatprep.subr.mxu0 0.0
    %7675 = vmatpush2.msra.mxu0 0.0
    %7676 = vmatprep.subr.mxu0 0.0
    %7677 = vmatpush2.msra.mxu0 0.0
    %7678 = vmatprep.mubr.f32.mxu0 0.0
    %v7679 = vand.u32 %v7297, 4294901760
    %7680 = vmatmul.mubr.f32.gmra.mxu0 %v7679
    %v7681 = vpop.f32.mrf.mxu0
    %v7682 = vadd.f32 %v7605, %v7681
    %v7683 = vpop.f32.mrf.mxu0
    %7684 = vdwg.mxu0
    %7685 = vmatprep.subr.mxu0 0.0
    %7686 = vmatpush1.msra.mxu0 0.0
    %7687 = vmatprep.subr.mxu0 0.0
    %7688 = vmatpush1.msra.mxu0 0.0
    %7689 = vmatprep.subr.mxu0 0.0
    %7690 = vmatpush1.msra.mxu0 0.0
    %7691 = vmatprep.subr.mxu0 0.0
    %7692 = vmatpush1.msra.mxu0 0.0
    %7693 = vmatprep.subr.mxu0 0.0
    %7694 = vmatpush1.msra.mxu0 0.0
    %7695 = vmatprep.subr.mxu0 0.0
    %7696 = vmatpush1.msra.mxu0 0.0
    %7697 = vmatprep.subr.mxu0 0.0
    %7698 = vmatpush1.msra.mxu0 0.0
    %7699 = vmatprep.subr.mxu0 0.0
    %7700 = vmatpush1.msra.mxu0 0.0
    %7701 = vmatprep.subr.mxu0 0.0
    %7702 = vmatpush1.msra.mxu0 0.0
    %7703 = vmatprep.subr.mxu0 0.0
    %7704 = vmatpush1.msra.mxu0 0.0
    %7705 = vmatprep.subr.mxu0 0.0
    %7706 = vmatpush1.msra.mxu0 0.0
    %7707 = vmatprep.subr.mxu0 0.0
    %7708 = vmatpush1.msra.mxu0 0.0
    %7709 = vmatprep.subr.mxu0 0.0
    %7710 = vmatpush1.msra.mxu0 0.0
    %7711 = vmatprep.subr.mxu0 0.0
    %7712 = vmatpush1.msra.mxu0 0.0
    %7713 = vmatprep.subr.mxu0 0.0
    %v7714 = vand.u32 %v7293, 4294901760
    %7715 = vmatpush1.msra.mxu0 %v7714
    %7716 = vmatprep.subr.mxu0 0.0
    %v7717 = vand.u32 %v7287, 4294901760
    %7718 = vmatpush1.msra.mxu0 %v7717
    %7719 = vmatprep.subr.mxu0 0.0
    %7720 = vmatpush2.msra.mxu0 0.0
    %7721 = vmatprep.subr.mxu0 0.0
    %7722 = vmatpush2.msra.mxu0 0.0
    %7723 = vmatprep.subr.mxu0 0.0
    %7724 = vmatpush2.msra.mxu0 0.0
    %7725 = vmatprep.subr.mxu0 0.0
    %7726 = vmatpush2.msra.mxu0 0.0
    %7727 = vmatprep.subr.mxu0 0.0
    %7728 = vmatpush2.msra.mxu0 0.0
    %7729 = vmatprep.subr.mxu0 0.0
    %7730 = vmatpush2.msra.mxu0 0.0
    %7731 = vmatprep.subr.mxu0 0.0
    %7732 = vmatpush2.msra.mxu0 0.0
    %7733 = vmatprep.subr.mxu0 0.0
    %7734 = vmatpush2.msra.mxu0 0.0
    %7735 = vmatprep.subr.mxu0 0.0
    %7736 = vmatpush2.msra.mxu0 0.0
    %7737 = vmatprep.subr.mxu0 0.0
    %7738 = vmatpush2.msra.mxu0 0.0
    %7739 = vmatprep.subr.mxu0 0.0
    %7740 = vmatpush2.msra.mxu0 0.0
    %7741 = vmatprep.subr.mxu0 0.0
    %7742 = vmatpush2.msra.mxu0 0.0
    %7743 = vmatprep.subr.mxu0 0.0
    %7744 = vmatpush2.msra.mxu0 0.0
    %7745 = vmatprep.subr.mxu0 0.0
    %7746 = vmatpush2.msra.mxu0 0.0
    %7747 = vmatprep.subr.mxu0 0.0
    %7748 = vmatpush2.msra.mxu0 0.0
    %7749 = vmatprep.subr.mxu0 0.0
    %7750 = vmatpush2.msra.mxu0 0.0
    %7751 = vmatprep.mubr.f32.mxu0 0.0
    %v7752 = vand.u32 %v7297, 4294901760
    %7753 = vmatmul.mubr.f32.gmra.mxu0 %v7752
    %v7754 = vpop.f32.mrf.mxu0
    %v7755 = vadd.f32 %v7682, %v7754
    %v7756 = vpop.f32.mrf.mxu0
    %7757 = vdwg.mxu0
    %v7759 = vcombine.high %v7755, %v7755
    %vm7761 = vcmask 27648
    %7762 = vst.msk [vmem:[#allocation12] sm:$0xf] %vm7761, %v7755
    %7763 = vst.msk [vmem:[#allocation12 + $0x4] sm:$0xf] %vm7761, %v7759
    // Predicated region
    $region50: #{tpu_custom_call.1} parent=1 // pred_check
      _
    $region51: #{tpu_custom_call.1} parent=1 // pred_check_branch
      %7765 = sbr.rel (0) target = $region53
    $region52: #{tpu_custom_call.1} parent=1 // pred_region
      %s7767 = ssub.s32 128, 128
      %7768 = vsyncadd [#allocation8], %s7767
      %s7769 = sshll.u32 [#allocation12], 4
      %s7770 = int_to_ptr.vmem [resolvable:$true] %s7769
      %7775 = dma.vmem_to_hbm [thread:$0]  %s7770, 128, %s9, [#allocation8], 64, 64, 4
    $region53: #{tpu_custom_call.1} parent=1 // pred_fallthru
      _
    // Predicated region
    $region54: #{tpu_custom_call.1} parent=1 // pred_check
      _
    $region55: #{tpu_custom_call.1} parent=1 // pred_check_branch
      %7777 = sbr.rel (0) target = $region57
    $region56: #{tpu_custom_call.1} parent=1 // pred_region
      %7778 = dma.done [#allocation8], 128
    $region57: #{tpu_custom_call.1} parent=1 // pred_fallthru
      _
    %7779 = vsyncpa [#allocation7], 1
    %7780 = vsyncpa [#allocation10], 1
    %7781 = vsyncpa [#allocation8], 1

</llo_original>
